<compile_context>
chip_gen: v5e
topology: v5e:2x2
jax: 0.10.0
libtpu: 0.0.40
codegen_flags: <defaults>
</compile_context>

<pallas_src>
import functools

import numpy as np
import jax
import jax.numpy as jnp
from jax.experimental import pallas as pl
from jax.experimental.pallas import tpu as pltpu


# ----------------------------------------------------------------------------
# Host-side constant builders (tap-validity masks, upsample / pool selectors)
# ----------------------------------------------------------------------------
def _make_shift_masks(B, H, W, k):
    """(k*k, 1, B*H*W) {0,1} masks marking valid source pixels per conv tap."""
    hk = k // 2
    r = np.arange(B * H * W)
    y = (r // W) % H
    x = r % W
    masks = []
    for dy in range(-hk, hk + 1):
        for dx in range(-hk, hk + 1):
            m = (y + dy >= 0) & (y + dy < H) & (x + dx >= 0) & (x + dx < W)
            masks.append(m.astype(np.float32))
    return jnp.asarray(np.stack(masks)[:, None, :])


def _make_upsample_mat(B, h, w):
    """(B*h*w, B*2h*2w) selector M so that up = r_next @ M (nearest 2x)."""
    H, W = 2 * h, 2 * w
    R, S = B * H * W, B * h * w
    r = np.arange(R)
    b = r // (H * W)
    y = (r // W) % H
    x = r % W
    src = b * (h * w) + (y // 2) * w + (x // 2)
    M = np.zeros((S, R), np.float32)
    M[src, r] = 1.0
    return jnp.asarray(M)


def _make_pool_sel(B, H, W):
    """(4, B*H*W, B*(H/2)*(W/2)) selectors; maxpool = max_d (x @ sel[d])."""
    h, w = H // 2, W // 2
    inR, outR = B * H * W, B * h * w
    s = np.arange(outR)
    b = s // (h * w)
    i = (s // w) % h
    j = s % w
    sel = np.zeros((4, inR, outR), np.float32)
    for d, (di, dj) in enumerate(((0, 0), (0, 1), (1, 0), (1, 1))):
        src = b * (H * W) + (2 * i + di) * W + (2 * j + dj)
        sel[d, src, s] = 1.0
    return jnp.asarray(sel)


# ----------------------------------------------------------------------------
# In-kernel 'same' conv: k*k shifted matmuls on channel-major flattened maps.
#   x      : (Cin, R) value, R = B*H*W, channels on sublanes, spatial on lanes
#   w_ref  : (k*k, Cout, Cin)   per-tap transposed weights
#   b_ref  : (Cout, 1)          bias
#   m_ref  : (k*k, 1, R)        tap validity masks
# ----------------------------------------------------------------------------
def _conv_same(x, w_ref, b_ref, m_ref, width, k):
    Cin, R = x.shape
    Cout = w_ref.shape[1]
    hk = k // 2
    pad = hk * (width + 1)
    if pad > 0:
        zeros = jnp.zeros((Cin, pad), jnp.float32)
        xp = jnp.concatenate([zeros, x, zeros], axis=1)
    else:
        xp = x
    acc = jnp.zeros((Cout, R), jnp.float32)
    for ky in range(k):
        for kx in range(k):
            s = ky * k + kx
            off = (ky - hk) * width + (kx - hk)
            patch = xp[:, pad + off:pad + off + R]
            if off != 0:
                patch = patch * m_ref[s]          # zero invalid (wrapped) taps
            acc = acc + jnp.dot(w_ref[s], patch,
                                preferred_element_type=jnp.float32)
    return acc + b_ref[...]


# ----------------------------------------------------------------------------
# Fused PredNet kernel: one grid step == one timestep of the recurrence.
# ----------------------------------------------------------------------------
def _prednet_kernel(*refs, L, C, Wl, R, k, pixel_max):
    it = iter(refs)
    frames = next(it)                                   # (1, C0, R0) frame x[t]
    lstm_w = [next(it) for _ in range(L)]
    lstm_b = [next(it) for _ in range(L)]
    ahat_w = [next(it) for _ in range(L)]
    ahat_b = [next(it) for _ in range(L)]
    a_w = [next(it) for _ in range(L - 1)]
    a_b = [next(it) for _ in range(L - 1)]
    masks = [next(it) for _ in range(L)]
    up_mat = [next(it) for _ in range(L - 1)]
    pool_sel = [next(it) for _ in range(L - 1)]
    pred = next(it)                                     # output (1, C0, R0)
    r_scr = [next(it) for _ in range(L)]
    c_scr = [next(it) for _ in range(L)]
    e_scr = [next(it) for _ in range(L)]
    a_scr = [next(it) for _ in range(L - 1)]            # a_scr[i] == a[l=i+1]

    g = pl.program_id(0)

    @pl.when(g == 0)
    def _init():
        for l in range(L):
            r_scr[l][...] = jnp.zeros((C[l], R[l]), jnp.float32)
            c_scr[l][...] = jnp.zeros((C[l], R[l]), jnp.float32)
            e_scr[l][...] = jnp.zeros((2 * C[l], R[l]), jnp.float32)

    # ---------------- ConvLSTM sweep: top layer down to layer 0 -------------
    r_new = [None] * L
    for l in reversed(range(L)):
        r_prev = r_scr[l][...]
        e_prev = e_scr[l][...]
        c_prev = c_scr[l][...]
        inp = jnp.concatenate([r_prev, e_prev], axis=0)
        if l < L - 1:
            up = jnp.dot(r_new[l + 1], up_mat[l][...],          # nearest 2x
                         preferred_element_type=jnp.float32)
            inp = jnp.concatenate([inp, up], axis=0)
        gates = _conv_same(inp, lstm_w[l], lstm_b[l], masks[l], Wl[l], k)
        cl = C[l]
        i_g = jnp.clip(gates[0 * cl:1 * cl], 0.0, 1.0)   # Hardtanh(0, 1)
        f_g = jnp.clip(gates[1 * cl:2 * cl], 0.0, 1.0)
        o_g = jnp.clip(gates[2 * cl:3 * cl], 0.0, 1.0)
        g_g = jnp.tanh(gates[3 * cl:4 * cl])             # Tanh gate
        # inplace ReLU in the reference persists relu(f*c + i*g) as the cell
        c_new = jnp.maximum(f_g * c_prev + i_g * g_g, 0.0)
        r_new[l] = o_g * c_new
        c_scr[l][...] = c_new
        r_scr[l][...] = r_new[l]

    # ---------------- layer-0 prediction (emitted every frame) --------------
    ahat0 = jnp.maximum(
        _conv_same(r_new[0], ahat_w[0], ahat_b[0], masks[0], Wl[0], k), 0.0)
    ahat0 = jnp.minimum(ahat0, pixel_max)                # clamp(0, pixel_max)
    pred[0] = ahat0

    # ---------------- errors + feed-forward A path (skip on last frame) -----
    @pl.when(g < pl.num_programs(0) - 1)
    def _errors():
        for l in range(L):
            if l == 0:
                a_cur = frames[0]
                ahat_l = ahat0
            else:
                a_cur = a_scr[l - 1][...]
                ahat_l = jnp.maximum(
                    _conv_same(r_new[l], ahat_w[l], ahat_b[l], masks[l],
                               Wl[l], k), 0.0)
            e_l = jnp.concatenate([jnp.maximum(ahat_l - a_cur, 0.0),
                                   jnp.maximum(a_cur - ahat_l, 0.0)], axis=0)
            e_scr[l][...] = e_l
            if l < L - 1:
                ac = _conv_same(e_l, a_w[l], a_b[l], masks[l], Wl[l], k)
                pooled = jnp.dot(ac, pool_sel[l][0],
                                 preferred_element_type=jnp.float32)
                for d in range(1, 4):
                    pooled = jnp.maximum(
                        pooled, jnp.dot(ac, pool_sel[l][d],
                                        preferred_element_type=jnp.float32))
                a_scr[l][...] = pooled                   # a for layer l+1


# ----------------------------------------------------------------------------
# Parameters (Conv weights ~ N(0, 0.02), biases = 0; canonical conv layouts)
# ----------------------------------------------------------------------------
def init_params(key, stack_sizes, R_stack_sizes, A_filt_sizes,
                Ahat_filt_sizes, R_filt_sizes, gain=0.02):
    L = len(stack_sizes)
    keys = jax.random.split(key, 3 * L)
    params = {"lstm_w": [], "lstm_b": [], "ahat_w": [], "ahat_b": [],
              "a_w": [], "a_b": []}
    for l in range(L):
        cin = 3 * stack_sizes[l] + (stack_sizes[l + 1] if l < L - 1 else 0)
        kr = R_filt_sizes[l]
        params["lstm_w"].append(
            gain * jax.random.normal(keys[3 * l],
                                     (4, kr, kr, cin, R_stack_sizes[l]),
                                     jnp.float32))
        params["lstm_b"].append(jnp.zeros((4, R_stack_sizes[l]), jnp.float32))
        ka = Ahat_filt_sizes[l]
        params["ahat_w"].append(
            gain * jax.random.normal(keys[3 * l + 1],
                                     (ka, ka, R_stack_sizes[l],
                                      R_stack_sizes[l]), jnp.float32))
        params["ahat_b"].append(jnp.zeros((1, R_stack_sizes[l]), jnp.float32))
        if l < L - 1:
            kA = A_filt_sizes[l]
            params["a_w"].append(
                gain * jax.random.normal(keys[3 * l + 2],
                                         (kA, kA, 2 * stack_sizes[l],
                                          stack_sizes[l + 1]), jnp.float32))
            params["a_b"].append(jnp.zeros((1, stack_sizes[l + 1]), jnp.float32))
    return params


# ----------------------------------------------------------------------------
# Forward pass: one fused pallas_call over all timesteps.
# ----------------------------------------------------------------------------
@functools.partial(jax.jit, static_argnames=("stack_sizes", "pixel_max"))
def prednet_forward(x, params, stack_sizes, pixel_max=1.0):
    """x: (B, T, C, H, W).  Returns layer-0 predictions, (T-1, B, C, H, W)."""
    B, T, C0, H, W = x.shape
    L = len(stack_sizes)
    assert stack_sizes[0] == C0
    nb = T - 1

    k = params["lstm_w"][0].shape[1]
    for wl in list(params["lstm_w"]) + list(params["ahat_w"]) + list(params["a_w"]):
        assert wl.shape[1] == k and k % 2 == 1, "all filters must share one odd size"

    C = tuple(int(c) for c in stack_sizes)
    Hs = [H // (2 ** l) for l in range(L)]
    Ws = [W // (2 ** l) for l in range(L)]
    for l in range(L - 1):
        assert Hs[l] % 2 == 0 and Ws[l] % 2 == 0
    R = [B * Hs[l] * Ws[l] for l in range(L)]

    # frames: (T, C0, B*H*W)   (row index = b*H*W + y*W + x)
    frames = jnp.transpose(x.astype(jnp.float32),
                           (1, 2, 0, 3, 4)).reshape(T, C0, R[0])

    masks = [_make_shift_masks(B, Hs[l], Ws[l], k) for l in range(L)]
    up_mats = [_make_upsample_mat(B, Hs[l + 1], Ws[l + 1]) for l in range(L - 1)]
    pool_sels = [_make_pool_sel(B, Hs[l], Ws[l]) for l in range(L - 1)]

    # Repack weights tap-major with (Cout, Cin) per tap (gates stacked i,f,o,c)
    lstm_w, lstm_b, ahat_w, ahat_b, a_w, a_b = [], [], [], [], [], []
    for l in range(L):
        w4 = params["lstm_w"][l]                                 # (4,k,k,cin,C)
        cin = w4.shape[3]
        lstm_w.append(jnp.transpose(w4, (1, 2, 0, 4, 3)).reshape(k * k, 4 * C[l], cin))
        lstm_b.append(params["lstm_b"][l].reshape(4 * C[l], 1))
        wa = params["ahat_w"][l]                                 # (k,k,C,C)
        ahat_w.append(jnp.transpose(wa, (0, 1, 3, 2)).reshape(k * k, C[l], C[l]))
        ahat_b.append(params["ahat_b"][l].reshape(C[l], 1))
        if l < L - 1:
            wA = params["a_w"][l]                                # (k,k,2C,Cn)
            a_w.append(jnp.transpose(wA, (0, 1, 3, 2)).reshape(k * k, C[l + 1],
                                                               2 * C[l]))
            a_b.append(params["a_b"][l].reshape(C[l + 1], 1))

    inputs = ([frames] + lstm_w + lstm_b + ahat_w + ahat_b + a_w + a_b
              + masks + up_mats + pool_sels)

    def _const_spec(a):
        nd = a.ndim
        return pl.BlockSpec(a.shape, lambda g, _nd=nd: (0,) * _nd)

    in_specs = [pl.BlockSpec((1, C0, R[0]), lambda g: (g + 1, 0, 0))]
    in_specs += [_const_spec(a) for a in inputs[1:]]

    scratch = ([pltpu.VMEM((C[l], R[l]), jnp.float32) for l in range(L)]        # r
               + [pltpu.VMEM((C[l], R[l]), jnp.float32) for l in range(L)]      # c
               + [pltpu.VMEM((2 * C[l], R[l]), jnp.float32) for l in range(L)]  # e
               + [pltpu.VMEM((C[l], R[l]), jnp.float32) for l in range(1, L)])  # a

    kernel = functools.partial(_prednet_kernel, L=L, C=C, Wl=tuple(Ws),
                               R=tuple(R), k=k, pixel_max=float(pixel_max))

    preds_flat = pl.pallas_call(
        kernel,
        out_shape=jax.ShapeDtypeStruct((nb, C0, R[0]), jnp.float32),
        grid=(nb,),
        in_specs=in_specs,
        out_specs=pl.BlockSpec((1, C0, R[0]), lambda g: (g, 0, 0)),
        scratch_shapes=scratch,
        compiler_params=pltpu.CompilerParams(
            dimension_semantics=("arbitrary",)),   # sequential recurrence
    )(*inputs)

    # (nb, C0, B*H*W) -> (nb, B, C0, H, W)
    return preds_flat.reshape(nb, C0, B, H, W).transpose(0, 2, 1, 3, 4)


# ----------------------------------------------------------------------------
if __name__ == "__main__":
    stack_sizes = (4, 8)
    R_stack_sizes = (4, 8)          # must equal stack_sizes (module's math)
    A_filt_sizes = (3,)
    Ahat_filt_sizes = (3, 3)
    R_filt_sizes = (3, 3)
    B, T, H, W = 2, 4, 16, 16

    key = jax.random.PRNGKey(0)
    kp, kx = jax.random.split(key)
    params = init_params(kp, stack_sizes, R_stack_sizes, A_filt_sizes,
                         Ahat_filt_sizes, R_filt_sizes)
    # frames in [0, 1], like the module's /255 preprocessing
    x = jax.random.uniform(kx, (B, T, stack_sizes[0], H, W), dtype=jnp.float32)

    preds = prednet_forward(x, params, stack_sizes, pixel_max=1.0)
    jax.block_until_ready(preds)
    assert preds.shape == (T - 1, B, stack_sizes[0], H, W)
    assert bool(jnp.all(jnp.isfinite(preds)))
    print("KERNEL_OK")
</pallas_src>

<mosaic_0001>
module attributes {stable_mosaic.version = 11 : i64} {
  func.func @_prednet_kernel(%arg0: i32, %arg1: memref<1x4x512xf32, #tpu.memory_space<vmem>>, %arg2: memref<9x16x20xf32, #tpu.memory_space<vmem>>, %arg3: memref<9x32x24xf32, #tpu.memory_space<vmem>>, %arg4: memref<16x1xf32, #tpu.memory_space<vmem>>, %arg5: memref<32x1xf32, #tpu.memory_space<vmem>>, %arg6: memref<9x4x4xf32, #tpu.memory_space<vmem>>, %arg7: memref<9x8x8xf32, #tpu.memory_space<vmem>>, %arg8: memref<4x1xf32, #tpu.memory_space<vmem>>, %arg9: memref<8x1xf32, #tpu.memory_space<vmem>>, %arg10: memref<9x8x8xf32, #tpu.memory_space<vmem>>, %arg11: memref<8x1xf32, #tpu.memory_space<vmem>>, %arg12: memref<9x1x512xf32, #tpu.memory_space<vmem>>, %arg13: memref<9x1x128xf32, #tpu.memory_space<vmem>>, %arg14: memref<128x512xf32, #tpu.memory_space<vmem>>, %arg15: memref<4x512x128xf32, #tpu.memory_space<vmem>>, %arg16: memref<1x4x512xf32, #tpu.memory_space<vmem>>, %arg17: memref<4x512xf32, #tpu.memory_space<vmem>>, %arg18: memref<8x128xf32, #tpu.memory_space<vmem>>, %arg19: memref<4x512xf32, #tpu.memory_space<vmem>>, %arg20: memref<8x128xf32, #tpu.memory_space<vmem>>, %arg21: memref<8x512xf32, #tpu.memory_space<vmem>>, %arg22: memref<16x128xf32, #tpu.memory_space<vmem>>, %arg23: memref<8x128xf32, #tpu.memory_space<vmem>>) attributes {dimension_semantics = [#tpu.dimension_semantics<arbitrary>], iteration_bounds = array<i64: 3>, scalar_prefetch = 0 : i64, scratch_operands = 7 : i64, tpu.core_type = #tpu.core_type<tc>, window_params = [{transform_indices = @transform_0, window_bounds = array<i64: 1, 4, 512>}, {pipeline_mode = #tpu.pipeline_mode<synchronous>, transform_indices = @transform_1, window_bounds = array<i64: 9, 16, 20>}, {pipeline_mode = #tpu.pipeline_mode<synchronous>, transform_indices = @transform_2, window_bounds = array<i64: 9, 32, 24>}, {pipeline_mode = #tpu.pipeline_mode<synchronous>, transform_indices = @transform_3, window_bounds = array<i64: 16, 1>}, {pipeline_mode = #tpu.pipeline_mode<synchronous>, transform_indices = @transform_4, window_bounds = array<i64: 32, 1>}, {pipeline_mode = #tpu.pipeline_mode<synchronous>, transform_indices = @transform_5, window_bounds = array<i64: 9, 4, 4>}, {pipeline_mode = #tpu.pipeline_mode<synchronous>, transform_indices = @transform_6, window_bounds = array<i64: 9, 8, 8>}, {pipeline_mode = #tpu.pipeline_mode<synchronous>, transform_indices = @transform_7, window_bounds = array<i64: 4, 1>}, {pipeline_mode = #tpu.pipeline_mode<synchronous>, transform_indices = @transform_8, window_bounds = array<i64: 8, 1>}, {pipeline_mode = #tpu.pipeline_mode<synchronous>, transform_indices = @transform_9, window_bounds = array<i64: 9, 8, 8>}, {pipeline_mode = #tpu.pipeline_mode<synchronous>, transform_indices = @transform_10, window_bounds = array<i64: 8, 1>}, {pipeline_mode = #tpu.pipeline_mode<synchronous>, transform_indices = @transform_11, window_bounds = array<i64: 9, 1, 512>}, {pipeline_mode = #tpu.pipeline_mode<synchronous>, transform_indices = @transform_12, window_bounds = array<i64: 9, 1, 128>}, {pipeline_mode = #tpu.pipeline_mode<synchronous>, transform_indices = @transform_13, window_bounds = array<i64: 128, 512>}, {pipeline_mode = #tpu.pipeline_mode<synchronous>, transform_indices = @transform_14, window_bounds = array<i64: 4, 512, 128>}, {transform_indices = @transform_15, window_bounds = array<i64: 1, 4, 512>}]} {
    %c0_i32 = arith.constant 0 : i32
    %0 = arith.cmpi eq, %arg0, %c0_i32 : i32
    %1 = arith.extui %0 : i1 to i32
    %c0_i32_0 = arith.constant 0 : i32
    %2 = arith.cmpi ne, %1, %c0_i32_0 : i32
    scf.if %2 {
      %cst_226 = arith.constant 0.000000e+00 : f32
      %323 = vector.broadcast %cst_226 : f32 to vector<4x512xf32>
      %c0_227 = arith.constant 0 : index
      %c0_228 = arith.constant 0 : index
      %324 = vector.load %arg17[%c0_227, %c0_228] : memref<4x512xf32, #tpu.memory_space<vmem>>, vector<4x512xf32>
      tpu.vector_store %arg17[%c0_227, %c0_228], %323 {strides = array<i32>} : memref<4x512xf32, #tpu.memory_space<vmem>>, vector<4x512xf32>,
      %cst_229 = arith.constant 0.000000e+00 : f32
      %325 = vector.broadcast %cst_229 : f32 to vector<4x512xf32>
      %c0_230 = arith.constant 0 : index
      %c0_231 = arith.constant 0 : index
      %326 = vector.load %arg19[%c0_230, %c0_231] : memref<4x512xf32, #tpu.memory_space<vmem>>, vector<4x512xf32>
      tpu.vector_store %arg19[%c0_230, %c0_231], %325 {strides = array<i32>} : memref<4x512xf32, #tpu.memory_space<vmem>>, vector<4x512xf32>,
      %cst_232 = arith.constant 0.000000e+00 : f32
      %327 = vector.broadcast %cst_232 : f32 to vector<8x512xf32>
      %c0_233 = arith.constant 0 : index
      %c0_234 = arith.constant 0 : index
      %328 = vector.load %arg21[%c0_233, %c0_234] : memref<8x512xf32, #tpu.memory_space<vmem>>, vector<8x512xf32>
      tpu.vector_store %arg21[%c0_233, %c0_234], %327 {strides = array<i32>} : memref<8x512xf32, #tpu.memory_space<vmem>>, vector<8x512xf32>,
      %cst_235 = arith.constant 0.000000e+00 : f32
      %329 = vector.broadcast %cst_235 : f32 to vector<8x128xf32>
      %c0_236 = arith.constant 0 : index
      %c0_237 = arith.constant 0 : index
      %330 = vector.load %arg18[%c0_236, %c0_237] : memref<8x128xf32, #tpu.memory_space<vmem>>, vector<8x128xf32>
      tpu.vector_store %arg18[%c0_236, %c0_237], %329 {strides = array<i32>} : memref<8x128xf32, #tpu.memory_space<vmem>>, vector<8x128xf32>,
      %cst_238 = arith.constant 0.000000e+00 : f32
      %331 = vector.broadcast %cst_238 : f32 to vector<8x128xf32>
      %c0_239 = arith.constant 0 : index
      %c0_240 = arith.constant 0 : index
      %332 = vector.load %arg20[%c0_239, %c0_240] : memref<8x128xf32, #tpu.memory_space<vmem>>, vector<8x128xf32>
      tpu.vector_store %arg20[%c0_239, %c0_240], %331 {strides = array<i32>} : memref<8x128xf32, #tpu.memory_space<vmem>>, vector<8x128xf32>,
      %cst_241 = arith.constant 0.000000e+00 : f32
      %333 = vector.broadcast %cst_241 : f32 to vector<16x128xf32>
      %c0_242 = arith.constant 0 : index
      %c0_243 = arith.constant 0 : index
      %334 = vector.load %arg22[%c0_242, %c0_243] : memref<16x128xf32, #tpu.memory_space<vmem>>, vector<16x128xf32>
      tpu.vector_store %arg22[%c0_242, %c0_243], %333 {strides = array<i32>} : memref<16x128xf32, #tpu.memory_space<vmem>>, vector<16x128xf32>,
    } else {
    }
    %c0 = arith.constant 0 : index
    %c0_1 = arith.constant 0 : index
    %3 = vector.load %arg18[%c0, %c0_1] : memref<8x128xf32, #tpu.memory_space<vmem>>, vector<8x128xf32>
    %c0_2 = arith.constant 0 : index
    %c0_3 = arith.constant 0 : index
    %4 = vector.load %arg22[%c0_2, %c0_3] : memref<16x128xf32, #tpu.memory_space<vmem>>, vector<16x128xf32>
    %c0_4 = arith.constant 0 : index
    %c0_5 = arith.constant 0 : index
    %5 = vector.load %arg20[%c0_4, %c0_5] : memref<8x128xf32, #tpu.memory_space<vmem>>, vector<8x128xf32>
    %6 = tpu.concatenate %3, %4 in 0 : vector<8x128xf32>, vector<16x128xf32> -> vector<24x128xf32>
    %cst = arith.constant 0.000000e+00 : f32
    %7 = vector.broadcast %cst : f32 to vector<24x9xf32>
    %8 = tpu.concatenate %7, %6, %7 in 1 : vector<24x9xf32>, vector<24x128xf32>, vector<24x9xf32> -> vector<24x146xf32>
    %cst_6 = arith.constant 0.000000e+00 : f32
    %9 = vector.broadcast %cst_6 : f32 to vector<32x128xf32>
    %10 = vector.extract_strided_slice %8 {offsets = [0, 0], sizes = [24, 128], strides = [1, 1]} : vector<24x146xf32> to vector<24x128xf32>
    %c0_7 = arith.constant 0 : index
    %c0_8 = arith.constant 0 : index
    %c0_9 = arith.constant 0 : index
    %11 = vector.load %arg13[%c0_7, %c0_8, %c0_9] : memref<9x1x128xf32, #tpu.memory_space<vmem>>, vector<1x1x128xf32>
    %12 = vector.shape_cast %11 : vector<1x1x128xf32> to vector<1x128xf32>
    %13 = vector.broadcast %12 : vector<1x128xf32> to vector<24x128xf32>
    %14 = arith.mulf %10, %13 : vector<24x128xf32>
    %c0_10 = arith.constant 0 : index
    %c0_11 = arith.constant 0 : index
    %c0_12 = arith.constant 0 : index
    %15 = vector.load %arg3[%c0_10, %c0_11, %c0_12] : memref<9x32x24xf32, #tpu.memory_space<vmem>>, vector<1x32x24xf32>
    %16 = vector.shape_cast %15 : vector<1x32x24xf32> to vector<32x24xf32>
    %cst_13 = arith.constant dense<0.000000e+00> : vector<32x128xf32>
    %17 = tpu.matmul %16, %14, %cst_13 {dimension_numbers = #tpu.dot_dimension_numbers<[1], [0], [0], [1], [0, 0, 1, 1], [], []>} : vector<32x24xf32>, vector<24x128xf32>, vector<32x128xf32> -> vector<32x128xf32>
    %18 = arith.addf %9, %17 : vector<32x128xf32>
    %19 = vector.extract_strided_slice %8 {offsets = [0, 1], sizes = [24, 128], strides = [1, 1]} : vector<24x146xf32> to vector<24x128xf32>
    %c1 = arith.constant 1 : index
    %c0_14 = arith.constant 0 : index
    %c0_15 = arith.constant 0 : index
    %20 = vector.load %arg13[%c1, %c0_14, %c0_15] : memref<9x1x128xf32, #tpu.memory_space<vmem>>, vector<1x1x128xf32>
    %21 = vector.shape_cast %20 : vector<1x1x128xf32> to vector<1x128xf32>
    %22 = vector.broadcast %21 : vector<1x128xf32> to vector<24x128xf32>
    %23 = arith.mulf %19, %22 : vector<24x128xf32>
    %c1_16 = arith.constant 1 : index
    %c0_17 = arith.constant 0 : index
    %c0_18 = arith.constant 0 : index
    %24 = vector.load %arg3[%c1_16, %c0_17, %c0_18] : memref<9x32x24xf32, #tpu.memory_space<vmem>>, vector<1x32x24xf32>
    %25 = vector.shape_cast %24 : vector<1x32x24xf32> to vector<32x24xf32>
    %cst_19 = arith.constant dense<0.000000e+00> : vector<32x128xf32>
    %26 = tpu.matmul %25, %23, %cst_19 {dimension_numbers = #tpu.dot_dimension_numbers<[1], [0], [0], [1], [0, 0, 1, 1], [], []>} : vector<32x24xf32>, vector<24x128xf32>, vector<32x128xf32> -> vector<32x128xf32>
    %27 = arith.addf %18, %26 : vector<32x128xf32>
    %28 = vector.extract_strided_slice %8 {offsets = [0, 2], sizes = [24, 128], strides = [1, 1]} : vector<24x146xf32> to vector<24x128xf32>
    %c2 = arith.constant 2 : index
    %c0_20 = arith.constant 0 : index
    %c0_21 = arith.constant 0 : index
    %29 = vector.load %arg13[%c2, %c0_20, %c0_21] : memref<9x1x128xf32, #tpu.memory_space<vmem>>, vector<1x1x128xf32>
    %30 = vector.shape_cast %29 : vector<1x1x128xf32> to vector<1x128xf32>
    %31 = vector.broadcast %30 : vector<1x128xf32> to vector<24x128xf32>
    %32 = arith.mulf %28, %31 : vector<24x128xf32>
    %c2_22 = arith.constant 2 : index
    %c0_23 = arith.constant 0 : index
    %c0_24 = arith.constant 0 : index
    %33 = vector.load %arg3[%c2_22, %c0_23, %c0_24] : memref<9x32x24xf32, #tpu.memory_space<vmem>>, vector<1x32x24xf32>
    %34 = vector.shape_cast %33 : vector<1x32x24xf32> to vector<32x24xf32>
    %cst_25 = arith.constant dense<0.000000e+00> : vector<32x128xf32>
    %35 = tpu.matmul %34, %32, %cst_25 {dimension_numbers = #tpu.dot_dimension_numbers<[1], [0], [0], [1], [0, 0, 1, 1], [], []>} : vector<32x24xf32>, vector<24x128xf32>, vector<32x128xf32> -> vector<32x128xf32>
    %36 = arith.addf %27, %35 : vector<32x128xf32>
    %37 = vector.extract_strided_slice %8 {offsets = [0, 8], sizes = [24, 128], strides = [1, 1]} : vector<24x146xf32> to vector<24x128xf32>
    %c3 = arith.constant 3 : index
    %c0_26 = arith.constant 0 : index
    %c0_27 = arith.constant 0 : index
    %38 = vector.load %arg13[%c3, %c0_26, %c0_27] : memref<9x1x128xf32, #tpu.memory_space<vmem>>, vector<1x1x128xf32>
    %39 = vector.shape_cast %38 : vector<1x1x128xf32> to vector<1x128xf32>
    %40 = vector.broadcast %39 : vector<1x128xf32> to vector<24x128xf32>
    %41 = arith.mulf %37, %40 : vector<24x128xf32>
    %c3_28 = arith.constant 3 : index
    %c0_29 = arith.constant 0 : index
    %c0_30 = arith.constant 0 : index
    %42 = vector.load %arg3[%c3_28, %c0_29, %c0_30] : memref<9x32x24xf32, #tpu.memory_space<vmem>>, vector<1x32x24xf32>
    %43 = vector.shape_cast %42 : vector<1x32x24xf32> to vector<32x24xf32>
    %cst_31 = arith.constant dense<0.000000e+00> : vector<32x128xf32>
    %44 = tpu.matmul %43, %41, %cst_31 {dimension_numbers = #tpu.dot_dimension_numbers<[1], [0], [0], [1], [0, 0, 1, 1], [], []>} : vector<32x24xf32>, vector<24x128xf32>, vector<32x128xf32> -> vector<32x128xf32>
    %45 = arith.addf %36, %44 : vector<32x128xf32>
    %46 = vector.extract_strided_slice %8 {offsets = [0, 9], sizes = [24, 128], strides = [1, 1]} : vector<24x146xf32> to vector<24x128xf32>
    %c4 = arith.constant 4 : index
    %c0_32 = arith.constant 0 : index
    %c0_33 = arith.constant 0 : index
    %47 = vector.load %arg3[%c4, %c0_32, %c0_33] : memref<9x32x24xf32, #tpu.memory_space<vmem>>, vector<1x32x24xf32>
    %48 = vector.shape_cast %47 : vector<1x32x24xf32> to vector<32x24xf32>
    %cst_34 = arith.constant dense<0.000000e+00> : vector<32x128xf32>
    %49 = tpu.matmul %48, %46, %cst_34 {dimension_numbers = #tpu.dot_dimension_numbers<[1], [0], [0], [1], [0, 0, 1, 1], [], []>} : vector<32x24xf32>, vector<24x128xf32>, vector<32x128xf32> -> vector<32x128xf32>
    %50 = arith.addf %45, %49 : vector<32x128xf32>
    %51 = vector.extract_strided_slice %8 {offsets = [0, 10], sizes = [24, 128], strides = [1, 1]} : vector<24x146xf32> to vector<24x128xf32>
    %c5 = arith.constant 5 : index
    %c0_35 = arith.constant 0 : index
    %c0_36 = arith.constant 0 : index
    %52 = vector.load %arg13[%c5, %c0_35, %c0_36] : memref<9x1x128xf32, #tpu.memory_space<vmem>>, vector<1x1x128xf32>
    %53 = vector.shape_cast %52 : vector<1x1x128xf32> to vector<1x128xf32>
    %54 = vector.broadcast %53 : vector<1x128xf32> to vector<24x128xf32>
    %55 = arith.mulf %51, %54 : vector<24x128xf32>
    %c5_37 = arith.constant 5 : index
    %c0_38 = arith.constant 0 : index
    %c0_39 = arith.constant 0 : index
    %56 = vector.load %arg3[%c5_37, %c0_38, %c0_39] : memref<9x32x24xf32, #tpu.memory_space<vmem>>, vector<1x32x24xf32>
    %57 = vector.shape_cast %56 : vector<1x32x24xf32> to vector<32x24xf32>
    %cst_40 = arith.constant dense<0.000000e+00> : vector<32x128xf32>
    %58 = tpu.matmul %57, %55, %cst_40 {dimension_numbers = #tpu.dot_dimension_numbers<[1], [0], [0], [1], [0, 0, 1, 1], [], []>} : vector<32x24xf32>, vector<24x128xf32>, vector<32x128xf32> -> vector<32x128xf32>
    %59 = arith.addf %50, %58 : vector<32x128xf32>
    %60 = vector.extract_strided_slice %8 {offsets = [0, 16], sizes = [24, 128], strides = [1, 1]} : vector<24x146xf32> to vector<24x128xf32>
    %c6 = arith.constant 6 : index
    %c0_41 = arith.constant 0 : index
    %c0_42 = arith.constant 0 : index
    %61 = vector.load %arg13[%c6, %c0_41, %c0_42] : memref<9x1x128xf32, #tpu.memory_space<vmem>>, vector<1x1x128xf32>
    %62 = vector.shape_cast %61 : vector<1x1x128xf32> to vector<1x128xf32>
    %63 = vector.broadcast %62 : vector<1x128xf32> to vector<24x128xf32>
    %64 = arith.mulf %60, %63 : vector<24x128xf32>
    %c6_43 = arith.constant 6 : index
    %c0_44 = arith.constant 0 : index
    %c0_45 = arith.constant 0 : index
    %65 = vector.load %arg3[%c6_43, %c0_44, %c0_45] : memref<9x32x24xf32, #tpu.memory_space<vmem>>, vector<1x32x24xf32>
    %66 = vector.shape_cast %65 : vector<1x32x24xf32> to vector<32x24xf32>
    %cst_46 = arith.constant dense<0.000000e+00> : vector<32x128xf32>
    %67 = tpu.matmul %66, %64, %cst_46 {dimension_numbers = #tpu.dot_dimension_numbers<[1], [0], [0], [1], [0, 0, 1, 1], [], []>} : vector<32x24xf32>, vector<24x128xf32>, vector<32x128xf32> -> vector<32x128xf32>
    %68 = arith.addf %59, %67 : vector<32x128xf32>
    %69 = vector.extract_strided_slice %8 {offsets = [0, 17], sizes = [24, 128], strides = [1, 1]} : vector<24x146xf32> to vector<24x128xf32>
    %c7 = arith.constant 7 : index
    %c0_47 = arith.constant 0 : index
    %c0_48 = arith.constant 0 : index
    %70 = vector.load %arg13[%c7, %c0_47, %c0_48] : memref<9x1x128xf32, #tpu.memory_space<vmem>>, vector<1x1x128xf32>
    %71 = vector.shape_cast %70 : vector<1x1x128xf32> to vector<1x128xf32>
    %72 = vector.broadcast %71 : vector<1x128xf32> to vector<24x128xf32>
    %73 = arith.mulf %69, %72 : vector<24x128xf32>
    %c7_49 = arith.constant 7 : index
    %c0_50 = arith.constant 0 : index
    %c0_51 = arith.constant 0 : index
    %74 = vector.load %arg3[%c7_49, %c0_50, %c0_51] : memref<9x32x24xf32, #tpu.memory_space<vmem>>, vector<1x32x24xf32>
    %75 = vector.shape_cast %74 : vector<1x32x24xf32> to vector<32x24xf32>
    %cst_52 = arith.constant dense<0.000000e+00> : vector<32x128xf32>
    %76 = tpu.matmul %75, %73, %cst_52 {dimension_numbers = #tpu.dot_dimension_numbers<[1], [0], [0], [1], [0, 0, 1, 1], [], []>} : vector<32x24xf32>, vector<24x128xf32>, vector<32x128xf32> -> vector<32x128xf32>
    %77 = arith.addf %68, %76 : vector<32x128xf32>
    %78 = vector.extract_strided_slice %8 {offsets = [0, 18], sizes = [24, 128], strides = [1, 1]} : vector<24x146xf32> to vector<24x128xf32>
    %c8 = arith.constant 8 : index
    %c0_53 = arith.constant 0 : index
    %c0_54 = arith.constant 0 : index
    %79 = vector.load %arg13[%c8, %c0_53, %c0_54] : memref<9x1x128xf32, #tpu.memory_space<vmem>>, vector<1x1x128xf32>
    %80 = vector.shape_cast %79 : vector<1x1x128xf32> to vector<1x128xf32>
    %81 = vector.broadcast %80 : vector<1x128xf32> to vector<24x128xf32>
    %82 = arith.mulf %78, %81 : vector<24x128xf32>
    %c8_55 = arith.constant 8 : index
    %c0_56 = arith.constant 0 : index
    %c0_57 = arith.constant 0 : index
    %83 = vector.load %arg3[%c8_55, %c0_56, %c0_57] : memref<9x32x24xf32, #tpu.memory_space<vmem>>, vector<1x32x24xf32>
    %84 = vector.shape_cast %83 : vector<1x32x24xf32> to vector<32x24xf32>
    %cst_58 = arith.constant dense<0.000000e+00> : vector<32x128xf32>
    %85 = tpu.matmul %84, %82, %cst_58 {dimension_numbers = #tpu.dot_dimension_numbers<[1], [0], [0], [1], [0, 0, 1, 1], [], []>} : vector<32x24xf32>, vector<24x128xf32>, vector<32x128xf32> -> vector<32x128xf32>
    %86 = arith.addf %77, %85 : vector<32x128xf32>
    %c0_59 = arith.constant 0 : index
    %c0_60 = arith.constant 0 : index
    %87 = vector.load %arg5[%c0_59, %c0_60] : memref<32x1xf32, #tpu.memory_space<vmem>>, vector<32x1xf32>
    %88 = vector.broadcast %87 : vector<32x1xf32> to vector<32x128xf32>
    %89 = arith.addf %86, %88 : vector<32x128xf32>
    %90 = vector.extract_strided_slice %89 {offsets = [0, 0], sizes = [8, 128], strides = [1, 1]} : vector<32x128xf32> to vector<8x128xf32>
    %cst_61 = arith.constant 0.000000e+00 : f32
    %cst_62 = arith.constant 1.000000e+00 : f32
    %91 = vector.broadcast %cst_61 : f32 to vector<8x128xf32>
    %92 = arith.maximumf %91, %90 : vector<8x128xf32>
    %93 = vector.broadcast %cst_62 : f32 to vector<8x128xf32>
    %94 = arith.minimumf %93, %92 : vector<8x128xf32>
    %95 = vector.extract_strided_slice %89 {offsets = [8, 0], sizes = [8, 128], strides = [1, 1]} : vector<32x128xf32> to vector<8x128xf32>
    %cst_63 = arith.constant 0.000000e+00 : f32
    %cst_64 = arith.constant 1.000000e+00 : f32
    %96 = vector.broadcast %cst_63 : f32 to vector<8x128xf32>
    %97 = arith.maximumf %96, %95 : vector<8x128xf32>
    %98 = vector.broadcast %cst_64 : f32 to vector<8x128xf32>
    %99 = arith.minimumf %98, %97 : vector<8x128xf32>
    %100 = vector.extract_strided_slice %89 {offsets = [16, 0], sizes = [8, 128], strides = [1, 1]} : vector<32x128xf32> to vector<8x128xf32>
    %cst_65 = arith.constant 0.000000e+00 : f32
    %cst_66 = arith.constant 1.000000e+00 : f32
    %101 = vector.broadcast %cst_65 : f32 to vector<8x128xf32>
    %102 = arith.maximumf %101, %100 : vector<8x128xf32>
    %103 = vector.broadcast %cst_66 : f32 to vector<8x128xf32>
    %104 = arith.minimumf %103, %102 : vector<8x128xf32>
    %105 = vector.extract_strided_slice %89 {offsets = [24, 0], sizes = [8, 128], strides = [1, 1]} : vector<32x128xf32> to vector<8x128xf32>
    %106 = math.tanh %105 : vector<8x128xf32>
    %107 = arith.mulf %99, %5 : vector<8x128xf32>
    %108 = arith.mulf %94, %106 : vector<8x128xf32>
    %109 = arith.addf %107, %108 : vector<8x128xf32>
    %cst_67 = arith.constant 0.000000e+00 : f32
    %110 = vector.broadcast %cst_67 : f32 to vector<8x128xf32>
    %111 = arith.maximumf %109, %110 : vector<8x128xf32>
    %112 = arith.mulf %104, %111 : vector<8x128xf32>
    %c0_68 = arith.constant 0 : index
    %c0_69 = arith.constant 0 : index
    %113 = vector.load %arg20[%c0_68, %c0_69] : memref<8x128xf32, #tpu.memory_space<vmem>>, vector<8x128xf32>
    tpu.vector_store %arg20[%c0_68, %c0_69], %111 {strides = array<i32>} : memref<8x128xf32, #tpu.memory_space<vmem>>, vector<8x128xf32>,
    %c0_70 = arith.constant 0 : index
    %c0_71 = arith.constant 0 : index
    %114 = vector.load %arg18[%c0_70, %c0_71] : memref<8x128xf32, #tpu.memory_space<vmem>>, vector<8x128xf32>
    tpu.vector_store %arg18[%c0_70, %c0_71], %112 {strides = array<i32>} : memref<8x128xf32, #tpu.memory_space<vmem>>, vector<8x128xf32>,
    %c0_72 = arith.constant 0 : index
    %c0_73 = arith.constant 0 : index
    %115 = vector.load %arg17[%c0_72, %c0_73] : memref<4x512xf32, #tpu.memory_space<vmem>>, vector<4x512xf32>
    %c0_74 = arith.constant 0 : index
    %c0_75 = arith.constant 0 : index
    %116 = vector.load %arg21[%c0_74, %c0_75] : memref<8x512xf32, #tpu.memory_space<vmem>>, vector<8x512xf32>
    %c0_76 = arith.constant 0 : index
    %c0_77 = arith.constant 0 : index
    %117 = vector.load %arg19[%c0_76, %c0_77] : memref<4x512xf32, #tpu.memory_space<vmem>>, vector<4x512xf32>
    %118 = tpu.concatenate %115, %116 in 0 : vector<4x512xf32>, vector<8x512xf32> -> vector<12x512xf32>
    %c0_78 = arith.constant 0 : index
    %c0_79 = arith.constant 0 : index
    %119 = vector.load %arg14[%c0_78, %c0_79] : memref<128x512xf32, #tpu.memory_space<vmem>>, vector<128x512xf32>
    %cst_80 = arith.constant dense<0.000000e+00> : vector<8x512xf32>
    %120 = tpu.matmul %112, %119, %cst_80 {dimension_numbers = #tpu.dot_dimension_numbers<[1], [0], [0], [1], [0, 0, 1, 1], [], []>} : vector<8x128xf32>, vector<128x512xf32>, vector<8x512xf32> -> vector<8x512xf32>
    %121 = tpu.concatenate %118, %120 in 0 : vector<12x512xf32>, vector<8x512xf32> -> vector<20x512xf32>
    %cst_81 = arith.constant 0.000000e+00 : f32
    %122 = vector.broadcast %cst_81 : f32 to vector<20x17xf32>
    %123 = tpu.concatenate %122, %121, %122 in 1 : vector<20x17xf32>, vector<20x512xf32>, vector<20x17xf32> -> vector<20x546xf32>
    %cst_82 = arith.constant 0.000000e+00 : f32
    %124 = vector.broadcast %cst_82 : f32 to vector<16x512xf32>
    %125 = vector.extract_strided_slice %123 {offsets = [0, 0], sizes = [20, 512], strides = [1, 1]} : vector<20x546xf32> to vector<20x512xf32>
    %c0_83 = arith.constant 0 : index
    %c0_84 = arith.constant 0 : index
    %c0_85 = arith.constant 0 : index
    %126 = vector.load %arg12[%c0_83, %c0_84, %c0_85] : memref<9x1x512xf32, #tpu.memory_space<vmem>>, vector<1x1x512xf32>
    %127 = vector.shape_cast %126 : vector<1x1x512xf32> to vector<1x512xf32>
    %128 = vector.broadcast %127 : vector<1x512xf32> to vector<20x512xf32>
    %129 = arith.mulf %125, %128 : vector<20x512xf32>
    %c0_86 = arith.constant 0 : index
    %c0_87 = arith.constant 0 : index
    %c0_88 = arith.constant 0 : index
    %130 = vector.load %arg2[%c0_86, %c0_87, %c0_88] : memref<9x16x20xf32, #tpu.memory_space<vmem>>, vector<1x16x20xf32>
    %131 = vector.shape_cast %130 : vector<1x16x20xf32> to vector<16x20xf32>
    %cst_89 = arith.constant dense<0.000000e+00> : vector<16x512xf32>
    %132 = tpu.matmul %131, %129, %cst_89 {dimension_numbers = #tpu.dot_dimension_numbers<[1], [0], [0], [1], [0, 0, 1, 1], [], []>} : vector<16x20xf32>, vector<20x512xf32>, vector<16x512xf32> -> vector<16x512xf32>
    %133 = arith.addf %124, %132 : vector<16x512xf32>
    %134 = vector.extract_strided_slice %123 {offsets = [0, 1], sizes = [20, 512], strides = [1, 1]} : vector<20x546xf32> to vector<20x512xf32>
    %c1_90 = arith.constant 1 : index
    %c0_91 = arith.constant 0 : index
    %c0_92 = arith.constant 0 : index
    %135 = vector.load %arg12[%c1_90, %c0_91, %c0_92] : memref<9x1x512xf32, #tpu.memory_space<vmem>>, vector<1x1x512xf32>
    %136 = vector.shape_cast %135 : vector<1x1x512xf32> to vector<1x512xf32>
    %137 = vector.broadcast %136 : vector<1x512xf32> to vector<20x512xf32>
    %138 = arith.mulf %134, %137 : vector<20x512xf32>
    %c1_93 = arith.constant 1 : index
    %c0_94 = arith.constant 0 : index
    %c0_95 = arith.constant 0 : index
    %139 = vector.load %arg2[%c1_93, %c0_94, %c0_95] : memref<9x16x20xf32, #tpu.memory_space<vmem>>, vector<1x16x20xf32>
    %140 = vector.shape_cast %139 : vector<1x16x20xf32> to vector<16x20xf32>
    %cst_96 = arith.constant dense<0.000000e+00> : vector<16x512xf32>
    %141 = tpu.matmul %140, %138, %cst_96 {dimension_numbers = #tpu.dot_dimension_numbers<[1], [0], [0], [1], [0, 0, 1, 1], [], []>} : vector<16x20xf32>, vector<20x512xf32>, vector<16x512xf32> -> vector<16x512xf32>
    %142 = arith.addf %133, %141 : vector<16x512xf32>
    %143 = vector.extract_strided_slice %123 {offsets = [0, 2], sizes = [20, 512], strides = [1, 1]} : vector<20x546xf32> to vector<20x512xf32>
    %c2_97 = arith.constant 2 : index
    %c0_98 = arith.constant 0 : index
    %c0_99 = arith.constant 0 : index
    %144 = vector.load %arg12[%c2_97, %c0_98, %c0_99] : memref<9x1x512xf32, #tpu.memory_space<vmem>>, vector<1x1x512xf32>
    %145 = vector.shape_cast %144 : vector<1x1x512xf32> to vector<1x512xf32>
    %146 = vector.broadcast %145 : vector<1x512xf32> to vector<20x512xf32>
    %147 = arith.mulf %143, %146 : vector<20x512xf32>
    %c2_100 = arith.constant 2 : index
    %c0_101 = arith.constant 0 : index
    %c0_102 = arith.constant 0 : index
    %148 = vector.load %arg2[%c2_100, %c0_101, %c0_102] : memref<9x16x20xf32, #tpu.memory_space<vmem>>, vector<1x16x20xf32>
    %149 = vector.shape_cast %148 : vector<1x16x20xf32> to vector<16x20xf32>
    %cst_103 = arith.constant dense<0.000000e+00> : vector<16x512xf32>
    %150 = tpu.matmul %149, %147, %cst_103 {dimension_numbers = #tpu.dot_dimension_numbers<[1], [0], [0], [1], [0, 0, 1, 1], [], []>} : vector<16x20xf32>, vector<20x512xf32>, vector<16x512xf32> -> vector<16x512xf32>
    %151 = arith.addf %142, %150 : vector<16x512xf32>
    %152 = vector.extract_strided_slice %123 {offsets = [0, 16], sizes = [20, 512], strides = [1, 1]} : vector<20x546xf32> to vector<20x512xf32>
    %c3_104 = arith.constant 3 : index
    %c0_105 = arith.constant 0 : index
    %c0_106 = arith.constant 0 : index
    %153 = vector.load %arg12[%c3_104, %c0_105, %c0_106] : memref<9x1x512xf32, #tpu.memory_space<vmem>>, vector<1x1x512xf32>
    %154 = vector.shape_cast %153 : vector<1x1x512xf32> to vector<1x512xf32>
    %155 = vector.broadcast %154 : vector<1x512xf32> to vector<20x512xf32>
    %156 = arith.mulf %152, %155 : vector<20x512xf32>
    %c3_107 = arith.constant 3 : index
    %c0_108 = arith.constant 0 : index
    %c0_109 = arith.constant 0 : index
    %157 = vector.load %arg2[%c3_107, %c0_108, %c0_109] : memref<9x16x20xf32, #tpu.memory_space<vmem>>, vector<1x16x20xf32>
    %158 = vector.shape_cast %157 : vector<1x16x20xf32> to vector<16x20xf32>
    %cst_110 = arith.constant dense<0.000000e+00> : vector<16x512xf32>
    %159 = tpu.matmul %158, %156, %cst_110 {dimension_numbers = #tpu.dot_dimension_numbers<[1], [0], [0], [1], [0, 0, 1, 1], [], []>} : vector<16x20xf32>, vector<20x512xf32>, vector<16x512xf32> -> vector<16x512xf32>
    %160 = arith.addf %151, %159 : vector<16x512xf32>
    %161 = vector.extract_strided_slice %123 {offsets = [0, 17], sizes = [20, 512], strides = [1, 1]} : vector<20x546xf32> to vector<20x512xf32>
    %c4_111 = arith.constant 4 : index
    %c0_112 = arith.constant 0 : index
    %c0_113 = arith.constant 0 : index
    %162 = vector.load %arg2[%c4_111, %c0_112, %c0_113] : memref<9x16x20xf32, #tpu.memory_space<vmem>>, vector<1x16x20xf32>
    %163 = vector.shape_cast %162 : vector<1x16x20xf32> to vector<16x20xf32>
    %cst_114 = arith.constant dense<0.000000e+00> : vector<16x512xf32>
    %164 = tpu.matmul %163, %161, %cst_114 {dimension_numbers = #tpu.dot_dimension_numbers<[1], [0], [0], [1], [0, 0, 1, 1], [], []>} : vector<16x20xf32>, vector<20x512xf32>, vector<16x512xf32> -> vector<16x512xf32>
    %165 = arith.addf %160, %164 : vector<16x512xf32>
    %166 = vector.extract_strided_slice %123 {offsets = [0, 18], sizes = [20, 512], strides = [1, 1]} : vector<20x546xf32> to vector<20x512xf32>
    %c5_115 = arith.constant 5 : index
    %c0_116 = arith.constant 0 : index
    %c0_117 = arith.constant 0 : index
    %167 = vector.load %arg12[%c5_115, %c0_116, %c0_117] : memref<9x1x512xf32, #tpu.memory_space<vmem>>, vector<1x1x512xf32>
    %168 = vector.shape_cast %167 : vector<1x1x512xf32> to vector<1x512xf32>
    %169 = vector.broadcast %168 : vector<1x512xf32> to vector<20x512xf32>
    %170 = arith.mulf %166, %169 : vector<20x512xf32>
    %c5_118 = arith.constant 5 : index
    %c0_119 = arith.constant 0 : index
    %c0_120 = arith.constant 0 : index
    %171 = vector.load %arg2[%c5_118, %c0_119, %c0_120] : memref<9x16x20xf32, #tpu.memory_space<vmem>>, vector<1x16x20xf32>
    %172 = vector.shape_cast %171 : vector<1x16x20xf32> to vector<16x20xf32>
    %cst_121 = arith.constant dense<0.000000e+00> : vector<16x512xf32>
    %173 = tpu.matmul %172, %170, %cst_121 {dimension_numbers = #tpu.dot_dimension_numbers<[1], [0], [0], [1], [0, 0, 1, 1], [], []>} : vector<16x20xf32>, vector<20x512xf32>, vector<16x512xf32> -> vector<16x512xf32>
    %174 = arith.addf %165, %173 : vector<16x512xf32>
    %175 = vector.extract_strided_slice %123 {offsets = [0, 32], sizes = [20, 512], strides = [1, 1]} : vector<20x546xf32> to vector<20x512xf32>
    %c6_122 = arith.constant 6 : index
    %c0_123 = arith.constant 0 : index
    %c0_124 = arith.constant 0 : index
    %176 = vector.load %arg12[%c6_122, %c0_123, %c0_124] : memref<9x1x512xf32, #tpu.memory_space<vmem>>, vector<1x1x512xf32>
    %177 = vector.shape_cast %176 : vector<1x1x512xf32> to vector<1x512xf32>
    %178 = vector.broadcast %177 : vector<1x512xf32> to vector<20x512xf32>
    %179 = arith.mulf %175, %178 : vector<20x512xf32>
    %c6_125 = arith.constant 6 : index
    %c0_126 = arith.constant 0 : index
    %c0_127 = arith.constant 0 : index
    %180 = vector.load %arg2[%c6_125, %c0_126, %c0_127] : memref<9x16x20xf32, #tpu.memory_space<vmem>>, vector<1x16x20xf32>
    %181 = vector.shape_cast %180 : vector<1x16x20xf32> to vector<16x20xf32>
    %cst_128 = arith.constant dense<0.000000e+00> : vector<16x512xf32>
    %182 = tpu.matmul %181, %179, %cst_128 {dimension_numbers = #tpu.dot_dimension_numbers<[1], [0], [0], [1], [0, 0, 1, 1], [], []>} : vector<16x20xf32>, vector<20x512xf32>, vector<16x512xf32> -> vector<16x512xf32>
    %183 = arith.addf %174, %182 : vector<16x512xf32>
    %184 = vector.extract_strided_slice %123 {offsets = [0, 33], sizes = [20, 512], strides = [1, 1]} : vector<20x546xf32> to vector<20x512xf32>
    %c7_129 = arith.constant 7 : index
    %c0_130 = arith.constant 0 : index
    %c0_131 = arith.constant 0 : index
    %185 = vector.load %arg12[%c7_129, %c0_130, %c0_131] : memref<9x1x512xf32, #tpu.memory_space<vmem>>, vector<1x1x512xf32>
    %186 = vector.shape_cast %185 : vector<1x1x512xf32> to vector<1x512xf32>
    %187 = vector.broadcast %186 : vector<1x512xf32> to vector<20x512xf32>
    %188 = arith.mulf %184, %187 : vector<20x512xf32>
    %c7_132 = arith.constant 7 : index
    %c0_133 = arith.constant 0 : index
    %c0_134 = arith.constant 0 : index
    %189 = vector.load %arg2[%c7_132, %c0_133, %c0_134] : memref<9x16x20xf32, #tpu.memory_space<vmem>>, vector<1x16x20xf32>
    %190 = vector.shape_cast %189 : vector<1x16x20xf32> to vector<16x20xf32>
    %cst_135 = arith.constant dense<0.000000e+00> : vector<16x512xf32>
    %191 = tpu.matmul %190, %188, %cst_135 {dimension_numbers = #tpu.dot_dimension_numbers<[1], [0], [0], [1], [0, 0, 1, 1], [], []>} : vector<16x20xf32>, vector<20x512xf32>, vector<16x512xf32> -> vector<16x512xf32>
    %192 = arith.addf %183, %191 : vector<16x512xf32>
    %193 = vector.extract_strided_slice %123 {offsets = [0, 34], sizes = [20, 512], strides = [1, 1]} : vector<20x546xf32> to vector<20x512xf32>
    %c8_136 = arith.constant 8 : index
    %c0_137 = arith.constant 0 : index
    %c0_138 = arith.constant 0 : index
    %194 = vector.load %arg12[%c8_136, %c0_137, %c0_138] : memref<9x1x512xf32, #tpu.memory_space<vmem>>, vector<1x1x512xf32>
    %195 = vector.shape_cast %194 : vector<1x1x512xf32> to vector<1x512xf32>
    %196 = vector.broadcast %195 : vector<1x512xf32> to vector<20x512xf32>
    %197 = arith.mulf %193, %196 : vector<20x512xf32>
    %c8_139 = arith.constant 8 : index
    %c0_140 = arith.constant 0 : index
    %c0_141 = arith.constant 0 : index
    %198 = vector.load %arg2[%c8_139, %c0_140, %c0_141] : memref<9x16x20xf32, #tpu.memory_space<vmem>>, vector<1x16x20xf32>
    %199 = vector.shape_cast %198 : vector<1x16x20xf32> to vector<16x20xf32>
    %cst_142 = arith.constant dense<0.000000e+00> : vector<16x512xf32>
    %200 = tpu.matmul %199, %197, %cst_142 {dimension_numbers = #tpu.dot_dimension_numbers<[1], [0], [0], [1], [0, 0, 1, 1], [], []>} : vector<16x20xf32>, vector<20x512xf32>, vector<16x512xf32> -> vector<16x512xf32>
    %201 = arith.addf %192, %200 : vector<16x512xf32>
    %c0_143 = arith.constant 0 : index
    %c0_144 = arith.constant 0 : index
    %202 = vector.load %arg4[%c0_143, %c0_144] : memref<16x1xf32, #tpu.memory_space<vmem>>, vector<16x1xf32>
    %203 = vector.broadcast %202 : vector<16x1xf32> to vector<16x512xf32>
    %204 = arith.addf %201, %203 : vector<16x512xf32>
    %205 = vector.extract_strided_slice %204 {offsets = [0, 0], sizes = [4, 512], strides = [1, 1]} : vector<16x512xf32> to vector<4x512xf32>
    %cst_145 = arith.constant 0.000000e+00 : f32
    %cst_146 = arith.constant 1.000000e+00 : f32
    %206 = vector.broadcast %cst_145 : f32 to vector<4x512xf32>
    %207 = arith.maximumf %206, %205 : vector<4x512xf32>
    %208 = vector.broadcast %cst_146 : f32 to vector<4x512xf32>
    %209 = arith.minimumf %208, %207 : vector<4x512xf32>
    %210 = vector.extract_strided_slice %204 {offsets = [4, 0], sizes = [4, 512], strides = [1, 1]} : vector<16x512xf32> to vector<4x512xf32>
    %cst_147 = arith.constant 0.000000e+00 : f32
    %cst_148 = arith.constant 1.000000e+00 : f32
    %211 = vector.broadcast %cst_147 : f32 to vector<4x512xf32>
    %212 = arith.maximumf %211, %210 : vector<4x512xf32>
    %213 = vector.broadcast %cst_148 : f32 to vector<4x512xf32>
    %214 = arith.minimumf %213, %212 : vector<4x512xf32>
    %215 = vector.extract_strided_slice %204 {offsets = [8, 0], sizes = [4, 512], strides = [1, 1]} : vector<16x512xf32> to vector<4x512xf32>
    %cst_149 = arith.constant 0.000000e+00 : f32
    %cst_150 = arith.constant 1.000000e+00 : f32
    %216 = vector.broadcast %cst_149 : f32 to vector<4x512xf32>
    %217 = arith.maximumf %216, %215 : vector<4x512xf32>
    %218 = vector.broadcast %cst_150 : f32 to vector<4x512xf32>
    %219 = arith.minimumf %218, %217 : vector<4x512xf32>
    %220 = vector.extract_strided_slice %204 {offsets = [12, 0], sizes = [4, 512], strides = [1, 1]} : vector<16x512xf32> to vector<4x512xf32>
    %221 = math.tanh %220 : vector<4x512xf32>
    %222 = arith.mulf %214, %117 : vector<4x512xf32>
    %223 = arith.mulf %209, %221 : vector<4x512xf32>
    %224 = arith.addf %222, %223 : vector<4x512xf32>
    %cst_151 = arith.constant 0.000000e+00 : f32
    %225 = vector.broadcast %cst_151 : f32 to vector<4x512xf32>
    %226 = arith.maximumf %224, %225 : vector<4x512xf32>
    %227 = arith.mulf %219, %226 : vector<4x512xf32>
    %c0_152 = arith.constant 0 : index
    %c0_153 = arith.constant 0 : index
    %228 = vector.load %arg19[%c0_152, %c0_153] : memref<4x512xf32, #tpu.memory_space<vmem>>, vector<4x512xf32>
    tpu.vector_store %arg19[%c0_152, %c0_153], %226 {strides = array<i32>} : memref<4x512xf32, #tpu.memory_space<vmem>>, vector<4x512xf32>,
    %c0_154 = arith.constant 0 : index
    %c0_155 = arith.constant 0 : index
    %229 = vector.load %arg17[%c0_154, %c0_155] : memref<4x512xf32, #tpu.memory_space<vmem>>, vector<4x512xf32>
    tpu.vector_store %arg17[%c0_154, %c0_155], %227 {strides = array<i32>} : memref<4x512xf32, #tpu.memory_space<vmem>>, vector<4x512xf32>,
    %cst_156 = arith.constant 0.000000e+00 : f32
    %230 = vector.broadcast %cst_156 : f32 to vector<4x17xf32>
    %231 = tpu.concatenate %230, %227, %230 in 1 : vector<4x17xf32>, vector<4x512xf32>, vector<4x17xf32> -> vector<4x546xf32>
    %cst_157 = arith.constant 0.000000e+00 : f32
    %232 = vector.broadcast %cst_157 : f32 to vector<4x512xf32>
    %233 = vector.extract_strided_slice %231 {offsets = [0, 0], sizes = [4, 512], strides = [1, 1]} : vector<4x546xf32> to vector<4x512xf32>
    %c0_158 = arith.constant 0 : index
    %c0_159 = arith.constant 0 : index
    %c0_160 = arith.constant 0 : index
    %234 = vector.load %arg12[%c0_158, %c0_159, %c0_160] : memref<9x1x512xf32, #tpu.memory_space<vmem>>, vector<1x1x512xf32>
    %235 = vector.shape_cast %234 : vector<1x1x512xf32> to vector<1x512xf32>
    %236 = vector.broadcast %235 : vector<1x512xf32> to vector<4x512xf32>
    %237 = arith.mulf %233, %236 : vector<4x512xf32>
    %c0_161 = arith.constant 0 : index
    %c0_162 = arith.constant 0 : index
    %c0_163 = arith.constant 0 : index
    %238 = vector.load %arg6[%c0_161, %c0_162, %c0_163] : memref<9x4x4xf32, #tpu.memory_space<vmem>>, vector<1x4x4xf32>
    %239 = vector.shape_cast %238 : vector<1x4x4xf32> to vector<4x4xf32>
    %cst_164 = arith.constant dense<0.000000e+00> : vector<4x512xf32>
    %240 = tpu.matmul %239, %237, %cst_164 {dimension_numbers = #tpu.dot_dimension_numbers<[1], [0], [0], [1], [0, 0, 1, 1], [], []>} : vector<4x4xf32>, vector<4x512xf32>, vector<4x512xf32> -> vector<4x512xf32>
    %241 = arith.addf %232, %240 : vector<4x512xf32>
    %242 = vector.extract_strided_slice %231 {offsets = [0, 1], sizes = [4, 512], strides = [1, 1]} : vector<4x546xf32> to vector<4x512xf32>
    %c1_165 = arith.constant 1 : index
    %c0_166 = arith.constant 0 : index
    %c0_167 = arith.constant 0 : index
    %243 = vector.load %arg12[%c1_165, %c0_166, %c0_167] : memref<9x1x512xf32, #tpu.memory_space<vmem>>, vector<1x1x512xf32>
    %244 = vector.shape_cast %243 : vector<1x1x512xf32> to vector<1x512xf32>
    %245 = vector.broadcast %244 : vector<1x512xf32> to vector<4x512xf32>
    %246 = arith.mulf %242, %245 : vector<4x512xf32>
    %c1_168 = arith.constant 1 : index
    %c0_169 = arith.constant 0 : index
    %c0_170 = arith.constant 0 : index
    %247 = vector.load %arg6[%c1_168, %c0_169, %c0_170] : memref<9x4x4xf32, #tpu.memory_space<vmem>>, vector<1x4x4xf32>
    %248 = vector.shape_cast %247 : vector<1x4x4xf32> to vector<4x4xf32>
    %cst_171 = arith.constant dense<0.000000e+00> : vector<4x512xf32>
    %249 = tpu.matmul %248, %246, %cst_171 {dimension_numbers = #tpu.dot_dimension_numbers<[1], [0], [0], [1], [0, 0, 1, 1], [], []>} : vector<4x4xf32>, vector<4x512xf32>, vector<4x512xf32> -> vector<4x512xf32>
    %250 = arith.addf %241, %249 : vector<4x512xf32>
    %251 = vector.extract_strided_slice %231 {offsets = [0, 2], sizes = [4, 512], strides = [1, 1]} : vector<4x546xf32> to vector<4x512xf32>
    %c2_172 = arith.constant 2 : index
    %c0_173 = arith.constant 0 : index
    %c0_174 = arith.constant 0 : index
    %252 = vector.load %arg12[%c2_172, %c0_173, %c0_174] : memref<9x1x512xf32, #tpu.memory_space<vmem>>, vector<1x1x512xf32>
    %253 = vector.shape_cast %252 : vector<1x1x512xf32> to vector<1x512xf32>
    %254 = vector.broadcast %253 : vector<1x512xf32> to vector<4x512xf32>
    %255 = arith.mulf %251, %254 : vector<4x512xf32>
    %c2_175 = arith.constant 2 : index
    %c0_176 = arith.constant 0 : index
    %c0_177 = arith.constant 0 : index
    %256 = vector.load %arg6[%c2_175, %c0_176, %c0_177] : memref<9x4x4xf32, #tpu.memory_space<vmem>>, vector<1x4x4xf32>
    %257 = vector.shape_cast %256 : vector<1x4x4xf32> to vector<4x4xf32>
    %cst_178 = arith.constant dense<0.000000e+00> : vector<4x512xf32>
    %258 = tpu.matmul %257, %255, %cst_178 {dimension_numbers = #tpu.dot_dimension_numbers<[1], [0], [0], [1], [0, 0, 1, 1], [], []>} : vector<4x4xf32>, vector<4x512xf32>, vector<4x512xf32> -> vector<4x512xf32>
    %259 = arith.addf %250, %258 : vector<4x512xf32>
    %260 = vector.extract_strided_slice %231 {offsets = [0, 16], sizes = [4, 512], strides = [1, 1]} : vector<4x546xf32> to vector<4x512xf32>
    %c3_179 = arith.constant 3 : index
    %c0_180 = arith.constant 0 : index
    %c0_181 = arith.constant 0 : index
    %261 = vector.load %arg12[%c3_179, %c0_180, %c0_181] : memref<9x1x512xf32, #tpu.memory_space<vmem>>, vector<1x1x512xf32>
    %262 = vector.shape_cast %261 : vector<1x1x512xf32> to vector<1x512xf32>
    %263 = vector.broadcast %262 : vector<1x512xf32> to vector<4x512xf32>
    %264 = arith.mulf %260, %263 : vector<4x512xf32>
    %c3_182 = arith.constant 3 : index
    %c0_183 = arith.constant 0 : index
    %c0_184 = arith.constant 0 : index
    %265 = vector.load %arg6[%c3_182, %c0_183, %c0_184] : memref<9x4x4xf32, #tpu.memory_space<vmem>>, vector<1x4x4xf32>
    %266 = vector.shape_cast %265 : vector<1x4x4xf32> to vector<4x4xf32>
    %cst_185 = arith.constant dense<0.000000e+00> : vector<4x512xf32>
    %267 = tpu.matmul %266, %264, %cst_185 {dimension_numbers = #tpu.dot_dimension_numbers<[1], [0], [0], [1], [0, 0, 1, 1], [], []>} : vector<4x4xf32>, vector<4x512xf32>, vector<4x512xf32> -> vector<4x512xf32>
    %268 = arith.addf %259, %267 : vector<4x512xf32>
    %269 = vector.extract_strided_slice %231 {offsets = [0, 17], sizes = [4, 512], strides = [1, 1]} : vector<4x546xf32> to vector<4x512xf32>
    %c4_186 = arith.constant 4 : index
    %c0_187 = arith.constant 0 : index
    %c0_188 = arith.constant 0 : index
    %270 = vector.load %arg6[%c4_186, %c0_187, %c0_188] : memref<9x4x4xf32, #tpu.memory_space<vmem>>, vector<1x4x4xf32>
    %271 = vector.shape_cast %270 : vector<1x4x4xf32> to vector<4x4xf32>
    %cst_189 = arith.constant dense<0.000000e+00> : vector<4x512xf32>
    %272 = tpu.matmul %271, %269, %cst_189 {dimension_numbers = #tpu.dot_dimension_numbers<[1], [0], [0], [1], [0, 0, 1, 1], [], []>} : vector<4x4xf32>, vector<4x512xf32>, vector<4x512xf32> -> vector<4x512xf32>
    %273 = arith.addf %268, %272 : vector<4x512xf32>
    %274 = vector.extract_strided_slice %231 {offsets = [0, 18], sizes = [4, 512], strides = [1, 1]} : vector<4x546xf32> to vector<4x512xf32>
    %c5_190 = arith.constant 5 : index
    %c0_191 = arith.constant 0 : index
    %c0_192 = arith.constant 0 : index
    %275 = vector.load %arg12[%c5_190, %c0_191, %c0_192] : memref<9x1x512xf32, #tpu.memory_space<vmem>>, vector<1x1x512xf32>
    %276 = vector.shape_cast %275 : vector<1x1x512xf32> to vector<1x512xf32>
    %277 = vector.broadcast %276 : vector<1x512xf32> to vector<4x512xf32>
    %278 = arith.mulf %274, %277 : vector<4x512xf32>
    %c5_193 = arith.constant 5 : index
    %c0_194 = arith.constant 0 : index
    %c0_195 = arith.constant 0 : index
    %279 = vector.load %arg6[%c5_193, %c0_194, %c0_195] : memref<9x4x4xf32, #tpu.memory_space<vmem>>, vector<1x4x4xf32>
    %280 = vector.shape_cast %279 : vector<1x4x4xf32> to vector<4x4xf32>
    %cst_196 = arith.constant dense<0.000000e+00> : vector<4x512xf32>
    %281 = tpu.matmul %280, %278, %cst_196 {dimension_numbers = #tpu.dot_dimension_numbers<[1], [0], [0], [1], [0, 0, 1, 1], [], []>} : vector<4x4xf32>, vector<4x512xf32>, vector<4x512xf32> -> vector<4x512xf32>
    %282 = arith.addf %273, %281 : vector<4x512xf32>
    %283 = vector.extract_strided_slice %231 {offsets = [0, 32], sizes = [4, 512], strides = [1, 1]} : vector<4x546xf32> to vector<4x512xf32>
    %c6_197 = arith.constant 6 : index
    %c0_198 = arith.constant 0 : index
    %c0_199 = arith.constant 0 : index
    %284 = vector.load %arg12[%c6_197, %c0_198, %c0_199] : memref<9x1x512xf32, #tpu.memory_space<vmem>>, vector<1x1x512xf32>
    %285 = vector.shape_cast %284 : vector<1x1x512xf32> to vector<1x512xf32>
    %286 = vector.broadcast %285 : vector<1x512xf32> to vector<4x512xf32>
    %287 = arith.mulf %283, %286 : vector<4x512xf32>
    %c6_200 = arith.constant 6 : index
    %c0_201 = arith.constant 0 : index
    %c0_202 = arith.constant 0 : index
    %288 = vector.load %arg6[%c6_200, %c0_201, %c0_202] : memref<9x4x4xf32, #tpu.memory_space<vmem>>, vector<1x4x4xf32>
    %289 = vector.shape_cast %288 : vector<1x4x4xf32> to vector<4x4xf32>
    %cst_203 = arith.constant dense<0.000000e+00> : vector<4x512xf32>
    %290 = tpu.matmul %289, %287, %cst_203 {dimension_numbers = #tpu.dot_dimension_numbers<[1], [0], [0], [1], [0, 0, 1, 1], [], []>} : vector<4x4xf32>, vector<4x512xf32>, vector<4x512xf32> -> vector<4x512xf32>
    %291 = arith.addf %282, %290 : vector<4x512xf32>
    %292 = vector.extract_strided_slice %231 {offsets = [0, 33], sizes = [4, 512], strides = [1, 1]} : vector<4x546xf32> to vector<4x512xf32>
    %c7_204 = arith.constant 7 : index
    %c0_205 = arith.constant 0 : index
    %c0_206 = arith.constant 0 : index
    %293 = vector.load %arg12[%c7_204, %c0_205, %c0_206] : memref<9x1x512xf32, #tpu.memory_space<vmem>>, vector<1x1x512xf32>
    %294 = vector.shape_cast %293 : vector<1x1x512xf32> to vector<1x512xf32>
    %295 = vector.broadcast %294 : vector<1x512xf32> to vector<4x512xf32>
    %296 = arith.mulf %292, %295 : vector<4x512xf32>
    %c7_207 = arith.constant 7 : index
    %c0_208 = arith.constant 0 : index
    %c0_209 = arith.constant 0 : index
    %297 = vector.load %arg6[%c7_207, %c0_208, %c0_209] : memref<9x4x4xf32, #tpu.memory_space<vmem>>, vector<1x4x4xf32>
    %298 = vector.shape_cast %297 : vector<1x4x4xf32> to vector<4x4xf32>
    %cst_210 = arith.constant dense<0.000000e+00> : vector<4x512xf32>
    %299 = tpu.matmul %298, %296, %cst_210 {dimension_numbers = #tpu.dot_dimension_numbers<[1], [0], [0], [1], [0, 0, 1, 1], [], []>} : vector<4x4xf32>, vector<4x512xf32>, vector<4x512xf32> -> vector<4x512xf32>
    %300 = arith.addf %291, %299 : vector<4x512xf32>
    %301 = vector.extract_strided_slice %231 {offsets = [0, 34], sizes = [4, 512], strides = [1, 1]} : vector<4x546xf32> to vector<4x512xf32>
    %c8_211 = arith.constant 8 : index
    %c0_212 = arith.constant 0 : index
    %c0_213 = arith.constant 0 : index
    %302 = vector.load %arg12[%c8_211, %c0_212, %c0_213] : memref<9x1x512xf32, #tpu.memory_space<vmem>>, vector<1x1x512xf32>
    %303 = vector.shape_cast %302 : vector<1x1x512xf32> to vector<1x512xf32>
    %304 = vector.broadcast %303 : vector<1x512xf32> to vector<4x512xf32>
    %305 = arith.mulf %301, %304 : vector<4x512xf32>
    %c8_214 = arith.constant 8 : index
    %c0_215 = arith.constant 0 : index
    %c0_216 = arith.constant 0 : index
    %306 = vector.load %arg6[%c8_214, %c0_215, %c0_216] : memref<9x4x4xf32, #tpu.memory_space<vmem>>, vector<1x4x4xf32>
    %307 = vector.shape_cast %306 : vector<1x4x4xf32> to vector<4x4xf32>
    %cst_217 = arith.constant dense<0.000000e+00> : vector<4x512xf32>
    %308 = tpu.matmul %307, %305, %cst_217 {dimension_numbers = #tpu.dot_dimension_numbers<[1], [0], [0], [1], [0, 0, 1, 1], [], []>} : vector<4x4xf32>, vector<4x512xf32>, vector<4x512xf32> -> vector<4x512xf32>
    %309 = arith.addf %300, %308 : vector<4x512xf32>
    %c0_218 = arith.constant 0 : index
    %c0_219 = arith.constant 0 : index
    %310 = vector.load %arg8[%c0_218, %c0_219] : memref<4x1xf32, #tpu.memory_space<vmem>>, vector<4x1xf32>
    %311 = vector.broadcast %310 : vector<4x1xf32> to vector<4x512xf32>
    %312 = arith.addf %309, %311 : vector<4x512xf32>
    %cst_220 = arith.constant 0.000000e+00 : f32
    %313 = vector.broadcast %cst_220 : f32 to vector<4x512xf32>
    %314 = arith.maximumf %312, %313 : vector<4x512xf32>
    %cst_221 = arith.constant 1.000000e+00 : f32
    %315 = vector.broadcast %cst_221 : f32 to vector<4x512xf32>
    %316 = arith.minimumf %314, %315 : vector<4x512xf32>
    %c0_222 = arith.constant 0 : index
    %c0_223 = arith.constant 0 : index
    %c0_224 = arith.constant 0 : index
    %317 = vector.load %arg16[%c0_222, %c0_223, %c0_224] : memref<1x4x512xf32, #tpu.memory_space<vmem>>, vector<1x4x512xf32>
    %318 = vector.shape_cast %317 : vector<1x4x512xf32> to vector<4x512xf32>
    %319 = vector.shape_cast %316 : vector<4x512xf32> to vector<1x4x512xf32>
    tpu.vector_store %arg16[%c0_222, %c0_223, %c0_224], %319 {strides = array<i32>} : memref<1x4x512xf32, #tpu.memory_space<vmem>>, vector<1x4x512xf32>,
    %c2_i32 = arith.constant 2 : i32
    %320 = arith.cmpi slt, %arg0, %c2_i32 : i32
    %321 = arith.extui %320 : i1 to i32
    %c0_i32_225 = arith.constant 0 : i32
    %322 = arith.cmpi ne, %321, %c0_i32_225 : i32
    scf.if %322 {
      %c0_226 = arith.constant 0 : index
      %c0_227 = arith.constant 0 : index
      %c0_228 = arith.constant 0 : index
      %323 = vector.load %arg1[%c0_226, %c0_227, %c0_228] : memref<1x4x512xf32, #tpu.memory_space<vmem>>, vector<1x4x512xf32>
      %324 = vector.shape_cast %323 : vector<1x4x512xf32> to vector<4x512xf32>
      %325 = arith.subf %316, %324 : vector<4x512xf32>
      %cst_229 = arith.constant 0.000000e+00 : f32
      %326 = vector.broadcast %cst_229 : f32 to vector<4x512xf32>
      %327 = arith.maximumf %325, %326 : vector<4x512xf32>
      %328 = arith.subf %324, %316 : vector<4x512xf32>
      %cst_230 = arith.constant 0.000000e+00 : f32
      %329 = vector.broadcast %cst_230 : f32 to vector<4x512xf32>
      %330 = arith.maximumf %328, %329 : vector<4x512xf32>
      %331 = tpu.concatenate %327, %330 in 0 : vector<4x512xf32>, vector<4x512xf32> -> vector<8x512xf32>
      %c0_231 = arith.constant 0 : index
      %c0_232 = arith.constant 0 : index
      %332 = vector.load %arg21[%c0_231, %c0_232] : memref<8x512xf32, #tpu.memory_space<vmem>>, vector<8x512xf32>
      tpu.vector_store %arg21[%c0_231, %c0_232], %331 {strides = array<i32>} : memref<8x512xf32, #tpu.memory_space<vmem>>, vector<8x512xf32>,
      %cst_233 = arith.constant 0.000000e+00 : f32
      %333 = vector.broadcast %cst_233 : f32 to vector<8x17xf32>
      %334 = tpu.concatenate %333, %331, %333 in 1 : vector<8x17xf32>, vector<8x512xf32>, vector<8x17xf32> -> vector<8x546xf32>
      %cst_234 = arith.constant 0.000000e+00 : f32
      %335 = vector.broadcast %cst_234 : f32 to vector<8x512xf32>
      %336 = vector.extract_strided_slice %334 {offsets = [0, 0], sizes = [8, 512], strides = [1, 1]} : vector<8x546xf32> to vector<8x512xf32>
      %c0_235 = arith.constant 0 : index
      %c0_236 = arith.constant 0 : index
      %c0_237 = arith.constant 0 : index
      %337 = vector.load %arg12[%c0_235, %c0_236, %c0_237] : memref<9x1x512xf32, #tpu.memory_space<vmem>>, vector<1x1x512xf32>
      %338 = vector.shape_cast %337 : vector<1x1x512xf32> to vector<1x512xf32>
      %339 = vector.broadcast %338 : vector<1x512xf32> to vector<8x512xf32>
      %340 = arith.mulf %336, %339 : vector<8x512xf32>
      %c0_238 = arith.constant 0 : index
      %c0_239 = arith.constant 0 : index
      %c0_240 = arith.constant 0 : index
      %341 = vector.load %arg10[%c0_238, %c0_239, %c0_240] : memref<9x8x8xf32, #tpu.memory_space<vmem>>, vector<1x8x8xf32>
      %342 = vector.shape_cast %341 : vector<1x8x8xf32> to vector<8x8xf32>
      %cst_241 = arith.constant dense<0.000000e+00> : vector<8x512xf32>
      %343 = tpu.matmul %342, %340, %cst_241 {dimension_numbers = #tpu.dot_dimension_numbers<[1], [0], [0], [1], [0, 0, 1, 1], [], []>} : vector<8x8xf32>, vector<8x512xf32>, vector<8x512xf32> -> vector<8x512xf32>
      %344 = arith.addf %335, %343 : vector<8x512xf32>
      %345 = vector.extract_strided_slice %334 {offsets = [0, 1], sizes = [8, 512], strides = [1, 1]} : vector<8x546xf32> to vector<8x512xf32>
      %c1_242 = arith.constant 1 : index
      %c0_243 = arith.constant 0 : index
      %c0_244 = arith.constant 0 : index
      %346 = vector.load %arg12[%c1_242, %c0_243, %c0_244] : memref<9x1x512xf32, #tpu.memory_space<vmem>>, vector<1x1x512xf32>
      %347 = vector.shape_cast %346 : vector<1x1x512xf32> to vector<1x512xf32>
      %348 = vector.broadcast %347 : vector<1x512xf32> to vector<8x512xf32>
      %349 = arith.mulf %345, %348 : vector<8x512xf32>
      %c1_245 = arith.constant 1 : index
      %c0_246 = arith.constant 0 : index
      %c0_247 = arith.constant 0 : index
      %350 = vector.load %arg10[%c1_245, %c0_246, %c0_247] : memref<9x8x8xf32, #tpu.memory_space<vmem>>, vector<1x8x8xf32>
      %351 = vector.shape_cast %350 : vector<1x8x8xf32> to vector<8x8xf32>
      %cst_248 = arith.constant dense<0.000000e+00> : vector<8x512xf32>
      %352 = tpu.matmul %351, %349, %cst_248 {dimension_numbers = #tpu.dot_dimension_numbers<[1], [0], [0], [1], [0, 0, 1, 1], [], []>} : vector<8x8xf32>, vector<8x512xf32>, vector<8x512xf32> -> vector<8x512xf32>
      %353 = arith.addf %344, %352 : vector<8x512xf32>
      %354 = vector.extract_strided_slice %334 {offsets = [0, 2], sizes = [8, 512], strides = [1, 1]} : vector<8x546xf32> to vector<8x512xf32>
      %c2_249 = arith.constant 2 : index
      %c0_250 = arith.constant 0 : index
      %c0_251 = arith.constant 0 : index
      %355 = vector.load %arg12[%c2_249, %c0_250, %c0_251] : memref<9x1x512xf32, #tpu.memory_space<vmem>>, vector<1x1x512xf32>
      %356 = vector.shape_cast %355 : vector<1x1x512xf32> to vector<1x512xf32>
      %357 = vector.broadcast %356 : vector<1x512xf32> to vector<8x512xf32>
      %358 = arith.mulf %354, %357 : vector<8x512xf32>
      %c2_252 = arith.constant 2 : index
      %c0_253 = arith.constant 0 : index
      %c0_254 = arith.constant 0 : index
      %359 = vector.load %arg10[%c2_252, %c0_253, %c0_254] : memref<9x8x8xf32, #tpu.memory_space<vmem>>, vector<1x8x8xf32>
      %360 = vector.shape_cast %359 : vector<1x8x8xf32> to vector<8x8xf32>
      %cst_255 = arith.constant dense<0.000000e+00> : vector<8x512xf32>
      %361 = tpu.matmul %360, %358, %cst_255 {dimension_numbers = #tpu.dot_dimension_numbers<[1], [0], [0], [1], [0, 0, 1, 1], [], []>} : vector<8x8xf32>, vector<8x512xf32>, vector<8x512xf32> -> vector<8x512xf32>
      %362 = arith.addf %353, %361 : vector<8x512xf32>
      %363 = vector.extract_strided_slice %334 {offsets = [0, 16], sizes = [8, 512], strides = [1, 1]} : vector<8x546xf32> to vector<8x512xf32>
      %c3_256 = arith.constant 3 : index
      %c0_257 = arith.constant 0 : index
      %c0_258 = arith.constant 0 : index
      %364 = vector.load %arg12[%c3_256, %c0_257, %c0_258] : memref<9x1x512xf32, #tpu.memory_space<vmem>>, vector<1x1x512xf32>
      %365 = vector.shape_cast %364 : vector<1x1x512xf32> to vector<1x512xf32>
      %366 = vector.broadcast %365 : vector<1x512xf32> to vector<8x512xf32>
      %367 = arith.mulf %363, %366 : vector<8x512xf32>
      %c3_259 = arith.constant 3 : index
      %c0_260 = arith.constant 0 : index
      %c0_261 = arith.constant 0 : index
      %368 = vector.load %arg10[%c3_259, %c0_260, %c0_261] : memref<9x8x8xf32, #tpu.memory_space<vmem>>, vector<1x8x8xf32>
      %369 = vector.shape_cast %368 : vector<1x8x8xf32> to vector<8x8xf32>
      %cst_262 = arith.constant dense<0.000000e+00> : vector<8x512xf32>
      %370 = tpu.matmul %369, %367, %cst_262 {dimension_numbers = #tpu.dot_dimension_numbers<[1], [0], [0], [1], [0, 0, 1, 1], [], []>} : vector<8x8xf32>, vector<8x512xf32>, vector<8x512xf32> -> vector<8x512xf32>
      %371 = arith.addf %362, %370 : vector<8x512xf32>
      %372 = vector.extract_strided_slice %334 {offsets = [0, 17], sizes = [8, 512], strides = [1, 1]} : vector<8x546xf32> to vector<8x512xf32>
      %c4_263 = arith.constant 4 : index
      %c0_264 = arith.constant 0 : index
      %c0_265 = arith.constant 0 : index
      %373 = vector.load %arg10[%c4_263, %c0_264, %c0_265] : memref<9x8x8xf32, #tpu.memory_space<vmem>>, vector<1x8x8xf32>
      %374 = vector.shape_cast %373 : vector<1x8x8xf32> to vector<8x8xf32>
      %cst_266 = arith.constant dense<0.000000e+00> : vector<8x512xf32>
      %375 = tpu.matmul %374, %372, %cst_266 {dimension_numbers = #tpu.dot_dimension_numbers<[1], [0], [0], [1], [0, 0, 1, 1], [], []>} : vector<8x8xf32>, vector<8x512xf32>, vector<8x512xf32> -> vector<8x512xf32>
      %376 = arith.addf %371, %375 : vector<8x512xf32>
      %377 = vector.extract_strided_slice %334 {offsets = [0, 18], sizes = [8, 512], strides = [1, 1]} : vector<8x546xf32> to vector<8x512xf32>
      %c5_267 = arith.constant 5 : index
      %c0_268 = arith.constant 0 : index
      %c0_269 = arith.constant 0 : index
      %378 = vector.load %arg12[%c5_267, %c0_268, %c0_269] : memref<9x1x512xf32, #tpu.memory_space<vmem>>, vector<1x1x512xf32>
      %379 = vector.shape_cast %378 : vector<1x1x512xf32> to vector<1x512xf32>
      %380 = vector.broadcast %379 : vector<1x512xf32> to vector<8x512xf32>
      %381 = arith.mulf %377, %380 : vector<8x512xf32>
      %c5_270 = arith.constant 5 : index
      %c0_271 = arith.constant 0 : index
      %c0_272 = arith.constant 0 : index
      %382 = vector.load %arg10[%c5_270, %c0_271, %c0_272] : memref<9x8x8xf32, #tpu.memory_space<vmem>>, vector<1x8x8xf32>
      %383 = vector.shape_cast %382 : vector<1x8x8xf32> to vector<8x8xf32>
      %cst_273 = arith.constant dense<0.000000e+00> : vector<8x512xf32>
      %384 = tpu.matmul %383, %381, %cst_273 {dimension_numbers = #tpu.dot_dimension_numbers<[1], [0], [0], [1], [0, 0, 1, 1], [], []>} : vector<8x8xf32>, vector<8x512xf32>, vector<8x512xf32> -> vector<8x512xf32>
      %385 = arith.addf %376, %384 : vector<8x512xf32>
      %386 = vector.extract_strided_slice %334 {offsets = [0, 32], sizes = [8, 512], strides = [1, 1]} : vector<8x546xf32> to vector<8x512xf32>
      %c6_274 = arith.constant 6 : index
      %c0_275 = arith.constant 0 : index
      %c0_276 = arith.constant 0 : index
      %387 = vector.load %arg12[%c6_274, %c0_275, %c0_276] : memref<9x1x512xf32, #tpu.memory_space<vmem>>, vector<1x1x512xf32>
      %388 = vector.shape_cast %387 : vector<1x1x512xf32> to vector<1x512xf32>
      %389 = vector.broadcast %388 : vector<1x512xf32> to vector<8x512xf32>
      %390 = arith.mulf %386, %389 : vector<8x512xf32>
      %c6_277 = arith.constant 6 : index
      %c0_278 = arith.constant 0 : index
      %c0_279 = arith.constant 0 : index
      %391 = vector.load %arg10[%c6_277, %c0_278, %c0_279] : memref<9x8x8xf32, #tpu.memory_space<vmem>>, vector<1x8x8xf32>
      %392 = vector.shape_cast %391 : vector<1x8x8xf32> to vector<8x8xf32>
      %cst_280 = arith.constant dense<0.000000e+00> : vector<8x512xf32>
      %393 = tpu.matmul %392, %390, %cst_280 {dimension_numbers = #tpu.dot_dimension_numbers<[1], [0], [0], [1], [0, 0, 1, 1], [], []>} : vector<8x8xf32>, vector<8x512xf32>, vector<8x512xf32> -> vector<8x512xf32>
      %394 = arith.addf %385, %393 : vector<8x512xf32>
      %395 = vector.extract_strided_slice %334 {offsets = [0, 33], sizes = [8, 512], strides = [1, 1]} : vector<8x546xf32> to vector<8x512xf32>
      %c7_281 = arith.constant 7 : index
      %c0_282 = arith.constant 0 : index
      %c0_283 = arith.constant 0 : index
      %396 = vector.load %arg12[%c7_281, %c0_282, %c0_283] : memref<9x1x512xf32, #tpu.memory_space<vmem>>, vector<1x1x512xf32>
      %397 = vector.shape_cast %396 : vector<1x1x512xf32> to vector<1x512xf32>
      %398 = vector.broadcast %397 : vector<1x512xf32> to vector<8x512xf32>
      %399 = arith.mulf %395, %398 : vector<8x512xf32>
      %c7_284 = arith.constant 7 : index
      %c0_285 = arith.constant 0 : index
      %c0_286 = arith.constant 0 : index
      %400 = vector.load %arg10[%c7_284, %c0_285, %c0_286] : memref<9x8x8xf32, #tpu.memory_space<vmem>>, vector<1x8x8xf32>
      %401 = vector.shape_cast %400 : vector<1x8x8xf32> to vector<8x8xf32>
      %cst_287 = arith.constant dense<0.000000e+00> : vector<8x512xf32>
      %402 = tpu.matmul %401, %399, %cst_287 {dimension_numbers = #tpu.dot_dimension_numbers<[1], [0], [0], [1], [0, 0, 1, 1], [], []>} : vector<8x8xf32>, vector<8x512xf32>, vector<8x512xf32> -> vector<8x512xf32>
      %403 = arith.addf %394, %402 : vector<8x512xf32>
      %404 = vector.extract_strided_slice %334 {offsets = [0, 34], sizes = [8, 512], strides = [1, 1]} : vector<8x546xf32> to vector<8x512xf32>
      %c8_288 = arith.constant 8 : index
      %c0_289 = arith.constant 0 : index
      %c0_290 = arith.constant 0 : index
      %405 = vector.load %arg12[%c8_288, %c0_289, %c0_290] : memref<9x1x512xf32, #tpu.memory_space<vmem>>, vector<1x1x512xf32>
      %406 = vector.shape_cast %405 : vector<1x1x512xf32> to vector<1x512xf32>
      %407 = vector.broadcast %406 : vector<1x512xf32> to vector<8x512xf32>
      %408 = arith.mulf %404, %407 : vector<8x512xf32>
      %c8_291 = arith.constant 8 : index
      %c0_292 = arith.constant 0 : index
      %c0_293 = arith.constant 0 : index
      %409 = vector.load %arg10[%c8_291, %c0_292, %c0_293] : memref<9x8x8xf32, #tpu.memory_space<vmem>>, vector<1x8x8xf32>
      %410 = vector.shape_cast %409 : vector<1x8x8xf32> to vector<8x8xf32>
      %cst_294 = arith.constant dense<0.000000e+00> : vector<8x512xf32>
      %411 = tpu.matmul %410, %408, %cst_294 {dimension_numbers = #tpu.dot_dimension_numbers<[1], [0], [0], [1], [0, 0, 1, 1], [], []>} : vector<8x8xf32>, vector<8x512xf32>, vector<8x512xf32> -> vector<8x512xf32>
      %412 = arith.addf %403, %411 : vector<8x512xf32>
      %c0_295 = arith.constant 0 : index
      %c0_296 = arith.constant 0 : index
      %413 = vector.load %arg11[%c0_295, %c0_296] : memref<8x1xf32, #tpu.memory_space<vmem>>, vector<8x1xf32>
      %414 = vector.broadcast %413 : vector<8x1xf32> to vector<8x512xf32>
      %415 = arith.addf %412, %414 : vector<8x512xf32>
      %c0_297 = arith.constant 0 : index
      %c0_298 = arith.constant 0 : index
      %c0_299 = arith.constant 0 : index
      %416 = vector.load %arg15[%c0_297, %c0_298, %c0_299] : memref<4x512x128xf32, #tpu.memory_space<vmem>>, vector<1x512x128xf32>
      %417 = vector.shape_cast %416 : vector<1x512x128xf32> to vector<512x128xf32>
      %cst_300 = arith.constant dense<0.000000e+00> : vector<8x128xf32>
      %418 = tpu.matmul %415, %417, %cst_300 {dimension_numbers = #tpu.dot_dimension_numbers<[1], [0], [0], [1], [0, 0, 1, 1], [], []>} : vector<8x512xf32>, vector<512x128xf32>, vector<8x128xf32> -> vector<8x128xf32>
      %c1_301 = arith.constant 1 : index
      %c0_302 = arith.constant 0 : index
      %c0_303 = arith.constant 0 : index
      %419 = vector.load %arg15[%c1_301, %c0_302, %c0_303] : memref<4x512x128xf32, #tpu.memory_space<vmem>>, vector<1x512x128xf32>
      %420 = vector.shape_cast %419 : vector<1x512x128xf32> to vector<512x128xf32>
      %cst_304 = arith.constant dense<0.000000e+00> : vector<8x128xf32>
      %421 = tpu.matmul %415, %420, %cst_304 {dimension_numbers = #tpu.dot_dimension_numbers<[1], [0], [0], [1], [0, 0, 1, 1], [], []>} : vector<8x512xf32>, vector<512x128xf32>, vector<8x128xf32> -> vector<8x128xf32>
      %422 = arith.maximumf %418, %421 : vector<8x128xf32>
      %c2_305 = arith.constant 2 : index
      %c0_306 = arith.constant 0 : index
      %c0_307 = arith.constant 0 : index
      %423 = vector.load %arg15[%c2_305, %c0_306, %c0_307] : memref<4x512x128xf32, #tpu.memory_space<vmem>>, vector<1x512x128xf32>
      %424 = vector.shape_cast %423 : vector<1x512x128xf32> to vector<512x128xf32>
      %cst_308 = arith.constant dense<0.000000e+00> : vector<8x128xf32>
      %425 = tpu.matmul %415, %424, %cst_308 {dimension_numbers = #tpu.dot_dimension_numbers<[1], [0], [0], [1], [0, 0, 1, 1], [], []>} : vector<8x512xf32>, vector<512x128xf32>, vector<8x128xf32> -> vector<8x128xf32>
      %426 = arith.maximumf %422, %425 : vector<8x128xf32>
      %c3_309 = arith.constant 3 : index
      %c0_310 = arith.constant 0 : index
      %c0_311 = arith.constant 0 : index
      %427 = vector.load %arg15[%c3_309, %c0_310, %c0_311] : memref<4x512x128xf32, #tpu.memory_space<vmem>>, vector<1x512x128xf32>
      %428 = vector.shape_cast %427 : vector<1x512x128xf32> to vector<512x128xf32>
      %cst_312 = arith.constant dense<0.000000e+00> : vector<8x128xf32>
      %429 = tpu.matmul %415, %428, %cst_312 {dimension_numbers = #tpu.dot_dimension_numbers<[1], [0], [0], [1], [0, 0, 1, 1], [], []>} : vector<8x512xf32>, vector<512x128xf32>, vector<8x128xf32> -> vector<8x128xf32>
      %430 = arith.maximumf %426, %429 : vector<8x128xf32>
      %c0_313 = arith.constant 0 : index
      %c0_314 = arith.constant 0 : index
      %431 = vector.load %arg23[%c0_313, %c0_314] : memref<8x128xf32, #tpu.memory_space<vmem>>, vector<8x128xf32>
      tpu.vector_store %arg23[%c0_313, %c0_314], %430 {strides = array<i32>} : memref<8x128xf32, #tpu.memory_space<vmem>>, vector<8x128xf32>,
      %c0_315 = arith.constant 0 : index
      %c0_316 = arith.constant 0 : index
      %432 = vector.load %arg23[%c0_315, %c0_316] : memref<8x128xf32, #tpu.memory_space<vmem>>, vector<8x128xf32>
      %cst_317 = arith.constant 0.000000e+00 : f32
      %433 = vector.broadcast %cst_317 : f32 to vector<8x9xf32>
      %434 = tpu.concatenate %433, %112, %433 in 1 : vector<8x9xf32>, vector<8x128xf32>, vector<8x9xf32> -> vector<8x146xf32>
      %cst_318 = arith.constant 0.000000e+00 : f32
      %435 = vector.broadcast %cst_318 : f32 to vector<8x128xf32>
      %436 = vector.extract_strided_slice %434 {offsets = [0, 0], sizes = [8, 128], strides = [1, 1]} : vector<8x146xf32> to vector<8x128xf32>
      %c0_319 = arith.constant 0 : index
      %c0_320 = arith.constant 0 : index
      %c0_321 = arith.constant 0 : index
      %437 = vector.load %arg13[%c0_319, %c0_320, %c0_321] : memref<9x1x128xf32, #tpu.memory_space<vmem>>, vector<1x1x128xf32>
      %438 = vector.shape_cast %437 : vector<1x1x128xf32> to vector<1x128xf32>
      %439 = vector.broadcast %438 : vector<1x128xf32> to vector<8x128xf32>
      %440 = arith.mulf %436, %439 : vector<8x128xf32>
      %c0_322 = arith.constant 0 : index
      %c0_323 = arith.constant 0 : index
      %c0_324 = arith.constant 0 : index
      %441 = vector.load %arg7[%c0_322, %c0_323, %c0_324] : memref<9x8x8xf32, #tpu.memory_space<vmem>>, vector<1x8x8xf32>
      %442 = vector.shape_cast %441 : vector<1x8x8xf32> to vector<8x8xf32>
      %cst_325 = arith.constant dense<0.000000e+00> : vector<8x128xf32>
      %443 = tpu.matmul %442, %440, %cst_325 {dimension_numbers = #tpu.dot_dimension_numbers<[1], [0], [0], [1], [0, 0, 1, 1], [], []>} : vector<8x8xf32>, vector<8x128xf32>, vector<8x128xf32> -> vector<8x128xf32>
      %444 = arith.addf %435, %443 : vector<8x128xf32>
      %445 = vector.extract_strided_slice %434 {offsets = [0, 1], sizes = [8, 128], strides = [1, 1]} : vector<8x146xf32> to vector<8x128xf32>
      %c1_326 = arith.constant 1 : index
      %c0_327 = arith.constant 0 : index
      %c0_328 = arith.constant 0 : index
      %446 = vector.load %arg13[%c1_326, %c0_327, %c0_328] : memref<9x1x128xf32, #tpu.memory_space<vmem>>, vector<1x1x128xf32>
      %447 = vector.shape_cast %446 : vector<1x1x128xf32> to vector<1x128xf32>
      %448 = vector.broadcast %447 : vector<1x128xf32> to vector<8x128xf32>
      %449 = arith.mulf %445, %448 : vector<8x128xf32>
      %c1_329 = arith.constant 1 : index
      %c0_330 = arith.constant 0 : index
      %c0_331 = arith.constant 0 : index
      %450 = vector.load %arg7[%c1_329, %c0_330, %c0_331] : memref<9x8x8xf32, #tpu.memory_space<vmem>>, vector<1x8x8xf32>
      %451 = vector.shape_cast %450 : vector<1x8x8xf32> to vector<8x8xf32>
      %cst_332 = arith.constant dense<0.000000e+00> : vector<8x128xf32>
      %452 = tpu.matmul %451, %449, %cst_332 {dimension_numbers = #tpu.dot_dimension_numbers<[1], [0], [0], [1], [0, 0, 1, 1], [], []>} : vector<8x8xf32>, vector<8x128xf32>, vector<8x128xf32> -> vector<8x128xf32>
      %453 = arith.addf %444, %452 : vector<8x128xf32>
      %454 = vector.extract_strided_slice %434 {offsets = [0, 2], sizes = [8, 128], strides = [1, 1]} : vector<8x146xf32> to vector<8x128xf32>
      %c2_333 = arith.constant 2 : index
      %c0_334 = arith.constant 0 : index
      %c0_335 = arith.constant 0 : index
      %455 = vector.load %arg13[%c2_333, %c0_334, %c0_335] : memref<9x1x128xf32, #tpu.memory_space<vmem>>, vector<1x1x128xf32>
      %456 = vector.shape_cast %455 : vector<1x1x128xf32> to vector<1x128xf32>
      %457 = vector.broadcast %456 : vector<1x128xf32> to vector<8x128xf32>
      %458 = arith.mulf %454, %457 : vector<8x128xf32>
      %c2_336 = arith.constant 2 : index
      %c0_337 = arith.constant 0 : index
      %c0_338 = arith.constant 0 : index
      %459 = vector.load %arg7[%c2_336, %c0_337, %c0_338] : memref<9x8x8xf32, #tpu.memory_space<vmem>>, vector<1x8x8xf32>
      %460 = vector.shape_cast %459 : vector<1x8x8xf32> to vector<8x8xf32>
      %cst_339 = arith.constant dense<0.000000e+00> : vector<8x128xf32>
      %461 = tpu.matmul %460, %458, %cst_339 {dimension_numbers = #tpu.dot_dimension_numbers<[1], [0], [0], [1], [0, 0, 1, 1], [], []>} : vector<8x8xf32>, vector<8x128xf32>, vector<8x128xf32> -> vector<8x128xf32>
      %462 = arith.addf %453, %461 : vector<8x128xf32>
      %463 = vector.extract_strided_slice %434 {offsets = [0, 8], sizes = [8, 128], strides = [1, 1]} : vector<8x146xf32> to vector<8x128xf32>
      %c3_340 = arith.constant 3 : index
      %c0_341 = arith.constant 0 : index
      %c0_342 = arith.constant 0 : index
      %464 = vector.load %arg13[%c3_340, %c0_341, %c0_342] : memref<9x1x128xf32, #tpu.memory_space<vmem>>, vector<1x1x128xf32>
      %465 = vector.shape_cast %464 : vector<1x1x128xf32> to vector<1x128xf32>
      %466 = vector.broadcast %465 : vector<1x128xf32> to vector<8x128xf32>
      %467 = arith.mulf %463, %466 : vector<8x128xf32>
      %c3_343 = arith.constant 3 : index
      %c0_344 = arith.constant 0 : index
      %c0_345 = arith.constant 0 : index
      %468 = vector.load %arg7[%c3_343, %c0_344, %c0_345] : memref<9x8x8xf32, #tpu.memory_space<vmem>>, vector<1x8x8xf32>
      %469 = vector.shape_cast %468 : vector<1x8x8xf32> to vector<8x8xf32>
      %cst_346 = arith.constant dense<0.000000e+00> : vector<8x128xf32>
      %470 = tpu.matmul %469, %467, %cst_346 {dimension_numbers = #tpu.dot_dimension_numbers<[1], [0], [0], [1], [0, 0, 1, 1], [], []>} : vector<8x8xf32>, vector<8x128xf32>, vector<8x128xf32> -> vector<8x128xf32>
      %471 = arith.addf %462, %470 : vector<8x128xf32>
      %472 = vector.extract_strided_slice %434 {offsets = [0, 9], sizes = [8, 128], strides = [1, 1]} : vector<8x146xf32> to vector<8x128xf32>
      %c4_347 = arith.constant 4 : index
      %c0_348 = arith.constant 0 : index
      %c0_349 = arith.constant 0 : index
      %473 = vector.load %arg7[%c4_347, %c0_348, %c0_349] : memref<9x8x8xf32, #tpu.memory_space<vmem>>, vector<1x8x8xf32>
      %474 = vector.shape_cast %473 : vector<1x8x8xf32> to vector<8x8xf32>
      %cst_350 = arith.constant dense<0.000000e+00> : vector<8x128xf32>
      %475 = tpu.matmul %474, %472, %cst_350 {dimension_numbers = #tpu.dot_dimension_numbers<[1], [0], [0], [1], [0, 0, 1, 1], [], []>} : vector<8x8xf32>, vector<8x128xf32>, vector<8x128xf32> -> vector<8x128xf32>
      %476 = arith.addf %471, %475 : vector<8x128xf32>
      %477 = vector.extract_strided_slice %434 {offsets = [0, 10], sizes = [8, 128], strides = [1, 1]} : vector<8x146xf32> to vector<8x128xf32>
      %c5_351 = arith.constant 5 : index
      %c0_352 = arith.constant 0 : index
      %c0_353 = arith.constant 0 : index
      %478 = vector.load %arg13[%c5_351, %c0_352, %c0_353] : memref<9x1x128xf32, #tpu.memory_space<vmem>>, vector<1x1x128xf32>
      %479 = vector.shape_cast %478 : vector<1x1x128xf32> to vector<1x128xf32>
      %480 = vector.broadcast %479 : vector<1x128xf32> to vector<8x128xf32>
      %481 = arith.mulf %477, %480 : vector<8x128xf32>
      %c5_354 = arith.constant 5 : index
      %c0_355 = arith.constant 0 : index
      %c0_356 = arith.constant 0 : index
      %482 = vector.load %arg7[%c5_354, %c0_355, %c0_356] : memref<9x8x8xf32, #tpu.memory_space<vmem>>, vector<1x8x8xf32>
      %483 = vector.shape_cast %482 : vector<1x8x8xf32> to vector<8x8xf32>
      %cst_357 = arith.constant dense<0.000000e+00> : vector<8x128xf32>
      %484 = tpu.matmul %483, %481, %cst_357 {dimension_numbers = #tpu.dot_dimension_numbers<[1], [0], [0], [1], [0, 0, 1, 1], [], []>} : vector<8x8xf32>, vector<8x128xf32>, vector<8x128xf32> -> vector<8x128xf32>
      %485 = arith.addf %476, %484 : vector<8x128xf32>
      %486 = vector.extract_strided_slice %434 {offsets = [0, 16], sizes = [8, 128], strides = [1, 1]} : vector<8x146xf32> to vector<8x128xf32>
      %c6_358 = arith.constant 6 : index
      %c0_359 = arith.constant 0 : index
      %c0_360 = arith.constant 0 : index
      %487 = vector.load %arg13[%c6_358, %c0_359, %c0_360] : memref<9x1x128xf32, #tpu.memory_space<vmem>>, vector<1x1x128xf32>
      %488 = vector.shape_cast %487 : vector<1x1x128xf32> to vector<1x128xf32>
      %489 = vector.broadcast %488 : vector<1x128xf32> to vector<8x128xf32>
      %490 = arith.mulf %486, %489 : vector<8x128xf32>
      %c6_361 = arith.constant 6 : index
      %c0_362 = arith.constant 0 : index
      %c0_363 = arith.constant 0 : index
      %491 = vector.load %arg7[%c6_361, %c0_362, %c0_363] : memref<9x8x8xf32, #tpu.memory_space<vmem>>, vector<1x8x8xf32>
      %492 = vector.shape_cast %491 : vector<1x8x8xf32> to vector<8x8xf32>
      %cst_364 = arith.constant dense<0.000000e+00> : vector<8x128xf32>
      %493 = tpu.matmul %492, %490, %cst_364 {dimension_numbers = #tpu.dot_dimension_numbers<[1], [0], [0], [1], [0, 0, 1, 1], [], []>} : vector<8x8xf32>, vector<8x128xf32>, vector<8x128xf32> -> vector<8x128xf32>
      %494 = arith.addf %485, %493 : vector<8x128xf32>
      %495 = vector.extract_strided_slice %434 {offsets = [0, 17], sizes = [8, 128], strides = [1, 1]} : vector<8x146xf32> to vector<8x128xf32>
      %c7_365 = arith.constant 7 : index
      %c0_366 = arith.constant 0 : index
      %c0_367 = arith.constant 0 : index
      %496 = vector.load %arg13[%c7_365, %c0_366, %c0_367] : memref<9x1x128xf32, #tpu.memory_space<vmem>>, vector<1x1x128xf32>
      %497 = vector.shape_cast %496 : vector<1x1x128xf32> to vector<1x128xf32>
      %498 = vector.broadcast %497 : vector<1x128xf32> to vector<8x128xf32>
      %499 = arith.mulf %495, %498 : vector<8x128xf32>
      %c7_368 = arith.constant 7 : index
      %c0_369 = arith.constant 0 : index
      %c0_370 = arith.constant 0 : index
      %500 = vector.load %arg7[%c7_368, %c0_369, %c0_370] : memref<9x8x8xf32, #tpu.memory_space<vmem>>, vector<1x8x8xf32>
      %501 = vector.shape_cast %500 : vector<1x8x8xf32> to vector<8x8xf32>
      %cst_371 = arith.constant dense<0.000000e+00> : vector<8x128xf32>
      %502 = tpu.matmul %501, %499, %cst_371 {dimension_numbers = #tpu.dot_dimension_numbers<[1], [0], [0], [1], [0, 0, 1, 1], [], []>} : vector<8x8xf32>, vector<8x128xf32>, vector<8x128xf32> -> vector<8x128xf32>
      %503 = arith.addf %494, %502 : vector<8x128xf32>
      %504 = vector.extract_strided_slice %434 {offsets = [0, 18], sizes = [8, 128], strides = [1, 1]} : vector<8x146xf32> to vector<8x128xf32>
      %c8_372 = arith.constant 8 : index
      %c0_373 = arith.constant 0 : index
      %c0_374 = arith.constant 0 : index
      %505 = vector.load %arg13[%c8_372, %c0_373, %c0_374] : memref<9x1x128xf32, #tpu.memory_space<vmem>>, vector<1x1x128xf32>
      %506 = vector.shape_cast %505 : vector<1x1x128xf32> to vector<1x128xf32>
      %507 = vector.broadcast %506 : vector<1x128xf32> to vector<8x128xf32>
      %508 = arith.mulf %504, %507 : vector<8x128xf32>
      %c8_375 = arith.constant 8 : index
      %c0_376 = arith.constant 0 : index
      %c0_377 = arith.constant 0 : index
      %509 = vector.load %arg7[%c8_375, %c0_376, %c0_377] : memref<9x8x8xf32, #tpu.memory_space<vmem>>, vector<1x8x8xf32>
      %510 = vector.shape_cast %509 : vector<1x8x8xf32> to vector<8x8xf32>
      %cst_378 = arith.constant dense<0.000000e+00> : vector<8x128xf32>
      %511 = tpu.matmul %510, %508, %cst_378 {dimension_numbers = #tpu.dot_dimension_numbers<[1], [0], [0], [1], [0, 0, 1, 1], [], []>} : vector<8x8xf32>, vector<8x128xf32>, vector<8x128xf32> -> vector<8x128xf32>
      %512 = arith.addf %503, %511 : vector<8x128xf32>
      %c0_379 = arith.constant 0 : index
      %c0_380 = arith.constant 0 : index
      %513 = vector.load %arg9[%c0_379, %c0_380] : memref<8x1xf32, #tpu.memory_space<vmem>>, vector<8x1xf32>
      %514 = vector.broadcast %513 : vector<8x1xf32> to vector<8x128xf32>
      %515 = arith.addf %512, %514 : vector<8x128xf32>
      %cst_381 = arith.constant 0.000000e+00 : f32
      %516 = vector.broadcast %cst_381 : f32 to vector<8x128xf32>
      %517 = arith.maximumf %515, %516 : vector<8x128xf32>
      %518 = arith.subf %517, %432 : vector<8x128xf32>
      %cst_382 = arith.constant 0.000000e+00 : f32
      %519 = vector.broadcast %cst_382 : f32 to vector<8x128xf32>
      %520 = arith.maximumf %518, %519 : vector<8x128xf32>
      %521 = arith.subf %432, %517 : vector<8x128xf32>
      %cst_383 = arith.constant 0.000000e+00 : f32
      %522 = vector.broadcast %cst_383 : f32 to vector<8x128xf32>
      %523 = arith.maximumf %521, %522 : vector<8x128xf32>
      %524 = tpu.concatenate %520, %523 in 0 : vector<8x128xf32>, vector<8x128xf32> -> vector<16x128xf32>
      %c0_384 = arith.constant 0 : index
      %c0_385 = arith.constant 0 : index
      %525 = vector.load %arg22[%c0_384, %c0_385] : memref<16x128xf32, #tpu.memory_space<vmem>>, vector<16x128xf32>
      tpu.vector_store %arg22[%c0_384, %c0_385], %524 {strides = array<i32>} : memref<16x128xf32, #tpu.memory_space<vmem>>, vector<16x128xf32>,
    } else {
    }
    return
  }
  func.func @transform_0(%arg0: i32) -> (i32, i32, i32) {
    %c1_i32 = arith.constant 1 : i32
    %0 = arith.addi %arg0, %c1_i32 : i32
    %c0_i32 = arith.constant 0 : i32
    %c0_i32_0 = arith.constant 0 : i32
    %c0_i32_1 = arith.constant 0 : i32
    return %0, %c0_i32, %c0_i32_0 : i32, i32, i32
  }
  func.func @transform_1(%arg0: i32) -> (i32, i32, i32) {
    %c0_i32 = arith.constant 0 : i32
    %c0_i32_0 = arith.constant 0 : i32
    %c0_i32_1 = arith.constant 0 : i32
    %c0_i32_2 = arith.constant 0 : i32
    return %c0_i32, %c0_i32_0, %c0_i32_1 : i32, i32, i32
  }
  func.func @transform_2(%arg0: i32) -> (i32, i32, i32) {
    %c0_i32 = arith.constant 0 : i32
    %c0_i32_0 = arith.constant 0 : i32
    %c0_i32_1 = arith.constant 0 : i32
    %c0_i32_2 = arith.constant 0 : i32
    return %c0_i32, %c0_i32_0, %c0_i32_1 : i32, i32, i32
  }
  func.func @transform_3(%arg0: i32) -> (i32, i32) {
    %c0_i32 = arith.constant 0 : i32
    %c0_i32_0 = arith.constant 0 : i32
    %c0_i32_1 = arith.constant 0 : i32
    return %c0_i32, %c0_i32_0 : i32, i32
  }
  func.func @transform_4(%arg0: i32) -> (i32, i32) {
    %c0_i32 = arith.constant 0 : i32
    %c0_i32_0 = arith.constant 0 : i32
    %c0_i32_1 = arith.constant 0 : i32
    return %c0_i32, %c0_i32_0 : i32, i32
  }
  func.func @transform_5(%arg0: i32) -> (i32, i32, i32) {
    %c0_i32 = arith.constant 0 : i32
    %c0_i32_0 = arith.constant 0 : i32
    %c0_i32_1 = arith.constant 0 : i32
    %c0_i32_2 = arith.constant 0 : i32
    return %c0_i32, %c0_i32_0, %c0_i32_1 : i32, i32, i32
  }
  func.func @transform_6(%arg0: i32) -> (i32, i32, i32) {
    %c0_i32 = arith.constant 0 : i32
    %c0_i32_0 = arith.constant 0 : i32
    %c0_i32_1 = arith.constant 0 : i32
    %c0_i32_2 = arith.constant 0 : i32
    return %c0_i32, %c0_i32_0, %c0_i32_1 : i32, i32, i32
  }
  func.func @transform_7(%arg0: i32) -> (i32, i32) {
    %c0_i32 = arith.constant 0 : i32
    %c0_i32_0 = arith.constant 0 : i32
    %c0_i32_1 = arith.constant 0 : i32
    return %c0_i32, %c0_i32_0 : i32, i32
  }
  func.func @transform_8(%arg0: i32) -> (i32, i32) {
    %c0_i32 = arith.constant 0 : i32
    %c0_i32_0 = arith.constant 0 : i32
    %c0_i32_1 = arith.constant 0 : i32
    return %c0_i32, %c0_i32_0 : i32, i32
  }
  func.func @transform_9(%arg0: i32) -> (i32, i32, i32) {
    %c0_i32 = arith.constant 0 : i32
    %c0_i32_0 = arith.constant 0 : i32
    %c0_i32_1 = arith.constant 0 : i32
    %c0_i32_2 = arith.constant 0 : i32
    return %c0_i32, %c0_i32_0, %c0_i32_1 : i32, i32, i32
  }
  func.func @transform_10(%arg0: i32) -> (i32, i32) {
    %c0_i32 = arith.constant 0 : i32
    %c0_i32_0 = arith.constant 0 : i32
    %c0_i32_1 = arith.constant 0 : i32
    return %c0_i32, %c0_i32_0 : i32, i32
  }
  func.func @transform_11(%arg0: i32) -> (i32, i32, i32) {
    %c0_i32 = arith.constant 0 : i32
    %c0_i32_0 = arith.constant 0 : i32
    %c0_i32_1 = arith.constant 0 : i32
    %c0_i32_2 = arith.constant 0 : i32
    return %c0_i32, %c0_i32_0, %c0_i32_1 : i32, i32, i32
  }
  func.func @transform_12(%arg0: i32) -> (i32, i32, i32) {
    %c0_i32 = arith.constant 0 : i32
    %c0_i32_0 = arith.constant 0 : i32
    %c0_i32_1 = arith.constant 0 : i32
    %c0_i32_2 = arith.constant 0 : i32
    return %c0_i32, %c0_i32_0, %c0_i32_1 : i32, i32, i32
  }
  func.func @transform_13(%arg0: i32) -> (i32, i32) {
    %c0_i32 = arith.constant 0 : i32
    %c0_i32_0 = arith.constant 0 : i32
    %c0_i32_1 = arith.constant 0 : i32
    return %c0_i32, %c0_i32_0 : i32, i32
  }
  func.func @transform_14(%arg0: i32) -> (i32, i32, i32) {
    %c0_i32 = arith.constant 0 : i32
    %c0_i32_0 = arith.constant 0 : i32
    %c0_i32_1 = arith.constant 0 : i32
    %c0_i32_2 = arith.constant 0 : i32
    return %c0_i32, %c0_i32_0, %c0_i32_1 : i32, i32, i32
  }
  func.func @transform_15(%arg0: i32) -> (i32, i32, i32) {
    %c0_i32 = arith.constant 0 : i32
    %c0_i32_0 = arith.constant 0 : i32
    %c0_i32_1 = arith.constant 0 : i32
    return %arg0, %c0_i32, %c0_i32_0 : i32, i32, i32
  }
}

</mosaic_0001>

<llo_original>
// kernel: prednet_forward.1
$region0: #{prednet_forward.1}
  #allocation0 [shape = 'u32[]', space=smem, size = 0x4, offset = 0x4, fixed_abs, tag = 'smem constant byte address 0x4 - core index']
  #allocation1 [shape = 'u32[72,128]{1,0:T(1,128)}', space=vmem, size = 0x9000, scoped, tag = 'internal scratch']
  #allocation2 [shape = 'f32[4,512]{1,0:T(4,128)}', space=vmem, size = 0x2000, scoped, tag = 'scratch operand']
  #allocation3 [shape = 'f32[8,128]{1,0:T(8,128)}', space=vmem, size = 0x1000, scoped, tag = 'scratch operand']
  #allocation4 [shape = 'f32[4,512]{1,0:T(4,128)}', space=vmem, size = 0x2000, scoped, tag = 'scratch operand']
  #allocation5 [shape = 'f32[8,128]{1,0:T(8,128)}', space=vmem, size = 0x1000, scoped, tag = 'scratch operand']
  #allocation6 [shape = 'f32[8,512]{1,0:T(8,128)}', space=vmem, size = 0x4000, scoped, tag = 'scratch operand']
  #allocation7 [shape = 'f32[16,128]{1,0:T(8,128)}', space=vmem, size = 0x2000, scoped, tag = 'scratch operand']
  #allocation8 [shape = 'f32[8,128]{1,0:T(8,128)}', space=vmem, size = 0x1000, scoped, tag = 'scratch operand']
  %s0 = inlined_call_operand.vmem [shape: f32[4,4,512], index: 0, kind: input, shape index: {}]
  %s1 = inlined_call_operand.vmem [shape: f32[9,16,20], index: 1, kind: input, shape index: {}]
  %s2 = inlined_call_operand.vmem [shape: f32[9,32,24], index: 2, kind: input, shape index: {}]
  %s3 = inlined_call_operand.vmem [shape: f32[16,1], index: 3, kind: input, shape index: {}]
  %s4 = inlined_call_operand.vmem [shape: f32[32,1], index: 4, kind: input, shape index: {}]
  %s5 = inlined_call_operand.vmem [shape: f32[9,4,4], index: 5, kind: input, shape index: {}]
  %s6 = inlined_call_operand.vmem [shape: f32[9,8,8], index: 6, kind: input, shape index: {}]
  %s7 = inlined_call_operand.vmem [shape: f32[4,1], index: 7, kind: input, shape index: {}]
  %s8 = inlined_call_operand.vmem [shape: f32[8,1], index: 8, kind: input, shape index: {}]
  %s9 = inlined_call_operand.vmem [shape: f32[9,8,8], index: 9, kind: input, shape index: {}]
  %s10 = inlined_call_operand.vmem [shape: f32[8,1], index: 10, kind: input, shape index: {}]
  %s11 = inlined_call_operand.vmem [shape: f32[9,1,512], index: 11, kind: input, shape index: {}]
  %s12 = inlined_call_operand.vmem [shape: f32[9,1,128], index: 12, kind: input, shape index: {}]
  %s13 = inlined_call_operand.vmem [shape: f32[128,512], index: 13, kind: input, shape index: {}]
  %s14 = inlined_call_operand.hbm [shape: f32[4,512,128], index: 14, kind: input, shape index: {}]
  %s15 = inlined_call_operand.vmem [shape: f32[3,4,512], index: 15, kind: output, shape index: {}]
  %s16 = sld [smem:[#allocation0]]
  $region105: #{prednet_forward.1} parent=0
    _
  %s18 = ssub.s32 1, %s16
  %s19 = scalar_select 0, %s18, %s16
  $region1: #{prednet_forward.1} parent=0
    #allocation9 [shape = 'u8[1048576]{0}', space=vmem, size = 0x100000, scoped, tag = 'input window, operand 14, single buffered']
    #allocation10 [shape = 's32[2]{0}', space=sflag, size = 0x8, scoped, tag = 'scoped memory for prednet_forward.1']
    %20 = vsyncpa [#allocation10], 0
    loop: start=0, step=1, limit=5
    $region2: #{prednet_forward.1} parent=1 // loop_pre_header
      _
    $region3: #{prednet_forward.1} parent=1 // loop_header
      %s22 = sphi 0, %s26
      %p23 = scmp.ge.s32.totalorder %s22, 5
      %s34 = sphi 0, %s36
      %s37 = sphi 0, %s34
      %s38 = sphi 0, %s37
      %s54 = sphi 0, %s38
      %s58 = sphi 0, %s58
      %s60 = sphi 0, %s58
      %s61 = sphi 0, %s60
      %s75 = sphi 0, %s61
      %s79 = sphi 0, %s79
      %s81 = sphi 0, %s79
      %s82 = sphi 0, %s81
      %s96 = sphi 0, %s82
      %s100 = sphi 0, %s100
      %s102 = sphi 0, %s100
      %s103 = sphi 0, %s102
      %s117 = sphi 0, %s103
      %s121 = sphi 0, %s121
      %s123 = sphi 0, %s121
      %s124 = sphi 0, %s123
      %s138 = sphi 0, %s124
      %s142 = sphi 0, %s142
      %s144 = sphi 0, %s142
      %s145 = sphi 0, %s144
      %s159 = sphi 0, %s145
      %s163 = sphi 0, %s163
      %s165 = sphi 0, %s163
      %s166 = sphi 0, %s165
      %s180 = sphi 0, %s166
      %s184 = sphi 0, %s184
      %s186 = sphi 0, %s184
      %s187 = sphi 0, %s186
      %s201 = sphi 0, %s187
      %s205 = sphi 0, %s205
      %s207 = sphi 0, %s205
      %s208 = sphi 0, %s207
      %s222 = sphi 0, %s208
      %s226 = sphi 0, %s226
      %s228 = sphi 0, %s226
      %s229 = sphi 0, %s228
      %s243 = sphi 0, %s229
      %s247 = sphi 0, %s247
      %s249 = sphi 0, %s247
      %s250 = sphi 0, %s249
      %s264 = sphi 0, %s250
      %s268 = sphi 0, %s268
      %s270 = sphi 0, %s268
      %s271 = sphi 0, %s270
      %s285 = sphi 0, %s271
      %s289 = sphi 0, %s289
      %s291 = sphi 0, %s289
      %s292 = sphi 0, %s291
      %s306 = sphi 0, %s292
      %s310 = sphi 0, %s310
      %s312 = sphi 0, %s310
      %s313 = sphi 0, %s312
      %s327 = sphi 0, %s313
      %s331 = sphi 0, %s331
      %s333 = sphi 0, %s331
      %s334 = sphi 0, %s333
      %s348 = sphi 0, %s334
      %s354 = sphi 0, %s356
      %s357 = sphi 0, %s354
      %s358 = sphi 0, %s357
      %s374 = sphi 0, %s358
    $region4: #{prednet_forward.1} parent=1 // loop_header_branch
      %25 = sbr.rel (%p23) target = $region8
    $region5: #{prednet_forward.1} parent=1 // loop_body
      %s27 = ssub.s32 %s22, 1
      %s28 = ssub.s32 %s22, 2
      %s29 = sadd.s32 %s22, 1
      %s30 = sadd.s32 %s22, 1
      %s31 = sadd.s32 %s29, 1
      %s32 = ssub.s32 %s30, %s31
      %p33 = scmp.eq.s32.totalorder %s32, 0
      %s35 = sadd.s32 %s34, 1
      %s36 = scalar_select %p33, %s34, %s35
      %p39 = pneg %p33
      %p40 = scmp.eq.s32.totalorder %s22, 2
      %p41 = por %p39, %p40
      %p42 = scmp.ne.s32.totalorder %s34, %s37
      %p43 = scmp.eq.s32.totalorder %s22, 0
      %p44 = por %p42, %p43
      %p45 = scmp.ne.s32.totalorder %s34, %s37
      %p46 = scmp.eq.s32.totalorder %s27, 2
      %p47 = por %p45, %p46
      %p48 = scmp.ne.s32.totalorder %s37, %s38
      %p49 = scmp.eq.s32.totalorder %s27, 0
      %p50 = por %p48, %p49
      %p51 = scmp.ne.s32.totalorder %s37, %s38
      %p52 = scmp.eq.s32.totalorder %s28, 2
      %p53 = por %p51, %p52
      %p55 = scmp.ne.s32.totalorder %s38, %s54
      %p56 = scmp.eq.s32.totalorder %s28, 0
      %p57 = por %p55, %p56
      %s59 = sadd.s32 %s58, 1
      %p62 = scmp.eq.s32.totalorder %s22, 2
      %p63 = scmp.ne.s32.totalorder %s58, %s60
      %p64 = scmp.eq.s32.totalorder %s22, 0
      %p65 = por %p63, %p64
      %p66 = scmp.ne.s32.totalorder %s58, %s60
      %p67 = scmp.eq.s32.totalorder %s27, 2
      %p68 = por %p66, %p67
      %p69 = scmp.ne.s32.totalorder %s60, %s61
      %p70 = scmp.eq.s32.totalorder %s27, 0
      %p71 = por %p69, %p70
      %p72 = scmp.ne.s32.totalorder %s60, %s61
      %p73 = scmp.eq.s32.totalorder %s28, 2
      %p74 = por %p72, %p73
      %p76 = scmp.ne.s32.totalorder %s61, %s75
      %p77 = scmp.eq.s32.totalorder %s28, 0
      %p78 = por %p76, %p77
      %s80 = sadd.s32 %s79, 1
      %p83 = scmp.eq.s32.totalorder %s22, 2
      %p84 = scmp.ne.s32.totalorder %s79, %s81
      %p85 = scmp.eq.s32.totalorder %s22, 0
      %p86 = por %p84, %p85
      %p87 = scmp.ne.s32.totalorder %s79, %s81
      %p88 = scmp.eq.s32.totalorder %s27, 2
      %p89 = por %p87, %p88
      %p90 = scmp.ne.s32.totalorder %s81, %s82
      %p91 = scmp.eq.s32.totalorder %s27, 0
      %p92 = por %p90, %p91
      %p93 = scmp.ne.s32.totalorder %s81, %s82
      %p94 = scmp.eq.s32.totalorder %s28, 2
      %p95 = por %p93, %p94
      %p97 = scmp.ne.s32.totalorder %s82, %s96
      %p98 = scmp.eq.s32.totalorder %s28, 0
      %p99 = por %p97, %p98
      %s101 = sadd.s32 %s100, 1
      %p104 = scmp.eq.s32.totalorder %s22, 2
      %p105 = scmp.ne.s32.totalorder %s100, %s102
      %p106 = scmp.eq.s32.totalorder %s22, 0
      %p107 = por %p105, %p106
      %p108 = scmp.ne.s32.totalorder %s100, %s102
      %p109 = scmp.eq.s32.totalorder %s27, 2
      %p110 = por %p108, %p109
      %p111 = scmp.ne.s32.totalorder %s102, %s103
      %p112 = scmp.eq.s32.totalorder %s27, 0
      %p113 = por %p111, %p112
      %p114 = scmp.ne.s32.totalorder %s102, %s103
      %p115 = scmp.eq.s32.totalorder %s28, 2
      %p116 = por %p114, %p115
      %p118 = scmp.ne.s32.totalorder %s103, %s117
      %p119 = scmp.eq.s32.totalorder %s28, 0
      %p120 = por %p118, %p119
      %s122 = sadd.s32 %s121, 1
      %p125 = scmp.eq.s32.totalorder %s22, 2
      %p126 = scmp.ne.s32.totalorder %s121, %s123
      %p127 = scmp.eq.s32.totalorder %s22, 0
      %p128 = por %p126, %p127
      %p129 = scmp.ne.s32.totalorder %s121, %s123
      %p130 = scmp.eq.s32.totalorder %s27, 2
      %p131 = por %p129, %p130
      %p132 = scmp.ne.s32.totalorder %s123, %s124
      %p133 = scmp.eq.s32.totalorder %s27, 0
      %p134 = por %p132, %p133
      %p135 = scmp.ne.s32.totalorder %s123, %s124
      %p136 = scmp.eq.s32.totalorder %s28, 2
      %p137 = por %p135, %p136
      %p139 = scmp.ne.s32.totalorder %s124, %s138
      %p140 = scmp.eq.s32.totalorder %s28, 0
      %p141 = por %p139, %p140
      %s143 = sadd.s32 %s142, 1
      %p146 = scmp.eq.s32.totalorder %s22, 2
      %p147 = scmp.ne.s32.totalorder %s142, %s144
      %p148 = scmp.eq.s32.totalorder %s22, 0
      %p149 = por %p147, %p148
      %p150 = scmp.ne.s32.totalorder %s142, %s144
      %p151 = scmp.eq.s32.totalorder %s27, 2
      %p152 = por %p150, %p151
      %p153 = scmp.ne.s32.totalorder %s144, %s145
      %p154 = scmp.eq.s32.totalorder %s27, 0
      %p155 = por %p153, %p154
      %p156 = scmp.ne.s32.totalorder %s144, %s145
      %p157 = scmp.eq.s32.totalorder %s28, 2
      %p158 = por %p156, %p157
      %p160 = scmp.ne.s32.totalorder %s145, %s159
      %p161 = scmp.eq.s32.totalorder %s28, 0
      %p162 = por %p160, %p161
      %s164 = sadd.s32 %s163, 1
      %p167 = scmp.eq.s32.totalorder %s22, 2
      %p168 = scmp.ne.s32.totalorder %s163, %s165
      %p169 = scmp.eq.s32.totalorder %s22, 0
      %p170 = por %p168, %p169
      %p171 = scmp.ne.s32.totalorder %s163, %s165
      %p172 = scmp.eq.s32.totalorder %s27, 2
      %p173 = por %p171, %p172
      %p174 = scmp.ne.s32.totalorder %s165, %s166
      %p175 = scmp.eq.s32.totalorder %s27, 0
      %p176 = por %p174, %p175
      %p177 = scmp.ne.s32.totalorder %s165, %s166
      %p178 = scmp.eq.s32.totalorder %s28, 2
      %p179 = por %p177, %p178
      %p181 = scmp.ne.s32.totalorder %s166, %s180
      %p182 = scmp.eq.s32.totalorder %s28, 0
      %p183 = por %p181, %p182
      %s185 = sadd.s32 %s184, 1
      %p188 = scmp.eq.s32.totalorder %s22, 2
      %p189 = scmp.ne.s32.totalorder %s184, %s186
      %p190 = scmp.eq.s32.totalorder %s22, 0
      %p191 = por %p189, %p190
      %p192 = scmp.ne.s32.totalorder %s184, %s186
      %p193 = scmp.eq.s32.totalorder %s27, 2
      %p194 = por %p192, %p193
      %p195 = scmp.ne.s32.totalorder %s186, %s187
      %p196 = scmp.eq.s32.totalorder %s27, 0
      %p197 = por %p195, %p196
      %p198 = scmp.ne.s32.totalorder %s186, %s187
      %p199 = scmp.eq.s32.totalorder %s28, 2
      %p200 = por %p198, %p199
      %p202 = scmp.ne.s32.totalorder %s187, %s201
      %p203 = scmp.eq.s32.totalorder %s28, 0
      %p204 = por %p202, %p203
      %s206 = sadd.s32 %s205, 1
      %p209 = scmp.eq.s32.totalorder %s22, 2
      %p210 = scmp.ne.s32.totalorder %s205, %s207
      %p211 = scmp.eq.s32.totalorder %s22, 0
      %p212 = por %p210, %p211
      %p213 = scmp.ne.s32.totalorder %s205, %s207
      %p214 = scmp.eq.s32.totalorder %s27, 2
      %p215 = por %p213, %p214
      %p216 = scmp.ne.s32.totalorder %s207, %s208
      %p217 = scmp.eq.s32.totalorder %s27, 0
      %p218 = por %p216, %p217
      %p219 = scmp.ne.s32.totalorder %s207, %s208
      %p220 = scmp.eq.s32.totalorder %s28, 2
      %p221 = por %p219, %p220
      %p223 = scmp.ne.s32.totalorder %s208, %s222
      %p224 = scmp.eq.s32.totalorder %s28, 0
      %p225 = por %p223, %p224
      %s227 = sadd.s32 %s226, 1
      %p230 = scmp.eq.s32.totalorder %s22, 2
      %p231 = scmp.ne.s32.totalorder %s226, %s228
      %p232 = scmp.eq.s32.totalorder %s22, 0
      %p233 = por %p231, %p232
      %p234 = scmp.ne.s32.totalorder %s226, %s228
      %p235 = scmp.eq.s32.totalorder %s27, 2
      %p236 = por %p234, %p235
      %p237 = scmp.ne.s32.totalorder %s228, %s229
      %p238 = scmp.eq.s32.totalorder %s27, 0
      %p239 = por %p237, %p238
      %p240 = scmp.ne.s32.totalorder %s228, %s229
      %p241 = scmp.eq.s32.totalorder %s28, 2
      %p242 = por %p240, %p241
      %p244 = scmp.ne.s32.totalorder %s229, %s243
      %p245 = scmp.eq.s32.totalorder %s28, 0
      %p246 = por %p244, %p245
      %s248 = sadd.s32 %s247, 1
      %p251 = scmp.eq.s32.totalorder %s22, 2
      %p252 = scmp.ne.s32.totalorder %s247, %s249
      %p253 = scmp.eq.s32.totalorder %s22, 0
      %p254 = por %p252, %p253
      %p255 = scmp.ne.s32.totalorder %s247, %s249
      %p256 = scmp.eq.s32.totalorder %s27, 2
      %p257 = por %p255, %p256
      %p258 = scmp.ne.s32.totalorder %s249, %s250
      %p259 = scmp.eq.s32.totalorder %s27, 0
      %p260 = por %p258, %p259
      %p261 = scmp.ne.s32.totalorder %s249, %s250
      %p262 = scmp.eq.s32.totalorder %s28, 2
      %p263 = por %p261, %p262
      %p265 = scmp.ne.s32.totalorder %s250, %s264
      %p266 = scmp.eq.s32.totalorder %s28, 0
      %p267 = por %p265, %p266
      %s269 = sadd.s32 %s268, 1
      %p272 = scmp.eq.s32.totalorder %s22, 2
      %p273 = scmp.ne.s32.totalorder %s268, %s270
      %p274 = scmp.eq.s32.totalorder %s22, 0
      %p275 = por %p273, %p274
      %p276 = scmp.ne.s32.totalorder %s268, %s270
      %p277 = scmp.eq.s32.totalorder %s27, 2
      %p278 = por %p276, %p277
      %p279 = scmp.ne.s32.totalorder %s270, %s271
      %p280 = scmp.eq.s32.totalorder %s27, 0
      %p281 = por %p279, %p280
      %p282 = scmp.ne.s32.totalorder %s270, %s271
      %p283 = scmp.eq.s32.totalorder %s28, 2
      %p284 = por %p282, %p283
      %p286 = scmp.ne.s32.totalorder %s271, %s285
      %p287 = scmp.eq.s32.totalorder %s28, 0
      %p288 = por %p286, %p287
      %s290 = sadd.s32 %s289, 1
      %p293 = scmp.eq.s32.totalorder %s22, 2
      %p294 = scmp.ne.s32.totalorder %s289, %s291
      %p295 = scmp.eq.s32.totalorder %s22, 0
      %p296 = por %p294, %p295
      %p297 = scmp.ne.s32.totalorder %s289, %s291
      %p298 = scmp.eq.s32.totalorder %s27, 2
      %p299 = por %p297, %p298
      %p300 = scmp.ne.s32.totalorder %s291, %s292
      %p301 = scmp.eq.s32.totalorder %s27, 0
      %p302 = por %p300, %p301
      %p303 = scmp.ne.s32.totalorder %s291, %s292
      %p304 = scmp.eq.s32.totalorder %s28, 2
      %p305 = por %p303, %p304
      %p307 = scmp.ne.s32.totalorder %s292, %s306
      %p308 = scmp.eq.s32.totalorder %s28, 0
      %p309 = por %p307, %p308
      %s311 = sadd.s32 %s310, 1
      %p314 = scmp.eq.s32.totalorder %s22, 2
      %p315 = scmp.ne.s32.totalorder %s310, %s312
      %p316 = scmp.eq.s32.totalorder %s22, 0
      %p317 = por %p315, %p316
      %p318 = scmp.ne.s32.totalorder %s310, %s312
      %p319 = scmp.eq.s32.totalorder %s27, 2
      %p320 = por %p318, %p319
      %p321 = scmp.ne.s32.totalorder %s312, %s313
      %p322 = scmp.eq.s32.totalorder %s27, 0
      %p323 = por %p321, %p322
      %p324 = scmp.ne.s32.totalorder %s312, %s313
      %p325 = scmp.eq.s32.totalorder %s28, 2
      %p326 = por %p324, %p325
      %p328 = scmp.ne.s32.totalorder %s313, %s327
      %p329 = scmp.eq.s32.totalorder %s28, 0
      %p330 = por %p328, %p329
      %s332 = sadd.s32 %s331, 1
      %p335 = scmp.eq.s32.totalorder %s22, 2
      %p336 = scmp.ne.s32.totalorder %s331, %s333
      %p337 = scmp.eq.s32.totalorder %s22, 0
      %p338 = por %p336, %p337
      %p339 = scmp.ne.s32.totalorder %s331, %s333
      %p340 = scmp.eq.s32.totalorder %s27, 2
      %p341 = por %p339, %p340
      %p342 = scmp.ne.s32.totalorder %s333, %s334
      %p343 = scmp.eq.s32.totalorder %s27, 0
      %p344 = por %p342, %p343
      %p345 = scmp.ne.s32.totalorder %s333, %s334
      %p346 = scmp.eq.s32.totalorder %s28, 2
      %p347 = por %p345, %p346
      %p349 = scmp.ne.s32.totalorder %s334, %s348
      %p350 = scmp.eq.s32.totalorder %s28, 0
      %p351 = por %p349, %p350
      %s352 = ssub.s32 %s22, %s29
      %p353 = scmp.eq.s32.totalorder %s352, 0
      %s355 = sadd.s32 %s354, 1
      %s356 = scalar_select %p353, %s354, %s355
      %p359 = pneg %p353
      %p360 = scmp.eq.s32.totalorder %s22, 2
      %p361 = por %p359, %p360
      %p362 = scmp.ne.s32.totalorder %s354, %s357
      %p363 = scmp.eq.s32.totalorder %s22, 0
      %p364 = por %p362, %p363
      %p365 = scmp.ne.s32.totalorder %s354, %s357
      %p366 = scmp.eq.s32.totalorder %s27, 2
      %p367 = por %p365, %p366
      %p368 = scmp.ne.s32.totalorder %s357, %s358
      %p369 = scmp.eq.s32.totalorder %s27, 0
      %p370 = por %p368, %p369
      %p371 = scmp.ne.s32.totalorder %s357, %s358
      %p372 = scmp.eq.s32.totalorder %s28, 2
      %p373 = por %p371, %p372
      %p375 = scmp.ne.s32.totalorder %s358, %s374
      %p376 = scmp.eq.s32.totalorder %s28, 0
      %p377 = por %p375, %p376
      %p378 = scmp.le.s32.totalorder 1, %s22
      %p379 = scmp.lt.s32.totalorder %s22, 4
      %p380 = pnand %p378, %p379
      %p381 = pneg %p380
      // Predicated region
      $region9: #{prednet_forward.1} parent=5 // pred_check
        _
      $region10: #{prednet_forward.1} parent=5 // pred_check_branch
        %383 = sbr.rel (%p380) target = $region12
      $region11: #{prednet_forward.1} parent=5 // pred_region
        %s384 = ssub.s32 %s22, 1
        // Predicated region
        $region13: #{prednet_forward.1} parent=11 // pred_check
          %p385 = pneg %p71
        $region14: #{prednet_forward.1} parent=11 // pred_check_branch
          %387 = sbr.rel (%p385) target = $region16
        $region15: #{prednet_forward.1} parent=11 // pred_region
          _
        $region16: #{prednet_forward.1} parent=11 // pred_fallthru
          _
        // Predicated region
        $region17: #{prednet_forward.1} parent=11 // pred_check
          %p388 = pneg %p92
        $region18: #{prednet_forward.1} parent=11 // pred_check_branch
          %390 = sbr.rel (%p388) target = $region20
        $region19: #{prednet_forward.1} parent=11 // pred_region
          _
        $region20: #{prednet_forward.1} parent=11 // pred_fallthru
          _
        // Predicated region
        $region21: #{prednet_forward.1} parent=11 // pred_check
          %p391 = pneg %p113
        $region22: #{prednet_forward.1} parent=11 // pred_check_branch
          %393 = sbr.rel (%p391) target = $region24
        $region23: #{prednet_forward.1} parent=11 // pred_region
          _
        $region24: #{prednet_forward.1} parent=11 // pred_fallthru
          _
        // Predicated region
        $region25: #{prednet_forward.1} parent=11 // pred_check
          %p394 = pneg %p134
        $region26: #{prednet_forward.1} parent=11 // pred_check_branch
          %396 = sbr.rel (%p394) target = $region28
        $region27: #{prednet_forward.1} parent=11 // pred_region
          _
        $region28: #{prednet_forward.1} parent=11 // pred_fallthru
          _
        // Predicated region
        $region29: #{prednet_forward.1} parent=11 // pred_check
          %p397 = pneg %p155
        $region30: #{prednet_forward.1} parent=11 // pred_check_branch
          %399 = sbr.rel (%p397) target = $region32
        $region31: #{prednet_forward.1} parent=11 // pred_region
          _
        $region32: #{prednet_forward.1} parent=11 // pred_fallthru
          _
        // Predicated region
        $region33: #{prednet_forward.1} parent=11 // pred_check
          %p400 = pneg %p176
        $region34: #{prednet_forward.1} parent=11 // pred_check_branch
          %402 = sbr.rel (%p400) target = $region36
        $region35: #{prednet_forward.1} parent=11 // pred_region
          _
        $region36: #{prednet_forward.1} parent=11 // pred_fallthru
          _
        // Predicated region
        $region37: #{prednet_forward.1} parent=11 // pred_check
          %p403 = pneg %p197
        $region38: #{prednet_forward.1} parent=11 // pred_check_branch
          %405 = sbr.rel (%p403) target = $region40
        $region39: #{prednet_forward.1} parent=11 // pred_region
          _
        $region40: #{prednet_forward.1} parent=11 // pred_fallthru
          _
        // Predicated region
        $region41: #{prednet_forward.1} parent=11 // pred_check
          %p406 = pneg %p218
        $region42: #{prednet_forward.1} parent=11 // pred_check_branch
          %408 = sbr.rel (%p406) target = $region44
        $region43: #{prednet_forward.1} parent=11 // pred_region
          _
        $region44: #{prednet_forward.1} parent=11 // pred_fallthru
          _
        // Predicated region
        $region45: #{prednet_forward.1} parent=11 // pred_check
          %p409 = pneg %p239
        $region46: #{prednet_forward.1} parent=11 // pred_check_branch
          %411 = sbr.rel (%p409) target = $region48
        $region47: #{prednet_forward.1} parent=11 // pred_region
          _
        $region48: #{prednet_forward.1} parent=11 // pred_fallthru
          _
        // Predicated region
        $region49: #{prednet_forward.1} parent=11 // pred_check
          %p412 = pneg %p260
        $region50: #{prednet_forward.1} parent=11 // pred_check_branch
          %414 = sbr.rel (%p412) target = $region52
        $region51: #{prednet_forward.1} parent=11 // pred_region
          _
        $region52: #{prednet_forward.1} parent=11 // pred_fallthru
          _
        // Predicated region
        $region53: #{prednet_forward.1} parent=11 // pred_check
          %p415 = pneg %p281
        $region54: #{prednet_forward.1} parent=11 // pred_check_branch
          %417 = sbr.rel (%p415) target = $region56
        $region55: #{prednet_forward.1} parent=11 // pred_region
          _
        $region56: #{prednet_forward.1} parent=11 // pred_fallthru
          _
        // Predicated region
        $region57: #{prednet_forward.1} parent=11 // pred_check
          %p418 = pneg %p302
        $region58: #{prednet_forward.1} parent=11 // pred_check_branch
          %420 = sbr.rel (%p418) target = $region60
        $region59: #{prednet_forward.1} parent=11 // pred_region
          _
        $region60: #{prednet_forward.1} parent=11 // pred_fallthru
          _
        // Predicated region
        $region61: #{prednet_forward.1} parent=11 // pred_check
          %p421 = pneg %p323
        $region62: #{prednet_forward.1} parent=11 // pred_check_branch
          %423 = sbr.rel (%p421) target = $region64
        $region63: #{prednet_forward.1} parent=11 // pred_region
          _
        $region64: #{prednet_forward.1} parent=11 // pred_fallthru
          _
        // Predicated region
        $region65: #{prednet_forward.1} parent=11 // pred_check
          %p424 = pneg %p344
        $region66: #{prednet_forward.1} parent=11 // pred_check_branch
          %426 = sbr.rel (%p424) target = $region68
        $region67: #{prednet_forward.1} parent=11 // pred_region
          %428 = vsyncadd [#allocation10], 0
          %s429 = sshll.u32 %s14, 4
          %s430 = int_to_ptr.hbm [resolvable:$true] %s429
          %s431 = sshll.u32 [#allocation9], 4
          %s432 = int_to_ptr.vmem [resolvable:$true] %s431
          %437 = dma.hbm_to_vmem [thread:$0]  %s430, 32768, %s432, [#allocation10], 128, 128, 8
        $region68: #{prednet_forward.1} parent=11 // pred_fallthru
          _
      $region12: #{prednet_forward.1} parent=5 // pred_fallthru
        _
      %p438 = scmp.lt.s32.totalorder %s22, 3
      // Predicated region
      $region69: #{prednet_forward.1} parent=5 // pred_check
        %p439 = pneg %p438
      $region70: #{prednet_forward.1} parent=5 // pred_check_branch
        %441 = sbr.rel (%p439) target = $region72
      $region71: #{prednet_forward.1} parent=5 // pred_region
        // Predicated region
        $region73: #{prednet_forward.1} parent=71 // pred_check
          %p442 = pneg %p44
        $region74: #{prednet_forward.1} parent=71 // pred_check_branch
          %444 = sbr.rel (%p442) target = $region76
        $region75: #{prednet_forward.1} parent=71 // pred_region
          %s445 = sadd.s32 %s22, 1
          %p446 = scmp.lt.s32.totalorder %s445, 3
          %s447 = scalar_select %p446, %s445, 3
          %s448 = smul.addr %s447, 4
          %s449 = smul.addr %s448, 4
          %s450 = scalar_lea.vmem %s0, %s449
          %s451 = sadd.s32 %s22, 1
        $region76: #{prednet_forward.1} parent=71 // pred_fallthru
          _
      $region72: #{prednet_forward.1} parent=5 // pred_fallthru
        _
      %p452 = scmp.le.s32.totalorder 1, %s22
      %p453 = scmp.lt.s32.totalorder %s22, 4
      %p454 = pnand %p452, %p453
      %p455 = pneg %p454
      // Predicated region
      $region77: #{prednet_forward.1} parent=5 // pred_check
        _
      $region78: #{prednet_forward.1} parent=5 // pred_check_branch
        %457 = sbr.rel (%p454) target = $region80
      $region79: #{prednet_forward.1} parent=5 // pred_region
        %s458 = ssub.s32 %s22, 1
        // Predicated region
        $region81: #{prednet_forward.1} parent=79 // pred_check
          %p459 = pneg %p344
        $region82: #{prednet_forward.1} parent=79 // pred_check_branch
          %461 = sbr.rel (%p459) target = $region84
        $region83: #{prednet_forward.1} parent=79 // pred_region
          %463 = dma.done [#allocation10], 32768
        $region84: #{prednet_forward.1} parent=79 // pred_fallthru
          _
        %s464 = sadd.s32 %s27, 1
        %p465 = scmp.lt.s32.totalorder %s464, 3
        %s466 = scalar_select %p465, %s464, 3
        %s467 = smul.addr %s466, 4
        %s468 = smul.addr %s467, 4
        %s469 = scalar_lea.vmem %s0, %s468
        %p470 = pneg %p50
        %p471 = pneg %p47
        %p472 = pneg %p71
        %p473 = pneg %p68
        %p474 = pneg %p92
        %p475 = pneg %p89
        %p476 = pneg %p113
        %p477 = pneg %p110
        %p478 = pneg %p134
        %p479 = pneg %p131
        %p480 = pneg %p155
        %p481 = pneg %p152
        %p482 = pneg %p176
        %p483 = pneg %p173
        %p484 = pneg %p197
        %p485 = pneg %p194
        %p486 = pneg %p218
        %p487 = pneg %p215
        %p488 = pneg %p239
        %p489 = pneg %p236
        %p490 = pneg %p260
        %p491 = pneg %p257
        %p492 = pneg %p281
        %p493 = pneg %p278
        %p494 = pneg %p302
        %p495 = pneg %p299
        %p496 = pneg %p323
        %p497 = pneg %p320
        %p498 = pneg %p344
        %p499 = pneg %p341
        %p500 = pneg %p370
        %p501 = pneg %p367
        %p502 = scmp.lt.s32.totalorder %s27, 2
        %s503 = scalar_select %p502, %s27, 2
        %s504 = smul.addr %s503, 4
        %s505 = smul.addr %s504, 4
        %s506 = scalar_lea.vmem %s15, %s505
        %s507 = sadd.s32 %s27, 1
        %p508 = scmp.lt.s32.totalorder %s507, 3
        %s509 = scalar_select %p508, %s507, 3
        %s510 = smul.addr %s509, 4
        %s511 = smul.addr %s510, 4
        %s512 = scalar_lea.vmem %s0, %s511
        %s513 = sadd.s32 %s27, 1
        %p514 = scmp.lt.s32.totalorder %s27, 2
        %s515 = scalar_select %p514, %s27, 2
        %s516 = smul.addr %s515, 4
        %s517 = smul.addr %s516, 4
        %s518 = scalar_lea.vmem %s15, %s517
        %p519 = scmp.eq.s32.totalorder %s27, 0
        // Predicated region
        $region85: #{prednet_forward.1} parent=79 // pred_check
          %p520 = pneg %p519
        $region86: #{prednet_forward.1} parent=79 // pred_check_branch
          %522 = sbr.rel (%p520) target = $region88
        $region87: #{prednet_forward.1} parent=79 // pred_region
          %523 = vst [vmem:[#allocation2] sm:$0xff] 0.0
          %524 = vst [vmem:[#allocation2 + $0x8] sm:$0xff] 0.0
          %525 = vst [vmem:[#allocation4] sm:$0xff] 0.0
          %526 = vst [vmem:[#allocation4 + $0x8] sm:$0xff] 0.0
          %527 = vst [vmem:[#allocation6] sm:$0xff] 0.0
          %528 = vst [vmem:[#allocation6 + $0x8] sm:$0xff] 0.0
          %529 = vst [vmem:[#allocation6 + $0x10] sm:$0xff] 0.0
          %530 = vst [vmem:[#allocation6 + $0x18] sm:$0xff] 0.0
          %531 = vst [vmem:[#allocation3] sm:$0xff] 0.0
          %532 = vst [vmem:[#allocation5] sm:$0xff] 0.0
          %533 = vst [vmem:[#allocation7] sm:$0xff] 0.0
          %534 = vst [vmem:[#allocation7 + $0x8] sm:$0xff] 0.0
        $region88: #{prednet_forward.1} parent=79 // pred_fallthru
          _
        %v535 = vld [vmem:[#allocation3] sm:$0xff]
        %v536 = vld [vmem:[#allocation7] sm:$0xff]
        %v537 = vld [vmem:[#allocation7 + $0x8] sm:$0xff]
        %v538 = vld [vmem:[#allocation5] sm:$0xff]
        %542 = vrot.lane.b32.xlu0 %v535, 9
        %v543 = vpop.permute.xlu0 %542
        %544 = vrot.lane.b32.xlu0 %v536, 9
        %v545 = vpop.permute.xlu0 %544
        %546 = vrot.lane.b32.xlu0 %v537, 9
        %v547 = vpop.permute.xlu0 %546
        %vm551 = vcmask 72704
        %v552 = vsel %vm551, 0.0, %v543
        %v553 = vsel %vm551, 0.0, %v545
        %v554 = vsel %vm551, 0.0, %v547
        %v555 = vsel %vm551, %v543, 0.0
        %v556 = vsel %vm551, %v545, 0.0
        %v557 = vsel %vm551, %v547, 0.0
        %v558 = vld [vmem:[%s12] sm:$0x1]
        %v560 = vperm.slane %v558, 0
        %v562 = vmul.f32 %v552, %v560
        %v563 = vmul.f32 %v553, %v560
        %v564 = vmul.f32 %v554, %v560
        %v565 = vld [vmem:[%s2] sm:$0xff]
        %v566 = vld [vmem:[%s2 + $0x8] sm:$0xff]
        %v567 = vld [vmem:[%s2 + $0x10] sm:$0xff]
        %v568 = vld [vmem:[%s2 + $0x18] sm:$0xff]
        %s569 = scalar_lea.vmem %s12, 1
        %v570 = vld [vmem:[%s569] sm:$0x1]
        %v572 = vperm.slane %v570, 0
        %573 = vrot.lane.b32.xlu0 %v572, 1
        %v574 = vpop.permute.xlu0 %573
        %v576 = vmul.f32 %v552, %v574
        %v577 = vmul.f32 %v555, %v574
        %v578 = vmul.f32 %v553, %v574
        %v579 = vmul.f32 %v556, %v574
        %v580 = vmul.f32 %v554, %v574
        %v581 = vmul.f32 %v557, %v574
        %s582 = scalar_lea.vmem %s2, 32
        %v583 = vld [vmem:[%s582] sm:$0xff]
        %v584 = vld [vmem:[%s582 + $0x8] sm:$0xff]
        %v585 = vld [vmem:[%s582 + $0x10] sm:$0xff]
        %v586 = vld [vmem:[%s582 + $0x18] sm:$0xff]
        %593 = vrot.lane.b32.xlu0 %v576, 127
        %v594 = vpop.permute.xlu0 %593
        %595 = vrot.lane.b32.xlu0 %v577, 127
        %v596 = vpop.permute.xlu0 %595
        %597 = vrot.lane.b32.xlu0 %v578, 127
        %v598 = vpop.permute.xlu0 %597
        %599 = vrot.lane.b32.xlu0 %v579, 127
        %v600 = vpop.permute.xlu0 %599
        %601 = vrot.lane.b32.xlu0 %v580, 127
        %v602 = vpop.permute.xlu0 %601
        %603 = vrot.lane.b32.xlu0 %v581, 127
        %v604 = vpop.permute.xlu0 %603
        %vm605 = vcmask 1039360
        %v606 = vsel %vm605, %v594, %v596
        %v607 = vsel %vm605, %v598, %v600
        %v608 = vsel %vm605, %v602, %v604
        %vm612 = vcmask 195584
        %v614 = vsel %vm612, %v583, 0
        %v617 = vsel %vm612, %v584, 0
        %v620 = vsel %vm612, %v585, 0
        %v623 = vsel %vm612, %v586, 0
        %625 = vmatpush.msra.mxu0 0.0
        %626 = vmatpush.msra.mxu0 0.0
        %627 = vmatpush.msra.mxu0 0.0
        %628 = vmatpush.msra.mxu0 0.0
        %629 = vmatpush.msra.mxu0 0.0
        %630 = vmatpush.msra.mxu0 0.0
        %631 = vmatpush.msra.mxu0 0.0
        %632 = vmatpush.msra.mxu0 0.0
        %633 = vmatpush.msra.mxu0 0.0
        %634 = vmatpush.msra.mxu0 0.0
        %635 = vmatpush.msra.mxu0 0.0
        %636 = vmatpush.msra.mxu0 0.0
        %637 = vmatpush.msra.mxu0 0.0
        %638 = vmatpush.msra.mxu0 %v608
        %639 = vmatpush.msra.mxu0 %v607
        %640 = vmatpush.msra.mxu0 %v606
        %641 = vmatmul.f32.gmra.mxu0 %v614
        %v642 = vpop.f32.mrf.mxu0
        %v643 = vadd.f32 0.0, %v642
        %644 = vmatmul.f32.gmra.mxu0 %v617
        %v645 = vpop.f32.mrf.mxu0
        %v646 = vadd.f32 0.0, %v645
        %647 = vmatmul.f32.gmra.mxu0 %v620
        %v648 = vpop.f32.mrf.mxu0
        %v649 = vadd.f32 0.0, %v648
        %650 = vmatmul.f32.gmra.mxu0 %v623
        %v651 = vpop.f32.mrf.mxu0
        %v652 = vadd.f32 0.0, %v651
        %653 = vdwg.mxu0
        %v655 = vsel %vm612, %v565, 0
        %v658 = vsel %vm612, %v566, 0
        %v661 = vsel %vm612, %v567, 0
        %v664 = vsel %vm612, %v568, 0
        %666 = vmatpush.msra.mxu0 0.0
        %667 = vmatpush.msra.mxu0 0.0
        %668 = vmatpush.msra.mxu0 0.0
        %669 = vmatpush.msra.mxu0 0.0
        %670 = vmatpush.msra.mxu0 0.0
        %671 = vmatpush.msra.mxu0 0.0
        %672 = vmatpush.msra.mxu0 0.0
        %673 = vmatpush.msra.mxu0 0.0
        %674 = vmatpush.msra.mxu0 0.0
        %675 = vmatpush.msra.mxu0 0.0
        %676 = vmatpush.msra.mxu0 0.0
        %677 = vmatpush.msra.mxu0 0.0
        %678 = vmatpush.msra.mxu0 0.0
        %679 = vmatpush.msra.mxu0 %v564
        %680 = vmatpush.msra.mxu0 %v563
        %681 = vmatpush.msra.mxu0 %v562
        %682 = vmatmul.f32.gmra.mxu0 %v655
        %v683 = vpop.f32.mrf.mxu0
        %v684 = vadd.f32 %v643, %v683
        %685 = vmatmul.f32.gmra.mxu0 %v658
        %v686 = vpop.f32.mrf.mxu0
        %v687 = vadd.f32 %v646, %v686
        %688 = vmatmul.f32.gmra.mxu0 %v661
        %v689 = vpop.f32.mrf.mxu0
        %v690 = vadd.f32 %v649, %v689
        %691 = vmatmul.f32.gmra.mxu0 %v664
        %v692 = vpop.f32.mrf.mxu0
        %v693 = vadd.f32 %v652, %v692
        %694 = vdwg.mxu0
        %s695 = scalar_lea.vmem %s12, 2
        %v696 = vld [vmem:[%s695] sm:$0x1]
        %v698 = vperm.slane %v696, 0
        %699 = vrot.lane.b32.xlu0 %v698, 2
        %v700 = vpop.permute.xlu0 %699
        %v702 = vmul.f32 %v552, %v700
        %v703 = vmul.f32 %v555, %v700
        %v704 = vmul.f32 %v553, %v700
        %v705 = vmul.f32 %v556, %v700
        %v706 = vmul.f32 %v554, %v700
        %v707 = vmul.f32 %v557, %v700
        %s708 = scalar_lea.vmem %s2, 64
        %v709 = vld [vmem:[%s708] sm:$0xff]
        %v710 = vld [vmem:[%s708 + $0x8] sm:$0xff]
        %v711 = vld [vmem:[%s708 + $0x10] sm:$0xff]
        %v712 = vld [vmem:[%s708 + $0x18] sm:$0xff]
        %719 = vrot.lane.b32.xlu0 %v702, 126
        %v720 = vpop.permute.xlu0 %719
        %721 = vrot.lane.b32.xlu0 %v703, 126
        %v722 = vpop.permute.xlu0 %721
        %723 = vrot.lane.b32.xlu0 %v704, 126
        %v724 = vpop.permute.xlu0 %723
        %725 = vrot.lane.b32.xlu0 %v705, 126
        %v726 = vpop.permute.xlu0 %725
        %727 = vrot.lane.b32.xlu0 %v706, 126
        %v728 = vpop.permute.xlu0 %727
        %729 = vrot.lane.b32.xlu0 %v707, 126
        %v730 = vpop.permute.xlu0 %729
        %vm731 = vcmask 1031168
        %v732 = vsel %vm731, %v720, %v722
        %v733 = vsel %vm731, %v724, %v726
        %v734 = vsel %vm731, %v728, %v730
        %v739 = vsel %vm612, %v709, 0
        %v742 = vsel %vm612, %v710, 0
        %v745 = vsel %vm612, %v711, 0
        %v748 = vsel %vm612, %v712, 0
        %750 = vmatpush.msra.mxu0 0.0
        %751 = vmatpush.msra.mxu0 0.0
        %752 = vmatpush.msra.mxu0 0.0
        %753 = vmatpush.msra.mxu0 0.0
        %754 = vmatpush.msra.mxu0 0.0
        %755 = vmatpush.msra.mxu0 0.0
        %756 = vmatpush.msra.mxu0 0.0
        %757 = vmatpush.msra.mxu0 0.0
        %758 = vmatpush.msra.mxu0 0.0
        %759 = vmatpush.msra.mxu0 0.0
        %760 = vmatpush.msra.mxu0 0.0
        %761 = vmatpush.msra.mxu0 0.0
        %762 = vmatpush.msra.mxu0 0.0
        %763 = vmatpush.msra.mxu0 %v734
        %764 = vmatpush.msra.mxu0 %v733
        %765 = vmatpush.msra.mxu0 %v732
        %766 = vmatmul.f32.gmra.mxu0 %v739
        %v767 = vpop.f32.mrf.mxu0
        %v768 = vadd.f32 0.0, %v767
        %769 = vmatmul.f32.gmra.mxu0 %v742
        %v770 = vpop.f32.mrf.mxu0
        %v771 = vadd.f32 0.0, %v770
        %772 = vmatmul.f32.gmra.mxu0 %v745
        %v773 = vpop.f32.mrf.mxu0
        %v774 = vadd.f32 0.0, %v773
        %775 = vmatmul.f32.gmra.mxu0 %v748
        %v776 = vpop.f32.mrf.mxu0
        %v777 = vadd.f32 0.0, %v776
        %778 = vdwg.mxu0
        %v779 = vadd.f32 %v684, %v768
        %v780 = vadd.f32 %v687, %v771
        %v781 = vadd.f32 %v690, %v774
        %v782 = vadd.f32 %v693, %v777
        %s783 = scalar_lea.vmem %s12, 3
        %v784 = vld [vmem:[%s783] sm:$0x1]
        %v786 = vperm.slane %v784, 0
        %787 = vrot.lane.b32.xlu0 %v786, 8
        %v788 = vpop.permute.xlu0 %787
        %v790 = vmul.f32 %v552, %v788
        %v791 = vmul.f32 %v555, %v788
        %v792 = vmul.f32 %v553, %v788
        %v793 = vmul.f32 %v556, %v788
        %v794 = vmul.f32 %v554, %v788
        %v795 = vmul.f32 %v557, %v788
        %s796 = scalar_lea.vmem %s2, 96
        %v797 = vld [vmem:[%s796] sm:$0xff]
        %v798 = vld [vmem:[%s796 + $0x8] sm:$0xff]
        %v799 = vld [vmem:[%s796 + $0x10] sm:$0xff]
        %v800 = vld [vmem:[%s796 + $0x18] sm:$0xff]
        %807 = vrot.lane.b32.xlu0 %v790, 120
        %v808 = vpop.permute.xlu0 %807
        %809 = vrot.lane.b32.xlu0 %v791, 120
        %v810 = vpop.permute.xlu0 %809
        %811 = vrot.lane.b32.xlu0 %v792, 120
        %v812 = vpop.permute.xlu0 %811
        %813 = vrot.lane.b32.xlu0 %v793, 120
        %v814 = vpop.permute.xlu0 %813
        %815 = vrot.lane.b32.xlu0 %v794, 120
        %v816 = vpop.permute.xlu0 %815
        %817 = vrot.lane.b32.xlu0 %v795, 120
        %v818 = vpop.permute.xlu0 %817
        %vm819 = vcmask 982016
        %v820 = vsel %vm819, %v808, %v810
        %v821 = vsel %vm819, %v812, %v814
        %v822 = vsel %vm819, %v816, %v818
        %v827 = vsel %vm612, %v797, 0
        %v830 = vsel %vm612, %v798, 0
        %v833 = vsel %vm612, %v799, 0
        %v836 = vsel %vm612, %v800, 0
        %838 = vmatpush.msra.mxu0 0.0
        %839 = vmatpush.msra.mxu0 0.0
        %840 = vmatpush.msra.mxu0 0.0
        %841 = vmatpush.msra.mxu0 0.0
        %842 = vmatpush.msra.mxu0 0.0
        %843 = vmatpush.msra.mxu0 0.0
        %844 = vmatpush.msra.mxu0 0.0
        %845 = vmatpush.msra.mxu0 0.0
        %846 = vmatpush.msra.mxu0 0.0
        %847 = vmatpush.msra.mxu0 0.0
        %848 = vmatpush.msra.mxu0 0.0
        %849 = vmatpush.msra.mxu0 0.0
        %850 = vmatpush.msra.mxu0 0.0
        %851 = vmatpush.msra.mxu0 %v822
        %852 = vmatpush.msra.mxu0 %v821
        %853 = vmatpush.msra.mxu0 %v820
        %854 = vmatmul.f32.gmra.mxu0 %v827
        %v855 = vpop.f32.mrf.mxu0
        %v856 = vadd.f32 0.0, %v855
        %857 = vmatmul.f32.gmra.mxu0 %v830
        %v858 = vpop.f32.mrf.mxu0
        %v859 = vadd.f32 0.0, %v858
        %860 = vmatmul.f32.gmra.mxu0 %v833
        %v861 = vpop.f32.mrf.mxu0
        %v862 = vadd.f32 0.0, %v861
        %863 = vmatmul.f32.gmra.mxu0 %v836
        %v864 = vpop.f32.mrf.mxu0
        %v865 = vadd.f32 0.0, %v864
        %866 = vdwg.mxu0
        %v867 = vadd.f32 %v779, %v856
        %v868 = vadd.f32 %v780, %v859
        %v869 = vadd.f32 %v781, %v862
        %v870 = vadd.f32 %v782, %v865
        %s871 = scalar_lea.vmem %s2, 128
        %v872 = vld [vmem:[%s871] sm:$0xff]
        %v873 = vld [vmem:[%s871 + $0x8] sm:$0xff]
        %v874 = vld [vmem:[%s871 + $0x10] sm:$0xff]
        %v875 = vld [vmem:[%s871 + $0x18] sm:$0xff]
        %882 = vrot.lane.b32.xlu0 %v552, 119
        %v883 = vpop.permute.xlu0 %882
        %884 = vrot.lane.b32.xlu0 %v555, 119
        %v885 = vpop.permute.xlu0 %884
        %886 = vrot.lane.b32.xlu0 %v553, 119
        %v887 = vpop.permute.xlu0 %886
        %888 = vrot.lane.b32.xlu0 %v556, 119
        %v889 = vpop.permute.xlu0 %888
        %890 = vrot.lane.b32.xlu0 %v554, 119
        %v891 = vpop.permute.xlu0 %890
        %892 = vrot.lane.b32.xlu0 %v557, 119
        %v893 = vpop.permute.xlu0 %892
        %vm894 = vcmask 973824
        %v895 = vsel %vm894, %v883, %v885
        %v896 = vsel %vm894, %v887, %v889
        %v897 = vsel %vm894, %v891, %v893
        %v902 = vsel %vm612, %v872, 0
        %v905 = vsel %vm612, %v873, 0
        %v908 = vsel %vm612, %v874, 0
        %v911 = vsel %vm612, %v875, 0
        %913 = vmatpush.msra.mxu0 0.0
        %914 = vmatpush.msra.mxu0 0.0
        %915 = vmatpush.msra.mxu0 0.0
        %916 = vmatpush.msra.mxu0 0.0
        %917 = vmatpush.msra.mxu0 0.0
        %918 = vmatpush.msra.mxu0 0.0
        %919 = vmatpush.msra.mxu0 0.0
        %920 = vmatpush.msra.mxu0 0.0
        %921 = vmatpush.msra.mxu0 0.0
        %922 = vmatpush.msra.mxu0 0.0
        %923 = vmatpush.msra.mxu0 0.0
        %924 = vmatpush.msra.mxu0 0.0
        %925 = vmatpush.msra.mxu0 0.0
        %926 = vmatpush.msra.mxu0 %v897
        %927 = vmatpush.msra.mxu0 %v896
        %928 = vmatpush.msra.mxu0 %v895
        %929 = vmatmul.f32.gmra.mxu0 %v902
        %v930 = vpop.f32.mrf.mxu0
        %v931 = vadd.f32 0.0, %v930
        %932 = vmatmul.f32.gmra.mxu0 %v905
        %v933 = vpop.f32.mrf.mxu0
        %v934 = vadd.f32 0.0, %v933
        %935 = vmatmul.f32.gmra.mxu0 %v908
        %v936 = vpop.f32.mrf.mxu0
        %v937 = vadd.f32 0.0, %v936
        %938 = vmatmul.f32.gmra.mxu0 %v911
        %v939 = vpop.f32.mrf.mxu0
        %v940 = vadd.f32 0.0, %v939
        %941 = vdwg.mxu0
        %v942 = vadd.f32 %v867, %v931
        %v943 = vadd.f32 %v868, %v934
        %v944 = vadd.f32 %v869, %v937
        %v945 = vadd.f32 %v870, %v940
        %s946 = scalar_lea.vmem %s12, 5
        %v947 = vld [vmem:[%s946] sm:$0x1]
        %v949 = vperm.slane %v947, 0
        %950 = vrot.lane.b32.xlu0 %v949, 10
        %v951 = vpop.permute.xlu0 %950
        %v953 = vmul.f32 %v552, %v951
        %v954 = vmul.f32 %v555, %v951
        %v955 = vmul.f32 %v553, %v951
        %v956 = vmul.f32 %v556, %v951
        %v957 = vmul.f32 %v554, %v951
        %v958 = vmul.f32 %v557, %v951
        %s959 = scalar_lea.vmem %s2, 160
        %v960 = vld [vmem:[%s959] sm:$0xff]
        %v961 = vld [vmem:[%s959 + $0x8] sm:$0xff]
        %v962 = vld [vmem:[%s959 + $0x10] sm:$0xff]
        %v963 = vld [vmem:[%s959 + $0x18] sm:$0xff]
        %970 = vrot.lane.b32.xlu0 %v953, 118
        %v971 = vpop.permute.xlu0 %970
        %972 = vrot.lane.b32.xlu0 %v954, 118
        %v973 = vpop.permute.xlu0 %972
        %974 = vrot.lane.b32.xlu0 %v955, 118
        %v975 = vpop.permute.xlu0 %974
        %976 = vrot.lane.b32.xlu0 %v956, 118
        %v977 = vpop.permute.xlu0 %976
        %978 = vrot.lane.b32.xlu0 %v957, 118
        %v979 = vpop.permute.xlu0 %978
        %980 = vrot.lane.b32.xlu0 %v958, 118
        %v981 = vpop.permute.xlu0 %980
        %vm982 = vcmask 965632
        %v983 = vsel %vm982, %v971, %v973
        %v984 = vsel %vm982, %v975, %v977
        %v985 = vsel %vm982, %v979, %v981
        %v990 = vsel %vm612, %v960, 0
        %v993 = vsel %vm612, %v961, 0
        %v996 = vsel %vm612, %v962, 0
        %v999 = vsel %vm612, %v963, 0
        %1001 = vmatpush.msra.mxu0 0.0
        %1002 = vmatpush.msra.mxu0 0.0
        %1003 = vmatpush.msra.mxu0 0.0
        %1004 = vmatpush.msra.mxu0 0.0
        %1005 = vmatpush.msra.mxu0 0.0
        %1006 = vmatpush.msra.mxu0 0.0
        %1007 = vmatpush.msra.mxu0 0.0
        %1008 = vmatpush.msra.mxu0 0.0
        %1009 = vmatpush.msra.mxu0 0.0
        %1010 = vmatpush.msra.mxu0 0.0
        %1011 = vmatpush.msra.mxu0 0.0
        %1012 = vmatpush.msra.mxu0 0.0
        %1013 = vmatpush.msra.mxu0 0.0
        %1014 = vmatpush.msra.mxu0 %v985
        %1015 = vmatpush.msra.mxu0 %v984
        %1016 = vmatpush.msra.mxu0 %v983
        %1017 = vmatmul.f32.gmra.mxu0 %v990
        %v1018 = vpop.f32.mrf.mxu0
        %v1019 = vadd.f32 0.0, %v1018
        %1020 = vmatmul.f32.gmra.mxu0 %v993
        %v1021 = vpop.f32.mrf.mxu0
        %v1022 = vadd.f32 0.0, %v1021
        %1023 = vmatmul.f32.gmra.mxu0 %v996
        %v1024 = vpop.f32.mrf.mxu0
        %v1025 = vadd.f32 0.0, %v1024
        %1026 = vmatmul.f32.gmra.mxu0 %v999
        %v1027 = vpop.f32.mrf.mxu0
        %v1028 = vadd.f32 0.0, %v1027
        %1029 = vdwg.mxu0
        %v1030 = vadd.f32 %v942, %v1019
        %v1031 = vadd.f32 %v943, %v1022
        %v1032 = vadd.f32 %v944, %v1025
        %v1033 = vadd.f32 %v945, %v1028
        %s1034 = scalar_lea.vmem %s12, 6
        %v1035 = vld [vmem:[%s1034] sm:$0x1]
        %v1037 = vperm.slane %v1035, 0
        %1038 = vrot.lane.b32.xlu0 %v1037, 16
        %v1039 = vpop.permute.xlu0 %1038
        %v1041 = vmul.f32 %v552, %v1039
        %v1042 = vmul.f32 %v555, %v1039
        %v1043 = vmul.f32 %v553, %v1039
        %v1044 = vmul.f32 %v556, %v1039
        %v1045 = vmul.f32 %v554, %v1039
        %v1046 = vmul.f32 %v557, %v1039
        %s1047 = scalar_lea.vmem %s2, 192
        %v1048 = vld [vmem:[%s1047] sm:$0xff]
        %v1049 = vld [vmem:[%s1047 + $0x8] sm:$0xff]
        %v1050 = vld [vmem:[%s1047 + $0x10] sm:$0xff]
        %v1051 = vld [vmem:[%s1047 + $0x18] sm:$0xff]
        %1058 = vrot.lane.b32.xlu0 %v1041, 112
        %v1059 = vpop.permute.xlu0 %1058
        %1060 = vrot.lane.b32.xlu0 %v1042, 112
        %v1061 = vpop.permute.xlu0 %1060
        %1062 = vrot.lane.b32.xlu0 %v1043, 112
        %v1063 = vpop.permute.xlu0 %1062
        %1064 = vrot.lane.b32.xlu0 %v1044, 112
        %v1065 = vpop.permute.xlu0 %1064
        %1066 = vrot.lane.b32.xlu0 %v1045, 112
        %v1067 = vpop.permute.xlu0 %1066
        %1068 = vrot.lane.b32.xlu0 %v1046, 112
        %v1069 = vpop.permute.xlu0 %1068
        %vm1070 = vcmask 916480
        %v1071 = vsel %vm1070, %v1059, %v1061
        %v1072 = vsel %vm1070, %v1063, %v1065
        %v1073 = vsel %vm1070, %v1067, %v1069
        %v1078 = vsel %vm612, %v1048, 0
        %v1081 = vsel %vm612, %v1049, 0
        %v1084 = vsel %vm612, %v1050, 0
        %v1087 = vsel %vm612, %v1051, 0
        %1089 = vmatpush.msra.mxu0 0.0
        %1090 = vmatpush.msra.mxu0 0.0
        %1091 = vmatpush.msra.mxu0 0.0
        %1092 = vmatpush.msra.mxu0 0.0
        %1093 = vmatpush.msra.mxu0 0.0
        %1094 = vmatpush.msra.mxu0 0.0
        %1095 = vmatpush.msra.mxu0 0.0
        %1096 = vmatpush.msra.mxu0 0.0
        %1097 = vmatpush.msra.mxu0 0.0
        %1098 = vmatpush.msra.mxu0 0.0
        %1099 = vmatpush.msra.mxu0 0.0
        %1100 = vmatpush.msra.mxu0 0.0
        %1101 = vmatpush.msra.mxu0 0.0
        %1102 = vmatpush.msra.mxu0 %v1073
        %1103 = vmatpush.msra.mxu0 %v1072
        %1104 = vmatpush.msra.mxu0 %v1071
        %1105 = vmatmul.f32.gmra.mxu0 %v1078
        %v1106 = vpop.f32.mrf.mxu0
        %v1107 = vadd.f32 0.0, %v1106
        %1108 = vmatmul.f32.gmra.mxu0 %v1081
        %v1109 = vpop.f32.mrf.mxu0
        %v1110 = vadd.f32 0.0, %v1109
        %1111 = vmatmul.f32.gmra.mxu0 %v1084
        %v1112 = vpop.f32.mrf.mxu0
        %v1113 = vadd.f32 0.0, %v1112
        %1114 = vmatmul.f32.gmra.mxu0 %v1087
        %v1115 = vpop.f32.mrf.mxu0
        %v1116 = vadd.f32 0.0, %v1115
        %1117 = vdwg.mxu0
        %v1118 = vadd.f32 %v1030, %v1107
        %v1119 = vadd.f32 %v1031, %v1110
        %v1120 = vadd.f32 %v1032, %v1113
        %v1121 = vadd.f32 %v1033, %v1116
        %s1122 = scalar_lea.vmem %s12, 7
        %v1123 = vld [vmem:[%s1122] sm:$0x1]
        %v1125 = vperm.slane %v1123, 0
        %1126 = vrot.lane.b32.xlu0 %v1125, 17
        %v1127 = vpop.permute.xlu0 %1126
        %v1129 = vmul.f32 %v552, %v1127
        %v1130 = vmul.f32 %v555, %v1127
        %v1131 = vmul.f32 %v553, %v1127
        %v1132 = vmul.f32 %v556, %v1127
        %v1133 = vmul.f32 %v554, %v1127
        %v1134 = vmul.f32 %v557, %v1127
        %s1135 = scalar_lea.vmem %s2, 224
        %v1136 = vld [vmem:[%s1135] sm:$0xff]
        %v1137 = vld [vmem:[%s1135 + $0x8] sm:$0xff]
        %v1138 = vld [vmem:[%s1135 + $0x10] sm:$0xff]
        %v1139 = vld [vmem:[%s1135 + $0x18] sm:$0xff]
        %1146 = vrot.lane.b32.xlu0 %v1129, 111
        %v1147 = vpop.permute.xlu0 %1146
        %1148 = vrot.lane.b32.xlu0 %v1130, 111
        %v1149 = vpop.permute.xlu0 %1148
        %1150 = vrot.lane.b32.xlu0 %v1131, 111
        %v1151 = vpop.permute.xlu0 %1150
        %1152 = vrot.lane.b32.xlu0 %v1132, 111
        %v1153 = vpop.permute.xlu0 %1152
        %1154 = vrot.lane.b32.xlu0 %v1133, 111
        %v1155 = vpop.permute.xlu0 %1154
        %1156 = vrot.lane.b32.xlu0 %v1134, 111
        %v1157 = vpop.permute.xlu0 %1156
        %vm1158 = vcmask 908288
        %v1159 = vsel %vm1158, %v1147, %v1149
        %v1160 = vsel %vm1158, %v1151, %v1153
        %v1161 = vsel %vm1158, %v1155, %v1157
        %v1166 = vsel %vm612, %v1136, 0
        %v1169 = vsel %vm612, %v1137, 0
        %v1172 = vsel %vm612, %v1138, 0
        %v1175 = vsel %vm612, %v1139, 0
        %1177 = vmatpush.msra.mxu0 0.0
        %1178 = vmatpush.msra.mxu0 0.0
        %1179 = vmatpush.msra.mxu0 0.0
        %1180 = vmatpush.msra.mxu0 0.0
        %1181 = vmatpush.msra.mxu0 0.0
        %1182 = vmatpush.msra.mxu0 0.0
        %1183 = vmatpush.msra.mxu0 0.0
        %1184 = vmatpush.msra.mxu0 0.0
        %1185 = vmatpush.msra.mxu0 0.0
        %1186 = vmatpush.msra.mxu0 0.0
        %1187 = vmatpush.msra.mxu0 0.0
        %1188 = vmatpush.msra.mxu0 0.0
        %1189 = vmatpush.msra.mxu0 0.0
        %1190 = vmatpush.msra.mxu0 %v1161
        %1191 = vmatpush.msra.mxu0 %v1160
        %1192 = vmatpush.msra.mxu0 %v1159
        %1193 = vmatmul.f32.gmra.mxu0 %v1166
        %v1194 = vpop.f32.mrf.mxu0
        %v1195 = vadd.f32 0.0, %v1194
        %1196 = vmatmul.f32.gmra.mxu0 %v1169
        %v1197 = vpop.f32.mrf.mxu0
        %v1198 = vadd.f32 0.0, %v1197
        %1199 = vmatmul.f32.gmra.mxu0 %v1172
        %v1200 = vpop.f32.mrf.mxu0
        %v1201 = vadd.f32 0.0, %v1200
        %1202 = vmatmul.f32.gmra.mxu0 %v1175
        %v1203 = vpop.f32.mrf.mxu0
        %v1204 = vadd.f32 0.0, %v1203
        %1205 = vdwg.mxu0
        %v1206 = vadd.f32 %v1118, %v1195
        %v1207 = vadd.f32 %v1119, %v1198
        %v1208 = vadd.f32 %v1120, %v1201
        %v1209 = vadd.f32 %v1121, %v1204
        %s1210 = scalar_lea.vmem %s12, 8
        %v1211 = vld [vmem:[%s1210] sm:$0x1]
        %v1213 = vperm.slane %v1211, 0
        %1214 = vrot.lane.b32.xlu0 %v1213, 18
        %v1215 = vpop.permute.xlu0 %1214
        %v1217 = vmul.f32 %v552, %v1215
        %v1218 = vmul.f32 %v555, %v1215
        %v1219 = vmul.f32 %v553, %v1215
        %v1220 = vmul.f32 %v556, %v1215
        %v1221 = vmul.f32 %v554, %v1215
        %v1222 = vmul.f32 %v557, %v1215
        %s1223 = scalar_lea.vmem %s2, 256
        %v1224 = vld [vmem:[%s1223] sm:$0xff]
        %v1225 = vld [vmem:[%s1223 + $0x8] sm:$0xff]
        %v1226 = vld [vmem:[%s1223 + $0x10] sm:$0xff]
        %v1227 = vld [vmem:[%s1223 + $0x18] sm:$0xff]
        %1234 = vrot.lane.b32.xlu0 %v1217, 110
        %v1235 = vpop.permute.xlu0 %1234
        %1236 = vrot.lane.b32.xlu0 %v1218, 110
        %v1237 = vpop.permute.xlu0 %1236
        %1238 = vrot.lane.b32.xlu0 %v1219, 110
        %v1239 = vpop.permute.xlu0 %1238
        %1240 = vrot.lane.b32.xlu0 %v1220, 110
        %v1241 = vpop.permute.xlu0 %1240
        %1242 = vrot.lane.b32.xlu0 %v1221, 110
        %v1243 = vpop.permute.xlu0 %1242
        %1244 = vrot.lane.b32.xlu0 %v1222, 110
        %v1245 = vpop.permute.xlu0 %1244
        %vm1246 = vcmask 900096
        %v1247 = vsel %vm1246, %v1235, %v1237
        %v1248 = vsel %vm1246, %v1239, %v1241
        %v1249 = vsel %vm1246, %v1243, %v1245
        %v1254 = vsel %vm612, %v1224, 0
        %v1257 = vsel %vm612, %v1225, 0
        %v1260 = vsel %vm612, %v1226, 0
        %v1263 = vsel %vm612, %v1227, 0
        %1265 = vmatpush.msra.mxu0 0.0
        %1266 = vmatpush.msra.mxu0 0.0
        %1267 = vmatpush.msra.mxu0 0.0
        %1268 = vmatpush.msra.mxu0 0.0
        %1269 = vmatpush.msra.mxu0 0.0
        %1270 = vmatpush.msra.mxu0 0.0
        %1271 = vmatpush.msra.mxu0 0.0
        %1272 = vmatpush.msra.mxu0 0.0
        %1273 = vmatpush.msra.mxu0 0.0
        %1274 = vmatpush.msra.mxu0 0.0
        %1275 = vmatpush.msra.mxu0 0.0
        %1276 = vmatpush.msra.mxu0 0.0
        %1277 = vmatpush.msra.mxu0 0.0
        %1278 = vmatpush.msra.mxu0 %v1249
        %1279 = vmatpush.msra.mxu0 %v1248
        %1280 = vmatpush.msra.mxu0 %v1247
        %1281 = vmatmul.f32.gmra.mxu0 %v1254
        %v1282 = vpop.f32.mrf.mxu0
        %v1283 = vadd.f32 0.0, %v1282
        %1284 = vmatmul.f32.gmra.mxu0 %v1257
        %v1285 = vpop.f32.mrf.mxu0
        %v1286 = vadd.f32 0.0, %v1285
        %1287 = vmatmul.f32.gmra.mxu0 %v1260
        %v1288 = vpop.f32.mrf.mxu0
        %v1289 = vadd.f32 0.0, %v1288
        %1290 = vmatmul.f32.gmra.mxu0 %v1263
        %v1291 = vpop.f32.mrf.mxu0
        %v1292 = vadd.f32 0.0, %v1291
        %1293 = vdwg.mxu0
        %v1294 = vadd.f32 %v1206, %v1283
        %v1295 = vadd.f32 %v1207, %v1286
        %v1296 = vadd.f32 %v1208, %v1289
        %v1297 = vadd.f32 %v1209, %v1292
        %v1298 = vld [vmem:[%s4] sm:$0xff]
        %v1299 = vld [vmem:[%s4 + $0x8] sm:$0xff]
        %v1300 = vld [vmem:[%s4 + $0x10] sm:$0xff]
        %v1301 = vld [vmem:[%s4 + $0x18] sm:$0xff]
        %1303 = vset.pattern.permute.xlu0 0
        %1304 = vperm.xlu0 %1303, %v1298
        %v1305 = vpop.permute.xlu0 %1304
        %1308 = vset.pattern.permute.xlu0 0
        %1309 = vperm.xlu0 %1308, %v1299
        %v1310 = vpop.permute.xlu0 %1309
        %1313 = vset.pattern.permute.xlu0 0
        %1314 = vperm.xlu0 %1313, %v1300
        %v1315 = vpop.permute.xlu0 %1314
        %1318 = vset.pattern.permute.xlu0 0
        %1319 = vperm.xlu0 %1318, %v1301
        %v1320 = vpop.permute.xlu0 %1319
        %v1322 = vadd.f32 %v1294, %v1305
        %v1323 = vadd.f32 %v1295, %v1310
        %v1324 = vadd.f32 %v1296, %v1315
        %v1325 = vadd.f32 %v1297, %v1320
        %v1326 = vmax.f32 %v1322, 0.0
        %v1327 = vmin.f32 %v1326, 1.0
        %v1328 = vmax.f32 %v1323, 0.0
        %v1329 = vmin.f32 %v1328, 1.0
        %v1330 = vmax.f32 %v1324, 0.0
        %v1331 = vmin.f32 %v1330, 1.0
        %v1332 = vtanh.pop %v1325
        %v1333 = vmul.f32 %v1329, %v538
        %v1334 = vmul.f32 %v1327, %v1332
        %v1335 = vadd.f32 %v1333, %v1334
        %v1336 = vmax.f32 %v1335, 0.0
        %v1337 = vmul.f32 %v1331, %v1336
        %1338 = vst [vmem:[#allocation5] sm:$0xff] %v1336
        %1339 = vst [vmem:[#allocation3] sm:$0xff] %v1337
        %v1340 = vld [vmem:[#allocation2] sm:$0xff]
        %v1341 = vld [vmem:[#allocation2 + $0x8] sm:$0xff]
        %v1342 = vld [vmem:[#allocation6] sm:$0xff]
        %v1343 = vld [vmem:[#allocation6 + $0x8] sm:$0xff]
        %v1344 = vld [vmem:[#allocation6 + $0x10] sm:$0xff]
        %v1345 = vld [vmem:[#allocation6 + $0x18] sm:$0xff]
        %v1346 = vld [vmem:[#allocation4] sm:$0xff]
        %v1347 = vld [vmem:[#allocation4 + $0x8] sm:$0xff]
        %1350 = vst [vmem:[#allocation1] ss:$2 sm:$0xff] %v1340
        %s1351 = scalar_lea.vmem [#allocation1], 16
        %1352 = vst [vmem:[%s1351] ss:$2 sm:$0xff] %v1341
        %v1353 = vld.sshfl [vmem:[#allocation1] sm:$0xff pattern:$0x75316420]
        %v1354 = vld.sshfl [vmem:[#allocation1 + $0x8] sm:$0xff pattern:$0x75316420]
        %v1355 = vld.sshfl [vmem:[#allocation1 + $0x10] sm:$0xff pattern:$0x75316420]
        %v1356 = vld.sshfl [vmem:[#allocation1 + $0x18] sm:$0xff pattern:$0x75316420]
        %v1365 = vrot.slane %v1342, 4
        %v1366 = vrot.slane %v1343, 4
        %v1367 = vrot.slane %v1344, 4
        %v1368 = vrot.slane %v1345, 4
        %vm1373 = vcmask 1043456
        %v1374 = vsel %vm1373, %v1353, %v1365
        %v1375 = vsel %vm1373, %v1354, %v1366
        %v1376 = vsel %vm1373, %v1355, %v1367
        %v1377 = vsel %vm1373, %v1356, %v1368
        %v1378 = vld [vmem:[%s13] sm:$0xff]
        %v1379 = vld [vmem:[%s13 + $0x8] sm:$0xff]
        %v1380 = vld [vmem:[%s13 + $0x10] sm:$0xff]
        %v1381 = vld [vmem:[%s13 + $0x18] sm:$0xff]
        %v1382 = vld [vmem:[%s13 + $0x20] sm:$0xff]
        %v1383 = vld [vmem:[%s13 + $0x28] sm:$0xff]
        %v1384 = vld [vmem:[%s13 + $0x30] sm:$0xff]
        %v1385 = vld [vmem:[%s13 + $0x38] sm:$0xff]
        %v1386 = vld [vmem:[%s13 + $0x40] sm:$0xff]
        %v1387 = vld [vmem:[%s13 + $0x48] sm:$0xff]
        %v1388 = vld [vmem:[%s13 + $0x50] sm:$0xff]
        %v1389 = vld [vmem:[%s13 + $0x58] sm:$0xff]
        %v1390 = vld [vmem:[%s13 + $0x60] sm:$0xff]
        %v1391 = vld [vmem:[%s13 + $0x68] sm:$0xff]
        %v1392 = vld [vmem:[%s13 + $0x70] sm:$0xff]
        %v1393 = vld [vmem:[%s13 + $0x78] sm:$0xff]
        %v1394 = vld [vmem:[%s13 + $0x80] sm:$0xff]
        %v1395 = vld [vmem:[%s13 + $0x88] sm:$0xff]
        %v1396 = vld [vmem:[%s13 + $0x90] sm:$0xff]
        %v1397 = vld [vmem:[%s13 + $0x98] sm:$0xff]
        %v1398 = vld [vmem:[%s13 + $0xa0] sm:$0xff]
        %v1399 = vld [vmem:[%s13 + $0xa8] sm:$0xff]
        %v1400 = vld [vmem:[%s13 + $0xb0] sm:$0xff]
        %v1401 = vld [vmem:[%s13 + $0xb8] sm:$0xff]
        %v1402 = vld [vmem:[%s13 + $0xc0] sm:$0xff]
        %v1403 = vld [vmem:[%s13 + $0xc8] sm:$0xff]
        %v1404 = vld [vmem:[%s13 + $0xd0] sm:$0xff]
        %v1405 = vld [vmem:[%s13 + $0xd8] sm:$0xff]
        %v1406 = vld [vmem:[%s13 + $0xe0] sm:$0xff]
        %v1407 = vld [vmem:[%s13 + $0xe8] sm:$0xff]
        %v1408 = vld [vmem:[%s13 + $0xf0] sm:$0xff]
        %v1409 = vld [vmem:[%s13 + $0xf8] sm:$0xff]
        %v1410 = vld [vmem:[%s13 + $0x100] sm:$0xff]
        %v1411 = vld [vmem:[%s13 + $0x108] sm:$0xff]
        %v1412 = vld [vmem:[%s13 + $0x110] sm:$0xff]
        %v1413 = vld [vmem:[%s13 + $0x118] sm:$0xff]
        %v1414 = vld [vmem:[%s13 + $0x120] sm:$0xff]
        %v1415 = vld [vmem:[%s13 + $0x128] sm:$0xff]
        %v1416 = vld [vmem:[%s13 + $0x130] sm:$0xff]
        %v1417 = vld [vmem:[%s13 + $0x138] sm:$0xff]
        %v1418 = vld [vmem:[%s13 + $0x140] sm:$0xff]
        %v1419 = vld [vmem:[%s13 + $0x148] sm:$0xff]
        %v1420 = vld [vmem:[%s13 + $0x150] sm:$0xff]
        %v1421 = vld [vmem:[%s13 + $0x158] sm:$0xff]
        %v1422 = vld [vmem:[%s13 + $0x160] sm:$0xff]
        %v1423 = vld [vmem:[%s13 + $0x168] sm:$0xff]
        %v1424 = vld [vmem:[%s13 + $0x170] sm:$0xff]
        %v1425 = vld [vmem:[%s13 + $0x178] sm:$0xff]
        %v1426 = vld [vmem:[%s13 + $0x180] sm:$0xff]
        %v1427 = vld [vmem:[%s13 + $0x188] sm:$0xff]
        %v1428 = vld [vmem:[%s13 + $0x190] sm:$0xff]
        %v1429 = vld [vmem:[%s13 + $0x198] sm:$0xff]
        %v1430 = vld [vmem:[%s13 + $0x1a0] sm:$0xff]
        %v1431 = vld [vmem:[%s13 + $0x1a8] sm:$0xff]
        %v1432 = vld [vmem:[%s13 + $0x1b0] sm:$0xff]
        %v1433 = vld [vmem:[%s13 + $0x1b8] sm:$0xff]
        %v1434 = vld [vmem:[%s13 + $0x1c0] sm:$0xff]
        %v1435 = vld [vmem:[%s13 + $0x1c8] sm:$0xff]
        %v1436 = vld [vmem:[%s13 + $0x1d0] sm:$0xff]
        %v1437 = vld [vmem:[%s13 + $0x1d8] sm:$0xff]
        %v1438 = vld [vmem:[%s13 + $0x1e0] sm:$0xff]
        %v1439 = vld [vmem:[%s13 + $0x1e8] sm:$0xff]
        %v1440 = vld [vmem:[%s13 + $0x1f0] sm:$0xff]
        %v1441 = vld [vmem:[%s13 + $0x1f8] sm:$0xff]
        %1442 = vmatpush.msra.mxu0 %v1438
        %1443 = vmatpush.msra.mxu0 %v1434
        %1444 = vmatpush.msra.mxu0 %v1430
        %1445 = vmatpush.msra.mxu0 %v1426
        %1446 = vmatpush.msra.mxu0 %v1422
        %1447 = vmatpush.msra.mxu0 %v1418
        %1448 = vmatpush.msra.mxu0 %v1414
        %1449 = vmatpush.msra.mxu0 %v1410
        %1450 = vmatpush.msra.mxu0 %v1406
        %1451 = vmatpush.msra.mxu0 %v1402
        %1452 = vmatpush.msra.mxu0 %v1398
        %1453 = vmatpush.msra.mxu0 %v1394
        %1454 = vmatpush.msra.mxu0 %v1390
        %1455 = vmatpush.msra.mxu0 %v1386
        %1456 = vmatpush.msra.mxu0 %v1382
        %1457 = vmatpush.msra.mxu0 %v1378
        %1458 = vmatmul.f32.gmra.mxu0 %v1337
        %v1459 = vpop.f32.mrf.mxu0
        %v1460 = vadd.f32 0.0, %v1459
        %1461 = vdwg.mxu0
        %1462 = vmatpush.msra.mxu0 %v1439
        %1463 = vmatpush.msra.mxu0 %v1435
        %1464 = vmatpush.msra.mxu0 %v1431
        %1465 = vmatpush.msra.mxu0 %v1427
        %1466 = vmatpush.msra.mxu0 %v1423
        %1467 = vmatpush.msra.mxu0 %v1419
        %1468 = vmatpush.msra.mxu0 %v1415
        %1469 = vmatpush.msra.mxu0 %v1411
        %1470 = vmatpush.msra.mxu0 %v1407
        %1471 = vmatpush.msra.mxu0 %v1403
        %1472 = vmatpush.msra.mxu0 %v1399
        %1473 = vmatpush.msra.mxu0 %v1395
        %1474 = vmatpush.msra.mxu0 %v1391
        %1475 = vmatpush.msra.mxu0 %v1387
        %1476 = vmatpush.msra.mxu0 %v1383
        %1477 = vmatpush.msra.mxu0 %v1379
        %1478 = vmatmul.f32.gmra.mxu0 %v1337
        %v1479 = vpop.f32.mrf.mxu0
        %v1480 = vadd.f32 0.0, %v1479
        %1481 = vdwg.mxu0
        %1482 = vmatpush.msra.mxu0 %v1440
        %1483 = vmatpush.msra.mxu0 %v1436
        %1484 = vmatpush.msra.mxu0 %v1432
        %1485 = vmatpush.msra.mxu0 %v1428
        %1486 = vmatpush.msra.mxu0 %v1424
        %1487 = vmatpush.msra.mxu0 %v1420
        %1488 = vmatpush.msra.mxu0 %v1416
        %1489 = vmatpush.msra.mxu0 %v1412
        %1490 = vmatpush.msra.mxu0 %v1408
        %1491 = vmatpush.msra.mxu0 %v1404
        %1492 = vmatpush.msra.mxu0 %v1400
        %1493 = vmatpush.msra.mxu0 %v1396
        %1494 = vmatpush.msra.mxu0 %v1392
        %1495 = vmatpush.msra.mxu0 %v1388
        %1496 = vmatpush.msra.mxu0 %v1384
        %1497 = vmatpush.msra.mxu0 %v1380
        %1498 = vmatmul.f32.gmra.mxu0 %v1337
        %v1499 = vpop.f32.mrf.mxu0
        %v1500 = vadd.f32 0.0, %v1499
        %1501 = vdwg.mxu0
        %1502 = vmatpush.msra.mxu0 %v1441
        %1503 = vmatpush.msra.mxu0 %v1437
        %1504 = vmatpush.msra.mxu0 %v1433
        %1505 = vmatpush.msra.mxu0 %v1429
        %1506 = vmatpush.msra.mxu0 %v1425
        %1507 = vmatpush.msra.mxu0 %v1421
        %1508 = vmatpush.msra.mxu0 %v1417
        %1509 = vmatpush.msra.mxu0 %v1413
        %1510 = vmatpush.msra.mxu0 %v1409
        %1511 = vmatpush.msra.mxu0 %v1405
        %1512 = vmatpush.msra.mxu0 %v1401
        %1513 = vmatpush.msra.mxu0 %v1397
        %1514 = vmatpush.msra.mxu0 %v1393
        %1515 = vmatpush.msra.mxu0 %v1389
        %1516 = vmatpush.msra.mxu0 %v1385
        %1517 = vmatpush.msra.mxu0 %v1381
        %1518 = vmatmul.f32.gmra.mxu0 %v1337
        %v1519 = vpop.f32.mrf.mxu0
        %v1520 = vadd.f32 0.0, %v1519
        %1521 = vdwg.mxu0
        %v1526 = vrot.slane %v1460, 4
        %v1527 = vrot.slane %v1480, 4
        %v1528 = vrot.slane %v1500, 4
        %v1529 = vrot.slane %v1520, 4
        %v1534 = vsel %vm1373, %v1365, %v1526
        %v1535 = vsel %vm1373, %v1366, %v1527
        %v1536 = vsel %vm1373, %v1367, %v1528
        %v1537 = vsel %vm1373, %v1368, %v1529
        %1546 = vrot.lane.b32.xlu0 %v1374, 17
        %v1547 = vpop.permute.xlu0 %1546
        %1548 = vrot.lane.b32.xlu0 %v1375, 17
        %v1549 = vpop.permute.xlu0 %1548
        %1550 = vrot.lane.b32.xlu0 %v1376, 17
        %v1551 = vpop.permute.xlu0 %1550
        %1552 = vrot.lane.b32.xlu0 %v1377, 17
        %v1553 = vpop.permute.xlu0 %1552
        %1554 = vrot.lane.b32.xlu0 %v1534, 17
        %v1555 = vpop.permute.xlu0 %1554
        %1556 = vrot.lane.b32.xlu0 %v1535, 17
        %v1557 = vpop.permute.xlu0 %1556
        %1558 = vrot.lane.b32.xlu0 %v1536, 17
        %v1559 = vpop.permute.xlu0 %1558
        %1560 = vrot.lane.b32.xlu0 %v1537, 17
        %v1561 = vpop.permute.xlu0 %1560
        %1562 = vrot.lane.b32.xlu0 %v1526, 17
        %v1563 = vpop.permute.xlu0 %1562
        %1564 = vrot.lane.b32.xlu0 %v1527, 17
        %v1565 = vpop.permute.xlu0 %1564
        %1566 = vrot.lane.b32.xlu0 %v1528, 17
        %v1567 = vpop.permute.xlu0 %1566
        %1568 = vrot.lane.b32.xlu0 %v1529, 17
        %v1569 = vpop.permute.xlu0 %1568
        %vm1570 = vcmask 138240
        %v1571 = vsel %vm1570, %v1547, %v1549
        %v1572 = vsel %vm1570, %v1549, %v1551
        %v1573 = vsel %vm1570, %v1551, %v1553
        %v1574 = vsel %vm1570, %v1555, %v1557
        %v1575 = vsel %vm1570, %v1557, %v1559
        %v1576 = vsel %vm1570, %v1559, %v1561
        %v1577 = vsel %vm1570, %v1563, %v1565
        %v1578 = vsel %vm1570, %v1565, %v1567
        %v1579 = vsel %vm1570, %v1567, %v1569
        %v1595 = vsel %vm1570, 0.0, %v1547
        %v1596 = vsel %vm1570, 0.0, %v1555
        %v1597 = vsel %vm1570, 0.0, %v1563
        %v1598 = vsel %vm1570, %v1553, 0.0
        %v1599 = vsel %vm1570, %v1561, 0.0
        %v1600 = vsel %vm1570, %v1569, 0.0
        %v1601 = vld [vmem:[%s11] sm:$0xf]
        %v1603 = vperm.slane %v1601, 0
        %v1604 = vperm.slane %v1601, 1
        %v1605 = vperm.slane %v1601, 2
        %v1606 = vperm.slane %v1601, 3
        %v1611 = vmul.f32 %v1595, %v1603
        %v1612 = vmul.f32 %v1571, %v1604
        %v1613 = vmul.f32 %v1572, %v1605
        %v1614 = vmul.f32 %v1573, %v1606
        %v1615 = vmul.f32 %v1596, %v1603
        %v1616 = vmul.f32 %v1574, %v1604
        %v1617 = vmul.f32 %v1575, %v1605
        %v1618 = vmul.f32 %v1576, %v1606
        %v1619 = vmul.f32 %v1597, %v1603
        %v1620 = vmul.f32 %v1577, %v1604
        %v1621 = vmul.f32 %v1578, %v1605
        %v1622 = vmul.f32 %v1579, %v1606
        %v1623 = vld [vmem:[%s1] sm:$0xff]
        %v1624 = vld [vmem:[%s1 + $0x8] sm:$0xff]
        %s1625 = scalar_lea.vmem %s11, 4
        %v1626 = vld [vmem:[%s1625] sm:$0xf]
        %v1628 = vperm.slane %v1626, 0
        %v1629 = vperm.slane %v1626, 1
        %v1630 = vperm.slane %v1626, 2
        %v1631 = vperm.slane %v1626, 3
        %1632 = vrot.lane.b32.xlu0 %v1628, 1
        %v1633 = vpop.permute.xlu0 %1632
        %1634 = vrot.lane.b32.xlu0 %v1629, 1
        %v1635 = vpop.permute.xlu0 %1634
        %1636 = vrot.lane.b32.xlu0 %v1630, 1
        %v1637 = vpop.permute.xlu0 %1636
        %1638 = vrot.lane.b32.xlu0 %v1631, 1
        %v1639 = vpop.permute.xlu0 %1638
        %vm1640 = vcmask 7168
        %v1641 = vsel %vm1640, %v1633, %v1635
        %v1642 = vsel %vm1640, %v1635, %v1637
        %v1643 = vsel %vm1640, %v1637, %v1639
        %v1649 = vmul.f32 %v1595, %v1633
        %v1650 = vmul.f32 %v1571, %v1641
        %v1651 = vmul.f32 %v1572, %v1642
        %v1652 = vmul.f32 %v1573, %v1643
        %v1653 = vmul.f32 %v1598, %v1639
        %v1654 = vmul.f32 %v1596, %v1633
        %v1655 = vmul.f32 %v1574, %v1641
        %v1656 = vmul.f32 %v1575, %v1642
        %v1657 = vmul.f32 %v1576, %v1643
        %v1658 = vmul.f32 %v1599, %v1639
        %v1659 = vmul.f32 %v1597, %v1633
        %v1660 = vmul.f32 %v1577, %v1641
        %v1661 = vmul.f32 %v1578, %v1642
        %v1662 = vmul.f32 %v1579, %v1643
        %v1663 = vmul.f32 %v1600, %v1639
        %s1664 = scalar_lea.vmem %s1, 16
        %v1665 = vld [vmem:[%s1664] sm:$0xff]
        %v1666 = vld [vmem:[%s1664 + $0x8] sm:$0xff]
        %1682 = vrot.lane.b32.xlu0 %v1649, 127
        %v1683 = vpop.permute.xlu0 %1682
        %1684 = vrot.lane.b32.xlu0 %v1650, 127
        %v1685 = vpop.permute.xlu0 %1684
        %1686 = vrot.lane.b32.xlu0 %v1651, 127
        %v1687 = vpop.permute.xlu0 %1686
        %1688 = vrot.lane.b32.xlu0 %v1652, 127
        %v1689 = vpop.permute.xlu0 %1688
        %1690 = vrot.lane.b32.xlu0 %v1653, 127
        %v1691 = vpop.permute.xlu0 %1690
        %1692 = vrot.lane.b32.xlu0 %v1654, 127
        %v1693 = vpop.permute.xlu0 %1692
        %1694 = vrot.lane.b32.xlu0 %v1655, 127
        %v1695 = vpop.permute.xlu0 %1694
        %1696 = vrot.lane.b32.xlu0 %v1656, 127
        %v1697 = vpop.permute.xlu0 %1696
        %1698 = vrot.lane.b32.xlu0 %v1657, 127
        %v1699 = vpop.permute.xlu0 %1698
        %1700 = vrot.lane.b32.xlu0 %v1658, 127
        %v1701 = vpop.permute.xlu0 %1700
        %1702 = vrot.lane.b32.xlu0 %v1659, 127
        %v1703 = vpop.permute.xlu0 %1702
        %1704 = vrot.lane.b32.xlu0 %v1660, 127
        %v1705 = vpop.permute.xlu0 %1704
        %1706 = vrot.lane.b32.xlu0 %v1661, 127
        %v1707 = vpop.permute.xlu0 %1706
        %1708 = vrot.lane.b32.xlu0 %v1662, 127
        %v1709 = vpop.permute.xlu0 %1708
        %1710 = vrot.lane.b32.xlu0 %v1663, 127
        %v1711 = vpop.permute.xlu0 %1710
        %v1712 = vsel %vm605, %v1683, %v1685
        %v1713 = vsel %vm605, %v1685, %v1687
        %v1714 = vsel %vm605, %v1687, %v1689
        %v1715 = vsel %vm605, %v1689, %v1691
        %v1716 = vsel %vm605, %v1693, %v1695
        %v1717 = vsel %vm605, %v1695, %v1697
        %v1718 = vsel %vm605, %v1697, %v1699
        %v1719 = vsel %vm605, %v1699, %v1701
        %v1720 = vsel %vm605, %v1703, %v1705
        %v1721 = vsel %vm605, %v1705, %v1707
        %v1722 = vsel %vm605, %v1707, %v1709
        %v1723 = vsel %vm605, %v1709, %v1711
        %vm1732 = vcmask 162816
        %v1734 = vsel %vm1732, %v1665, 0
        %v1737 = vsel %vm1732, %v1666, 0
        %v1739 = vsel %vm1373, %v1720, 0
        %v1741 = vsel %vm1373, %v1721, 0
        %v1743 = vsel %vm1373, %v1722, 0
        %v1745 = vsel %vm1373, %v1723, 0
        %1747 = vmatpush.msra.mxu0 0.0
        %1748 = vmatpush.msra.mxu0 0.0
        %1749 = vmatpush.msra.mxu0 0.0
        %1750 = vmatpush.msra.mxu0 0.0
        %1751 = vmatpush.msra.mxu0 0.0
        %1752 = vmatpush.msra.mxu0 0.0
        %1753 = vmatpush.msra.mxu0 0.0
        %1754 = vmatpush.msra.mxu0 0.0
        %1755 = vmatpush.msra.mxu0 0.0
        %1756 = vmatpush.msra.mxu0 0.0
        %1757 = vmatpush.msra.mxu0 0.0
        %1758 = vmatpush.msra.mxu0 0.0
        %1759 = vmatpush.msra.mxu0 0.0
        %1760 = vmatpush.msra.mxu0 %v1739
        %1761 = vmatpush.msra.mxu0 %v1716
        %1762 = vmatpush.msra.mxu0 %v1712
        %1763 = vmatmul.f32.gmra.mxu0 %v1734
        %v1764 = vpop.f32.mrf.mxu0
        %v1765 = vadd.f32 0.0, %v1764
        %1766 = vmatmul.f32.gmra.mxu0 %v1737
        %v1767 = vpop.f32.mrf.mxu0
        %v1768 = vadd.f32 0.0, %v1767
        %1769 = vdwg.mxu0
        %1770 = vmatpush.msra.mxu0 0.0
        %1771 = vmatpush.msra.mxu0 0.0
        %1772 = vmatpush.msra.mxu0 0.0
        %1773 = vmatpush.msra.mxu0 0.0
        %1774 = vmatpush.msra.mxu0 0.0
        %1775 = vmatpush.msra.mxu0 0.0
        %1776 = vmatpush.msra.mxu0 0.0
        %1777 = vmatpush.msra.mxu0 0.0
        %1778 = vmatpush.msra.mxu0 0.0
        %1779 = vmatpush.msra.mxu0 0.0
        %1780 = vmatpush.msra.mxu0 0.0
        %1781 = vmatpush.msra.mxu0 0.0
        %1782 = vmatpush.msra.mxu0 0.0
        %1783 = vmatpush.msra.mxu0 %v1741
        %1784 = vmatpush.msra.mxu0 %v1717
        %1785 = vmatpush.msra.mxu0 %v1713
        %1786 = vmatmul.f32.gmra.mxu0 %v1734
        %v1787 = vpop.f32.mrf.mxu0
        %v1788 = vadd.f32 0.0, %v1787
        %1789 = vmatmul.f32.gmra.mxu0 %v1737
        %v1790 = vpop.f32.mrf.mxu0
        %v1791 = vadd.f32 0.0, %v1790
        %1792 = vdwg.mxu0
        %1793 = vmatpush.msra.mxu0 0.0
        %1794 = vmatpush.msra.mxu0 0.0
        %1795 = vmatpush.msra.mxu0 0.0
        %1796 = vmatpush.msra.mxu0 0.0
        %1797 = vmatpush.msra.mxu0 0.0
        %1798 = vmatpush.msra.mxu0 0.0
        %1799 = vmatpush.msra.mxu0 0.0
        %1800 = vmatpush.msra.mxu0 0.0
        %1801 = vmatpush.msra.mxu0 0.0
        %1802 = vmatpush.msra.mxu0 0.0
        %1803 = vmatpush.msra.mxu0 0.0
        %1804 = vmatpush.msra.mxu0 0.0
        %1805 = vmatpush.msra.mxu0 0.0
        %1806 = vmatpush.msra.mxu0 %v1743
        %1807 = vmatpush.msra.mxu0 %v1718
        %1808 = vmatpush.msra.mxu0 %v1714
        %1809 = vmatmul.f32.gmra.mxu0 %v1734
        %v1810 = vpop.f32.mrf.mxu0
        %v1811 = vadd.f32 0.0, %v1810
        %1812 = vmatmul.f32.gmra.mxu0 %v1737
        %v1813 = vpop.f32.mrf.mxu0
        %v1814 = vadd.f32 0.0, %v1813
        %1815 = vdwg.mxu0
        %1816 = vmatpush.msra.mxu0 0.0
        %1817 = vmatpush.msra.mxu0 0.0
        %1818 = vmatpush.msra.mxu0 0.0
        %1819 = vmatpush.msra.mxu0 0.0
        %1820 = vmatpush.msra.mxu0 0.0
        %1821 = vmatpush.msra.mxu0 0.0
        %1822 = vmatpush.msra.mxu0 0.0
        %1823 = vmatpush.msra.mxu0 0.0
        %1824 = vmatpush.msra.mxu0 0.0
        %1825 = vmatpush.msra.mxu0 0.0
        %1826 = vmatpush.msra.mxu0 0.0
        %1827 = vmatpush.msra.mxu0 0.0
        %1828 = vmatpush.msra.mxu0 0.0
        %1829 = vmatpush.msra.mxu0 %v1745
        %1830 = vmatpush.msra.mxu0 %v1719
        %1831 = vmatpush.msra.mxu0 %v1715
        %1832 = vmatmul.f32.gmra.mxu0 %v1734
        %v1833 = vpop.f32.mrf.mxu0
        %v1834 = vadd.f32 0.0, %v1833
        %1835 = vmatmul.f32.gmra.mxu0 %v1737
        %v1836 = vpop.f32.mrf.mxu0
        %v1837 = vadd.f32 0.0, %v1836
        %1838 = vdwg.mxu0
        %v1840 = vsel %vm1732, %v1623, 0
        %v1843 = vsel %vm1732, %v1624, 0
        %v1846 = vsel %vm1373, %v1619, 0
        %v1849 = vsel %vm1373, %v1620, 0
        %v1852 = vsel %vm1373, %v1621, 0
        %v1855 = vsel %vm1373, %v1622, 0
        %1857 = vmatpush.msra.mxu0 0.0
        %1858 = vmatpush.msra.mxu0 0.0
        %1859 = vmatpush.msra.mxu0 0.0
        %1860 = vmatpush.msra.mxu0 0.0
        %1861 = vmatpush.msra.mxu0 0.0
        %1862 = vmatpush.msra.mxu0 0.0
        %1863 = vmatpush.msra.mxu0 0.0
        %1864 = vmatpush.msra.mxu0 0.0
        %1865 = vmatpush.msra.mxu0 0.0
        %1866 = vmatpush.msra.mxu0 0.0
        %1867 = vmatpush.msra.mxu0 0.0
        %1868 = vmatpush.msra.mxu0 0.0
        %1869 = vmatpush.msra.mxu0 0.0
        %1870 = vmatpush.msra.mxu0 %v1846
        %1871 = vmatpush.msra.mxu0 %v1615
        %1872 = vmatpush.msra.mxu0 %v1611
        %1873 = vmatmul.f32.gmra.mxu0 %v1840
        %v1874 = vpop.f32.mrf.mxu0
        %v1875 = vadd.f32 %v1765, %v1874
        %1876 = vmatmul.f32.gmra.mxu0 %v1843
        %v1877 = vpop.f32.mrf.mxu0
        %v1878 = vadd.f32 %v1768, %v1877
        %1879 = vdwg.mxu0
        %1880 = vmatpush.msra.mxu0 0.0
        %1881 = vmatpush.msra.mxu0 0.0
        %1882 = vmatpush.msra.mxu0 0.0
        %1883 = vmatpush.msra.mxu0 0.0
        %1884 = vmatpush.msra.mxu0 0.0
        %1885 = vmatpush.msra.mxu0 0.0
        %1886 = vmatpush.msra.mxu0 0.0
        %1887 = vmatpush.msra.mxu0 0.0
        %1888 = vmatpush.msra.mxu0 0.0
        %1889 = vmatpush.msra.mxu0 0.0
        %1890 = vmatpush.msra.mxu0 0.0
        %1891 = vmatpush.msra.mxu0 0.0
        %1892 = vmatpush.msra.mxu0 0.0
        %1893 = vmatpush.msra.mxu0 %v1849
        %1894 = vmatpush.msra.mxu0 %v1616
        %1895 = vmatpush.msra.mxu0 %v1612
        %1896 = vmatmul.f32.gmra.mxu0 %v1840
        %v1897 = vpop.f32.mrf.mxu0
        %v1898 = vadd.f32 %v1788, %v1897
        %1899 = vmatmul.f32.gmra.mxu0 %v1843
        %v1900 = vpop.f32.mrf.mxu0
        %v1901 = vadd.f32 %v1791, %v1900
        %1902 = vdwg.mxu0
        %1903 = vmatpush.msra.mxu0 0.0
        %1904 = vmatpush.msra.mxu0 0.0
        %1905 = vmatpush.msra.mxu0 0.0
        %1906 = vmatpush.msra.mxu0 0.0
        %1907 = vmatpush.msra.mxu0 0.0
        %1908 = vmatpush.msra.mxu0 0.0
        %1909 = vmatpush.msra.mxu0 0.0
        %1910 = vmatpush.msra.mxu0 0.0
        %1911 = vmatpush.msra.mxu0 0.0
        %1912 = vmatpush.msra.mxu0 0.0
        %1913 = vmatpush.msra.mxu0 0.0
        %1914 = vmatpush.msra.mxu0 0.0
        %1915 = vmatpush.msra.mxu0 0.0
        %1916 = vmatpush.msra.mxu0 %v1852
        %1917 = vmatpush.msra.mxu0 %v1617
        %1918 = vmatpush.msra.mxu0 %v1613
        %1919 = vmatmul.f32.gmra.mxu0 %v1840
        %v1920 = vpop.f32.mrf.mxu0
        %v1921 = vadd.f32 %v1811, %v1920
        %1922 = vmatmul.f32.gmra.mxu0 %v1843
        %v1923 = vpop.f32.mrf.mxu0
        %v1924 = vadd.f32 %v1814, %v1923
        %1925 = vdwg.mxu0
        %1926 = vmatpush.msra.mxu0 0.0
        %1927 = vmatpush.msra.mxu0 0.0
        %1928 = vmatpush.msra.mxu0 0.0
        %1929 = vmatpush.msra.mxu0 0.0
        %1930 = vmatpush.msra.mxu0 0.0
        %1931 = vmatpush.msra.mxu0 0.0
        %1932 = vmatpush.msra.mxu0 0.0
        %1933 = vmatpush.msra.mxu0 0.0
        %1934 = vmatpush.msra.mxu0 0.0
        %1935 = vmatpush.msra.mxu0 0.0
        %1936 = vmatpush.msra.mxu0 0.0
        %1937 = vmatpush.msra.mxu0 0.0
        %1938 = vmatpush.msra.mxu0 0.0
        %1939 = vmatpush.msra.mxu0 %v1855
        %1940 = vmatpush.msra.mxu0 %v1618
        %1941 = vmatpush.msra.mxu0 %v1614
        %1942 = vmatmul.f32.gmra.mxu0 %v1840
        %v1943 = vpop.f32.mrf.mxu0
        %v1944 = vadd.f32 %v1834, %v1943
        %1945 = vmatmul.f32.gmra.mxu0 %v1843
        %v1946 = vpop.f32.mrf.mxu0
        %v1947 = vadd.f32 %v1837, %v1946
        %1948 = vdwg.mxu0
        %s1949 = scalar_lea.vmem %s11, 8
        %v1950 = vld [vmem:[%s1949] sm:$0xf]
        %v1952 = vperm.slane %v1950, 0
        %v1953 = vperm.slane %v1950, 1
        %v1954 = vperm.slane %v1950, 2
        %v1955 = vperm.slane %v1950, 3
        %1956 = vrot.lane.b32.xlu0 %v1952, 2
        %v1957 = vpop.permute.xlu0 %1956
        %1958 = vrot.lane.b32.xlu0 %v1953, 2
        %v1959 = vpop.permute.xlu0 %1958
        %1960 = vrot.lane.b32.xlu0 %v1954, 2
        %v1961 = vpop.permute.xlu0 %1960
        %1962 = vrot.lane.b32.xlu0 %v1955, 2
        %v1963 = vpop.permute.xlu0 %1962
        %vm1964 = vcmask 15360
        %v1965 = vsel %vm1964, %v1957, %v1959
        %v1966 = vsel %vm1964, %v1959, %v1961
        %v1967 = vsel %vm1964, %v1961, %v1963
        %v1973 = vmul.f32 %v1595, %v1957
        %v1974 = vmul.f32 %v1571, %v1965
        %v1975 = vmul.f32 %v1572, %v1966
        %v1976 = vmul.f32 %v1573, %v1967
        %v1977 = vmul.f32 %v1598, %v1963
        %v1978 = vmul.f32 %v1596, %v1957
        %v1979 = vmul.f32 %v1574, %v1965
        %v1980 = vmul.f32 %v1575, %v1966
        %v1981 = vmul.f32 %v1576, %v1967
        %v1982 = vmul.f32 %v1599, %v1963
        %v1983 = vmul.f32 %v1597, %v1957
        %v1984 = vmul.f32 %v1577, %v1965
        %v1985 = vmul.f32 %v1578, %v1966
        %v1986 = vmul.f32 %v1579, %v1967
        %v1987 = vmul.f32 %v1600, %v1963
        %s1988 = scalar_lea.vmem %s1, 32
        %v1989 = vld [vmem:[%s1988] sm:$0xff]
        %v1990 = vld [vmem:[%s1988 + $0x8] sm:$0xff]
        %2006 = vrot.lane.b32.xlu0 %v1973, 126
        %v2007 = vpop.permute.xlu0 %2006
        %2008 = vrot.lane.b32.xlu0 %v1974, 126
        %v2009 = vpop.permute.xlu0 %2008
        %2010 = vrot.lane.b32.xlu0 %v1975, 126
        %v2011 = vpop.permute.xlu0 %2010
        %2012 = vrot.lane.b32.xlu0 %v1976, 126
        %v2013 = vpop.permute.xlu0 %2012
        %2014 = vrot.lane.b32.xlu0 %v1977, 126
        %v2015 = vpop.permute.xlu0 %2014
        %2016 = vrot.lane.b32.xlu0 %v1978, 126
        %v2017 = vpop.permute.xlu0 %2016
        %2018 = vrot.lane.b32.xlu0 %v1979, 126
        %v2019 = vpop.permute.xlu0 %2018
        %2020 = vrot.lane.b32.xlu0 %v1980, 126
        %v2021 = vpop.permute.xlu0 %2020
        %2022 = vrot.lane.b32.xlu0 %v1981, 126
        %v2023 = vpop.permute.xlu0 %2022
        %2024 = vrot.lane.b32.xlu0 %v1982, 126
        %v2025 = vpop.permute.xlu0 %2024
        %2026 = vrot.lane.b32.xlu0 %v1983, 126
        %v2027 = vpop.permute.xlu0 %2026
        %2028 = vrot.lane.b32.xlu0 %v1984, 126
        %v2029 = vpop.permute.xlu0 %2028
        %2030 = vrot.lane.b32.xlu0 %v1985, 126
        %v2031 = vpop.permute.xlu0 %2030
        %2032 = vrot.lane.b32.xlu0 %v1986, 126
        %v2033 = vpop.permute.xlu0 %2032
        %2034 = vrot.lane.b32.xlu0 %v1987, 126
        %v2035 = vpop.permute.xlu0 %2034
        %v2036 = vsel %vm731, %v2007, %v2009
        %v2037 = vsel %vm731, %v2009, %v2011
        %v2038 = vsel %vm731, %v2011, %v2013
        %v2039 = vsel %vm731, %v2013, %v2015
        %v2040 = vsel %vm731, %v2017, %v2019
        %v2041 = vsel %vm731, %v2019, %v2021
        %v2042 = vsel %vm731, %v2021, %v2023
        %v2043 = vsel %vm731, %v2023, %v2025
        %v2044 = vsel %vm731, %v2027, %v2029
        %v2045 = vsel %vm731, %v2029, %v2031
        %v2046 = vsel %vm731, %v2031, %v2033
        %v2047 = vsel %vm731, %v2033, %v2035
        %v2057 = vsel %vm1732, %v1989, 0
        %v2060 = vsel %vm1732, %v1990, 0
        %v2062 = vsel %vm1373, %v2044, 0
        %v2064 = vsel %vm1373, %v2045, 0
        %v2066 = vsel %vm1373, %v2046, 0
        %v2068 = vsel %vm1373, %v2047, 0
        %2070 = vmatpush.msra.mxu0 0.0
        %2071 = vmatpush.msra.mxu0 0.0
        %2072 = vmatpush.msra.mxu0 0.0
        %2073 = vmatpush.msra.mxu0 0.0
        %2074 = vmatpush.msra.mxu0 0.0
        %2075 = vmatpush.msra.mxu0 0.0
        %2076 = vmatpush.msra.mxu0 0.0
        %2077 = vmatpush.msra.mxu0 0.0
        %2078 = vmatpush.msra.mxu0 0.0
        %2079 = vmatpush.msra.mxu0 0.0
        %2080 = vmatpush.msra.mxu0 0.0
        %2081 = vmatpush.msra.mxu0 0.0
        %2082 = vmatpush.msra.mxu0 0.0
        %2083 = vmatpush.msra.mxu0 %v2062
        %2084 = vmatpush.msra.mxu0 %v2040
        %2085 = vmatpush.msra.mxu0 %v2036
        %2086 = vmatmul.f32.gmra.mxu0 %v2057
        %v2087 = vpop.f32.mrf.mxu0
        %v2088 = vadd.f32 0.0, %v2087
        %2089 = vmatmul.f32.gmra.mxu0 %v2060
        %v2090 = vpop.f32.mrf.mxu0
        %v2091 = vadd.f32 0.0, %v2090
        %2092 = vdwg.mxu0
        %2093 = vmatpush.msra.mxu0 0.0
        %2094 = vmatpush.msra.mxu0 0.0
        %2095 = vmatpush.msra.mxu0 0.0
        %2096 = vmatpush.msra.mxu0 0.0
        %2097 = vmatpush.msra.mxu0 0.0
        %2098 = vmatpush.msra.mxu0 0.0
        %2099 = vmatpush.msra.mxu0 0.0
        %2100 = vmatpush.msra.mxu0 0.0
        %2101 = vmatpush.msra.mxu0 0.0
        %2102 = vmatpush.msra.mxu0 0.0
        %2103 = vmatpush.msra.mxu0 0.0
        %2104 = vmatpush.msra.mxu0 0.0
        %2105 = vmatpush.msra.mxu0 0.0
        %2106 = vmatpush.msra.mxu0 %v2064
        %2107 = vmatpush.msra.mxu0 %v2041
        %2108 = vmatpush.msra.mxu0 %v2037
        %2109 = vmatmul.f32.gmra.mxu0 %v2057
        %v2110 = vpop.f32.mrf.mxu0
        %v2111 = vadd.f32 0.0, %v2110
        %2112 = vmatmul.f32.gmra.mxu0 %v2060
        %v2113 = vpop.f32.mrf.mxu0
        %v2114 = vadd.f32 0.0, %v2113
        %2115 = vdwg.mxu0
        %2116 = vmatpush.msra.mxu0 0.0
        %2117 = vmatpush.msra.mxu0 0.0
        %2118 = vmatpush.msra.mxu0 0.0
        %2119 = vmatpush.msra.mxu0 0.0
        %2120 = vmatpush.msra.mxu0 0.0
        %2121 = vmatpush.msra.mxu0 0.0
        %2122 = vmatpush.msra.mxu0 0.0
        %2123 = vmatpush.msra.mxu0 0.0
        %2124 = vmatpush.msra.mxu0 0.0
        %2125 = vmatpush.msra.mxu0 0.0
        %2126 = vmatpush.msra.mxu0 0.0
        %2127 = vmatpush.msra.mxu0 0.0
        %2128 = vmatpush.msra.mxu0 0.0
        %2129 = vmatpush.msra.mxu0 %v2066
        %2130 = vmatpush.msra.mxu0 %v2042
        %2131 = vmatpush.msra.mxu0 %v2038
        %2132 = vmatmul.f32.gmra.mxu0 %v2057
        %v2133 = vpop.f32.mrf.mxu0
        %v2134 = vadd.f32 0.0, %v2133
        %2135 = vmatmul.f32.gmra.mxu0 %v2060
        %v2136 = vpop.f32.mrf.mxu0
        %v2137 = vadd.f32 0.0, %v2136
        %2138 = vdwg.mxu0
        %2139 = vmatpush.msra.mxu0 0.0
        %2140 = vmatpush.msra.mxu0 0.0
        %2141 = vmatpush.msra.mxu0 0.0
        %2142 = vmatpush.msra.mxu0 0.0
        %2143 = vmatpush.msra.mxu0 0.0
        %2144 = vmatpush.msra.mxu0 0.0
        %2145 = vmatpush.msra.mxu0 0.0
        %2146 = vmatpush.msra.mxu0 0.0
        %2147 = vmatpush.msra.mxu0 0.0
        %2148 = vmatpush.msra.mxu0 0.0
        %2149 = vmatpush.msra.mxu0 0.0
        %2150 = vmatpush.msra.mxu0 0.0
        %2151 = vmatpush.msra.mxu0 0.0
        %2152 = vmatpush.msra.mxu0 %v2068
        %2153 = vmatpush.msra.mxu0 %v2043
        %2154 = vmatpush.msra.mxu0 %v2039
        %2155 = vmatmul.f32.gmra.mxu0 %v2057
        %v2156 = vpop.f32.mrf.mxu0
        %v2157 = vadd.f32 0.0, %v2156
        %2158 = vmatmul.f32.gmra.mxu0 %v2060
        %v2159 = vpop.f32.mrf.mxu0
        %v2160 = vadd.f32 0.0, %v2159
        %2161 = vdwg.mxu0
        %v2162 = vadd.f32 %v1875, %v2088
        %v2163 = vadd.f32 %v1898, %v2111
        %v2164 = vadd.f32 %v1921, %v2134
        %v2165 = vadd.f32 %v1944, %v2157
        %v2166 = vadd.f32 %v1878, %v2091
        %v2167 = vadd.f32 %v1901, %v2114
        %v2168 = vadd.f32 %v1924, %v2137
        %v2169 = vadd.f32 %v1947, %v2160
        %s2170 = scalar_lea.vmem %s11, 12
        %v2171 = vld [vmem:[%s2170] sm:$0xf]
        %v2173 = vperm.slane %v2171, 0
        %v2174 = vperm.slane %v2171, 1
        %v2175 = vperm.slane %v2171, 2
        %v2176 = vperm.slane %v2171, 3
        %2177 = vrot.lane.b32.xlu0 %v2173, 16
        %v2178 = vpop.permute.xlu0 %2177
        %2179 = vrot.lane.b32.xlu0 %v2174, 16
        %v2180 = vpop.permute.xlu0 %2179
        %2181 = vrot.lane.b32.xlu0 %v2175, 16
        %v2182 = vpop.permute.xlu0 %2181
        %2183 = vrot.lane.b32.xlu0 %v2176, 16
        %v2184 = vpop.permute.xlu0 %2183
        %vm2185 = vcmask 130048
        %v2186 = vsel %vm2185, %v2178, %v2180
        %v2187 = vsel %vm2185, %v2180, %v2182
        %v2188 = vsel %vm2185, %v2182, %v2184
        %v2194 = vmul.f32 %v1595, %v2178
        %v2195 = vmul.f32 %v1571, %v2186
        %v2196 = vmul.f32 %v1572, %v2187
        %v2197 = vmul.f32 %v1573, %v2188
        %v2198 = vmul.f32 %v1598, %v2184
        %v2199 = vmul.f32 %v1596, %v2178
        %v2200 = vmul.f32 %v1574, %v2186
        %v2201 = vmul.f32 %v1575, %v2187
        %v2202 = vmul.f32 %v1576, %v2188
        %v2203 = vmul.f32 %v1599, %v2184
        %v2204 = vmul.f32 %v1597, %v2178
        %v2205 = vmul.f32 %v1577, %v2186
        %v2206 = vmul.f32 %v1578, %v2187
        %v2207 = vmul.f32 %v1579, %v2188
        %v2208 = vmul.f32 %v1600, %v2184
        %s2209 = scalar_lea.vmem %s1, 48
        %v2210 = vld [vmem:[%s2209] sm:$0xff]
        %v2211 = vld [vmem:[%s2209 + $0x8] sm:$0xff]
        %2227 = vrot.lane.b32.xlu0 %v2194, 112
        %v2228 = vpop.permute.xlu0 %2227
        %2229 = vrot.lane.b32.xlu0 %v2195, 112
        %v2230 = vpop.permute.xlu0 %2229
        %2231 = vrot.lane.b32.xlu0 %v2196, 112
        %v2232 = vpop.permute.xlu0 %2231
        %2233 = vrot.lane.b32.xlu0 %v2197, 112
        %v2234 = vpop.permute.xlu0 %2233
        %2235 = vrot.lane.b32.xlu0 %v2198, 112
        %v2236 = vpop.permute.xlu0 %2235
        %2237 = vrot.lane.b32.xlu0 %v2199, 112
        %v2238 = vpop.permute.xlu0 %2237
        %2239 = vrot.lane.b32.xlu0 %v2200, 112
        %v2240 = vpop.permute.xlu0 %2239
        %2241 = vrot.lane.b32.xlu0 %v2201, 112
        %v2242 = vpop.permute.xlu0 %2241
        %2243 = vrot.lane.b32.xlu0 %v2202, 112
        %v2244 = vpop.permute.xlu0 %2243
        %2245 = vrot.lane.b32.xlu0 %v2203, 112
        %v2246 = vpop.permute.xlu0 %2245
        %2247 = vrot.lane.b32.xlu0 %v2204, 112
        %v2248 = vpop.permute.xlu0 %2247
        %2249 = vrot.lane.b32.xlu0 %v2205, 112
        %v2250 = vpop.permute.xlu0 %2249
        %2251 = vrot.lane.b32.xlu0 %v2206, 112
        %v2252 = vpop.permute.xlu0 %2251
        %2253 = vrot.lane.b32.xlu0 %v2207, 112
        %v2254 = vpop.permute.xlu0 %2253
        %2255 = vrot.lane.b32.xlu0 %v2208, 112
        %v2256 = vpop.permute.xlu0 %2255
        %v2257 = vsel %vm1070, %v2228, %v2230
        %v2258 = vsel %vm1070, %v2230, %v2232
        %v2259 = vsel %vm1070, %v2232, %v2234
        %v2260 = vsel %vm1070, %v2234, %v2236
        %v2261 = vsel %vm1070, %v2238, %v2240
        %v2262 = vsel %vm1070, %v2240, %v2242
        %v2263 = vsel %vm1070, %v2242, %v2244
        %v2264 = vsel %vm1070, %v2244, %v2246
        %v2265 = vsel %vm1070, %v2248, %v2250
        %v2266 = vsel %vm1070, %v2250, %v2252
        %v2267 = vsel %vm1070, %v2252, %v2254
        %v2268 = vsel %vm1070, %v2254, %v2256
        %v2278 = vsel %vm1732, %v2210, 0
        %v2281 = vsel %vm1732, %v2211, 0
        %v2283 = vsel %vm1373, %v2265, 0
        %v2285 = vsel %vm1373, %v2266, 0
        %v2287 = vsel %vm1373, %v2267, 0
        %v2289 = vsel %vm1373, %v2268, 0
        %2291 = vmatpush.msra.mxu0 0.0
        %2292 = vmatpush.msra.mxu0 0.0
        %2293 = vmatpush.msra.mxu0 0.0
        %2294 = vmatpush.msra.mxu0 0.0
        %2295 = vmatpush.msra.mxu0 0.0
        %2296 = vmatpush.msra.mxu0 0.0
        %2297 = vmatpush.msra.mxu0 0.0
        %2298 = vmatpush.msra.mxu0 0.0
        %2299 = vmatpush.msra.mxu0 0.0
        %2300 = vmatpush.msra.mxu0 0.0
        %2301 = vmatpush.msra.mxu0 0.0
        %2302 = vmatpush.msra.mxu0 0.0
        %2303 = vmatpush.msra.mxu0 0.0
        %2304 = vmatpush.msra.mxu0 %v2283
        %2305 = vmatpush.msra.mxu0 %v2261
        %2306 = vmatpush.msra.mxu0 %v2257
        %2307 = vmatmul.f32.gmra.mxu0 %v2278
        %v2308 = vpop.f32.mrf.mxu0
        %v2309 = vadd.f32 0.0, %v2308
        %2310 = vmatmul.f32.gmra.mxu0 %v2281
        %v2311 = vpop.f32.mrf.mxu0
        %v2312 = vadd.f32 0.0, %v2311
        %2313 = vdwg.mxu0
        %2314 = vmatpush.msra.mxu0 0.0
        %2315 = vmatpush.msra.mxu0 0.0
        %2316 = vmatpush.msra.mxu0 0.0
        %2317 = vmatpush.msra.mxu0 0.0
        %2318 = vmatpush.msra.mxu0 0.0
        %2319 = vmatpush.msra.mxu0 0.0
        %2320 = vmatpush.msra.mxu0 0.0
        %2321 = vmatpush.msra.mxu0 0.0
        %2322 = vmatpush.msra.mxu0 0.0
        %2323 = vmatpush.msra.mxu0 0.0
        %2324 = vmatpush.msra.mxu0 0.0
        %2325 = vmatpush.msra.mxu0 0.0
        %2326 = vmatpush.msra.mxu0 0.0
        %2327 = vmatpush.msra.mxu0 %v2285
        %2328 = vmatpush.msra.mxu0 %v2262
        %2329 = vmatpush.msra.mxu0 %v2258
        %2330 = vmatmul.f32.gmra.mxu0 %v2278
        %v2331 = vpop.f32.mrf.mxu0
        %v2332 = vadd.f32 0.0, %v2331
        %2333 = vmatmul.f32.gmra.mxu0 %v2281
        %v2334 = vpop.f32.mrf.mxu0
        %v2335 = vadd.f32 0.0, %v2334
        %2336 = vdwg.mxu0
        %2337 = vmatpush.msra.mxu0 0.0
        %2338 = vmatpush.msra.mxu0 0.0
        %2339 = vmatpush.msra.mxu0 0.0
        %2340 = vmatpush.msra.mxu0 0.0
        %2341 = vmatpush.msra.mxu0 0.0
        %2342 = vmatpush.msra.mxu0 0.0
        %2343 = vmatpush.msra.mxu0 0.0
        %2344 = vmatpush.msra.mxu0 0.0
        %2345 = vmatpush.msra.mxu0 0.0
        %2346 = vmatpush.msra.mxu0 0.0
        %2347 = vmatpush.msra.mxu0 0.0
        %2348 = vmatpush.msra.mxu0 0.0
        %2349 = vmatpush.msra.mxu0 0.0
        %2350 = vmatpush.msra.mxu0 %v2287
        %2351 = vmatpush.msra.mxu0 %v2263
        %2352 = vmatpush.msra.mxu0 %v2259
        %2353 = vmatmul.f32.gmra.mxu0 %v2278
        %v2354 = vpop.f32.mrf.mxu0
        %v2355 = vadd.f32 0.0, %v2354
        %2356 = vmatmul.f32.gmra.mxu0 %v2281
        %v2357 = vpop.f32.mrf.mxu0
        %v2358 = vadd.f32 0.0, %v2357
        %2359 = vdwg.mxu0
        %2360 = vmatpush.msra.mxu0 0.0
        %2361 = vmatpush.msra.mxu0 0.0
        %2362 = vmatpush.msra.mxu0 0.0
        %2363 = vmatpush.msra.mxu0 0.0
        %2364 = vmatpush.msra.mxu0 0.0
        %2365 = vmatpush.msra.mxu0 0.0
        %2366 = vmatpush.msra.mxu0 0.0
        %2367 = vmatpush.msra.mxu0 0.0
        %2368 = vmatpush.msra.mxu0 0.0
        %2369 = vmatpush.msra.mxu0 0.0
        %2370 = vmatpush.msra.mxu0 0.0
        %2371 = vmatpush.msra.mxu0 0.0
        %2372 = vmatpush.msra.mxu0 0.0
        %2373 = vmatpush.msra.mxu0 %v2289
        %2374 = vmatpush.msra.mxu0 %v2264
        %2375 = vmatpush.msra.mxu0 %v2260
        %2376 = vmatmul.f32.gmra.mxu0 %v2278
        %v2377 = vpop.f32.mrf.mxu0
        %v2378 = vadd.f32 0.0, %v2377
        %2379 = vmatmul.f32.gmra.mxu0 %v2281
        %v2380 = vpop.f32.mrf.mxu0
        %v2381 = vadd.f32 0.0, %v2380
        %2382 = vdwg.mxu0
        %v2383 = vadd.f32 %v2162, %v2309
        %v2384 = vadd.f32 %v2163, %v2332
        %v2385 = vadd.f32 %v2164, %v2355
        %v2386 = vadd.f32 %v2165, %v2378
        %v2387 = vadd.f32 %v2166, %v2312
        %v2388 = vadd.f32 %v2167, %v2335
        %v2389 = vadd.f32 %v2168, %v2358
        %v2390 = vadd.f32 %v2169, %v2381
        %s2391 = scalar_lea.vmem %s1, 64
        %v2392 = vld [vmem:[%s2391] sm:$0xff]
        %v2393 = vld [vmem:[%s2391 + $0x8] sm:$0xff]
        %2400 = vrot.lane.b32.xlu0 %v1595, 111
        %v2401 = vpop.permute.xlu0 %2400
        %2402 = vrot.lane.b32.xlu0 %v1571, 111
        %v2403 = vpop.permute.xlu0 %2402
        %2404 = vrot.lane.b32.xlu0 %v1572, 111
        %v2405 = vpop.permute.xlu0 %2404
        %2406 = vrot.lane.b32.xlu0 %v1573, 111
        %v2407 = vpop.permute.xlu0 %2406
        %2408 = vrot.lane.b32.xlu0 %v1598, 111
        %v2409 = vpop.permute.xlu0 %2408
        %2410 = vrot.lane.b32.xlu0 %v1596, 111
        %v2411 = vpop.permute.xlu0 %2410
        %2412 = vrot.lane.b32.xlu0 %v1574, 111
        %v2413 = vpop.permute.xlu0 %2412
        %2414 = vrot.lane.b32.xlu0 %v1575, 111
        %v2415 = vpop.permute.xlu0 %2414
        %2416 = vrot.lane.b32.xlu0 %v1576, 111
        %v2417 = vpop.permute.xlu0 %2416
        %2418 = vrot.lane.b32.xlu0 %v1599, 111
        %v2419 = vpop.permute.xlu0 %2418
        %2420 = vrot.lane.b32.xlu0 %v1597, 111
        %v2421 = vpop.permute.xlu0 %2420
        %2422 = vrot.lane.b32.xlu0 %v1577, 111
        %v2423 = vpop.permute.xlu0 %2422
        %2424 = vrot.lane.b32.xlu0 %v1578, 111
        %v2425 = vpop.permute.xlu0 %2424
        %2426 = vrot.lane.b32.xlu0 %v1579, 111
        %v2427 = vpop.permute.xlu0 %2426
        %2428 = vrot.lane.b32.xlu0 %v1600, 111
        %v2429 = vpop.permute.xlu0 %2428
        %v2430 = vsel %vm1158, %v2401, %v2403
        %v2431 = vsel %vm1158, %v2403, %v2405
        %v2432 = vsel %vm1158, %v2405, %v2407
        %v2433 = vsel %vm1158, %v2407, %v2409
        %v2434 = vsel %vm1158, %v2411, %v2413
        %v2435 = vsel %vm1158, %v2413, %v2415
        %v2436 = vsel %vm1158, %v2415, %v2417
        %v2437 = vsel %vm1158, %v2417, %v2419
        %v2438 = vsel %vm1158, %v2421, %v2423
        %v2439 = vsel %vm1158, %v2423, %v2425
        %v2440 = vsel %vm1158, %v2425, %v2427
        %v2441 = vsel %vm1158, %v2427, %v2429
        %v2451 = vsel %vm1732, %v2392, 0
        %v2454 = vsel %vm1732, %v2393, 0
        %v2456 = vsel %vm1373, %v2438, 0
        %v2458 = vsel %vm1373, %v2439, 0
        %v2460 = vsel %vm1373, %v2440, 0
        %v2462 = vsel %vm1373, %v2441, 0
        %2464 = vmatpush.msra.mxu0 0.0
        %2465 = vmatpush.msra.mxu0 0.0
        %2466 = vmatpush.msra.mxu0 0.0
        %2467 = vmatpush.msra.mxu0 0.0
        %2468 = vmatpush.msra.mxu0 0.0
        %2469 = vmatpush.msra.mxu0 0.0
        %2470 = vmatpush.msra.mxu0 0.0
        %2471 = vmatpush.msra.mxu0 0.0
        %2472 = vmatpush.msra.mxu0 0.0
        %2473 = vmatpush.msra.mxu0 0.0
        %2474 = vmatpush.msra.mxu0 0.0
        %2475 = vmatpush.msra.mxu0 0.0
        %2476 = vmatpush.msra.mxu0 0.0
        %2477 = vmatpush.msra.mxu0 %v2456
        %2478 = vmatpush.msra.mxu0 %v2434
        %2479 = vmatpush.msra.mxu0 %v2430
        %2480 = vmatmul.f32.gmra.mxu0 %v2451
        %v2481 = vpop.f32.mrf.mxu0
        %v2482 = vadd.f32 0.0, %v2481
        %2483 = vmatmul.f32.gmra.mxu0 %v2454
        %v2484 = vpop.f32.mrf.mxu0
        %v2485 = vadd.f32 0.0, %v2484
        %2486 = vdwg.mxu0
        %2487 = vmatpush.msra.mxu0 0.0
        %2488 = vmatpush.msra.mxu0 0.0
        %2489 = vmatpush.msra.mxu0 0.0
        %2490 = vmatpush.msra.mxu0 0.0
        %2491 = vmatpush.msra.mxu0 0.0
        %2492 = vmatpush.msra.mxu0 0.0
        %2493 = vmatpush.msra.mxu0 0.0
        %2494 = vmatpush.msra.mxu0 0.0
        %2495 = vmatpush.msra.mxu0 0.0
        %2496 = vmatpush.msra.mxu0 0.0
        %2497 = vmatpush.msra.mxu0 0.0
        %2498 = vmatpush.msra.mxu0 0.0
        %2499 = vmatpush.msra.mxu0 0.0
        %2500 = vmatpush.msra.mxu0 %v2458
        %2501 = vmatpush.msra.mxu0 %v2435
        %2502 = vmatpush.msra.mxu0 %v2431
        %2503 = vmatmul.f32.gmra.mxu0 %v2451
        %v2504 = vpop.f32.mrf.mxu0
        %v2505 = vadd.f32 0.0, %v2504
        %2506 = vmatmul.f32.gmra.mxu0 %v2454
        %v2507 = vpop.f32.mrf.mxu0
        %v2508 = vadd.f32 0.0, %v2507
        %2509 = vdwg.mxu0
        %2510 = vmatpush.msra.mxu0 0.0
        %2511 = vmatpush.msra.mxu0 0.0
        %2512 = vmatpush.msra.mxu0 0.0
        %2513 = vmatpush.msra.mxu0 0.0
        %2514 = vmatpush.msra.mxu0 0.0
        %2515 = vmatpush.msra.mxu0 0.0
        %2516 = vmatpush.msra.mxu0 0.0
        %2517 = vmatpush.msra.mxu0 0.0
        %2518 = vmatpush.msra.mxu0 0.0
        %2519 = vmatpush.msra.mxu0 0.0
        %2520 = vmatpush.msra.mxu0 0.0
        %2521 = vmatpush.msra.mxu0 0.0
        %2522 = vmatpush.msra.mxu0 0.0
        %2523 = vmatpush.msra.mxu0 %v2460
        %2524 = vmatpush.msra.mxu0 %v2436
        %2525 = vmatpush.msra.mxu0 %v2432
        %2526 = vmatmul.f32.gmra.mxu0 %v2451
        %v2527 = vpop.f32.mrf.mxu0
        %v2528 = vadd.f32 0.0, %v2527
        %2529 = vmatmul.f32.gmra.mxu0 %v2454
        %v2530 = vpop.f32.mrf.mxu0
        %v2531 = vadd.f32 0.0, %v2530
        %2532 = vdwg.mxu0
        %2533 = vmatpush.msra.mxu0 0.0
        %2534 = vmatpush.msra.mxu0 0.0
        %2535 = vmatpush.msra.mxu0 0.0
        %2536 = vmatpush.msra.mxu0 0.0
        %2537 = vmatpush.msra.mxu0 0.0
        %2538 = vmatpush.msra.mxu0 0.0
        %2539 = vmatpush.msra.mxu0 0.0
        %2540 = vmatpush.msra.mxu0 0.0
        %2541 = vmatpush.msra.mxu0 0.0
        %2542 = vmatpush.msra.mxu0 0.0
        %2543 = vmatpush.msra.mxu0 0.0
        %2544 = vmatpush.msra.mxu0 0.0
        %2545 = vmatpush.msra.mxu0 0.0
        %2546 = vmatpush.msra.mxu0 %v2462
        %2547 = vmatpush.msra.mxu0 %v2437
        %2548 = vmatpush.msra.mxu0 %v2433
        %2549 = vmatmul.f32.gmra.mxu0 %v2451
        %v2550 = vpop.f32.mrf.mxu0
        %v2551 = vadd.f32 0.0, %v2550
        %2552 = vmatmul.f32.gmra.mxu0 %v2454
        %v2553 = vpop.f32.mrf.mxu0
        %v2554 = vadd.f32 0.0, %v2553
        %2555 = vdwg.mxu0
        %v2556 = vadd.f32 %v2383, %v2482
        %v2557 = vadd.f32 %v2384, %v2505
        %v2558 = vadd.f32 %v2385, %v2528
        %v2559 = vadd.f32 %v2386, %v2551
        %v2560 = vadd.f32 %v2387, %v2485
        %v2561 = vadd.f32 %v2388, %v2508
        %v2562 = vadd.f32 %v2389, %v2531
        %v2563 = vadd.f32 %v2390, %v2554
        %s2564 = scalar_lea.vmem %s11, 20
        %v2565 = vld [vmem:[%s2564] sm:$0xf]
        %v2567 = vperm.slane %v2565, 0
        %v2568 = vperm.slane %v2565, 1
        %v2569 = vperm.slane %v2565, 2
        %v2570 = vperm.slane %v2565, 3
        %2571 = vrot.lane.b32.xlu0 %v2567, 18
        %v2572 = vpop.permute.xlu0 %2571
        %2573 = vrot.lane.b32.xlu0 %v2568, 18
        %v2574 = vpop.permute.xlu0 %2573
        %2575 = vrot.lane.b32.xlu0 %v2569, 18
        %v2576 = vpop.permute.xlu0 %2575
        %2577 = vrot.lane.b32.xlu0 %v2570, 18
        %v2578 = vpop.permute.xlu0 %2577
        %vm2579 = vcmask 146432
        %v2580 = vsel %vm2579, %v2572, %v2574
        %v2581 = vsel %vm2579, %v2574, %v2576
        %v2582 = vsel %vm2579, %v2576, %v2578
        %v2588 = vmul.f32 %v1595, %v2572
        %v2589 = vmul.f32 %v1571, %v2580
        %v2590 = vmul.f32 %v1572, %v2581
        %v2591 = vmul.f32 %v1573, %v2582
        %v2592 = vmul.f32 %v1598, %v2578
        %v2593 = vmul.f32 %v1596, %v2572
        %v2594 = vmul.f32 %v1574, %v2580
        %v2595 = vmul.f32 %v1575, %v2581
        %v2596 = vmul.f32 %v1576, %v2582
        %v2597 = vmul.f32 %v1599, %v2578
        %v2598 = vmul.f32 %v1597, %v2572
        %v2599 = vmul.f32 %v1577, %v2580
        %v2600 = vmul.f32 %v1578, %v2581
        %v2601 = vmul.f32 %v1579, %v2582
        %v2602 = vmul.f32 %v1600, %v2578
        %s2603 = scalar_lea.vmem %s1, 80
        %v2604 = vld [vmem:[%s2603] sm:$0xff]
        %v2605 = vld [vmem:[%s2603 + $0x8] sm:$0xff]
        %2621 = vrot.lane.b32.xlu0 %v2588, 110
        %v2622 = vpop.permute.xlu0 %2621
        %2623 = vrot.lane.b32.xlu0 %v2589, 110
        %v2624 = vpop.permute.xlu0 %2623
        %2625 = vrot.lane.b32.xlu0 %v2590, 110
        %v2626 = vpop.permute.xlu0 %2625
        %2627 = vrot.lane.b32.xlu0 %v2591, 110
        %v2628 = vpop.permute.xlu0 %2627
        %2629 = vrot.lane.b32.xlu0 %v2592, 110
        %v2630 = vpop.permute.xlu0 %2629
        %2631 = vrot.lane.b32.xlu0 %v2593, 110
        %v2632 = vpop.permute.xlu0 %2631
        %2633 = vrot.lane.b32.xlu0 %v2594, 110
        %v2634 = vpop.permute.xlu0 %2633
        %2635 = vrot.lane.b32.xlu0 %v2595, 110
        %v2636 = vpop.permute.xlu0 %2635
        %2637 = vrot.lane.b32.xlu0 %v2596, 110
        %v2638 = vpop.permute.xlu0 %2637
        %2639 = vrot.lane.b32.xlu0 %v2597, 110
        %v2640 = vpop.permute.xlu0 %2639
        %2641 = vrot.lane.b32.xlu0 %v2598, 110
        %v2642 = vpop.permute.xlu0 %2641
        %2643 = vrot.lane.b32.xlu0 %v2599, 110
        %v2644 = vpop.permute.xlu0 %2643
        %2645 = vrot.lane.b32.xlu0 %v2600, 110
        %v2646 = vpop.permute.xlu0 %2645
        %2647 = vrot.lane.b32.xlu0 %v2601, 110
        %v2648 = vpop.permute.xlu0 %2647
        %2649 = vrot.lane.b32.xlu0 %v2602, 110
        %v2650 = vpop.permute.xlu0 %2649
        %v2651 = vsel %vm1246, %v2622, %v2624
        %v2652 = vsel %vm1246, %v2624, %v2626
        %v2653 = vsel %vm1246, %v2626, %v2628
        %v2654 = vsel %vm1246, %v2628, %v2630
        %v2655 = vsel %vm1246, %v2632, %v2634
        %v2656 = vsel %vm1246, %v2634, %v2636
        %v2657 = vsel %vm1246, %v2636, %v2638
        %v2658 = vsel %vm1246, %v2638, %v2640
        %v2659 = vsel %vm1246, %v2642, %v2644
        %v2660 = vsel %vm1246, %v2644, %v2646
        %v2661 = vsel %vm1246, %v2646, %v2648
        %v2662 = vsel %vm1246, %v2648, %v2650
        %v2672 = vsel %vm1732, %v2604, 0
        %v2675 = vsel %vm1732, %v2605, 0
        %v2677 = vsel %vm1373, %v2659, 0
        %v2679 = vsel %vm1373, %v2660, 0
        %v2681 = vsel %vm1373, %v2661, 0
        %v2683 = vsel %vm1373, %v2662, 0
        %2685 = vmatpush.msra.mxu0 0.0
        %2686 = vmatpush.msra.mxu0 0.0
        %2687 = vmatpush.msra.mxu0 0.0
        %2688 = vmatpush.msra.mxu0 0.0
        %2689 = vmatpush.msra.mxu0 0.0
        %2690 = vmatpush.msra.mxu0 0.0
        %2691 = vmatpush.msra.mxu0 0.0
        %2692 = vmatpush.msra.mxu0 0.0
        %2693 = vmatpush.msra.mxu0 0.0
        %2694 = vmatpush.msra.mxu0 0.0
        %2695 = vmatpush.msra.mxu0 0.0
        %2696 = vmatpush.msra.mxu0 0.0
        %2697 = vmatpush.msra.mxu0 0.0
        %2698 = vmatpush.msra.mxu0 %v2677
        %2699 = vmatpush.msra.mxu0 %v2655
        %2700 = vmatpush.msra.mxu0 %v2651
        %2701 = vmatmul.f32.gmra.mxu0 %v2672
        %v2702 = vpop.f32.mrf.mxu0
        %v2703 = vadd.f32 0.0, %v2702
        %2704 = vmatmul.f32.gmra.mxu0 %v2675
        %v2705 = vpop.f32.mrf.mxu0
        %v2706 = vadd.f32 0.0, %v2705
        %2707 = vdwg.mxu0
        %2708 = vmatpush.msra.mxu0 0.0
        %2709 = vmatpush.msra.mxu0 0.0
        %2710 = vmatpush.msra.mxu0 0.0
        %2711 = vmatpush.msra.mxu0 0.0
        %2712 = vmatpush.msra.mxu0 0.0
        %2713 = vmatpush.msra.mxu0 0.0
        %2714 = vmatpush.msra.mxu0 0.0
        %2715 = vmatpush.msra.mxu0 0.0
        %2716 = vmatpush.msra.mxu0 0.0
        %2717 = vmatpush.msra.mxu0 0.0
        %2718 = vmatpush.msra.mxu0 0.0
        %2719 = vmatpush.msra.mxu0 0.0
        %2720 = vmatpush.msra.mxu0 0.0
        %2721 = vmatpush.msra.mxu0 %v2679
        %2722 = vmatpush.msra.mxu0 %v2656
        %2723 = vmatpush.msra.mxu0 %v2652
        %2724 = vmatmul.f32.gmra.mxu0 %v2672
        %v2725 = vpop.f32.mrf.mxu0
        %v2726 = vadd.f32 0.0, %v2725
        %2727 = vmatmul.f32.gmra.mxu0 %v2675
        %v2728 = vpop.f32.mrf.mxu0
        %v2729 = vadd.f32 0.0, %v2728
        %2730 = vdwg.mxu0
        %2731 = vmatpush.msra.mxu0 0.0
        %2732 = vmatpush.msra.mxu0 0.0
        %2733 = vmatpush.msra.mxu0 0.0
        %2734 = vmatpush.msra.mxu0 0.0
        %2735 = vmatpush.msra.mxu0 0.0
        %2736 = vmatpush.msra.mxu0 0.0
        %2737 = vmatpush.msra.mxu0 0.0
        %2738 = vmatpush.msra.mxu0 0.0
        %2739 = vmatpush.msra.mxu0 0.0
        %2740 = vmatpush.msra.mxu0 0.0
        %2741 = vmatpush.msra.mxu0 0.0
        %2742 = vmatpush.msra.mxu0 0.0
        %2743 = vmatpush.msra.mxu0 0.0
        %2744 = vmatpush.msra.mxu0 %v2681
        %2745 = vmatpush.msra.mxu0 %v2657
        %2746 = vmatpush.msra.mxu0 %v2653
        %2747 = vmatmul.f32.gmra.mxu0 %v2672
        %v2748 = vpop.f32.mrf.mxu0
        %v2749 = vadd.f32 0.0, %v2748
        %2750 = vmatmul.f32.gmra.mxu0 %v2675
        %v2751 = vpop.f32.mrf.mxu0
        %v2752 = vadd.f32 0.0, %v2751
        %2753 = vdwg.mxu0
        %2754 = vmatpush.msra.mxu0 0.0
        %2755 = vmatpush.msra.mxu0 0.0
        %2756 = vmatpush.msra.mxu0 0.0
        %2757 = vmatpush.msra.mxu0 0.0
        %2758 = vmatpush.msra.mxu0 0.0
        %2759 = vmatpush.msra.mxu0 0.0
        %2760 = vmatpush.msra.mxu0 0.0
        %2761 = vmatpush.msra.mxu0 0.0
        %2762 = vmatpush.msra.mxu0 0.0
        %2763 = vmatpush.msra.mxu0 0.0
        %2764 = vmatpush.msra.mxu0 0.0
        %2765 = vmatpush.msra.mxu0 0.0
        %2766 = vmatpush.msra.mxu0 0.0
        %2767 = vmatpush.msra.mxu0 %v2683
        %2768 = vmatpush.msra.mxu0 %v2658
        %2769 = vmatpush.msra.mxu0 %v2654
        %2770 = vmatmul.f32.gmra.mxu0 %v2672
        %v2771 = vpop.f32.mrf.mxu0
        %v2772 = vadd.f32 0.0, %v2771
        %2773 = vmatmul.f32.gmra.mxu0 %v2675
        %v2774 = vpop.f32.mrf.mxu0
        %v2775 = vadd.f32 0.0, %v2774
        %2776 = vdwg.mxu0
        %v2777 = vadd.f32 %v2556, %v2703
        %v2778 = vadd.f32 %v2557, %v2726
        %v2779 = vadd.f32 %v2558, %v2749
        %v2780 = vadd.f32 %v2559, %v2772
        %v2781 = vadd.f32 %v2560, %v2706
        %v2782 = vadd.f32 %v2561, %v2729
        %v2783 = vadd.f32 %v2562, %v2752
        %v2784 = vadd.f32 %v2563, %v2775
        %s2785 = scalar_lea.vmem %s11, 24
        %v2786 = vld [vmem:[%s2785] sm:$0xf]
        %v2788 = vperm.slane %v2786, 0
        %v2789 = vperm.slane %v2786, 1
        %v2790 = vperm.slane %v2786, 2
        %v2791 = vperm.slane %v2786, 3
        %2792 = vrot.lane.b32.xlu0 %v2788, 32
        %v2793 = vpop.permute.xlu0 %2792
        %2794 = vrot.lane.b32.xlu0 %v2789, 32
        %v2795 = vpop.permute.xlu0 %2794
        %2796 = vrot.lane.b32.xlu0 %v2790, 32
        %v2797 = vpop.permute.xlu0 %2796
        %2798 = vrot.lane.b32.xlu0 %v2791, 32
        %v2799 = vpop.permute.xlu0 %2798
        %vm2800 = vcmask 261120
        %v2801 = vsel %vm2800, %v2793, %v2795
        %v2802 = vsel %vm2800, %v2795, %v2797
        %v2803 = vsel %vm2800, %v2797, %v2799
        %v2809 = vmul.f32 %v1595, %v2793
        %v2810 = vmul.f32 %v1571, %v2801
        %v2811 = vmul.f32 %v1572, %v2802
        %v2812 = vmul.f32 %v1573, %v2803
        %v2813 = vmul.f32 %v1598, %v2799
        %v2814 = vmul.f32 %v1596, %v2793
        %v2815 = vmul.f32 %v1574, %v2801
        %v2816 = vmul.f32 %v1575, %v2802
        %v2817 = vmul.f32 %v1576, %v2803
        %v2818 = vmul.f32 %v1599, %v2799
        %v2819 = vmul.f32 %v1597, %v2793
        %v2820 = vmul.f32 %v1577, %v2801
        %v2821 = vmul.f32 %v1578, %v2802
        %v2822 = vmul.f32 %v1579, %v2803
        %v2823 = vmul.f32 %v1600, %v2799
        %s2824 = scalar_lea.vmem %s1, 96
        %v2825 = vld [vmem:[%s2824] sm:$0xff]
        %v2826 = vld [vmem:[%s2824 + $0x8] sm:$0xff]
        %2842 = vrot.lane.b32.xlu0 %v2809, 96
        %v2843 = vpop.permute.xlu0 %2842
        %2844 = vrot.lane.b32.xlu0 %v2810, 96
        %v2845 = vpop.permute.xlu0 %2844
        %2846 = vrot.lane.b32.xlu0 %v2811, 96
        %v2847 = vpop.permute.xlu0 %2846
        %2848 = vrot.lane.b32.xlu0 %v2812, 96
        %v2849 = vpop.permute.xlu0 %2848
        %2850 = vrot.lane.b32.xlu0 %v2813, 96
        %v2851 = vpop.permute.xlu0 %2850
        %2852 = vrot.lane.b32.xlu0 %v2814, 96
        %v2853 = vpop.permute.xlu0 %2852
        %2854 = vrot.lane.b32.xlu0 %v2815, 96
        %v2855 = vpop.permute.xlu0 %2854
        %2856 = vrot.lane.b32.xlu0 %v2816, 96
        %v2857 = vpop.permute.xlu0 %2856
        %2858 = vrot.lane.b32.xlu0 %v2817, 96
        %v2859 = vpop.permute.xlu0 %2858
        %2860 = vrot.lane.b32.xlu0 %v2818, 96
        %v2861 = vpop.permute.xlu0 %2860
        %2862 = vrot.lane.b32.xlu0 %v2819, 96
        %v2863 = vpop.permute.xlu0 %2862
        %2864 = vrot.lane.b32.xlu0 %v2820, 96
        %v2865 = vpop.permute.xlu0 %2864
        %2866 = vrot.lane.b32.xlu0 %v2821, 96
        %v2867 = vpop.permute.xlu0 %2866
        %2868 = vrot.lane.b32.xlu0 %v2822, 96
        %v2869 = vpop.permute.xlu0 %2868
        %2870 = vrot.lane.b32.xlu0 %v2823, 96
        %v2871 = vpop.permute.xlu0 %2870
        %vm2872 = vcmask 785408
        %v2873 = vsel %vm2872, %v2843, %v2845
        %v2874 = vsel %vm2872, %v2845, %v2847
        %v2875 = vsel %vm2872, %v2847, %v2849
        %v2876 = vsel %vm2872, %v2849, %v2851
        %v2877 = vsel %vm2872, %v2853, %v2855
        %v2878 = vsel %vm2872, %v2855, %v2857
        %v2879 = vsel %vm2872, %v2857, %v2859
        %v2880 = vsel %vm2872, %v2859, %v2861
        %v2881 = vsel %vm2872, %v2863, %v2865
        %v2882 = vsel %vm2872, %v2865, %v2867
        %v2883 = vsel %vm2872, %v2867, %v2869
        %v2884 = vsel %vm2872, %v2869, %v2871
        %v2894 = vsel %vm1732, %v2825, 0
        %v2897 = vsel %vm1732, %v2826, 0
        %v2899 = vsel %vm1373, %v2881, 0
        %v2901 = vsel %vm1373, %v2882, 0
        %v2903 = vsel %vm1373, %v2883, 0
        %v2905 = vsel %vm1373, %v2884, 0
        %2907 = vmatpush.msra.mxu0 0.0
        %2908 = vmatpush.msra.mxu0 0.0
        %2909 = vmatpush.msra.mxu0 0.0
        %2910 = vmatpush.msra.mxu0 0.0
        %2911 = vmatpush.msra.mxu0 0.0
        %2912 = vmatpush.msra.mxu0 0.0
        %2913 = vmatpush.msra.mxu0 0.0
        %2914 = vmatpush.msra.mxu0 0.0
        %2915 = vmatpush.msra.mxu0 0.0
        %2916 = vmatpush.msra.mxu0 0.0
        %2917 = vmatpush.msra.mxu0 0.0
        %2918 = vmatpush.msra.mxu0 0.0
        %2919 = vmatpush.msra.mxu0 0.0
        %2920 = vmatpush.msra.mxu0 %v2899
        %2921 = vmatpush.msra.mxu0 %v2877
        %2922 = vmatpush.msra.mxu0 %v2873
        %2923 = vmatmul.f32.gmra.mxu0 %v2894
        %v2924 = vpop.f32.mrf.mxu0
        %v2925 = vadd.f32 0.0, %v2924
        %2926 = vmatmul.f32.gmra.mxu0 %v2897
        %v2927 = vpop.f32.mrf.mxu0
        %v2928 = vadd.f32 0.0, %v2927
        %2929 = vdwg.mxu0
        %2930 = vmatpush.msra.mxu0 0.0
        %2931 = vmatpush.msra.mxu0 0.0
        %2932 = vmatpush.msra.mxu0 0.0
        %2933 = vmatpush.msra.mxu0 0.0
        %2934 = vmatpush.msra.mxu0 0.0
        %2935 = vmatpush.msra.mxu0 0.0
        %2936 = vmatpush.msra.mxu0 0.0
        %2937 = vmatpush.msra.mxu0 0.0
        %2938 = vmatpush.msra.mxu0 0.0
        %2939 = vmatpush.msra.mxu0 0.0
        %2940 = vmatpush.msra.mxu0 0.0
        %2941 = vmatpush.msra.mxu0 0.0
        %2942 = vmatpush.msra.mxu0 0.0
        %2943 = vmatpush.msra.mxu0 %v2901
        %2944 = vmatpush.msra.mxu0 %v2878
        %2945 = vmatpush.msra.mxu0 %v2874
        %2946 = vmatmul.f32.gmra.mxu0 %v2894
        %v2947 = vpop.f32.mrf.mxu0
        %v2948 = vadd.f32 0.0, %v2947
        %2949 = vmatmul.f32.gmra.mxu0 %v2897
        %v2950 = vpop.f32.mrf.mxu0
        %v2951 = vadd.f32 0.0, %v2950
        %2952 = vdwg.mxu0
        %2953 = vmatpush.msra.mxu0 0.0
        %2954 = vmatpush.msra.mxu0 0.0
        %2955 = vmatpush.msra.mxu0 0.0
        %2956 = vmatpush.msra.mxu0 0.0
        %2957 = vmatpush.msra.mxu0 0.0
        %2958 = vmatpush.msra.mxu0 0.0
        %2959 = vmatpush.msra.mxu0 0.0
        %2960 = vmatpush.msra.mxu0 0.0
        %2961 = vmatpush.msra.mxu0 0.0
        %2962 = vmatpush.msra.mxu0 0.0
        %2963 = vmatpush.msra.mxu0 0.0
        %2964 = vmatpush.msra.mxu0 0.0
        %2965 = vmatpush.msra.mxu0 0.0
        %2966 = vmatpush.msra.mxu0 %v2903
        %2967 = vmatpush.msra.mxu0 %v2879
        %2968 = vmatpush.msra.mxu0 %v2875
        %2969 = vmatmul.f32.gmra.mxu0 %v2894
        %v2970 = vpop.f32.mrf.mxu0
        %v2971 = vadd.f32 0.0, %v2970
        %2972 = vmatmul.f32.gmra.mxu0 %v2897
        %v2973 = vpop.f32.mrf.mxu0
        %v2974 = vadd.f32 0.0, %v2973
        %2975 = vdwg.mxu0
        %2976 = vmatpush.msra.mxu0 0.0
        %2977 = vmatpush.msra.mxu0 0.0
        %2978 = vmatpush.msra.mxu0 0.0
        %2979 = vmatpush.msra.mxu0 0.0
        %2980 = vmatpush.msra.mxu0 0.0
        %2981 = vmatpush.msra.mxu0 0.0
        %2982 = vmatpush.msra.mxu0 0.0
        %2983 = vmatpush.msra.mxu0 0.0
        %2984 = vmatpush.msra.mxu0 0.0
        %2985 = vmatpush.msra.mxu0 0.0
        %2986 = vmatpush.msra.mxu0 0.0
        %2987 = vmatpush.msra.mxu0 0.0
        %2988 = vmatpush.msra.mxu0 0.0
        %2989 = vmatpush.msra.mxu0 %v2905
        %2990 = vmatpush.msra.mxu0 %v2880
        %2991 = vmatpush.msra.mxu0 %v2876
        %2992 = vmatmul.f32.gmra.mxu0 %v2894
        %v2993 = vpop.f32.mrf.mxu0
        %v2994 = vadd.f32 0.0, %v2993
        %2995 = vmatmul.f32.gmra.mxu0 %v2897
        %v2996 = vpop.f32.mrf.mxu0
        %v2997 = vadd.f32 0.0, %v2996
        %2998 = vdwg.mxu0
        %v2999 = vadd.f32 %v2777, %v2925
        %v3000 = vadd.f32 %v2778, %v2948
        %v3001 = vadd.f32 %v2779, %v2971
        %v3002 = vadd.f32 %v2780, %v2994
        %v3003 = vadd.f32 %v2781, %v2928
        %v3004 = vadd.f32 %v2782, %v2951
        %v3005 = vadd.f32 %v2783, %v2974
        %v3006 = vadd.f32 %v2784, %v2997
        %s3007 = scalar_lea.vmem %s11, 28
        %v3008 = vld [vmem:[%s3007] sm:$0xf]
        %v3010 = vperm.slane %v3008, 0
        %v3011 = vperm.slane %v3008, 1
        %v3012 = vperm.slane %v3008, 2
        %v3013 = vperm.slane %v3008, 3
        %3014 = vrot.lane.b32.xlu0 %v3010, 33
        %v3015 = vpop.permute.xlu0 %3014
        %3016 = vrot.lane.b32.xlu0 %v3011, 33
        %v3017 = vpop.permute.xlu0 %3016
        %3018 = vrot.lane.b32.xlu0 %v3012, 33
        %v3019 = vpop.permute.xlu0 %3018
        %3020 = vrot.lane.b32.xlu0 %v3013, 33
        %v3021 = vpop.permute.xlu0 %3020
        %vm3022 = vcmask 269312
        %v3023 = vsel %vm3022, %v3015, %v3017
        %v3024 = vsel %vm3022, %v3017, %v3019
        %v3025 = vsel %vm3022, %v3019, %v3021
        %v3031 = vmul.f32 %v1595, %v3015
        %v3032 = vmul.f32 %v1571, %v3023
        %v3033 = vmul.f32 %v1572, %v3024
        %v3034 = vmul.f32 %v1573, %v3025
        %v3035 = vmul.f32 %v1598, %v3021
        %v3036 = vmul.f32 %v1596, %v3015
        %v3037 = vmul.f32 %v1574, %v3023
        %v3038 = vmul.f32 %v1575, %v3024
        %v3039 = vmul.f32 %v1576, %v3025
        %v3040 = vmul.f32 %v1599, %v3021
        %v3041 = vmul.f32 %v1597, %v3015
        %v3042 = vmul.f32 %v1577, %v3023
        %v3043 = vmul.f32 %v1578, %v3024
        %v3044 = vmul.f32 %v1579, %v3025
        %v3045 = vmul.f32 %v1600, %v3021
        %s3046 = scalar_lea.vmem %s1, 112
        %v3047 = vld [vmem:[%s3046] sm:$0xff]
        %v3048 = vld [vmem:[%s3046 + $0x8] sm:$0xff]
        %3064 = vrot.lane.b32.xlu0 %v3031, 95
        %v3065 = vpop.permute.xlu0 %3064
        %3066 = vrot.lane.b32.xlu0 %v3032, 95
        %v3067 = vpop.permute.xlu0 %3066
        %3068 = vrot.lane.b32.xlu0 %v3033, 95
        %v3069 = vpop.permute.xlu0 %3068
        %3070 = vrot.lane.b32.xlu0 %v3034, 95
        %v3071 = vpop.permute.xlu0 %3070
        %3072 = vrot.lane.b32.xlu0 %v3035, 95
        %v3073 = vpop.permute.xlu0 %3072
        %3074 = vrot.lane.b32.xlu0 %v3036, 95
        %v3075 = vpop.permute.xlu0 %3074
        %3076 = vrot.lane.b32.xlu0 %v3037, 95
        %v3077 = vpop.permute.xlu0 %3076
        %3078 = vrot.lane.b32.xlu0 %v3038, 95
        %v3079 = vpop.permute.xlu0 %3078
        %3080 = vrot.lane.b32.xlu0 %v3039, 95
        %v3081 = vpop.permute.xlu0 %3080
        %3082 = vrot.lane.b32.xlu0 %v3040, 95
        %v3083 = vpop.permute.xlu0 %3082
        %3084 = vrot.lane.b32.xlu0 %v3041, 95
        %v3085 = vpop.permute.xlu0 %3084
        %3086 = vrot.lane.b32.xlu0 %v3042, 95
        %v3087 = vpop.permute.xlu0 %3086
        %3088 = vrot.lane.b32.xlu0 %v3043, 95
        %v3089 = vpop.permute.xlu0 %3088
        %3090 = vrot.lane.b32.xlu0 %v3044, 95
        %v3091 = vpop.permute.xlu0 %3090
        %3092 = vrot.lane.b32.xlu0 %v3045, 95
        %v3093 = vpop.permute.xlu0 %3092
        %vm3094 = vcmask 777216
        %v3095 = vsel %vm3094, %v3065, %v3067
        %v3096 = vsel %vm3094, %v3067, %v3069
        %v3097 = vsel %vm3094, %v3069, %v3071
        %v3098 = vsel %vm3094, %v3071, %v3073
        %v3099 = vsel %vm3094, %v3075, %v3077
        %v3100 = vsel %vm3094, %v3077, %v3079
        %v3101 = vsel %vm3094, %v3079, %v3081
        %v3102 = vsel %vm3094, %v3081, %v3083
        %v3103 = vsel %vm3094, %v3085, %v3087
        %v3104 = vsel %vm3094, %v3087, %v3089
        %v3105 = vsel %vm3094, %v3089, %v3091
        %v3106 = vsel %vm3094, %v3091, %v3093
        %v3116 = vsel %vm1732, %v3047, 0
        %v3119 = vsel %vm1732, %v3048, 0
        %v3121 = vsel %vm1373, %v3103, 0
        %v3123 = vsel %vm1373, %v3104, 0
        %v3125 = vsel %vm1373, %v3105, 0
        %v3127 = vsel %vm1373, %v3106, 0
        %3129 = vmatpush.msra.mxu0 0.0
        %3130 = vmatpush.msra.mxu0 0.0
        %3131 = vmatpush.msra.mxu0 0.0
        %3132 = vmatpush.msra.mxu0 0.0
        %3133 = vmatpush.msra.mxu0 0.0
        %3134 = vmatpush.msra.mxu0 0.0
        %3135 = vmatpush.msra.mxu0 0.0
        %3136 = vmatpush.msra.mxu0 0.0
        %3137 = vmatpush.msra.mxu0 0.0
        %3138 = vmatpush.msra.mxu0 0.0
        %3139 = vmatpush.msra.mxu0 0.0
        %3140 = vmatpush.msra.mxu0 0.0
        %3141 = vmatpush.msra.mxu0 0.0
        %3142 = vmatpush.msra.mxu0 %v3121
        %3143 = vmatpush.msra.mxu0 %v3099
        %3144 = vmatpush.msra.mxu0 %v3095
        %3145 = vmatmul.f32.gmra.mxu0 %v3116
        %v3146 = vpop.f32.mrf.mxu0
        %v3147 = vadd.f32 0.0, %v3146
        %3148 = vmatmul.f32.gmra.mxu0 %v3119
        %v3149 = vpop.f32.mrf.mxu0
        %v3150 = vadd.f32 0.0, %v3149
        %3151 = vdwg.mxu0
        %3152 = vmatpush.msra.mxu0 0.0
        %3153 = vmatpush.msra.mxu0 0.0
        %3154 = vmatpush.msra.mxu0 0.0
        %3155 = vmatpush.msra.mxu0 0.0
        %3156 = vmatpush.msra.mxu0 0.0
        %3157 = vmatpush.msra.mxu0 0.0
        %3158 = vmatpush.msra.mxu0 0.0
        %3159 = vmatpush.msra.mxu0 0.0
        %3160 = vmatpush.msra.mxu0 0.0
        %3161 = vmatpush.msra.mxu0 0.0
        %3162 = vmatpush.msra.mxu0 0.0
        %3163 = vmatpush.msra.mxu0 0.0
        %3164 = vmatpush.msra.mxu0 0.0
        %3165 = vmatpush.msra.mxu0 %v3123
        %3166 = vmatpush.msra.mxu0 %v3100
        %3167 = vmatpush.msra.mxu0 %v3096
        %3168 = vmatmul.f32.gmra.mxu0 %v3116
        %v3169 = vpop.f32.mrf.mxu0
        %v3170 = vadd.f32 0.0, %v3169
        %3171 = vmatmul.f32.gmra.mxu0 %v3119
        %v3172 = vpop.f32.mrf.mxu0
        %v3173 = vadd.f32 0.0, %v3172
        %3174 = vdwg.mxu0
        %3175 = vmatpush.msra.mxu0 0.0
        %3176 = vmatpush.msra.mxu0 0.0
        %3177 = vmatpush.msra.mxu0 0.0
        %3178 = vmatpush.msra.mxu0 0.0
        %3179 = vmatpush.msra.mxu0 0.0
        %3180 = vmatpush.msra.mxu0 0.0
        %3181 = vmatpush.msra.mxu0 0.0
        %3182 = vmatpush.msra.mxu0 0.0
        %3183 = vmatpush.msra.mxu0 0.0
        %3184 = vmatpush.msra.mxu0 0.0
        %3185 = vmatpush.msra.mxu0 0.0
        %3186 = vmatpush.msra.mxu0 0.0
        %3187 = vmatpush.msra.mxu0 0.0
        %3188 = vmatpush.msra.mxu0 %v3125
        %3189 = vmatpush.msra.mxu0 %v3101
        %3190 = vmatpush.msra.mxu0 %v3097
        %3191 = vmatmul.f32.gmra.mxu0 %v3116
        %v3192 = vpop.f32.mrf.mxu0
        %v3193 = vadd.f32 0.0, %v3192
        %3194 = vmatmul.f32.gmra.mxu0 %v3119
        %v3195 = vpop.f32.mrf.mxu0
        %v3196 = vadd.f32 0.0, %v3195
        %3197 = vdwg.mxu0
        %3198 = vmatpush.msra.mxu0 0.0
        %3199 = vmatpush.msra.mxu0 0.0
        %3200 = vmatpush.msra.mxu0 0.0
        %3201 = vmatpush.msra.mxu0 0.0
        %3202 = vmatpush.msra.mxu0 0.0
        %3203 = vmatpush.msra.mxu0 0.0
        %3204 = vmatpush.msra.mxu0 0.0
        %3205 = vmatpush.msra.mxu0 0.0
        %3206 = vmatpush.msra.mxu0 0.0
        %3207 = vmatpush.msra.mxu0 0.0
        %3208 = vmatpush.msra.mxu0 0.0
        %3209 = vmatpush.msra.mxu0 0.0
        %3210 = vmatpush.msra.mxu0 0.0
        %3211 = vmatpush.msra.mxu0 %v3127
        %3212 = vmatpush.msra.mxu0 %v3102
        %3213 = vmatpush.msra.mxu0 %v3098
        %3214 = vmatmul.f32.gmra.mxu0 %v3116
        %v3215 = vpop.f32.mrf.mxu0
        %v3216 = vadd.f32 0.0, %v3215
        %3217 = vmatmul.f32.gmra.mxu0 %v3119
        %v3218 = vpop.f32.mrf.mxu0
        %v3219 = vadd.f32 0.0, %v3218
        %3220 = vdwg.mxu0
        %v3221 = vadd.f32 %v2999, %v3147
        %v3222 = vadd.f32 %v3000, %v3170
        %v3223 = vadd.f32 %v3001, %v3193
        %v3224 = vadd.f32 %v3002, %v3216
        %v3225 = vadd.f32 %v3003, %v3150
        %v3226 = vadd.f32 %v3004, %v3173
        %v3227 = vadd.f32 %v3005, %v3196
        %v3228 = vadd.f32 %v3006, %v3219
        %s3229 = scalar_lea.vmem %s11, 32
        %v3230 = vld [vmem:[%s3229] sm:$0xf]
        %v3232 = vperm.slane %v3230, 0
        %v3233 = vperm.slane %v3230, 1
        %v3234 = vperm.slane %v3230, 2
        %v3235 = vperm.slane %v3230, 3
        %3236 = vrot.lane.b32.xlu0 %v3232, 34
        %v3237 = vpop.permute.xlu0 %3236
        %3238 = vrot.lane.b32.xlu0 %v3233, 34
        %v3239 = vpop.permute.xlu0 %3238
        %3240 = vrot.lane.b32.xlu0 %v3234, 34
        %v3241 = vpop.permute.xlu0 %3240
        %3242 = vrot.lane.b32.xlu0 %v3235, 34
        %v3243 = vpop.permute.xlu0 %3242
        %vm3244 = vcmask 277504
        %v3245 = vsel %vm3244, %v3237, %v3239
        %v3246 = vsel %vm3244, %v3239, %v3241
        %v3247 = vsel %vm3244, %v3241, %v3243
        %v3253 = vmul.f32 %v1595, %v3237
        %v3254 = vmul.f32 %v1571, %v3245
        %v3255 = vmul.f32 %v1572, %v3246
        %v3256 = vmul.f32 %v1573, %v3247
        %v3257 = vmul.f32 %v1598, %v3243
        %v3258 = vmul.f32 %v1596, %v3237
        %v3259 = vmul.f32 %v1574, %v3245
        %v3260 = vmul.f32 %v1575, %v3246
        %v3261 = vmul.f32 %v1576, %v3247
        %v3262 = vmul.f32 %v1599, %v3243
        %v3263 = vmul.f32 %v1597, %v3237
        %v3264 = vmul.f32 %v1577, %v3245
        %v3265 = vmul.f32 %v1578, %v3246
        %v3266 = vmul.f32 %v1579, %v3247
        %v3267 = vmul.f32 %v1600, %v3243
        %s3268 = scalar_lea.vmem %s1, 128
        %v3269 = vld [vmem:[%s3268] sm:$0xff]
        %v3270 = vld [vmem:[%s3268 + $0x8] sm:$0xff]
        %3286 = vrot.lane.b32.xlu0 %v3253, 94
        %v3287 = vpop.permute.xlu0 %3286
        %3288 = vrot.lane.b32.xlu0 %v3254, 94
        %v3289 = vpop.permute.xlu0 %3288
        %3290 = vrot.lane.b32.xlu0 %v3255, 94
        %v3291 = vpop.permute.xlu0 %3290
        %3292 = vrot.lane.b32.xlu0 %v3256, 94
        %v3293 = vpop.permute.xlu0 %3292
        %3294 = vrot.lane.b32.xlu0 %v3257, 94
        %v3295 = vpop.permute.xlu0 %3294
        %3296 = vrot.lane.b32.xlu0 %v3258, 94
        %v3297 = vpop.permute.xlu0 %3296
        %3298 = vrot.lane.b32.xlu0 %v3259, 94
        %v3299 = vpop.permute.xlu0 %3298
        %3300 = vrot.lane.b32.xlu0 %v3260, 94
        %v3301 = vpop.permute.xlu0 %3300
        %3302 = vrot.lane.b32.xlu0 %v3261, 94
        %v3303 = vpop.permute.xlu0 %3302
        %3304 = vrot.lane.b32.xlu0 %v3262, 94
        %v3305 = vpop.permute.xlu0 %3304
        %3306 = vrot.lane.b32.xlu0 %v3263, 94
        %v3307 = vpop.permute.xlu0 %3306
        %3308 = vrot.lane.b32.xlu0 %v3264, 94
        %v3309 = vpop.permute.xlu0 %3308
        %3310 = vrot.lane.b32.xlu0 %v3265, 94
        %v3311 = vpop.permute.xlu0 %3310
        %3312 = vrot.lane.b32.xlu0 %v3266, 94
        %v3313 = vpop.permute.xlu0 %3312
        %3314 = vrot.lane.b32.xlu0 %v3267, 94
        %v3315 = vpop.permute.xlu0 %3314
        %vm3316 = vcmask 769024
        %v3317 = vsel %vm3316, %v3287, %v3289
        %v3318 = vsel %vm3316, %v3289, %v3291
        %v3319 = vsel %vm3316, %v3291, %v3293
        %v3320 = vsel %vm3316, %v3293, %v3295
        %v3321 = vsel %vm3316, %v3297, %v3299
        %v3322 = vsel %vm3316, %v3299, %v3301
        %v3323 = vsel %vm3316, %v3301, %v3303
        %v3324 = vsel %vm3316, %v3303, %v3305
        %v3325 = vsel %vm3316, %v3307, %v3309
        %v3326 = vsel %vm3316, %v3309, %v3311
        %v3327 = vsel %vm3316, %v3311, %v3313
        %v3328 = vsel %vm3316, %v3313, %v3315
        %v3338 = vsel %vm1732, %v3269, 0
        %v3341 = vsel %vm1732, %v3270, 0
        %v3343 = vsel %vm1373, %v3325, 0
        %v3345 = vsel %vm1373, %v3326, 0
        %v3347 = vsel %vm1373, %v3327, 0
        %v3349 = vsel %vm1373, %v3328, 0
        %3351 = vmatpush.msra.mxu0 0.0
        %3352 = vmatpush.msra.mxu0 0.0
        %3353 = vmatpush.msra.mxu0 0.0
        %3354 = vmatpush.msra.mxu0 0.0
        %3355 = vmatpush.msra.mxu0 0.0
        %3356 = vmatpush.msra.mxu0 0.0
        %3357 = vmatpush.msra.mxu0 0.0
        %3358 = vmatpush.msra.mxu0 0.0
        %3359 = vmatpush.msra.mxu0 0.0
        %3360 = vmatpush.msra.mxu0 0.0
        %3361 = vmatpush.msra.mxu0 0.0
        %3362 = vmatpush.msra.mxu0 0.0
        %3363 = vmatpush.msra.mxu0 0.0
        %3364 = vmatpush.msra.mxu0 %v3343
        %3365 = vmatpush.msra.mxu0 %v3321
        %3366 = vmatpush.msra.mxu0 %v3317
        %3367 = vmatmul.f32.gmra.mxu0 %v3338
        %v3368 = vpop.f32.mrf.mxu0
        %v3369 = vadd.f32 0.0, %v3368
        %3370 = vmatmul.f32.gmra.mxu0 %v3341
        %v3371 = vpop.f32.mrf.mxu0
        %v3372 = vadd.f32 0.0, %v3371
        %3373 = vdwg.mxu0
        %3374 = vmatpush.msra.mxu0 0.0
        %3375 = vmatpush.msra.mxu0 0.0
        %3376 = vmatpush.msra.mxu0 0.0
        %3377 = vmatpush.msra.mxu0 0.0
        %3378 = vmatpush.msra.mxu0 0.0
        %3379 = vmatpush.msra.mxu0 0.0
        %3380 = vmatpush.msra.mxu0 0.0
        %3381 = vmatpush.msra.mxu0 0.0
        %3382 = vmatpush.msra.mxu0 0.0
        %3383 = vmatpush.msra.mxu0 0.0
        %3384 = vmatpush.msra.mxu0 0.0
        %3385 = vmatpush.msra.mxu0 0.0
        %3386 = vmatpush.msra.mxu0 0.0
        %3387 = vmatpush.msra.mxu0 %v3345
        %3388 = vmatpush.msra.mxu0 %v3322
        %3389 = vmatpush.msra.mxu0 %v3318
        %3390 = vmatmul.f32.gmra.mxu0 %v3338
        %v3391 = vpop.f32.mrf.mxu0
        %v3392 = vadd.f32 0.0, %v3391
        %3393 = vmatmul.f32.gmra.mxu0 %v3341
        %v3394 = vpop.f32.mrf.mxu0
        %v3395 = vadd.f32 0.0, %v3394
        %3396 = vdwg.mxu0
        %3397 = vmatpush.msra.mxu0 0.0
        %3398 = vmatpush.msra.mxu0 0.0
        %3399 = vmatpush.msra.mxu0 0.0
        %3400 = vmatpush.msra.mxu0 0.0
        %3401 = vmatpush.msra.mxu0 0.0
        %3402 = vmatpush.msra.mxu0 0.0
        %3403 = vmatpush.msra.mxu0 0.0
        %3404 = vmatpush.msra.mxu0 0.0
        %3405 = vmatpush.msra.mxu0 0.0
        %3406 = vmatpush.msra.mxu0 0.0
        %3407 = vmatpush.msra.mxu0 0.0
        %3408 = vmatpush.msra.mxu0 0.0
        %3409 = vmatpush.msra.mxu0 0.0
        %3410 = vmatpush.msra.mxu0 %v3347
        %3411 = vmatpush.msra.mxu0 %v3323
        %3412 = vmatpush.msra.mxu0 %v3319
        %3413 = vmatmul.f32.gmra.mxu0 %v3338
        %v3414 = vpop.f32.mrf.mxu0
        %v3415 = vadd.f32 0.0, %v3414
        %3416 = vmatmul.f32.gmra.mxu0 %v3341
        %v3417 = vpop.f32.mrf.mxu0
        %v3418 = vadd.f32 0.0, %v3417
        %3419 = vdwg.mxu0
        %3420 = vmatpush.msra.mxu0 0.0
        %3421 = vmatpush.msra.mxu0 0.0
        %3422 = vmatpush.msra.mxu0 0.0
        %3423 = vmatpush.msra.mxu0 0.0
        %3424 = vmatpush.msra.mxu0 0.0
        %3425 = vmatpush.msra.mxu0 0.0
        %3426 = vmatpush.msra.mxu0 0.0
        %3427 = vmatpush.msra.mxu0 0.0
        %3428 = vmatpush.msra.mxu0 0.0
        %3429 = vmatpush.msra.mxu0 0.0
        %3430 = vmatpush.msra.mxu0 0.0
        %3431 = vmatpush.msra.mxu0 0.0
        %3432 = vmatpush.msra.mxu0 0.0
        %3433 = vmatpush.msra.mxu0 %v3349
        %3434 = vmatpush.msra.mxu0 %v3324
        %3435 = vmatpush.msra.mxu0 %v3320
        %3436 = vmatmul.f32.gmra.mxu0 %v3338
        %v3437 = vpop.f32.mrf.mxu0
        %v3438 = vadd.f32 0.0, %v3437
        %3439 = vmatmul.f32.gmra.mxu0 %v3341
        %v3440 = vpop.f32.mrf.mxu0
        %v3441 = vadd.f32 0.0, %v3440
        %3442 = vdwg.mxu0
        %v3443 = vadd.f32 %v3221, %v3369
        %v3444 = vadd.f32 %v3222, %v3392
        %v3445 = vadd.f32 %v3223, %v3415
        %v3446 = vadd.f32 %v3224, %v3438
        %v3447 = vadd.f32 %v3225, %v3372
        %v3448 = vadd.f32 %v3226, %v3395
        %v3449 = vadd.f32 %v3227, %v3418
        %v3450 = vadd.f32 %v3228, %v3441
        %v3451 = vld [vmem:[%s3] sm:$0xff]
        %v3452 = vld [vmem:[%s3 + $0x8] sm:$0xff]
        %3454 = vset.pattern.permute.xlu0 0
        %3455 = vperm.xlu0 %3454, %v3451
        %v3456 = vpop.permute.xlu0 %3455
        %3459 = vset.pattern.permute.xlu0 0
        %3460 = vperm.xlu0 %3459, %v3452
        %v3461 = vpop.permute.xlu0 %3460
        %v3463 = vadd.f32 %v3443, %v3456
        %v3464 = vadd.f32 %v3444, %v3456
        %v3465 = vadd.f32 %v3445, %v3456
        %v3466 = vadd.f32 %v3446, %v3456
        %v3467 = vadd.f32 %v3447, %v3461
        %v3468 = vadd.f32 %v3448, %v3461
        %v3469 = vadd.f32 %v3449, %v3461
        %v3470 = vadd.f32 %v3450, %v3461
        %v3471 = vmax.f32 %v3463, 0.0
        %v3472 = vmax.f32 %v3464, 0.0
        %v3473 = vmax.f32 %v3465, 0.0
        %v3474 = vmax.f32 %v3466, 0.0
        %v3475 = vmin.f32 %v3471, 1.0
        %v3476 = vmin.f32 %v3472, 1.0
        %v3477 = vmin.f32 %v3473, 1.0
        %v3478 = vmin.f32 %v3474, 1.0
        %v3479 = vmax.f32 %v3467, 0.0
        %v3480 = vmax.f32 %v3468, 0.0
        %v3481 = vmax.f32 %v3469, 0.0
        %v3482 = vmax.f32 %v3470, 0.0
        %v3483 = vmin.f32 %v3479, 1.0
        %v3484 = vmin.f32 %v3480, 1.0
        %v3485 = vmin.f32 %v3481, 1.0
        %v3486 = vmin.f32 %v3482, 1.0
        %v3487 = vtanh.pop %v3467
        %v3488 = vtanh.pop %v3468
        %v3489 = vtanh.pop %v3469
        %v3490 = vtanh.pop %v3470
        %s3493 = scalar_lea.vmem [#allocation1], 1
        %3494 = vst [vmem:[%s3493] ss:$2 sm:$0xff] %v1346
        %s3495 = scalar_lea.vmem [#allocation1], 17
        %3496 = vst [vmem:[%s3495] ss:$2 sm:$0xff] %v1347
        %v3497 = vld.sshfl [vmem:[#allocation1] sm:$0xff pattern:$0x75316420]
        %v3498 = vld.sshfl [vmem:[#allocation1 + $0x8] sm:$0xff pattern:$0x75316420]
        %v3499 = vld.sshfl [vmem:[#allocation1 + $0x10] sm:$0xff pattern:$0x75316420]
        %v3500 = vld.sshfl [vmem:[#allocation1 + $0x18] sm:$0xff pattern:$0x75316420]
        %v3505 = vmul.f32 %v3475, %v3497
        %v3506 = vmul.f32 %v3476, %v3498
        %v3507 = vmul.f32 %v3477, %v3499
        %v3508 = vmul.f32 %v3478, %v3500
        %v3513 = vrot.slane %v3487, 4
        %v3514 = vrot.slane %v3488, 4
        %v3515 = vrot.slane %v3489, 4
        %v3516 = vrot.slane %v3490, 4
        %v3521 = vmul.f32 %v3475, %v3513
        %v3522 = vmul.f32 %v3476, %v3514
        %v3523 = vmul.f32 %v3477, %v3515
        %v3524 = vmul.f32 %v3478, %v3516
        %v3529 = vrot.slane %v3521, 4
        %v3530 = vrot.slane %v3522, 4
        %v3531 = vrot.slane %v3523, 4
        %v3532 = vrot.slane %v3524, 4
        %v3537 = vadd.f32 %v3505, %v3529
        %v3538 = vadd.f32 %v3506, %v3530
        %v3539 = vadd.f32 %v3507, %v3531
        %v3540 = vadd.f32 %v3508, %v3532
        %v3541 = vmax.f32 %v3537, 0.0
        %v3542 = vmax.f32 %v3538, 0.0
        %v3543 = vmax.f32 %v3539, 0.0
        %v3544 = vmax.f32 %v3540, 0.0
        %v3549 = vrot.slane %v3541, 4
        %v3550 = vrot.slane %v3542, 4
        %v3551 = vrot.slane %v3543, 4
        %v3552 = vrot.slane %v3544, 4
        %v3557 = vmul.f32 %v3483, %v3549
        %v3558 = vmul.f32 %v3484, %v3550
        %v3559 = vmul.f32 %v3485, %v3551
        %v3560 = vmul.f32 %v3486, %v3552
        %3561 = vst.sshfl [vmem:[#allocation1] sm:$0xff pattern:$0x75316420] %v3541
        %3562 = vst.sshfl [vmem:[#allocation1 + $0x8] sm:$0xff pattern:$0x75316420] %v3542
        %3563 = vst.sshfl [vmem:[#allocation1 + $0x10] sm:$0xff pattern:$0x75316420] %v3543
        %3564 = vst.sshfl [vmem:[#allocation1 + $0x18] sm:$0xff pattern:$0x75316420] %v3544
        %s3565 = scalar_lea.vmem [#allocation1], 1
        %v3566 = vld [vmem:[%s3565] ss:$2 sm:$0xff]
        %s3567 = scalar_lea.vmem [#allocation1], 17
        %v3568 = vld [vmem:[%s3567] ss:$2 sm:$0xff]
        %3571 = vst [vmem:[#allocation4] sm:$0xff] %v3566
        %3572 = vst [vmem:[#allocation4 + $0x8] sm:$0xff] %v3568
        %v3577 = vrot.slane %v3558, 4
        %v3578 = vrot.slane %v3560, 4
        %v3579 = vsel %vm1373, %v3557, %v3577
        %v3580 = vsel %vm1373, %v3559, %v3578
        %3583 = vst [vmem:[#allocation2] sm:$0xff] %v3579
        %3584 = vst [vmem:[#allocation2 + $0x8] sm:$0xff] %v3580
        %3585 = vrot.lane.b32.xlu0 %v3557, 17
        %v3586 = vpop.permute.xlu0 %3585
        %3587 = vrot.lane.b32.xlu0 %v3558, 17
        %v3588 = vpop.permute.xlu0 %3587
        %3589 = vrot.lane.b32.xlu0 %v3559, 17
        %v3590 = vpop.permute.xlu0 %3589
        %3591 = vrot.lane.b32.xlu0 %v3560, 17
        %v3592 = vpop.permute.xlu0 %3591
        %v3593 = vsel %vm1570, %v3586, %v3588
        %v3594 = vsel %vm1570, %v3588, %v3590
        %v3595 = vsel %vm1570, %v3590, %v3592
        %v3601 = vsel %vm1570, 0.0, %v3586
        %v3602 = vsel %vm1570, %v3592, 0.0
        %v3603 = vld [vmem:[%s11] sm:$0xf]
        %v3605 = vperm.slane %v3603, 0
        %v3606 = vperm.slane %v3603, 1
        %v3607 = vperm.slane %v3603, 2
        %v3608 = vperm.slane %v3603, 3
        %v3613 = vmul.f32 %v3601, %v3605
        %v3614 = vmul.f32 %v3593, %v3606
        %v3615 = vmul.f32 %v3594, %v3607
        %v3616 = vmul.f32 %v3595, %v3608
        %v3617 = vld [vmem:[%s5] sm:$0xf]
        %v3618 = vld [vmem:[%s1625] sm:$0xf]
        %v3620 = vperm.slane %v3618, 0
        %v3621 = vperm.slane %v3618, 1
        %v3622 = vperm.slane %v3618, 2
        %v3623 = vperm.slane %v3618, 3
        %3624 = vrot.lane.b32.xlu0 %v3620, 1
        %v3625 = vpop.permute.xlu0 %3624
        %3626 = vrot.lane.b32.xlu0 %v3621, 1
        %v3627 = vpop.permute.xlu0 %3626
        %3628 = vrot.lane.b32.xlu0 %v3622, 1
        %v3629 = vpop.permute.xlu0 %3628
        %3630 = vrot.lane.b32.xlu0 %v3623, 1
        %v3631 = vpop.permute.xlu0 %3630
        %v3632 = vsel %vm1640, %v3625, %v3627
        %v3633 = vsel %vm1640, %v3627, %v3629
        %v3634 = vsel %vm1640, %v3629, %v3631
        %v3640 = vmul.f32 %v3601, %v3625
        %v3641 = vmul.f32 %v3593, %v3632
        %v3642 = vmul.f32 %v3594, %v3633
        %v3643 = vmul.f32 %v3595, %v3634
        %v3644 = vmul.f32 %v3602, %v3631
        %s3645 = scalar_lea.vmem %s5, 4
        %v3646 = vld [vmem:[%s3645] sm:$0xf]
        %3652 = vrot.lane.b32.xlu0 %v3640, 127
        %v3653 = vpop.permute.xlu0 %3652
        %3654 = vrot.lane.b32.xlu0 %v3641, 127
        %v3655 = vpop.permute.xlu0 %3654
        %3656 = vrot.lane.b32.xlu0 %v3642, 127
        %v3657 = vpop.permute.xlu0 %3656
        %3658 = vrot.lane.b32.xlu0 %v3643, 127
        %v3659 = vpop.permute.xlu0 %3658
        %3660 = vrot.lane.b32.xlu0 %v3644, 127
        %v3661 = vpop.permute.xlu0 %3660
        %v3662 = vsel %vm605, %v3653, %v3655
        %v3663 = vsel %vm605, %v3655, %v3657
        %v3664 = vsel %vm605, %v3657, %v3659
        %v3665 = vsel %vm605, %v3659, %v3661
        %vm3666 = vcmask 31744
        %v3668 = vsel %vm3666, %v3646, 0
        %v3670 = vsel %vm1373, %v3662, 0
        %v3672 = vsel %vm1373, %v3663, 0
        %v3674 = vsel %vm1373, %v3664, 0
        %v3676 = vsel %vm1373, %v3665, 0
        %3678 = vmatpush.msra.mxu0 0.0
        %3679 = vmatpush.msra.mxu0 0.0
        %3680 = vmatpush.msra.mxu0 0.0
        %3681 = vmatpush.msra.mxu0 0.0
        %3682 = vmatpush.msra.mxu0 0.0
        %3683 = vmatpush.msra.mxu0 0.0
        %3684 = vmatpush.msra.mxu0 0.0
        %3685 = vmatpush.msra.mxu0 0.0
        %3686 = vmatpush.msra.mxu0 0.0
        %3687 = vmatpush.msra.mxu0 0.0
        %3688 = vmatpush.msra.mxu0 0.0
        %3689 = vmatpush.msra.mxu0 0.0
        %3690 = vmatpush.msra.mxu0 0.0
        %3691 = vmatpush.msra.mxu0 0.0
        %3692 = vmatpush.msra.mxu0 0.0
        %3693 = vmatpush.msra.mxu0 %v3670
        %3694 = vmatmul.f32.gmra.mxu0 %v3668
        %v3695 = vpop.f32.mrf.mxu0
        %v3696 = vadd.f32 0.0, %v3695
        %3697 = vdwg.mxu0
        %3698 = vmatpush.msra.mxu0 0.0
        %3699 = vmatpush.msra.mxu0 0.0
        %3700 = vmatpush.msra.mxu0 0.0
        %3701 = vmatpush.msra.mxu0 0.0
        %3702 = vmatpush.msra.mxu0 0.0
        %3703 = vmatpush.msra.mxu0 0.0
        %3704 = vmatpush.msra.mxu0 0.0
        %3705 = vmatpush.msra.mxu0 0.0
        %3706 = vmatpush.msra.mxu0 0.0
        %3707 = vmatpush.msra.mxu0 0.0
        %3708 = vmatpush.msra.mxu0 0.0
        %3709 = vmatpush.msra.mxu0 0.0
        %3710 = vmatpush.msra.mxu0 0.0
        %3711 = vmatpush.msra.mxu0 0.0
        %3712 = vmatpush.msra.mxu0 0.0
        %3713 = vmatpush.msra.mxu0 %v3672
        %3714 = vmatmul.f32.gmra.mxu0 %v3668
        %v3715 = vpop.f32.mrf.mxu0
        %v3716 = vadd.f32 0.0, %v3715
        %3717 = vdwg.mxu0
        %3718 = vmatpush.msra.mxu0 0.0
        %3719 = vmatpush.msra.mxu0 0.0
        %3720 = vmatpush.msra.mxu0 0.0
        %3721 = vmatpush.msra.mxu0 0.0
        %3722 = vmatpush.msra.mxu0 0.0
        %3723 = vmatpush.msra.mxu0 0.0
        %3724 = vmatpush.msra.mxu0 0.0
        %3725 = vmatpush.msra.mxu0 0.0
        %3726 = vmatpush.msra.mxu0 0.0
        %3727 = vmatpush.msra.mxu0 0.0
        %3728 = vmatpush.msra.mxu0 0.0
        %3729 = vmatpush.msra.mxu0 0.0
        %3730 = vmatpush.msra.mxu0 0.0
        %3731 = vmatpush.msra.mxu0 0.0
        %3732 = vmatpush.msra.mxu0 0.0
        %3733 = vmatpush.msra.mxu0 %v3674
        %3734 = vmatmul.f32.gmra.mxu0 %v3668
        %v3735 = vpop.f32.mrf.mxu0
        %v3736 = vadd.f32 0.0, %v3735
        %3737 = vdwg.mxu0
        %3738 = vmatpush.msra.mxu0 0.0
        %3739 = vmatpush.msra.mxu0 0.0
        %3740 = vmatpush.msra.mxu0 0.0
        %3741 = vmatpush.msra.mxu0 0.0
        %3742 = vmatpush.msra.mxu0 0.0
        %3743 = vmatpush.msra.mxu0 0.0
        %3744 = vmatpush.msra.mxu0 0.0
        %3745 = vmatpush.msra.mxu0 0.0
        %3746 = vmatpush.msra.mxu0 0.0
        %3747 = vmatpush.msra.mxu0 0.0
        %3748 = vmatpush.msra.mxu0 0.0
        %3749 = vmatpush.msra.mxu0 0.0
        %3750 = vmatpush.msra.mxu0 0.0
        %3751 = vmatpush.msra.mxu0 0.0
        %3752 = vmatpush.msra.mxu0 0.0
        %3753 = vmatpush.msra.mxu0 %v3676
        %3754 = vmatmul.f32.gmra.mxu0 %v3668
        %v3755 = vpop.f32.mrf.mxu0
        %v3756 = vadd.f32 0.0, %v3755
        %3757 = vdwg.mxu0
        %v3759 = vsel %vm3666, %v3617, 0
        %v3762 = vsel %vm1373, %v3613, 0
        %v3765 = vsel %vm1373, %v3614, 0
        %v3768 = vsel %vm1373, %v3615, 0
        %v3771 = vsel %vm1373, %v3616, 0
        %3773 = vmatpush.msra.mxu0 0.0
        %3774 = vmatpush.msra.mxu0 0.0
        %3775 = vmatpush.msra.mxu0 0.0
        %3776 = vmatpush.msra.mxu0 0.0
        %3777 = vmatpush.msra.mxu0 0.0
        %3778 = vmatpush.msra.mxu0 0.0
        %3779 = vmatpush.msra.mxu0 0.0
        %3780 = vmatpush.msra.mxu0 0.0
        %3781 = vmatpush.msra.mxu0 0.0
        %3782 = vmatpush.msra.mxu0 0.0
        %3783 = vmatpush.msra.mxu0 0.0
        %3784 = vmatpush.msra.mxu0 0.0
        %3785 = vmatpush.msra.mxu0 0.0
        %3786 = vmatpush.msra.mxu0 0.0
        %3787 = vmatpush.msra.mxu0 0.0
        %3788 = vmatpush.msra.mxu0 %v3762
        %3789 = vmatmul.f32.gmra.mxu0 %v3759
        %v3790 = vpop.f32.mrf.mxu0
        %v3791 = vadd.f32 %v3696, %v3790
        %3792 = vdwg.mxu0
        %3793 = vmatpush.msra.mxu0 0.0
        %3794 = vmatpush.msra.mxu0 0.0
        %3795 = vmatpush.msra.mxu0 0.0
        %3796 = vmatpush.msra.mxu0 0.0
        %3797 = vmatpush.msra.mxu0 0.0
        %3798 = vmatpush.msra.mxu0 0.0
        %3799 = vmatpush.msra.mxu0 0.0
        %3800 = vmatpush.msra.mxu0 0.0
        %3801 = vmatpush.msra.mxu0 0.0
        %3802 = vmatpush.msra.mxu0 0.0
        %3803 = vmatpush.msra.mxu0 0.0
        %3804 = vmatpush.msra.mxu0 0.0
        %3805 = vmatpush.msra.mxu0 0.0
        %3806 = vmatpush.msra.mxu0 0.0
        %3807 = vmatpush.msra.mxu0 0.0
        %3808 = vmatpush.msra.mxu0 %v3765
        %3809 = vmatmul.f32.gmra.mxu0 %v3759
        %v3810 = vpop.f32.mrf.mxu0
        %v3811 = vadd.f32 %v3716, %v3810
        %3812 = vdwg.mxu0
        %3813 = vmatpush.msra.mxu0 0.0
        %3814 = vmatpush.msra.mxu0 0.0
        %3815 = vmatpush.msra.mxu0 0.0
        %3816 = vmatpush.msra.mxu0 0.0
        %3817 = vmatpush.msra.mxu0 0.0
        %3818 = vmatpush.msra.mxu0 0.0
        %3819 = vmatpush.msra.mxu0 0.0
        %3820 = vmatpush.msra.mxu0 0.0
        %3821 = vmatpush.msra.mxu0 0.0
        %3822 = vmatpush.msra.mxu0 0.0
        %3823 = vmatpush.msra.mxu0 0.0
        %3824 = vmatpush.msra.mxu0 0.0
        %3825 = vmatpush.msra.mxu0 0.0
        %3826 = vmatpush.msra.mxu0 0.0
        %3827 = vmatpush.msra.mxu0 0.0
        %3828 = vmatpush.msra.mxu0 %v3768
        %3829 = vmatmul.f32.gmra.mxu0 %v3759
        %v3830 = vpop.f32.mrf.mxu0
        %v3831 = vadd.f32 %v3736, %v3830
        %3832 = vdwg.mxu0
        %3833 = vmatpush.msra.mxu0 0.0
        %3834 = vmatpush.msra.mxu0 0.0
        %3835 = vmatpush.msra.mxu0 0.0
        %3836 = vmatpush.msra.mxu0 0.0
        %3837 = vmatpush.msra.mxu0 0.0
        %3838 = vmatpush.msra.mxu0 0.0
        %3839 = vmatpush.msra.mxu0 0.0
        %3840 = vmatpush.msra.mxu0 0.0
        %3841 = vmatpush.msra.mxu0 0.0
        %3842 = vmatpush.msra.mxu0 0.0
        %3843 = vmatpush.msra.mxu0 0.0
        %3844 = vmatpush.msra.mxu0 0.0
        %3845 = vmatpush.msra.mxu0 0.0
        %3846 = vmatpush.msra.mxu0 0.0
        %3847 = vmatpush.msra.mxu0 0.0
        %3848 = vmatpush.msra.mxu0 %v3771
        %3849 = vmatmul.f32.gmra.mxu0 %v3759
        %v3850 = vpop.f32.mrf.mxu0
        %v3851 = vadd.f32 %v3756, %v3850
        %3852 = vdwg.mxu0
        %v3853 = vld [vmem:[%s1949] sm:$0xf]
        %v3855 = vperm.slane %v3853, 0
        %v3856 = vperm.slane %v3853, 1
        %v3857 = vperm.slane %v3853, 2
        %v3858 = vperm.slane %v3853, 3
        %3859 = vrot.lane.b32.xlu0 %v3855, 2
        %v3860 = vpop.permute.xlu0 %3859
        %3861 = vrot.lane.b32.xlu0 %v3856, 2
        %v3862 = vpop.permute.xlu0 %3861
        %3863 = vrot.lane.b32.xlu0 %v3857, 2
        %v3864 = vpop.permute.xlu0 %3863
        %3865 = vrot.lane.b32.xlu0 %v3858, 2
        %v3866 = vpop.permute.xlu0 %3865
        %v3867 = vsel %vm1964, %v3860, %v3862
        %v3868 = vsel %vm1964, %v3862, %v3864
        %v3869 = vsel %vm1964, %v3864, %v3866
        %v3875 = vmul.f32 %v3601, %v3860
        %v3876 = vmul.f32 %v3593, %v3867
        %v3877 = vmul.f32 %v3594, %v3868
        %v3878 = vmul.f32 %v3595, %v3869
        %v3879 = vmul.f32 %v3602, %v3866
        %s3880 = scalar_lea.vmem %s5, 8
        %v3881 = vld [vmem:[%s3880] sm:$0xf]
        %3887 = vrot.lane.b32.xlu0 %v3875, 126
        %v3888 = vpop.permute.xlu0 %3887
        %3889 = vrot.lane.b32.xlu0 %v3876, 126
        %v3890 = vpop.permute.xlu0 %3889
        %3891 = vrot.lane.b32.xlu0 %v3877, 126
        %v3892 = vpop.permute.xlu0 %3891
        %3893 = vrot.lane.b32.xlu0 %v3878, 126
        %v3894 = vpop.permute.xlu0 %3893
        %3895 = vrot.lane.b32.xlu0 %v3879, 126
        %v3896 = vpop.permute.xlu0 %3895
        %v3897 = vsel %vm731, %v3888, %v3890
        %v3898 = vsel %vm731, %v3890, %v3892
        %v3899 = vsel %vm731, %v3892, %v3894
        %v3900 = vsel %vm731, %v3894, %v3896
        %v3902 = vsel %vm3666, %v3881, 0
        %v3904 = vsel %vm1373, %v3897, 0
        %v3906 = vsel %vm1373, %v3898, 0
        %v3908 = vsel %vm1373, %v3899, 0
        %v3910 = vsel %vm1373, %v3900, 0
        %3912 = vmatpush.msra.mxu0 0.0
        %3913 = vmatpush.msra.mxu0 0.0
        %3914 = vmatpush.msra.mxu0 0.0
        %3915 = vmatpush.msra.mxu0 0.0
        %3916 = vmatpush.msra.mxu0 0.0
        %3917 = vmatpush.msra.mxu0 0.0
        %3918 = vmatpush.msra.mxu0 0.0
        %3919 = vmatpush.msra.mxu0 0.0
        %3920 = vmatpush.msra.mxu0 0.0
        %3921 = vmatpush.msra.mxu0 0.0
        %3922 = vmatpush.msra.mxu0 0.0
        %3923 = vmatpush.msra.mxu0 0.0
        %3924 = vmatpush.msra.mxu0 0.0
        %3925 = vmatpush.msra.mxu0 0.0
        %3926 = vmatpush.msra.mxu0 0.0
        %3927 = vmatpush.msra.mxu0 %v3904
        %3928 = vmatmul.f32.gmra.mxu0 %v3902
        %v3929 = vpop.f32.mrf.mxu0
        %v3930 = vadd.f32 0.0, %v3929
        %3931 = vdwg.mxu0
        %3932 = vmatpush.msra.mxu0 0.0
        %3933 = vmatpush.msra.mxu0 0.0
        %3934 = vmatpush.msra.mxu0 0.0
        %3935 = vmatpush.msra.mxu0 0.0
        %3936 = vmatpush.msra.mxu0 0.0
        %3937 = vmatpush.msra.mxu0 0.0
        %3938 = vmatpush.msra.mxu0 0.0
        %3939 = vmatpush.msra.mxu0 0.0
        %3940 = vmatpush.msra.mxu0 0.0
        %3941 = vmatpush.msra.mxu0 0.0
        %3942 = vmatpush.msra.mxu0 0.0
        %3943 = vmatpush.msra.mxu0 0.0
        %3944 = vmatpush.msra.mxu0 0.0
        %3945 = vmatpush.msra.mxu0 0.0
        %3946 = vmatpush.msra.mxu0 0.0
        %3947 = vmatpush.msra.mxu0 %v3906
        %3948 = vmatmul.f32.gmra.mxu0 %v3902
        %v3949 = vpop.f32.mrf.mxu0
        %v3950 = vadd.f32 0.0, %v3949
        %3951 = vdwg.mxu0
        %3952 = vmatpush.msra.mxu0 0.0
        %3953 = vmatpush.msra.mxu0 0.0
        %3954 = vmatpush.msra.mxu0 0.0
        %3955 = vmatpush.msra.mxu0 0.0
        %3956 = vmatpush.msra.mxu0 0.0
        %3957 = vmatpush.msra.mxu0 0.0
        %3958 = vmatpush.msra.mxu0 0.0
        %3959 = vmatpush.msra.mxu0 0.0
        %3960 = vmatpush.msra.mxu0 0.0
        %3961 = vmatpush.msra.mxu0 0.0
        %3962 = vmatpush.msra.mxu0 0.0
        %3963 = vmatpush.msra.mxu0 0.0
        %3964 = vmatpush.msra.mxu0 0.0
        %3965 = vmatpush.msra.mxu0 0.0
        %3966 = vmatpush.msra.mxu0 0.0
        %3967 = vmatpush.msra.mxu0 %v3908
        %3968 = vmatmul.f32.gmra.mxu0 %v3902
        %v3969 = vpop.f32.mrf.mxu0
        %v3970 = vadd.f32 0.0, %v3969
        %3971 = vdwg.mxu0
        %3972 = vmatpush.msra.mxu0 0.0
        %3973 = vmatpush.msra.mxu0 0.0
        %3974 = vmatpush.msra.mxu0 0.0
        %3975 = vmatpush.msra.mxu0 0.0
        %3976 = vmatpush.msra.mxu0 0.0
        %3977 = vmatpush.msra.mxu0 0.0
        %3978 = vmatpush.msra.mxu0 0.0
        %3979 = vmatpush.msra.mxu0 0.0
        %3980 = vmatpush.msra.mxu0 0.0
        %3981 = vmatpush.msra.mxu0 0.0
        %3982 = vmatpush.msra.mxu0 0.0
        %3983 = vmatpush.msra.mxu0 0.0
        %3984 = vmatpush.msra.mxu0 0.0
        %3985 = vmatpush.msra.mxu0 0.0
        %3986 = vmatpush.msra.mxu0 0.0
        %3987 = vmatpush.msra.mxu0 %v3910
        %3988 = vmatmul.f32.gmra.mxu0 %v3902
        %v3989 = vpop.f32.mrf.mxu0
        %v3990 = vadd.f32 0.0, %v3989
        %3991 = vdwg.mxu0
        %v3992 = vadd.f32 %v3791, %v3930
        %v3993 = vadd.f32 %v3811, %v3950
        %v3994 = vadd.f32 %v3831, %v3970
        %v3995 = vadd.f32 %v3851, %v3990
        %v3996 = vld [vmem:[%s2170] sm:$0xf]
        %v3998 = vperm.slane %v3996, 0
        %v3999 = vperm.slane %v3996, 1
        %v4000 = vperm.slane %v3996, 2
        %v4001 = vperm.slane %v3996, 3
        %4002 = vrot.lane.b32.xlu0 %v3998, 16
        %v4003 = vpop.permute.xlu0 %4002
        %4004 = vrot.lane.b32.xlu0 %v3999, 16
        %v4005 = vpop.permute.xlu0 %4004
        %4006 = vrot.lane.b32.xlu0 %v4000, 16
        %v4007 = vpop.permute.xlu0 %4006
        %4008 = vrot.lane.b32.xlu0 %v4001, 16
        %v4009 = vpop.permute.xlu0 %4008
        %v4010 = vsel %vm2185, %v4003, %v4005
        %v4011 = vsel %vm2185, %v4005, %v4007
        %v4012 = vsel %vm2185, %v4007, %v4009
        %v4018 = vmul.f32 %v3601, %v4003
        %v4019 = vmul.f32 %v3593, %v4010
        %v4020 = vmul.f32 %v3594, %v4011
        %v4021 = vmul.f32 %v3595, %v4012
        %v4022 = vmul.f32 %v3602, %v4009
        %s4023 = scalar_lea.vmem %s5, 12
        %v4024 = vld [vmem:[%s4023] sm:$0xf]
        %4030 = vrot.lane.b32.xlu0 %v4018, 112
        %v4031 = vpop.permute.xlu0 %4030
        %4032 = vrot.lane.b32.xlu0 %v4019, 112
        %v4033 = vpop.permute.xlu0 %4032
        %4034 = vrot.lane.b32.xlu0 %v4020, 112
        %v4035 = vpop.permute.xlu0 %4034
        %4036 = vrot.lane.b32.xlu0 %v4021, 112
        %v4037 = vpop.permute.xlu0 %4036
        %4038 = vrot.lane.b32.xlu0 %v4022, 112
        %v4039 = vpop.permute.xlu0 %4038
        %v4040 = vsel %vm1070, %v4031, %v4033
        %v4041 = vsel %vm1070, %v4033, %v4035
        %v4042 = vsel %vm1070, %v4035, %v4037
        %v4043 = vsel %vm1070, %v4037, %v4039
        %v4045 = vsel %vm3666, %v4024, 0
        %v4047 = vsel %vm1373, %v4040, 0
        %v4049 = vsel %vm1373, %v4041, 0
        %v4051 = vsel %vm1373, %v4042, 0
        %v4053 = vsel %vm1373, %v4043, 0
        %4055 = vmatpush.msra.mxu0 0.0
        %4056 = vmatpush.msra.mxu0 0.0
        %4057 = vmatpush.msra.mxu0 0.0
        %4058 = vmatpush.msra.mxu0 0.0
        %4059 = vmatpush.msra.mxu0 0.0
        %4060 = vmatpush.msra.mxu0 0.0
        %4061 = vmatpush.msra.mxu0 0.0
        %4062 = vmatpush.msra.mxu0 0.0
        %4063 = vmatpush.msra.mxu0 0.0
        %4064 = vmatpush.msra.mxu0 0.0
        %4065 = vmatpush.msra.mxu0 0.0
        %4066 = vmatpush.msra.mxu0 0.0
        %4067 = vmatpush.msra.mxu0 0.0
        %4068 = vmatpush.msra.mxu0 0.0
        %4069 = vmatpush.msra.mxu0 0.0
        %4070 = vmatpush.msra.mxu0 %v4047
        %4071 = vmatmul.f32.gmra.mxu0 %v4045
        %v4072 = vpop.f32.mrf.mxu0
        %v4073 = vadd.f32 0.0, %v4072
        %4074 = vdwg.mxu0
        %4075 = vmatpush.msra.mxu0 0.0
        %4076 = vmatpush.msra.mxu0 0.0
        %4077 = vmatpush.msra.mxu0 0.0
        %4078 = vmatpush.msra.mxu0 0.0
        %4079 = vmatpush.msra.mxu0 0.0
        %4080 = vmatpush.msra.mxu0 0.0
        %4081 = vmatpush.msra.mxu0 0.0
        %4082 = vmatpush.msra.mxu0 0.0
        %4083 = vmatpush.msra.mxu0 0.0
        %4084 = vmatpush.msra.mxu0 0.0
        %4085 = vmatpush.msra.mxu0 0.0
        %4086 = vmatpush.msra.mxu0 0.0
        %4087 = vmatpush.msra.mxu0 0.0
        %4088 = vmatpush.msra.mxu0 0.0
        %4089 = vmatpush.msra.mxu0 0.0
        %4090 = vmatpush.msra.mxu0 %v4049
        %4091 = vmatmul.f32.gmra.mxu0 %v4045
        %v4092 = vpop.f32.mrf.mxu0
        %v4093 = vadd.f32 0.0, %v4092
        %4094 = vdwg.mxu0
        %4095 = vmatpush.msra.mxu0 0.0
        %4096 = vmatpush.msra.mxu0 0.0
        %4097 = vmatpush.msra.mxu0 0.0
        %4098 = vmatpush.msra.mxu0 0.0
        %4099 = vmatpush.msra.mxu0 0.0
        %4100 = vmatpush.msra.mxu0 0.0
        %4101 = vmatpush.msra.mxu0 0.0
        %4102 = vmatpush.msra.mxu0 0.0
        %4103 = vmatpush.msra.mxu0 0.0
        %4104 = vmatpush.msra.mxu0 0.0
        %4105 = vmatpush.msra.mxu0 0.0
        %4106 = vmatpush.msra.mxu0 0.0
        %4107 = vmatpush.msra.mxu0 0.0
        %4108 = vmatpush.msra.mxu0 0.0
        %4109 = vmatpush.msra.mxu0 0.0
        %4110 = vmatpush.msra.mxu0 %v4051
        %4111 = vmatmul.f32.gmra.mxu0 %v4045
        %v4112 = vpop.f32.mrf.mxu0
        %v4113 = vadd.f32 0.0, %v4112
        %4114 = vdwg.mxu0
        %4115 = vmatpush.msra.mxu0 0.0
        %4116 = vmatpush.msra.mxu0 0.0
        %4117 = vmatpush.msra.mxu0 0.0
        %4118 = vmatpush.msra.mxu0 0.0
        %4119 = vmatpush.msra.mxu0 0.0
        %4120 = vmatpush.msra.mxu0 0.0
        %4121 = vmatpush.msra.mxu0 0.0
        %4122 = vmatpush.msra.mxu0 0.0
        %4123 = vmatpush.msra.mxu0 0.0
        %4124 = vmatpush.msra.mxu0 0.0
        %4125 = vmatpush.msra.mxu0 0.0
        %4126 = vmatpush.msra.mxu0 0.0
        %4127 = vmatpush.msra.mxu0 0.0
        %4128 = vmatpush.msra.mxu0 0.0
        %4129 = vmatpush.msra.mxu0 0.0
        %4130 = vmatpush.msra.mxu0 %v4053
        %4131 = vmatmul.f32.gmra.mxu0 %v4045
        %v4132 = vpop.f32.mrf.mxu0
        %v4133 = vadd.f32 0.0, %v4132
        %4134 = vdwg.mxu0
        %v4135 = vadd.f32 %v3992, %v4073
        %v4136 = vadd.f32 %v3993, %v4093
        %v4137 = vadd.f32 %v3994, %v4113
        %v4138 = vadd.f32 %v3995, %v4133
        %s4139 = scalar_lea.vmem %s5, 16
        %v4140 = vld [vmem:[%s4139] sm:$0xf]
        %4143 = vrot.lane.b32.xlu0 %v3601, 111
        %v4144 = vpop.permute.xlu0 %4143
        %4145 = vrot.lane.b32.xlu0 %v3593, 111
        %v4146 = vpop.permute.xlu0 %4145
        %4147 = vrot.lane.b32.xlu0 %v3594, 111
        %v4148 = vpop.permute.xlu0 %4147
        %4149 = vrot.lane.b32.xlu0 %v3595, 111
        %v4150 = vpop.permute.xlu0 %4149
        %4151 = vrot.lane.b32.xlu0 %v3602, 111
        %v4152 = vpop.permute.xlu0 %4151
        %v4153 = vsel %vm1158, %v4144, %v4146
        %v4154 = vsel %vm1158, %v4146, %v4148
        %v4155 = vsel %vm1158, %v4148, %v4150
        %v4156 = vsel %vm1158, %v4150, %v4152
        %v4158 = vsel %vm3666, %v4140, 0
        %v4160 = vsel %vm1373, %v4153, 0
        %v4162 = vsel %vm1373, %v4154, 0
        %v4164 = vsel %vm1373, %v4155, 0
        %v4166 = vsel %vm1373, %v4156, 0
        %4168 = vmatpush.msra.mxu0 0.0
        %4169 = vmatpush.msra.mxu0 0.0
        %4170 = vmatpush.msra.mxu0 0.0
        %4171 = vmatpush.msra.mxu0 0.0
        %4172 = vmatpush.msra.mxu0 0.0
        %4173 = vmatpush.msra.mxu0 0.0
        %4174 = vmatpush.msra.mxu0 0.0
        %4175 = vmatpush.msra.mxu0 0.0
        %4176 = vmatpush.msra.mxu0 0.0
        %4177 = vmatpush.msra.mxu0 0.0
        %4178 = vmatpush.msra.mxu0 0.0
        %4179 = vmatpush.msra.mxu0 0.0
        %4180 = vmatpush.msra.mxu0 0.0
        %4181 = vmatpush.msra.mxu0 0.0
        %4182 = vmatpush.msra.mxu0 0.0
        %4183 = vmatpush.msra.mxu0 %v4160
        %4184 = vmatmul.f32.gmra.mxu0 %v4158
        %v4185 = vpop.f32.mrf.mxu0
        %v4186 = vadd.f32 0.0, %v4185
        %4187 = vdwg.mxu0
        %4188 = vmatpush.msra.mxu0 0.0
        %4189 = vmatpush.msra.mxu0 0.0
        %4190 = vmatpush.msra.mxu0 0.0
        %4191 = vmatpush.msra.mxu0 0.0
        %4192 = vmatpush.msra.mxu0 0.0
        %4193 = vmatpush.msra.mxu0 0.0
        %4194 = vmatpush.msra.mxu0 0.0
        %4195 = vmatpush.msra.mxu0 0.0
        %4196 = vmatpush.msra.mxu0 0.0
        %4197 = vmatpush.msra.mxu0 0.0
        %4198 = vmatpush.msra.mxu0 0.0
        %4199 = vmatpush.msra.mxu0 0.0
        %4200 = vmatpush.msra.mxu0 0.0
        %4201 = vmatpush.msra.mxu0 0.0
        %4202 = vmatpush.msra.mxu0 0.0
        %4203 = vmatpush.msra.mxu0 %v4162
        %4204 = vmatmul.f32.gmra.mxu0 %v4158
        %v4205 = vpop.f32.mrf.mxu0
        %v4206 = vadd.f32 0.0, %v4205
        %4207 = vdwg.mxu0
        %4208 = vmatpush.msra.mxu0 0.0
        %4209 = vmatpush.msra.mxu0 0.0
        %4210 = vmatpush.msra.mxu0 0.0
        %4211 = vmatpush.msra.mxu0 0.0
        %4212 = vmatpush.msra.mxu0 0.0
        %4213 = vmatpush.msra.mxu0 0.0
        %4214 = vmatpush.msra.mxu0 0.0
        %4215 = vmatpush.msra.mxu0 0.0
        %4216 = vmatpush.msra.mxu0 0.0
        %4217 = vmatpush.msra.mxu0 0.0
        %4218 = vmatpush.msra.mxu0 0.0
        %4219 = vmatpush.msra.mxu0 0.0
        %4220 = vmatpush.msra.mxu0 0.0
        %4221 = vmatpush.msra.mxu0 0.0
        %4222 = vmatpush.msra.mxu0 0.0
        %4223 = vmatpush.msra.mxu0 %v4164
        %4224 = vmatmul.f32.gmra.mxu0 %v4158
        %v4225 = vpop.f32.mrf.mxu0
        %v4226 = vadd.f32 0.0, %v4225
        %4227 = vdwg.mxu0
        %4228 = vmatpush.msra.mxu0 0.0
        %4229 = vmatpush.msra.mxu0 0.0
        %4230 = vmatpush.msra.mxu0 0.0
        %4231 = vmatpush.msra.mxu0 0.0
        %4232 = vmatpush.msra.mxu0 0.0
        %4233 = vmatpush.msra.mxu0 0.0
        %4234 = vmatpush.msra.mxu0 0.0
        %4235 = vmatpush.msra.mxu0 0.0
        %4236 = vmatpush.msra.mxu0 0.0
        %4237 = vmatpush.msra.mxu0 0.0
        %4238 = vmatpush.msra.mxu0 0.0
        %4239 = vmatpush.msra.mxu0 0.0
        %4240 = vmatpush.msra.mxu0 0.0
        %4241 = vmatpush.msra.mxu0 0.0
        %4242 = vmatpush.msra.mxu0 0.0
        %4243 = vmatpush.msra.mxu0 %v4166
        %4244 = vmatmul.f32.gmra.mxu0 %v4158
        %v4245 = vpop.f32.mrf.mxu0
        %v4246 = vadd.f32 0.0, %v4245
        %4247 = vdwg.mxu0
        %v4248 = vadd.f32 %v4135, %v4186
        %v4249 = vadd.f32 %v4136, %v4206
        %v4250 = vadd.f32 %v4137, %v4226
        %v4251 = vadd.f32 %v4138, %v4246
        %v4252 = vld [vmem:[%s2564] sm:$0xf]
        %v4254 = vperm.slane %v4252, 0
        %v4255 = vperm.slane %v4252, 1
        %v4256 = vperm.slane %v4252, 2
        %v4257 = vperm.slane %v4252, 3
        %4258 = vrot.lane.b32.xlu0 %v4254, 18
        %v4259 = vpop.permute.xlu0 %4258
        %4260 = vrot.lane.b32.xlu0 %v4255, 18
        %v4261 = vpop.permute.xlu0 %4260
        %4262 = vrot.lane.b32.xlu0 %v4256, 18
        %v4263 = vpop.permute.xlu0 %4262
        %4264 = vrot.lane.b32.xlu0 %v4257, 18
        %v4265 = vpop.permute.xlu0 %4264
        %v4266 = vsel %vm2579, %v4259, %v4261
        %v4267 = vsel %vm2579, %v4261, %v4263
        %v4268 = vsel %vm2579, %v4263, %v4265
        %v4274 = vmul.f32 %v3601, %v4259
        %v4275 = vmul.f32 %v3593, %v4266
        %v4276 = vmul.f32 %v3594, %v4267
        %v4277 = vmul.f32 %v3595, %v4268
        %v4278 = vmul.f32 %v3602, %v4265
        %s4279 = scalar_lea.vmem %s5, 20
        %v4280 = vld [vmem:[%s4279] sm:$0xf]
        %4286 = vrot.lane.b32.xlu0 %v4274, 110
        %v4287 = vpop.permute.xlu0 %4286
        %4288 = vrot.lane.b32.xlu0 %v4275, 110
        %v4289 = vpop.permute.xlu0 %4288
        %4290 = vrot.lane.b32.xlu0 %v4276, 110
        %v4291 = vpop.permute.xlu0 %4290
        %4292 = vrot.lane.b32.xlu0 %v4277, 110
        %v4293 = vpop.permute.xlu0 %4292
        %4294 = vrot.lane.b32.xlu0 %v4278, 110
        %v4295 = vpop.permute.xlu0 %4294
        %v4296 = vsel %vm1246, %v4287, %v4289
        %v4297 = vsel %vm1246, %v4289, %v4291
        %v4298 = vsel %vm1246, %v4291, %v4293
        %v4299 = vsel %vm1246, %v4293, %v4295
        %v4301 = vsel %vm3666, %v4280, 0
        %v4303 = vsel %vm1373, %v4296, 0
        %v4305 = vsel %vm1373, %v4297, 0
        %v4307 = vsel %vm1373, %v4298, 0
        %v4309 = vsel %vm1373, %v4299, 0
        %4311 = vmatpush.msra.mxu0 0.0
        %4312 = vmatpush.msra.mxu0 0.0
        %4313 = vmatpush.msra.mxu0 0.0
        %4314 = vmatpush.msra.mxu0 0.0
        %4315 = vmatpush.msra.mxu0 0.0
        %4316 = vmatpush.msra.mxu0 0.0
        %4317 = vmatpush.msra.mxu0 0.0
        %4318 = vmatpush.msra.mxu0 0.0
        %4319 = vmatpush.msra.mxu0 0.0
        %4320 = vmatpush.msra.mxu0 0.0
        %4321 = vmatpush.msra.mxu0 0.0
        %4322 = vmatpush.msra.mxu0 0.0
        %4323 = vmatpush.msra.mxu0 0.0
        %4324 = vmatpush.msra.mxu0 0.0
        %4325 = vmatpush.msra.mxu0 0.0
        %4326 = vmatpush.msra.mxu0 %v4303
        %4327 = vmatmul.f32.gmra.mxu0 %v4301
        %v4328 = vpop.f32.mrf.mxu0
        %v4329 = vadd.f32 0.0, %v4328
        %4330 = vdwg.mxu0
        %4331 = vmatpush.msra.mxu0 0.0
        %4332 = vmatpush.msra.mxu0 0.0
        %4333 = vmatpush.msra.mxu0 0.0
        %4334 = vmatpush.msra.mxu0 0.0
        %4335 = vmatpush.msra.mxu0 0.0
        %4336 = vmatpush.msra.mxu0 0.0
        %4337 = vmatpush.msra.mxu0 0.0
        %4338 = vmatpush.msra.mxu0 0.0
        %4339 = vmatpush.msra.mxu0 0.0
        %4340 = vmatpush.msra.mxu0 0.0
        %4341 = vmatpush.msra.mxu0 0.0
        %4342 = vmatpush.msra.mxu0 0.0
        %4343 = vmatpush.msra.mxu0 0.0
        %4344 = vmatpush.msra.mxu0 0.0
        %4345 = vmatpush.msra.mxu0 0.0
        %4346 = vmatpush.msra.mxu0 %v4305
        %4347 = vmatmul.f32.gmra.mxu0 %v4301
        %v4348 = vpop.f32.mrf.mxu0
        %v4349 = vadd.f32 0.0, %v4348
        %4350 = vdwg.mxu0
        %4351 = vmatpush.msra.mxu0 0.0
        %4352 = vmatpush.msra.mxu0 0.0
        %4353 = vmatpush.msra.mxu0 0.0
        %4354 = vmatpush.msra.mxu0 0.0
        %4355 = vmatpush.msra.mxu0 0.0
        %4356 = vmatpush.msra.mxu0 0.0
        %4357 = vmatpush.msra.mxu0 0.0
        %4358 = vmatpush.msra.mxu0 0.0
        %4359 = vmatpush.msra.mxu0 0.0
        %4360 = vmatpush.msra.mxu0 0.0
        %4361 = vmatpush.msra.mxu0 0.0
        %4362 = vmatpush.msra.mxu0 0.0
        %4363 = vmatpush.msra.mxu0 0.0
        %4364 = vmatpush.msra.mxu0 0.0
        %4365 = vmatpush.msra.mxu0 0.0
        %4366 = vmatpush.msra.mxu0 %v4307
        %4367 = vmatmul.f32.gmra.mxu0 %v4301
        %v4368 = vpop.f32.mrf.mxu0
        %v4369 = vadd.f32 0.0, %v4368
        %4370 = vdwg.mxu0
        %4371 = vmatpush.msra.mxu0 0.0
        %4372 = vmatpush.msra.mxu0 0.0
        %4373 = vmatpush.msra.mxu0 0.0
        %4374 = vmatpush.msra.mxu0 0.0
        %4375 = vmatpush.msra.mxu0 0.0
        %4376 = vmatpush.msra.mxu0 0.0
        %4377 = vmatpush.msra.mxu0 0.0
        %4378 = vmatpush.msra.mxu0 0.0
        %4379 = vmatpush.msra.mxu0 0.0
        %4380 = vmatpush.msra.mxu0 0.0
        %4381 = vmatpush.msra.mxu0 0.0
        %4382 = vmatpush.msra.mxu0 0.0
        %4383 = vmatpush.msra.mxu0 0.0
        %4384 = vmatpush.msra.mxu0 0.0
        %4385 = vmatpush.msra.mxu0 0.0
        %4386 = vmatpush.msra.mxu0 %v4309
        %4387 = vmatmul.f32.gmra.mxu0 %v4301
        %v4388 = vpop.f32.mrf.mxu0
        %v4389 = vadd.f32 0.0, %v4388
        %4390 = vdwg.mxu0
        %v4391 = vadd.f32 %v4248, %v4329
        %v4392 = vadd.f32 %v4249, %v4349
        %v4393 = vadd.f32 %v4250, %v4369
        %v4394 = vadd.f32 %v4251, %v4389
        %v4395 = vld [vmem:[%s2785] sm:$0xf]
        %v4397 = vperm.slane %v4395, 0
        %v4398 = vperm.slane %v4395, 1
        %v4399 = vperm.slane %v4395, 2
        %v4400 = vperm.slane %v4395, 3
        %4401 = vrot.lane.b32.xlu0 %v4397, 32
        %v4402 = vpop.permute.xlu0 %4401
        %4403 = vrot.lane.b32.xlu0 %v4398, 32
        %v4404 = vpop.permute.xlu0 %4403
        %4405 = vrot.lane.b32.xlu0 %v4399, 32
        %v4406 = vpop.permute.xlu0 %4405
        %4407 = vrot.lane.b32.xlu0 %v4400, 32
        %v4408 = vpop.permute.xlu0 %4407
        %v4409 = vsel %vm2800, %v4402, %v4404
        %v4410 = vsel %vm2800, %v4404, %v4406
        %v4411 = vsel %vm2800, %v4406, %v4408
        %v4417 = vmul.f32 %v3601, %v4402
        %v4418 = vmul.f32 %v3593, %v4409
        %v4419 = vmul.f32 %v3594, %v4410
        %v4420 = vmul.f32 %v3595, %v4411
        %v4421 = vmul.f32 %v3602, %v4408
        %s4422 = scalar_lea.vmem %s5, 24
        %v4423 = vld [vmem:[%s4422] sm:$0xf]
        %4429 = vrot.lane.b32.xlu0 %v4417, 96
        %v4430 = vpop.permute.xlu0 %4429
        %4431 = vrot.lane.b32.xlu0 %v4418, 96
        %v4432 = vpop.permute.xlu0 %4431
        %4433 = vrot.lane.b32.xlu0 %v4419, 96
        %v4434 = vpop.permute.xlu0 %4433
        %4435 = vrot.lane.b32.xlu0 %v4420, 96
        %v4436 = vpop.permute.xlu0 %4435
        %4437 = vrot.lane.b32.xlu0 %v4421, 96
        %v4438 = vpop.permute.xlu0 %4437
        %v4439 = vsel %vm2872, %v4430, %v4432
        %v4440 = vsel %vm2872, %v4432, %v4434
        %v4441 = vsel %vm2872, %v4434, %v4436
        %v4442 = vsel %vm2872, %v4436, %v4438
        %v4444 = vsel %vm3666, %v4423, 0
        %v4446 = vsel %vm1373, %v4439, 0
        %v4448 = vsel %vm1373, %v4440, 0
        %v4450 = vsel %vm1373, %v4441, 0
        %v4452 = vsel %vm1373, %v4442, 0
        %4454 = vmatpush.msra.mxu0 0.0
        %4455 = vmatpush.msra.mxu0 0.0
        %4456 = vmatpush.msra.mxu0 0.0
        %4457 = vmatpush.msra.mxu0 0.0
        %4458 = vmatpush.msra.mxu0 0.0
        %4459 = vmatpush.msra.mxu0 0.0
        %4460 = vmatpush.msra.mxu0 0.0
        %4461 = vmatpush.msra.mxu0 0.0
        %4462 = vmatpush.msra.mxu0 0.0
        %4463 = vmatpush.msra.mxu0 0.0
        %4464 = vmatpush.msra.mxu0 0.0
        %4465 = vmatpush.msra.mxu0 0.0
        %4466 = vmatpush.msra.mxu0 0.0
        %4467 = vmatpush.msra.mxu0 0.0
        %4468 = vmatpush.msra.mxu0 0.0
        %4469 = vmatpush.msra.mxu0 %v4446
        %4470 = vmatmul.f32.gmra.mxu0 %v4444
        %v4471 = vpop.f32.mrf.mxu0
        %v4472 = vadd.f32 0.0, %v4471
        %4473 = vdwg.mxu0
        %4474 = vmatpush.msra.mxu0 0.0
        %4475 = vmatpush.msra.mxu0 0.0
        %4476 = vmatpush.msra.mxu0 0.0
        %4477 = vmatpush.msra.mxu0 0.0
        %4478 = vmatpush.msra.mxu0 0.0
        %4479 = vmatpush.msra.mxu0 0.0
        %4480 = vmatpush.msra.mxu0 0.0
        %4481 = vmatpush.msra.mxu0 0.0
        %4482 = vmatpush.msra.mxu0 0.0
        %4483 = vmatpush.msra.mxu0 0.0
        %4484 = vmatpush.msra.mxu0 0.0
        %4485 = vmatpush.msra.mxu0 0.0
        %4486 = vmatpush.msra.mxu0 0.0
        %4487 = vmatpush.msra.mxu0 0.0
        %4488 = vmatpush.msra.mxu0 0.0
        %4489 = vmatpush.msra.mxu0 %v4448
        %4490 = vmatmul.f32.gmra.mxu0 %v4444
        %v4491 = vpop.f32.mrf.mxu0
        %v4492 = vadd.f32 0.0, %v4491
        %4493 = vdwg.mxu0
        %4494 = vmatpush.msra.mxu0 0.0
        %4495 = vmatpush.msra.mxu0 0.0
        %4496 = vmatpush.msra.mxu0 0.0
        %4497 = vmatpush.msra.mxu0 0.0
        %4498 = vmatpush.msra.mxu0 0.0
        %4499 = vmatpush.msra.mxu0 0.0
        %4500 = vmatpush.msra.mxu0 0.0
        %4501 = vmatpush.msra.mxu0 0.0
        %4502 = vmatpush.msra.mxu0 0.0
        %4503 = vmatpush.msra.mxu0 0.0
        %4504 = vmatpush.msra.mxu0 0.0
        %4505 = vmatpush.msra.mxu0 0.0
        %4506 = vmatpush.msra.mxu0 0.0
        %4507 = vmatpush.msra.mxu0 0.0
        %4508 = vmatpush.msra.mxu0 0.0
        %4509 = vmatpush.msra.mxu0 %v4450
        %4510 = vmatmul.f32.gmra.mxu0 %v4444
        %v4511 = vpop.f32.mrf.mxu0
        %v4512 = vadd.f32 0.0, %v4511
        %4513 = vdwg.mxu0
        %4514 = vmatpush.msra.mxu0 0.0
        %4515 = vmatpush.msra.mxu0 0.0
        %4516 = vmatpush.msra.mxu0 0.0
        %4517 = vmatpush.msra.mxu0 0.0
        %4518 = vmatpush.msra.mxu0 0.0
        %4519 = vmatpush.msra.mxu0 0.0
        %4520 = vmatpush.msra.mxu0 0.0
        %4521 = vmatpush.msra.mxu0 0.0
        %4522 = vmatpush.msra.mxu0 0.0
        %4523 = vmatpush.msra.mxu0 0.0
        %4524 = vmatpush.msra.mxu0 0.0
        %4525 = vmatpush.msra.mxu0 0.0
        %4526 = vmatpush.msra.mxu0 0.0
        %4527 = vmatpush.msra.mxu0 0.0
        %4528 = vmatpush.msra.mxu0 0.0
        %4529 = vmatpush.msra.mxu0 %v4452
        %4530 = vmatmul.f32.gmra.mxu0 %v4444
        %v4531 = vpop.f32.mrf.mxu0
        %v4532 = vadd.f32 0.0, %v4531
        %4533 = vdwg.mxu0
        %v4534 = vadd.f32 %v4391, %v4472
        %v4535 = vadd.f32 %v4392, %v4492
        %v4536 = vadd.f32 %v4393, %v4512
        %v4537 = vadd.f32 %v4394, %v4532
        %v4538 = vld [vmem:[%s3007] sm:$0xf]
        %v4540 = vperm.slane %v4538, 0
        %v4541 = vperm.slane %v4538, 1
        %v4542 = vperm.slane %v4538, 2
        %v4543 = vperm.slane %v4538, 3
        %4544 = vrot.lane.b32.xlu0 %v4540, 33
        %v4545 = vpop.permute.xlu0 %4544
        %4546 = vrot.lane.b32.xlu0 %v4541, 33
        %v4547 = vpop.permute.xlu0 %4546
        %4548 = vrot.lane.b32.xlu0 %v4542, 33
        %v4549 = vpop.permute.xlu0 %4548
        %4550 = vrot.lane.b32.xlu0 %v4543, 33
        %v4551 = vpop.permute.xlu0 %4550
        %v4552 = vsel %vm3022, %v4545, %v4547
        %v4553 = vsel %vm3022, %v4547, %v4549
        %v4554 = vsel %vm3022, %v4549, %v4551
        %v4560 = vmul.f32 %v3601, %v4545
        %v4561 = vmul.f32 %v3593, %v4552
        %v4562 = vmul.f32 %v3594, %v4553
        %v4563 = vmul.f32 %v3595, %v4554
        %v4564 = vmul.f32 %v3602, %v4551
        %s4565 = scalar_lea.vmem %s5, 28
        %v4566 = vld [vmem:[%s4565] sm:$0xf]
        %4572 = vrot.lane.b32.xlu0 %v4560, 95
        %v4573 = vpop.permute.xlu0 %4572
        %4574 = vrot.lane.b32.xlu0 %v4561, 95
        %v4575 = vpop.permute.xlu0 %4574
        %4576 = vrot.lane.b32.xlu0 %v4562, 95
        %v4577 = vpop.permute.xlu0 %4576
        %4578 = vrot.lane.b32.xlu0 %v4563, 95
        %v4579 = vpop.permute.xlu0 %4578
        %4580 = vrot.lane.b32.xlu0 %v4564, 95
        %v4581 = vpop.permute.xlu0 %4580
        %v4582 = vsel %vm3094, %v4573, %v4575
        %v4583 = vsel %vm3094, %v4575, %v4577
        %v4584 = vsel %vm3094, %v4577, %v4579
        %v4585 = vsel %vm3094, %v4579, %v4581
        %v4587 = vsel %vm3666, %v4566, 0
        %v4589 = vsel %vm1373, %v4582, 0
        %v4591 = vsel %vm1373, %v4583, 0
        %v4593 = vsel %vm1373, %v4584, 0
        %v4595 = vsel %vm1373, %v4585, 0
        %4597 = vmatpush.msra.mxu0 0.0
        %4598 = vmatpush.msra.mxu0 0.0
        %4599 = vmatpush.msra.mxu0 0.0
        %4600 = vmatpush.msra.mxu0 0.0
        %4601 = vmatpush.msra.mxu0 0.0
        %4602 = vmatpush.msra.mxu0 0.0
        %4603 = vmatpush.msra.mxu0 0.0
        %4604 = vmatpush.msra.mxu0 0.0
        %4605 = vmatpush.msra.mxu0 0.0
        %4606 = vmatpush.msra.mxu0 0.0
        %4607 = vmatpush.msra.mxu0 0.0
        %4608 = vmatpush.msra.mxu0 0.0
        %4609 = vmatpush.msra.mxu0 0.0
        %4610 = vmatpush.msra.mxu0 0.0
        %4611 = vmatpush.msra.mxu0 0.0
        %4612 = vmatpush.msra.mxu0 %v4589
        %4613 = vmatmul.f32.gmra.mxu0 %v4587
        %v4614 = vpop.f32.mrf.mxu0
        %v4615 = vadd.f32 0.0, %v4614
        %4616 = vdwg.mxu0
        %4617 = vmatpush.msra.mxu0 0.0
        %4618 = vmatpush.msra.mxu0 0.0
        %4619 = vmatpush.msra.mxu0 0.0
        %4620 = vmatpush.msra.mxu0 0.0
        %4621 = vmatpush.msra.mxu0 0.0
        %4622 = vmatpush.msra.mxu0 0.0
        %4623 = vmatpush.msra.mxu0 0.0
        %4624 = vmatpush.msra.mxu0 0.0
        %4625 = vmatpush.msra.mxu0 0.0
        %4626 = vmatpush.msra.mxu0 0.0
        %4627 = vmatpush.msra.mxu0 0.0
        %4628 = vmatpush.msra.mxu0 0.0
        %4629 = vmatpush.msra.mxu0 0.0
        %4630 = vmatpush.msra.mxu0 0.0
        %4631 = vmatpush.msra.mxu0 0.0
        %4632 = vmatpush.msra.mxu0 %v4591
        %4633 = vmatmul.f32.gmra.mxu0 %v4587
        %v4634 = vpop.f32.mrf.mxu0
        %v4635 = vadd.f32 0.0, %v4634
        %4636 = vdwg.mxu0
        %4637 = vmatpush.msra.mxu0 0.0
        %4638 = vmatpush.msra.mxu0 0.0
        %4639 = vmatpush.msra.mxu0 0.0
        %4640 = vmatpush.msra.mxu0 0.0
        %4641 = vmatpush.msra.mxu0 0.0
        %4642 = vmatpush.msra.mxu0 0.0
        %4643 = vmatpush.msra.mxu0 0.0
        %4644 = vmatpush.msra.mxu0 0.0
        %4645 = vmatpush.msra.mxu0 0.0
        %4646 = vmatpush.msra.mxu0 0.0
        %4647 = vmatpush.msra.mxu0 0.0
        %4648 = vmatpush.msra.mxu0 0.0
        %4649 = vmatpush.msra.mxu0 0.0
        %4650 = vmatpush.msra.mxu0 0.0
        %4651 = vmatpush.msra.mxu0 0.0
        %4652 = vmatpush.msra.mxu0 %v4593
        %4653 = vmatmul.f32.gmra.mxu0 %v4587
        %v4654 = vpop.f32.mrf.mxu0
        %v4655 = vadd.f32 0.0, %v4654
        %4656 = vdwg.mxu0
        %4657 = vmatpush.msra.mxu0 0.0
        %4658 = vmatpush.msra.mxu0 0.0
        %4659 = vmatpush.msra.mxu0 0.0
        %4660 = vmatpush.msra.mxu0 0.0
        %4661 = vmatpush.msra.mxu0 0.0
        %4662 = vmatpush.msra.mxu0 0.0
        %4663 = vmatpush.msra.mxu0 0.0
        %4664 = vmatpush.msra.mxu0 0.0
        %4665 = vmatpush.msra.mxu0 0.0
        %4666 = vmatpush.msra.mxu0 0.0
        %4667 = vmatpush.msra.mxu0 0.0
        %4668 = vmatpush.msra.mxu0 0.0
        %4669 = vmatpush.msra.mxu0 0.0
        %4670 = vmatpush.msra.mxu0 0.0
        %4671 = vmatpush.msra.mxu0 0.0
        %4672 = vmatpush.msra.mxu0 %v4595
        %4673 = vmatmul.f32.gmra.mxu0 %v4587
        %v4674 = vpop.f32.mrf.mxu0
        %v4675 = vadd.f32 0.0, %v4674
        %4676 = vdwg.mxu0
        %v4677 = vadd.f32 %v4534, %v4615
        %v4678 = vadd.f32 %v4535, %v4635
        %v4679 = vadd.f32 %v4536, %v4655
        %v4680 = vadd.f32 %v4537, %v4675
        %v4681 = vld [vmem:[%s3229] sm:$0xf]
        %v4683 = vperm.slane %v4681, 0
        %v4684 = vperm.slane %v4681, 1
        %v4685 = vperm.slane %v4681, 2
        %v4686 = vperm.slane %v4681, 3
        %4687 = vrot.lane.b32.xlu0 %v4683, 34
        %v4688 = vpop.permute.xlu0 %4687
        %4689 = vrot.lane.b32.xlu0 %v4684, 34
        %v4690 = vpop.permute.xlu0 %4689
        %4691 = vrot.lane.b32.xlu0 %v4685, 34
        %v4692 = vpop.permute.xlu0 %4691
        %4693 = vrot.lane.b32.xlu0 %v4686, 34
        %v4694 = vpop.permute.xlu0 %4693
        %v4695 = vsel %vm3244, %v4688, %v4690
        %v4696 = vsel %vm3244, %v4690, %v4692
        %v4697 = vsel %vm3244, %v4692, %v4694
        %v4703 = vmul.f32 %v3601, %v4688
        %v4704 = vmul.f32 %v3593, %v4695
        %v4705 = vmul.f32 %v3594, %v4696
        %v4706 = vmul.f32 %v3595, %v4697
        %v4707 = vmul.f32 %v3602, %v4694
        %s4708 = scalar_lea.vmem %s5, 32
        %v4709 = vld [vmem:[%s4708] sm:$0xf]
        %4715 = vrot.lane.b32.xlu0 %v4703, 94
        %v4716 = vpop.permute.xlu0 %4715
        %4717 = vrot.lane.b32.xlu0 %v4704, 94
        %v4718 = vpop.permute.xlu0 %4717
        %4719 = vrot.lane.b32.xlu0 %v4705, 94
        %v4720 = vpop.permute.xlu0 %4719
        %4721 = vrot.lane.b32.xlu0 %v4706, 94
        %v4722 = vpop.permute.xlu0 %4721
        %4723 = vrot.lane.b32.xlu0 %v4707, 94
        %v4724 = vpop.permute.xlu0 %4723
        %v4725 = vsel %vm3316, %v4716, %v4718
        %v4726 = vsel %vm3316, %v4718, %v4720
        %v4727 = vsel %vm3316, %v4720, %v4722
        %v4728 = vsel %vm3316, %v4722, %v4724
        %v4730 = vsel %vm3666, %v4709, 0
        %v4732 = vsel %vm1373, %v4725, 0
        %v4734 = vsel %vm1373, %v4726, 0
        %v4736 = vsel %vm1373, %v4727, 0
        %v4738 = vsel %vm1373, %v4728, 0
        %4740 = vmatpush.msra.mxu0 0.0
        %4741 = vmatpush.msra.mxu0 0.0
        %4742 = vmatpush.msra.mxu0 0.0
        %4743 = vmatpush.msra.mxu0 0.0
        %4744 = vmatpush.msra.mxu0 0.0
        %4745 = vmatpush.msra.mxu0 0.0
        %4746 = vmatpush.msra.mxu0 0.0
        %4747 = vmatpush.msra.mxu0 0.0
        %4748 = vmatpush.msra.mxu0 0.0
        %4749 = vmatpush.msra.mxu0 0.0
        %4750 = vmatpush.msra.mxu0 0.0
        %4751 = vmatpush.msra.mxu0 0.0
        %4752 = vmatpush.msra.mxu0 0.0
        %4753 = vmatpush.msra.mxu0 0.0
        %4754 = vmatpush.msra.mxu0 0.0
        %4755 = vmatpush.msra.mxu0 %v4732
        %4756 = vmatmul.f32.gmra.mxu0 %v4730
        %v4757 = vpop.f32.mrf.mxu0
        %v4758 = vadd.f32 0.0, %v4757
        %4759 = vdwg.mxu0
        %4760 = vmatpush.msra.mxu0 0.0
        %4761 = vmatpush.msra.mxu0 0.0
        %4762 = vmatpush.msra.mxu0 0.0
        %4763 = vmatpush.msra.mxu0 0.0
        %4764 = vmatpush.msra.mxu0 0.0
        %4765 = vmatpush.msra.mxu0 0.0
        %4766 = vmatpush.msra.mxu0 0.0
        %4767 = vmatpush.msra.mxu0 0.0
        %4768 = vmatpush.msra.mxu0 0.0
        %4769 = vmatpush.msra.mxu0 0.0
        %4770 = vmatpush.msra.mxu0 0.0
        %4771 = vmatpush.msra.mxu0 0.0
        %4772 = vmatpush.msra.mxu0 0.0
        %4773 = vmatpush.msra.mxu0 0.0
        %4774 = vmatpush.msra.mxu0 0.0
        %4775 = vmatpush.msra.mxu0 %v4734
        %4776 = vmatmul.f32.gmra.mxu0 %v4730
        %v4777 = vpop.f32.mrf.mxu0
        %v4778 = vadd.f32 0.0, %v4777
        %4779 = vdwg.mxu0
        %4780 = vmatpush.msra.mxu0 0.0
        %4781 = vmatpush.msra.mxu0 0.0
        %4782 = vmatpush.msra.mxu0 0.0
        %4783 = vmatpush.msra.mxu0 0.0
        %4784 = vmatpush.msra.mxu0 0.0
        %4785 = vmatpush.msra.mxu0 0.0
        %4786 = vmatpush.msra.mxu0 0.0
        %4787 = vmatpush.msra.mxu0 0.0
        %4788 = vmatpush.msra.mxu0 0.0
        %4789 = vmatpush.msra.mxu0 0.0
        %4790 = vmatpush.msra.mxu0 0.0
        %4791 = vmatpush.msra.mxu0 0.0
        %4792 = vmatpush.msra.mxu0 0.0
        %4793 = vmatpush.msra.mxu0 0.0
        %4794 = vmatpush.msra.mxu0 0.0
        %4795 = vmatpush.msra.mxu0 %v4736
        %4796 = vmatmul.f32.gmra.mxu0 %v4730
        %v4797 = vpop.f32.mrf.mxu0
        %v4798 = vadd.f32 0.0, %v4797
        %4799 = vdwg.mxu0
        %4800 = vmatpush.msra.mxu0 0.0
        %4801 = vmatpush.msra.mxu0 0.0
        %4802 = vmatpush.msra.mxu0 0.0
        %4803 = vmatpush.msra.mxu0 0.0
        %4804 = vmatpush.msra.mxu0 0.0
        %4805 = vmatpush.msra.mxu0 0.0
        %4806 = vmatpush.msra.mxu0 0.0
        %4807 = vmatpush.msra.mxu0 0.0
        %4808 = vmatpush.msra.mxu0 0.0
        %4809 = vmatpush.msra.mxu0 0.0
        %4810 = vmatpush.msra.mxu0 0.0
        %4811 = vmatpush.msra.mxu0 0.0
        %4812 = vmatpush.msra.mxu0 0.0
        %4813 = vmatpush.msra.mxu0 0.0
        %4814 = vmatpush.msra.mxu0 0.0
        %4815 = vmatpush.msra.mxu0 %v4738
        %4816 = vmatmul.f32.gmra.mxu0 %v4730
        %v4817 = vpop.f32.mrf.mxu0
        %v4818 = vadd.f32 0.0, %v4817
        %4819 = vdwg.mxu0
        %v4820 = vadd.f32 %v4677, %v4758
        %v4821 = vadd.f32 %v4678, %v4778
        %v4822 = vadd.f32 %v4679, %v4798
        %v4823 = vadd.f32 %v4680, %v4818
        %v4824 = vld [vmem:[%s7] sm:$0xf]
        %4826 = vset.pattern.permute.xlu0 0
        %4827 = vperm.xlu0 %4826, %v4824
        %v4828 = vpop.permute.xlu0 %4827
        %v4830 = vadd.f32 %v4820, %v4828
        %v4831 = vadd.f32 %v4821, %v4828
        %v4832 = vadd.f32 %v4822, %v4828
        %v4833 = vadd.f32 %v4823, %v4828
        %v4834 = vmax.f32 %v4830, 0.0
        %v4835 = vmax.f32 %v4831, 0.0
        %v4836 = vmax.f32 %v4832, 0.0
        %v4837 = vmax.f32 %v4833, 0.0
        %v4838 = vmin.f32 %v4834, 1.0
        %v4839 = vmin.f32 %v4835, 1.0
        %v4840 = vmin.f32 %v4836, 1.0
        %v4841 = vmin.f32 %v4837, 1.0
        %v4846 = vrot.slane %v4839, 4
        %v4847 = vrot.slane %v4841, 4
        %v4848 = vsel %vm1373, %v4838, %v4846
        %v4849 = vsel %vm1373, %v4840, %v4847
        %4852 = vst [vmem:[%s518] sm:$0xff] %v4848
        %4853 = vst [vmem:[%s518 + $0x8] sm:$0xff] %v4849
        %p4854 = scmp.lt.s32.totalorder %s27, 2
        // Predicated region
        $region89: #{prednet_forward.1} parent=79 // pred_check
          %p4855 = pneg %p4854
        $region90: #{prednet_forward.1} parent=79 // pred_check_branch
          %4857 = sbr.rel (%p4855) target = $region92
        $region91: #{prednet_forward.1} parent=79 // pred_region
          %v4858 = vld [vmem:[%s512] sm:$0xff]
          %v4859 = vld [vmem:[%s512 + $0x8] sm:$0xff]
          %4862 = vst [vmem:[#allocation1] ss:$2 sm:$0xff] %v4858
          %s4863 = scalar_lea.vmem [#allocation1], 16
          %4864 = vst [vmem:[%s4863] ss:$2 sm:$0xff] %v4859
          %v4865 = vld.sshfl [vmem:[#allocation1] sm:$0xff pattern:$0x75316420]
          %v4866 = vld.sshfl [vmem:[#allocation1 + $0x8] sm:$0xff pattern:$0x75316420]
          %v4867 = vld.sshfl [vmem:[#allocation1 + $0x10] sm:$0xff pattern:$0x75316420]
          %v4868 = vld.sshfl [vmem:[#allocation1 + $0x18] sm:$0xff pattern:$0x75316420]
          %v4873 = vsub.f32 %v4838, %v4865
          %v4874 = vsub.f32 %v4839, %v4866
          %v4875 = vsub.f32 %v4840, %v4867
          %v4876 = vsub.f32 %v4841, %v4868
          %v4877 = vmax.f32 %v4873, 0.0
          %v4878 = vmax.f32 %v4874, 0.0
          %v4879 = vmax.f32 %v4875, 0.0
          %v4880 = vmax.f32 %v4876, 0.0
          %v4881 = vsub.f32 %v4858, %v4848
          %v4882 = vsub.f32 %v4859, %v4849
          %v4883 = vmax.f32 %v4881, 0.0
          %v4884 = vmax.f32 %v4882, 0.0
          %s4887 = scalar_lea.vmem [#allocation1], 1
          %4888 = vst [vmem:[%s4887] ss:$2 sm:$0xff] %v4883
          %s4889 = scalar_lea.vmem [#allocation1], 17
          %4890 = vst [vmem:[%s4889] ss:$2 sm:$0xff] %v4884
          %v4891 = vld.sshfl [vmem:[#allocation1] sm:$0xff pattern:$0x75316420]
          %v4892 = vld.sshfl [vmem:[#allocation1 + $0x8] sm:$0xff pattern:$0x75316420]
          %v4893 = vld.sshfl [vmem:[#allocation1 + $0x10] sm:$0xff pattern:$0x75316420]
          %v4894 = vld.sshfl [vmem:[#allocation1 + $0x18] sm:$0xff pattern:$0x75316420]
          %v4899 = vsel %vm1373, %v4877, %v4891
          %v4900 = vsel %vm1373, %v4878, %v4892
          %v4901 = vsel %vm1373, %v4879, %v4893
          %v4902 = vsel %vm1373, %v4880, %v4894
          %4903 = vst [vmem:[#allocation6] sm:$0xff] %v4899
          %4904 = vst [vmem:[#allocation6 + $0x8] sm:$0xff] %v4900
          %4905 = vst [vmem:[#allocation6 + $0x10] sm:$0xff] %v4901
          %4906 = vst [vmem:[#allocation6 + $0x18] sm:$0xff] %v4902
          %4911 = vrot.lane.b32.xlu0 %v4899, 17
          %v4912 = vpop.permute.xlu0 %4911
          %4913 = vrot.lane.b32.xlu0 %v4900, 17
          %v4914 = vpop.permute.xlu0 %4913
          %4915 = vrot.lane.b32.xlu0 %v4901, 17
          %v4916 = vpop.permute.xlu0 %4915
          %4917 = vrot.lane.b32.xlu0 %v4902, 17
          %v4918 = vpop.permute.xlu0 %4917
          %v4919 = vsel %vm1570, %v4912, %v4914
          %v4920 = vsel %vm1570, %v4914, %v4916
          %v4921 = vsel %vm1570, %v4916, %v4918
          %v4927 = vsel %vm1570, 0.0, %v4912
          %v4928 = vsel %vm1570, %v4918, 0.0
          %v4929 = vld [vmem:[%s11] sm:$0xf]
          %v4931 = vperm.slane %v4929, 0
          %v4932 = vperm.slane %v4929, 1
          %v4933 = vperm.slane %v4929, 2
          %v4934 = vperm.slane %v4929, 3
          %v4939 = vmul.f32 %v4927, %v4931
          %v4940 = vmul.f32 %v4919, %v4932
          %v4941 = vmul.f32 %v4920, %v4933
          %v4942 = vmul.f32 %v4921, %v4934
          %v4943 = vld [vmem:[%s9] sm:$0xff]
          %v4944 = vld [vmem:[%s1625] sm:$0xf]
          %v4946 = vperm.slane %v4944, 0
          %v4947 = vperm.slane %v4944, 1
          %v4948 = vperm.slane %v4944, 2
          %v4949 = vperm.slane %v4944, 3
          %4950 = vrot.lane.b32.xlu0 %v4946, 1
          %v4951 = vpop.permute.xlu0 %4950
          %4952 = vrot.lane.b32.xlu0 %v4947, 1
          %v4953 = vpop.permute.xlu0 %4952
          %4954 = vrot.lane.b32.xlu0 %v4948, 1
          %v4955 = vpop.permute.xlu0 %4954
          %4956 = vrot.lane.b32.xlu0 %v4949, 1
          %v4957 = vpop.permute.xlu0 %4956
          %v4958 = vsel %vm1640, %v4951, %v4953
          %v4959 = vsel %vm1640, %v4953, %v4955
          %v4960 = vsel %vm1640, %v4955, %v4957
          %v4966 = vmul.f32 %v4927, %v4951
          %v4967 = vmul.f32 %v4919, %v4958
          %v4968 = vmul.f32 %v4920, %v4959
          %v4969 = vmul.f32 %v4921, %v4960
          %v4970 = vmul.f32 %v4928, %v4957
          %s4971 = scalar_lea.vmem %s9, 8
          %v4972 = vld [vmem:[%s4971] sm:$0xff]
          %4978 = vrot.lane.b32.xlu0 %v4966, 127
          %v4979 = vpop.permute.xlu0 %4978
          %4980 = vrot.lane.b32.xlu0 %v4967, 127
          %v4981 = vpop.permute.xlu0 %4980
          %4982 = vrot.lane.b32.xlu0 %v4968, 127
          %v4983 = vpop.permute.xlu0 %4982
          %4984 = vrot.lane.b32.xlu0 %v4969, 127
          %v4985 = vpop.permute.xlu0 %4984
          %4986 = vrot.lane.b32.xlu0 %v4970, 127
          %v4987 = vpop.permute.xlu0 %4986
          %v4988 = vsel %vm605, %v4979, %v4981
          %v4989 = vsel %vm605, %v4981, %v4983
          %v4990 = vsel %vm605, %v4983, %v4985
          %v4991 = vsel %vm605, %v4985, %v4987
          %vm4996 = vcmask 64512
          %v4998 = vsel %vm4996, %v4972, 0
          %5000 = vmatpush.msra.mxu0 0.0
          %5001 = vmatpush.msra.mxu0 0.0
          %5002 = vmatpush.msra.mxu0 0.0
          %5003 = vmatpush.msra.mxu0 0.0
          %5004 = vmatpush.msra.mxu0 0.0
          %5005 = vmatpush.msra.mxu0 0.0
          %5006 = vmatpush.msra.mxu0 0.0
          %5007 = vmatpush.msra.mxu0 0.0
          %5008 = vmatpush.msra.mxu0 0.0
          %5009 = vmatpush.msra.mxu0 0.0
          %5010 = vmatpush.msra.mxu0 0.0
          %5011 = vmatpush.msra.mxu0 0.0
          %5012 = vmatpush.msra.mxu0 0.0
          %5013 = vmatpush.msra.mxu0 0.0
          %5014 = vmatpush.msra.mxu0 0.0
          %5015 = vmatpush.msra.mxu0 %v4988
          %5016 = vmatmul.f32.gmra.mxu0 %v4998
          %v5017 = vpop.f32.mrf.mxu0
          %v5018 = vadd.f32 0.0, %v5017
          %5019 = vdwg.mxu0
          %5020 = vmatpush.msra.mxu0 0.0
          %5021 = vmatpush.msra.mxu0 0.0
          %5022 = vmatpush.msra.mxu0 0.0
          %5023 = vmatpush.msra.mxu0 0.0
          %5024 = vmatpush.msra.mxu0 0.0
          %5025 = vmatpush.msra.mxu0 0.0
          %5026 = vmatpush.msra.mxu0 0.0
          %5027 = vmatpush.msra.mxu0 0.0
          %5028 = vmatpush.msra.mxu0 0.0
          %5029 = vmatpush.msra.mxu0 0.0
          %5030 = vmatpush.msra.mxu0 0.0
          %5031 = vmatpush.msra.mxu0 0.0
          %5032 = vmatpush.msra.mxu0 0.0
          %5033 = vmatpush.msra.mxu0 0.0
          %5034 = vmatpush.msra.mxu0 0.0
          %5035 = vmatpush.msra.mxu0 %v4989
          %5036 = vmatmul.f32.gmra.mxu0 %v4998
          %v5037 = vpop.f32.mrf.mxu0
          %v5038 = vadd.f32 0.0, %v5037
          %5039 = vdwg.mxu0
          %5040 = vmatpush.msra.mxu0 0.0
          %5041 = vmatpush.msra.mxu0 0.0
          %5042 = vmatpush.msra.mxu0 0.0
          %5043 = vmatpush.msra.mxu0 0.0
          %5044 = vmatpush.msra.mxu0 0.0
          %5045 = vmatpush.msra.mxu0 0.0
          %5046 = vmatpush.msra.mxu0 0.0
          %5047 = vmatpush.msra.mxu0 0.0
          %5048 = vmatpush.msra.mxu0 0.0
          %5049 = vmatpush.msra.mxu0 0.0
          %5050 = vmatpush.msra.mxu0 0.0
          %5051 = vmatpush.msra.mxu0 0.0
          %5052 = vmatpush.msra.mxu0 0.0
          %5053 = vmatpush.msra.mxu0 0.0
          %5054 = vmatpush.msra.mxu0 0.0
          %5055 = vmatpush.msra.mxu0 %v4990
          %5056 = vmatmul.f32.gmra.mxu0 %v4998
          %v5057 = vpop.f32.mrf.mxu0
          %v5058 = vadd.f32 0.0, %v5057
          %5059 = vdwg.mxu0
          %5060 = vmatpush.msra.mxu0 0.0
          %5061 = vmatpush.msra.mxu0 0.0
          %5062 = vmatpush.msra.mxu0 0.0
          %5063 = vmatpush.msra.mxu0 0.0
          %5064 = vmatpush.msra.mxu0 0.0
          %5065 = vmatpush.msra.mxu0 0.0
          %5066 = vmatpush.msra.mxu0 0.0
          %5067 = vmatpush.msra.mxu0 0.0
          %5068 = vmatpush.msra.mxu0 0.0
          %5069 = vmatpush.msra.mxu0 0.0
          %5070 = vmatpush.msra.mxu0 0.0
          %5071 = vmatpush.msra.mxu0 0.0
          %5072 = vmatpush.msra.mxu0 0.0
          %5073 = vmatpush.msra.mxu0 0.0
          %5074 = vmatpush.msra.mxu0 0.0
          %5075 = vmatpush.msra.mxu0 %v4991
          %5076 = vmatmul.f32.gmra.mxu0 %v4998
          %v5077 = vpop.f32.mrf.mxu0
          %v5078 = vadd.f32 0.0, %v5077
          %5079 = vdwg.mxu0
          %v5081 = vsel %vm4996, %v4943, 0
          %5083 = vmatpush.msra.mxu0 0.0
          %5084 = vmatpush.msra.mxu0 0.0
          %5085 = vmatpush.msra.mxu0 0.0
          %5086 = vmatpush.msra.mxu0 0.0
          %5087 = vmatpush.msra.mxu0 0.0
          %5088 = vmatpush.msra.mxu0 0.0
          %5089 = vmatpush.msra.mxu0 0.0
          %5090 = vmatpush.msra.mxu0 0.0
          %5091 = vmatpush.msra.mxu0 0.0
          %5092 = vmatpush.msra.mxu0 0.0
          %5093 = vmatpush.msra.mxu0 0.0
          %5094 = vmatpush.msra.mxu0 0.0
          %5095 = vmatpush.msra.mxu0 0.0
          %5096 = vmatpush.msra.mxu0 0.0
          %5097 = vmatpush.msra.mxu0 0.0
          %5098 = vmatpush.msra.mxu0 %v4939
          %5099 = vmatmul.f32.gmra.mxu0 %v5081
          %v5100 = vpop.f32.mrf.mxu0
          %v5101 = vadd.f32 %v5018, %v5100
          %5102 = vdwg.mxu0
          %5103 = vmatpush.msra.mxu0 0.0
          %5104 = vmatpush.msra.mxu0 0.0
          %5105 = vmatpush.msra.mxu0 0.0
          %5106 = vmatpush.msra.mxu0 0.0
          %5107 = vmatpush.msra.mxu0 0.0
          %5108 = vmatpush.msra.mxu0 0.0
          %5109 = vmatpush.msra.mxu0 0.0
          %5110 = vmatpush.msra.mxu0 0.0
          %5111 = vmatpush.msra.mxu0 0.0
          %5112 = vmatpush.msra.mxu0 0.0
          %5113 = vmatpush.msra.mxu0 0.0
          %5114 = vmatpush.msra.mxu0 0.0
          %5115 = vmatpush.msra.mxu0 0.0
          %5116 = vmatpush.msra.mxu0 0.0
          %5117 = vmatpush.msra.mxu0 0.0
          %5118 = vmatpush.msra.mxu0 %v4940
          %5119 = vmatmul.f32.gmra.mxu0 %v5081
          %v5120 = vpop.f32.mrf.mxu0
          %v5121 = vadd.f32 %v5038, %v5120
          %5122 = vdwg.mxu0
          %5123 = vmatpush.msra.mxu0 0.0
          %5124 = vmatpush.msra.mxu0 0.0
          %5125 = vmatpush.msra.mxu0 0.0
          %5126 = vmatpush.msra.mxu0 0.0
          %5127 = vmatpush.msra.mxu0 0.0
          %5128 = vmatpush.msra.mxu0 0.0
          %5129 = vmatpush.msra.mxu0 0.0
          %5130 = vmatpush.msra.mxu0 0.0
          %5131 = vmatpush.msra.mxu0 0.0
          %5132 = vmatpush.msra.mxu0 0.0
          %5133 = vmatpush.msra.mxu0 0.0
          %5134 = vmatpush.msra.mxu0 0.0
          %5135 = vmatpush.msra.mxu0 0.0
          %5136 = vmatpush.msra.mxu0 0.0
          %5137 = vmatpush.msra.mxu0 0.0
          %5138 = vmatpush.msra.mxu0 %v4941
          %5139 = vmatmul.f32.gmra.mxu0 %v5081
          %v5140 = vpop.f32.mrf.mxu0
          %v5141 = vadd.f32 %v5058, %v5140
          %5142 = vdwg.mxu0
          %5143 = vmatpush.msra.mxu0 0.0
          %5144 = vmatpush.msra.mxu0 0.0
          %5145 = vmatpush.msra.mxu0 0.0
          %5146 = vmatpush.msra.mxu0 0.0
          %5147 = vmatpush.msra.mxu0 0.0
          %5148 = vmatpush.msra.mxu0 0.0
          %5149 = vmatpush.msra.mxu0 0.0
          %5150 = vmatpush.msra.mxu0 0.0
          %5151 = vmatpush.msra.mxu0 0.0
          %5152 = vmatpush.msra.mxu0 0.0
          %5153 = vmatpush.msra.mxu0 0.0
          %5154 = vmatpush.msra.mxu0 0.0
          %5155 = vmatpush.msra.mxu0 0.0
          %5156 = vmatpush.msra.mxu0 0.0
          %5157 = vmatpush.msra.mxu0 0.0
          %5158 = vmatpush.msra.mxu0 %v4942
          %5159 = vmatmul.f32.gmra.mxu0 %v5081
          %v5160 = vpop.f32.mrf.mxu0
          %v5161 = vadd.f32 %v5078, %v5160
          %5162 = vdwg.mxu0
          %v5163 = vld [vmem:[%s1949] sm:$0xf]
          %v5165 = vperm.slane %v5163, 0
          %v5166 = vperm.slane %v5163, 1
          %v5167 = vperm.slane %v5163, 2
          %v5168 = vperm.slane %v5163, 3
          %5169 = vrot.lane.b32.xlu0 %v5165, 2
          %v5170 = vpop.permute.xlu0 %5169
          %5171 = vrot.lane.b32.xlu0 %v5166, 2
          %v5172 = vpop.permute.xlu0 %5171
          %5173 = vrot.lane.b32.xlu0 %v5167, 2
          %v5174 = vpop.permute.xlu0 %5173
          %5175 = vrot.lane.b32.xlu0 %v5168, 2
          %v5176 = vpop.permute.xlu0 %5175
          %v5177 = vsel %vm1964, %v5170, %v5172
          %v5178 = vsel %vm1964, %v5172, %v5174
          %v5179 = vsel %vm1964, %v5174, %v5176
          %v5185 = vmul.f32 %v4927, %v5170
          %v5186 = vmul.f32 %v4919, %v5177
          %v5187 = vmul.f32 %v4920, %v5178
          %v5188 = vmul.f32 %v4921, %v5179
          %v5189 = vmul.f32 %v4928, %v5176
          %s5190 = scalar_lea.vmem %s9, 16
          %v5191 = vld [vmem:[%s5190] sm:$0xff]
          %5197 = vrot.lane.b32.xlu0 %v5185, 126
          %v5198 = vpop.permute.xlu0 %5197
          %5199 = vrot.lane.b32.xlu0 %v5186, 126
          %v5200 = vpop.permute.xlu0 %5199
          %5201 = vrot.lane.b32.xlu0 %v5187, 126
          %v5202 = vpop.permute.xlu0 %5201
          %5203 = vrot.lane.b32.xlu0 %v5188, 126
          %v5204 = vpop.permute.xlu0 %5203
          %5205 = vrot.lane.b32.xlu0 %v5189, 126
          %v5206 = vpop.permute.xlu0 %5205
          %v5207 = vsel %vm731, %v5198, %v5200
          %v5208 = vsel %vm731, %v5200, %v5202
          %v5209 = vsel %vm731, %v5202, %v5204
          %v5210 = vsel %vm731, %v5204, %v5206
          %v5216 = vsel %vm4996, %v5191, 0
          %5218 = vmatpush.msra.mxu0 0.0
          %5219 = vmatpush.msra.mxu0 0.0
          %5220 = vmatpush.msra.mxu0 0.0
          %5221 = vmatpush.msra.mxu0 0.0
          %5222 = vmatpush.msra.mxu0 0.0
          %5223 = vmatpush.msra.mxu0 0.0
          %5224 = vmatpush.msra.mxu0 0.0
          %5225 = vmatpush.msra.mxu0 0.0
          %5226 = vmatpush.msra.mxu0 0.0
          %5227 = vmatpush.msra.mxu0 0.0
          %5228 = vmatpush.msra.mxu0 0.0
          %5229 = vmatpush.msra.mxu0 0.0
          %5230 = vmatpush.msra.mxu0 0.0
          %5231 = vmatpush.msra.mxu0 0.0
          %5232 = vmatpush.msra.mxu0 0.0
          %5233 = vmatpush.msra.mxu0 %v5207
          %5234 = vmatmul.f32.gmra.mxu0 %v5216
          %v5235 = vpop.f32.mrf.mxu0
          %v5236 = vadd.f32 0.0, %v5235
          %5237 = vdwg.mxu0
          %5238 = vmatpush.msra.mxu0 0.0
          %5239 = vmatpush.msra.mxu0 0.0
          %5240 = vmatpush.msra.mxu0 0.0
          %5241 = vmatpush.msra.mxu0 0.0
          %5242 = vmatpush.msra.mxu0 0.0
          %5243 = vmatpush.msra.mxu0 0.0
          %5244 = vmatpush.msra.mxu0 0.0
          %5245 = vmatpush.msra.mxu0 0.0
          %5246 = vmatpush.msra.mxu0 0.0
          %5247 = vmatpush.msra.mxu0 0.0
          %5248 = vmatpush.msra.mxu0 0.0
          %5249 = vmatpush.msra.mxu0 0.0
          %5250 = vmatpush.msra.mxu0 0.0
          %5251 = vmatpush.msra.mxu0 0.0
          %5252 = vmatpush.msra.mxu0 0.0
          %5253 = vmatpush.msra.mxu0 %v5208
          %5254 = vmatmul.f32.gmra.mxu0 %v5216
          %v5255 = vpop.f32.mrf.mxu0
          %v5256 = vadd.f32 0.0, %v5255
          %5257 = vdwg.mxu0
          %5258 = vmatpush.msra.mxu0 0.0
          %5259 = vmatpush.msra.mxu0 0.0
          %5260 = vmatpush.msra.mxu0 0.0
          %5261 = vmatpush.msra.mxu0 0.0
          %5262 = vmatpush.msra.mxu0 0.0
          %5263 = vmatpush.msra.mxu0 0.0
          %5264 = vmatpush.msra.mxu0 0.0
          %5265 = vmatpush.msra.mxu0 0.0
          %5266 = vmatpush.msra.mxu0 0.0
          %5267 = vmatpush.msra.mxu0 0.0
          %5268 = vmatpush.msra.mxu0 0.0
          %5269 = vmatpush.msra.mxu0 0.0
          %5270 = vmatpush.msra.mxu0 0.0
          %5271 = vmatpush.msra.mxu0 0.0
          %5272 = vmatpush.msra.mxu0 0.0
          %5273 = vmatpush.msra.mxu0 %v5209
          %5274 = vmatmul.f32.gmra.mxu0 %v5216
          %v5275 = vpop.f32.mrf.mxu0
          %v5276 = vadd.f32 0.0, %v5275
          %5277 = vdwg.mxu0
          %5278 = vmatpush.msra.mxu0 0.0
          %5279 = vmatpush.msra.mxu0 0.0
          %5280 = vmatpush.msra.mxu0 0.0
          %5281 = vmatpush.msra.mxu0 0.0
          %5282 = vmatpush.msra.mxu0 0.0
          %5283 = vmatpush.msra.mxu0 0.0
          %5284 = vmatpush.msra.mxu0 0.0
          %5285 = vmatpush.msra.mxu0 0.0
          %5286 = vmatpush.msra.mxu0 0.0
          %5287 = vmatpush.msra.mxu0 0.0
          %5288 = vmatpush.msra.mxu0 0.0
          %5289 = vmatpush.msra.mxu0 0.0
          %5290 = vmatpush.msra.mxu0 0.0
          %5291 = vmatpush.msra.mxu0 0.0
          %5292 = vmatpush.msra.mxu0 0.0
          %5293 = vmatpush.msra.mxu0 %v5210
          %5294 = vmatmul.f32.gmra.mxu0 %v5216
          %v5295 = vpop.f32.mrf.mxu0
          %v5296 = vadd.f32 0.0, %v5295
          %5297 = vdwg.mxu0
          %v5298 = vadd.f32 %v5101, %v5236
          %v5299 = vadd.f32 %v5121, %v5256
          %v5300 = vadd.f32 %v5141, %v5276
          %v5301 = vadd.f32 %v5161, %v5296
          %v5302 = vld [vmem:[%s2170] sm:$0xf]
          %v5304 = vperm.slane %v5302, 0
          %v5305 = vperm.slane %v5302, 1
          %v5306 = vperm.slane %v5302, 2
          %v5307 = vperm.slane %v5302, 3
          %5308 = vrot.lane.b32.xlu0 %v5304, 16
          %v5309 = vpop.permute.xlu0 %5308
          %5310 = vrot.lane.b32.xlu0 %v5305, 16
          %v5311 = vpop.permute.xlu0 %5310
          %5312 = vrot.lane.b32.xlu0 %v5306, 16
          %v5313 = vpop.permute.xlu0 %5312
          %5314 = vrot.lane.b32.xlu0 %v5307, 16
          %v5315 = vpop.permute.xlu0 %5314
          %v5316 = vsel %vm2185, %v5309, %v5311
          %v5317 = vsel %vm2185, %v5311, %v5313
          %v5318 = vsel %vm2185, %v5313, %v5315
          %v5324 = vmul.f32 %v4927, %v5309
          %v5325 = vmul.f32 %v4919, %v5316
          %v5326 = vmul.f32 %v4920, %v5317
          %v5327 = vmul.f32 %v4921, %v5318
          %v5328 = vmul.f32 %v4928, %v5315
          %s5329 = scalar_lea.vmem %s9, 24
          %v5330 = vld [vmem:[%s5329] sm:$0xff]
          %5336 = vrot.lane.b32.xlu0 %v5324, 112
          %v5337 = vpop.permute.xlu0 %5336
          %5338 = vrot.lane.b32.xlu0 %v5325, 112
          %v5339 = vpop.permute.xlu0 %5338
          %5340 = vrot.lane.b32.xlu0 %v5326, 112
          %v5341 = vpop.permute.xlu0 %5340
          %5342 = vrot.lane.b32.xlu0 %v5327, 112
          %v5343 = vpop.permute.xlu0 %5342
          %5344 = vrot.lane.b32.xlu0 %v5328, 112
          %v5345 = vpop.permute.xlu0 %5344
          %v5346 = vsel %vm1070, %v5337, %v5339
          %v5347 = vsel %vm1070, %v5339, %v5341
          %v5348 = vsel %vm1070, %v5341, %v5343
          %v5349 = vsel %vm1070, %v5343, %v5345
          %v5355 = vsel %vm4996, %v5330, 0
          %5357 = vmatpush.msra.mxu0 0.0
          %5358 = vmatpush.msra.mxu0 0.0
          %5359 = vmatpush.msra.mxu0 0.0
          %5360 = vmatpush.msra.mxu0 0.0
          %5361 = vmatpush.msra.mxu0 0.0
          %5362 = vmatpush.msra.mxu0 0.0
          %5363 = vmatpush.msra.mxu0 0.0
          %5364 = vmatpush.msra.mxu0 0.0
          %5365 = vmatpush.msra.mxu0 0.0
          %5366 = vmatpush.msra.mxu0 0.0
          %5367 = vmatpush.msra.mxu0 0.0
          %5368 = vmatpush.msra.mxu0 0.0
          %5369 = vmatpush.msra.mxu0 0.0
          %5370 = vmatpush.msra.mxu0 0.0
          %5371 = vmatpush.msra.mxu0 0.0
          %5372 = vmatpush.msra.mxu0 %v5346
          %5373 = vmatmul.f32.gmra.mxu0 %v5355
          %v5374 = vpop.f32.mrf.mxu0
          %v5375 = vadd.f32 0.0, %v5374
          %5376 = vdwg.mxu0
          %5377 = vmatpush.msra.mxu0 0.0
          %5378 = vmatpush.msra.mxu0 0.0
          %5379 = vmatpush.msra.mxu0 0.0
          %5380 = vmatpush.msra.mxu0 0.0
          %5381 = vmatpush.msra.mxu0 0.0
          %5382 = vmatpush.msra.mxu0 0.0
          %5383 = vmatpush.msra.mxu0 0.0
          %5384 = vmatpush.msra.mxu0 0.0
          %5385 = vmatpush.msra.mxu0 0.0
          %5386 = vmatpush.msra.mxu0 0.0
          %5387 = vmatpush.msra.mxu0 0.0
          %5388 = vmatpush.msra.mxu0 0.0
          %5389 = vmatpush.msra.mxu0 0.0
          %5390 = vmatpush.msra.mxu0 0.0
          %5391 = vmatpush.msra.mxu0 0.0
          %5392 = vmatpush.msra.mxu0 %v5347
          %5393 = vmatmul.f32.gmra.mxu0 %v5355
          %v5394 = vpop.f32.mrf.mxu0
          %v5395 = vadd.f32 0.0, %v5394
          %5396 = vdwg.mxu0
          %5397 = vmatpush.msra.mxu0 0.0
          %5398 = vmatpush.msra.mxu0 0.0
          %5399 = vmatpush.msra.mxu0 0.0
          %5400 = vmatpush.msra.mxu0 0.0
          %5401 = vmatpush.msra.mxu0 0.0
          %5402 = vmatpush.msra.mxu0 0.0
          %5403 = vmatpush.msra.mxu0 0.0
          %5404 = vmatpush.msra.mxu0 0.0
          %5405 = vmatpush.msra.mxu0 0.0
          %5406 = vmatpush.msra.mxu0 0.0
          %5407 = vmatpush.msra.mxu0 0.0
          %5408 = vmatpush.msra.mxu0 0.0
          %5409 = vmatpush.msra.mxu0 0.0
          %5410 = vmatpush.msra.mxu0 0.0
          %5411 = vmatpush.msra.mxu0 0.0
          %5412 = vmatpush.msra.mxu0 %v5348
          %5413 = vmatmul.f32.gmra.mxu0 %v5355
          %v5414 = vpop.f32.mrf.mxu0
          %v5415 = vadd.f32 0.0, %v5414
          %5416 = vdwg.mxu0
          %5417 = vmatpush.msra.mxu0 0.0
          %5418 = vmatpush.msra.mxu0 0.0
          %5419 = vmatpush.msra.mxu0 0.0
          %5420 = vmatpush.msra.mxu0 0.0
          %5421 = vmatpush.msra.mxu0 0.0
          %5422 = vmatpush.msra.mxu0 0.0
          %5423 = vmatpush.msra.mxu0 0.0
          %5424 = vmatpush.msra.mxu0 0.0
          %5425 = vmatpush.msra.mxu0 0.0
          %5426 = vmatpush.msra.mxu0 0.0
          %5427 = vmatpush.msra.mxu0 0.0
          %5428 = vmatpush.msra.mxu0 0.0
          %5429 = vmatpush.msra.mxu0 0.0
          %5430 = vmatpush.msra.mxu0 0.0
          %5431 = vmatpush.msra.mxu0 0.0
          %5432 = vmatpush.msra.mxu0 %v5349
          %5433 = vmatmul.f32.gmra.mxu0 %v5355
          %v5434 = vpop.f32.mrf.mxu0
          %v5435 = vadd.f32 0.0, %v5434
          %5436 = vdwg.mxu0
          %v5437 = vadd.f32 %v5298, %v5375
          %v5438 = vadd.f32 %v5299, %v5395
          %v5439 = vadd.f32 %v5300, %v5415
          %v5440 = vadd.f32 %v5301, %v5435
          %s5441 = scalar_lea.vmem %s9, 32
          %v5442 = vld [vmem:[%s5441] sm:$0xff]
          %5445 = vrot.lane.b32.xlu0 %v4927, 111
          %v5446 = vpop.permute.xlu0 %5445
          %5447 = vrot.lane.b32.xlu0 %v4919, 111
          %v5448 = vpop.permute.xlu0 %5447
          %5449 = vrot.lane.b32.xlu0 %v4920, 111
          %v5450 = vpop.permute.xlu0 %5449
          %5451 = vrot.lane.b32.xlu0 %v4921, 111
          %v5452 = vpop.permute.xlu0 %5451
          %5453 = vrot.lane.b32.xlu0 %v4928, 111
          %v5454 = vpop.permute.xlu0 %5453
          %v5455 = vsel %vm1158, %v5446, %v5448
          %v5456 = vsel %vm1158, %v5448, %v5450
          %v5457 = vsel %vm1158, %v5450, %v5452
          %v5458 = vsel %vm1158, %v5452, %v5454
          %v5464 = vsel %vm4996, %v5442, 0
          %5466 = vmatpush.msra.mxu0 0.0
          %5467 = vmatpush.msra.mxu0 0.0
          %5468 = vmatpush.msra.mxu0 0.0
          %5469 = vmatpush.msra.mxu0 0.0
          %5470 = vmatpush.msra.mxu0 0.0
          %5471 = vmatpush.msra.mxu0 0.0
          %5472 = vmatpush.msra.mxu0 0.0
          %5473 = vmatpush.msra.mxu0 0.0
          %5474 = vmatpush.msra.mxu0 0.0
          %5475 = vmatpush.msra.mxu0 0.0
          %5476 = vmatpush.msra.mxu0 0.0
          %5477 = vmatpush.msra.mxu0 0.0
          %5478 = vmatpush.msra.mxu0 0.0
          %5479 = vmatpush.msra.mxu0 0.0
          %5480 = vmatpush.msra.mxu0 0.0
          %5481 = vmatpush.msra.mxu0 %v5455
          %5482 = vmatmul.f32.gmra.mxu0 %v5464
          %v5483 = vpop.f32.mrf.mxu0
          %v5484 = vadd.f32 0.0, %v5483
          %5485 = vdwg.mxu0
          %5486 = vmatpush.msra.mxu0 0.0
          %5487 = vmatpush.msra.mxu0 0.0
          %5488 = vmatpush.msra.mxu0 0.0
          %5489 = vmatpush.msra.mxu0 0.0
          %5490 = vmatpush.msra.mxu0 0.0
          %5491 = vmatpush.msra.mxu0 0.0
          %5492 = vmatpush.msra.mxu0 0.0
          %5493 = vmatpush.msra.mxu0 0.0
          %5494 = vmatpush.msra.mxu0 0.0
          %5495 = vmatpush.msra.mxu0 0.0
          %5496 = vmatpush.msra.mxu0 0.0
          %5497 = vmatpush.msra.mxu0 0.0
          %5498 = vmatpush.msra.mxu0 0.0
          %5499 = vmatpush.msra.mxu0 0.0
          %5500 = vmatpush.msra.mxu0 0.0
          %5501 = vmatpush.msra.mxu0 %v5456
          %5502 = vmatmul.f32.gmra.mxu0 %v5464
          %v5503 = vpop.f32.mrf.mxu0
          %v5504 = vadd.f32 0.0, %v5503
          %5505 = vdwg.mxu0
          %5506 = vmatpush.msra.mxu0 0.0
          %5507 = vmatpush.msra.mxu0 0.0
          %5508 = vmatpush.msra.mxu0 0.0
          %5509 = vmatpush.msra.mxu0 0.0
          %5510 = vmatpush.msra.mxu0 0.0
          %5511 = vmatpush.msra.mxu0 0.0
          %5512 = vmatpush.msra.mxu0 0.0
          %5513 = vmatpush.msra.mxu0 0.0
          %5514 = vmatpush.msra.mxu0 0.0
          %5515 = vmatpush.msra.mxu0 0.0
          %5516 = vmatpush.msra.mxu0 0.0
          %5517 = vmatpush.msra.mxu0 0.0
          %5518 = vmatpush.msra.mxu0 0.0
          %5519 = vmatpush.msra.mxu0 0.0
          %5520 = vmatpush.msra.mxu0 0.0
          %5521 = vmatpush.msra.mxu0 %v5457
          %5522 = vmatmul.f32.gmra.mxu0 %v5464
          %v5523 = vpop.f32.mrf.mxu0
          %v5524 = vadd.f32 0.0, %v5523
          %5525 = vdwg.mxu0
          %5526 = vmatpush.msra.mxu0 0.0
          %5527 = vmatpush.msra.mxu0 0.0
          %5528 = vmatpush.msra.mxu0 0.0
          %5529 = vmatpush.msra.mxu0 0.0
          %5530 = vmatpush.msra.mxu0 0.0
          %5531 = vmatpush.msra.mxu0 0.0
          %5532 = vmatpush.msra.mxu0 0.0
          %5533 = vmatpush.msra.mxu0 0.0
          %5534 = vmatpush.msra.mxu0 0.0
          %5535 = vmatpush.msra.mxu0 0.0
          %5536 = vmatpush.msra.mxu0 0.0
          %5537 = vmatpush.msra.mxu0 0.0
          %5538 = vmatpush.msra.mxu0 0.0
          %5539 = vmatpush.msra.mxu0 0.0
          %5540 = vmatpush.msra.mxu0 0.0
          %5541 = vmatpush.msra.mxu0 %v5458
          %5542 = vmatmul.f32.gmra.mxu0 %v5464
          %v5543 = vpop.f32.mrf.mxu0
          %v5544 = vadd.f32 0.0, %v5543
          %5545 = vdwg.mxu0
          %v5546 = vadd.f32 %v5437, %v5484
          %v5547 = vadd.f32 %v5438, %v5504
          %v5548 = vadd.f32 %v5439, %v5524
          %v5549 = vadd.f32 %v5440, %v5544
          %v5550 = vld [vmem:[%s2564] sm:$0xf]
          %v5552 = vperm.slane %v5550, 0
          %v5553 = vperm.slane %v5550, 1
          %v5554 = vperm.slane %v5550, 2
          %v5555 = vperm.slane %v5550, 3
          %5556 = vrot.lane.b32.xlu0 %v5552, 18
          %v5557 = vpop.permute.xlu0 %5556
          %5558 = vrot.lane.b32.xlu0 %v5553, 18
          %v5559 = vpop.permute.xlu0 %5558
          %5560 = vrot.lane.b32.xlu0 %v5554, 18
          %v5561 = vpop.permute.xlu0 %5560
          %5562 = vrot.lane.b32.xlu0 %v5555, 18
          %v5563 = vpop.permute.xlu0 %5562
          %v5564 = vsel %vm2579, %v5557, %v5559
          %v5565 = vsel %vm2579, %v5559, %v5561
          %v5566 = vsel %vm2579, %v5561, %v5563
          %v5572 = vmul.f32 %v4927, %v5557
          %v5573 = vmul.f32 %v4919, %v5564
          %v5574 = vmul.f32 %v4920, %v5565
          %v5575 = vmul.f32 %v4921, %v5566
          %v5576 = vmul.f32 %v4928, %v5563
          %s5577 = scalar_lea.vmem %s9, 40
          %v5578 = vld [vmem:[%s5577] sm:$0xff]
          %5584 = vrot.lane.b32.xlu0 %v5572, 110
          %v5585 = vpop.permute.xlu0 %5584
          %5586 = vrot.lane.b32.xlu0 %v5573, 110
          %v5587 = vpop.permute.xlu0 %5586
          %5588 = vrot.lane.b32.xlu0 %v5574, 110
          %v5589 = vpop.permute.xlu0 %5588
          %5590 = vrot.lane.b32.xlu0 %v5575, 110
          %v5591 = vpop.permute.xlu0 %5590
          %5592 = vrot.lane.b32.xlu0 %v5576, 110
          %v5593 = vpop.permute.xlu0 %5592
          %v5594 = vsel %vm1246, %v5585, %v5587
          %v5595 = vsel %vm1246, %v5587, %v5589
          %v5596 = vsel %vm1246, %v5589, %v5591
          %v5597 = vsel %vm1246, %v5591, %v5593
          %v5603 = vsel %vm4996, %v5578, 0
          %5605 = vmatpush.msra.mxu0 0.0
          %5606 = vmatpush.msra.mxu0 0.0
          %5607 = vmatpush.msra.mxu0 0.0
          %5608 = vmatpush.msra.mxu0 0.0
          %5609 = vmatpush.msra.mxu0 0.0
          %5610 = vmatpush.msra.mxu0 0.0
          %5611 = vmatpush.msra.mxu0 0.0
          %5612 = vmatpush.msra.mxu0 0.0
          %5613 = vmatpush.msra.mxu0 0.0
          %5614 = vmatpush.msra.mxu0 0.0
          %5615 = vmatpush.msra.mxu0 0.0
          %5616 = vmatpush.msra.mxu0 0.0
          %5617 = vmatpush.msra.mxu0 0.0
          %5618 = vmatpush.msra.mxu0 0.0
          %5619 = vmatpush.msra.mxu0 0.0
          %5620 = vmatpush.msra.mxu0 %v5594
          %5621 = vmatmul.f32.gmra.mxu0 %v5603
          %v5622 = vpop.f32.mrf.mxu0
          %v5623 = vadd.f32 0.0, %v5622
          %5624 = vdwg.mxu0
          %5625 = vmatpush.msra.mxu0 0.0
          %5626 = vmatpush.msra.mxu0 0.0
          %5627 = vmatpush.msra.mxu0 0.0
          %5628 = vmatpush.msra.mxu0 0.0
          %5629 = vmatpush.msra.mxu0 0.0
          %5630 = vmatpush.msra.mxu0 0.0
          %5631 = vmatpush.msra.mxu0 0.0
          %5632 = vmatpush.msra.mxu0 0.0
          %5633 = vmatpush.msra.mxu0 0.0
          %5634 = vmatpush.msra.mxu0 0.0
          %5635 = vmatpush.msra.mxu0 0.0
          %5636 = vmatpush.msra.mxu0 0.0
          %5637 = vmatpush.msra.mxu0 0.0
          %5638 = vmatpush.msra.mxu0 0.0
          %5639 = vmatpush.msra.mxu0 0.0
          %5640 = vmatpush.msra.mxu0 %v5595
          %5641 = vmatmul.f32.gmra.mxu0 %v5603
          %v5642 = vpop.f32.mrf.mxu0
          %v5643 = vadd.f32 0.0, %v5642
          %5644 = vdwg.mxu0
          %5645 = vmatpush.msra.mxu0 0.0
          %5646 = vmatpush.msra.mxu0 0.0
          %5647 = vmatpush.msra.mxu0 0.0
          %5648 = vmatpush.msra.mxu0 0.0
          %5649 = vmatpush.msra.mxu0 0.0
          %5650 = vmatpush.msra.mxu0 0.0
          %5651 = vmatpush.msra.mxu0 0.0
          %5652 = vmatpush.msra.mxu0 0.0
          %5653 = vmatpush.msra.mxu0 0.0
          %5654 = vmatpush.msra.mxu0 0.0
          %5655 = vmatpush.msra.mxu0 0.0
          %5656 = vmatpush.msra.mxu0 0.0
          %5657 = vmatpush.msra.mxu0 0.0
          %5658 = vmatpush.msra.mxu0 0.0
          %5659 = vmatpush.msra.mxu0 0.0
          %5660 = vmatpush.msra.mxu0 %v5596
          %5661 = vmatmul.f32.gmra.mxu0 %v5603
          %v5662 = vpop.f32.mrf.mxu0
          %v5663 = vadd.f32 0.0, %v5662
          %5664 = vdwg.mxu0
          %5665 = vmatpush.msra.mxu0 0.0
          %5666 = vmatpush.msra.mxu0 0.0
          %5667 = vmatpush.msra.mxu0 0.0
          %5668 = vmatpush.msra.mxu0 0.0
          %5669 = vmatpush.msra.mxu0 0.0
          %5670 = vmatpush.msra.mxu0 0.0
          %5671 = vmatpush.msra.mxu0 0.0
          %5672 = vmatpush.msra.mxu0 0.0
          %5673 = vmatpush.msra.mxu0 0.0
          %5674 = vmatpush.msra.mxu0 0.0
          %5675 = vmatpush.msra.mxu0 0.0
          %5676 = vmatpush.msra.mxu0 0.0
          %5677 = vmatpush.msra.mxu0 0.0
          %5678 = vmatpush.msra.mxu0 0.0
          %5679 = vmatpush.msra.mxu0 0.0
          %5680 = vmatpush.msra.mxu0 %v5597
          %5681 = vmatmul.f32.gmra.mxu0 %v5603
          %v5682 = vpop.f32.mrf.mxu0
          %v5683 = vadd.f32 0.0, %v5682
          %5684 = vdwg.mxu0
          %v5685 = vadd.f32 %v5546, %v5623
          %v5686 = vadd.f32 %v5547, %v5643
          %v5687 = vadd.f32 %v5548, %v5663
          %v5688 = vadd.f32 %v5549, %v5683
          %v5689 = vld [vmem:[%s2785] sm:$0xf]
          %v5691 = vperm.slane %v5689, 0
          %v5692 = vperm.slane %v5689, 1
          %v5693 = vperm.slane %v5689, 2
          %v5694 = vperm.slane %v5689, 3
          %5695 = vrot.lane.b32.xlu0 %v5691, 32
          %v5696 = vpop.permute.xlu0 %5695
          %5697 = vrot.lane.b32.xlu0 %v5692, 32
          %v5698 = vpop.permute.xlu0 %5697
          %5699 = vrot.lane.b32.xlu0 %v5693, 32
          %v5700 = vpop.permute.xlu0 %5699
          %5701 = vrot.lane.b32.xlu0 %v5694, 32
          %v5702 = vpop.permute.xlu0 %5701
          %v5703 = vsel %vm2800, %v5696, %v5698
          %v5704 = vsel %vm2800, %v5698, %v5700
          %v5705 = vsel %vm2800, %v5700, %v5702
          %v5711 = vmul.f32 %v4927, %v5696
          %v5712 = vmul.f32 %v4919, %v5703
          %v5713 = vmul.f32 %v4920, %v5704
          %v5714 = vmul.f32 %v4921, %v5705
          %v5715 = vmul.f32 %v4928, %v5702
          %s5716 = scalar_lea.vmem %s9, 48
          %v5717 = vld [vmem:[%s5716] sm:$0xff]
          %5723 = vrot.lane.b32.xlu0 %v5711, 96
          %v5724 = vpop.permute.xlu0 %5723
          %5725 = vrot.lane.b32.xlu0 %v5712, 96
          %v5726 = vpop.permute.xlu0 %5725
          %5727 = vrot.lane.b32.xlu0 %v5713, 96
          %v5728 = vpop.permute.xlu0 %5727
          %5729 = vrot.lane.b32.xlu0 %v5714, 96
          %v5730 = vpop.permute.xlu0 %5729
          %5731 = vrot.lane.b32.xlu0 %v5715, 96
          %v5732 = vpop.permute.xlu0 %5731
          %v5733 = vsel %vm2872, %v5724, %v5726
          %v5734 = vsel %vm2872, %v5726, %v5728
          %v5735 = vsel %vm2872, %v5728, %v5730
          %v5736 = vsel %vm2872, %v5730, %v5732
          %v5742 = vsel %vm4996, %v5717, 0
          %5744 = vmatpush.msra.mxu0 0.0
          %5745 = vmatpush.msra.mxu0 0.0
          %5746 = vmatpush.msra.mxu0 0.0
          %5747 = vmatpush.msra.mxu0 0.0
          %5748 = vmatpush.msra.mxu0 0.0
          %5749 = vmatpush.msra.mxu0 0.0
          %5750 = vmatpush.msra.mxu0 0.0
          %5751 = vmatpush.msra.mxu0 0.0
          %5752 = vmatpush.msra.mxu0 0.0
          %5753 = vmatpush.msra.mxu0 0.0
          %5754 = vmatpush.msra.mxu0 0.0
          %5755 = vmatpush.msra.mxu0 0.0
          %5756 = vmatpush.msra.mxu0 0.0
          %5757 = vmatpush.msra.mxu0 0.0
          %5758 = vmatpush.msra.mxu0 0.0
          %5759 = vmatpush.msra.mxu0 %v5733
          %5760 = vmatmul.f32.gmra.mxu0 %v5742
          %v5761 = vpop.f32.mrf.mxu0
          %v5762 = vadd.f32 0.0, %v5761
          %5763 = vdwg.mxu0
          %5764 = vmatpush.msra.mxu0 0.0
          %5765 = vmatpush.msra.mxu0 0.0
          %5766 = vmatpush.msra.mxu0 0.0
          %5767 = vmatpush.msra.mxu0 0.0
          %5768 = vmatpush.msra.mxu0 0.0
          %5769 = vmatpush.msra.mxu0 0.0
          %5770 = vmatpush.msra.mxu0 0.0
          %5771 = vmatpush.msra.mxu0 0.0
          %5772 = vmatpush.msra.mxu0 0.0
          %5773 = vmatpush.msra.mxu0 0.0
          %5774 = vmatpush.msra.mxu0 0.0
          %5775 = vmatpush.msra.mxu0 0.0
          %5776 = vmatpush.msra.mxu0 0.0
          %5777 = vmatpush.msra.mxu0 0.0
          %5778 = vmatpush.msra.mxu0 0.0
          %5779 = vmatpush.msra.mxu0 %v5734
          %5780 = vmatmul.f32.gmra.mxu0 %v5742
          %v5781 = vpop.f32.mrf.mxu0
          %v5782 = vadd.f32 0.0, %v5781
          %5783 = vdwg.mxu0
          %5784 = vmatpush.msra.mxu0 0.0
          %5785 = vmatpush.msra.mxu0 0.0
          %5786 = vmatpush.msra.mxu0 0.0
          %5787 = vmatpush.msra.mxu0 0.0
          %5788 = vmatpush.msra.mxu0 0.0
          %5789 = vmatpush.msra.mxu0 0.0
          %5790 = vmatpush.msra.mxu0 0.0
          %5791 = vmatpush.msra.mxu0 0.0
          %5792 = vmatpush.msra.mxu0 0.0
          %5793 = vmatpush.msra.mxu0 0.0
          %5794 = vmatpush.msra.mxu0 0.0
          %5795 = vmatpush.msra.mxu0 0.0
          %5796 = vmatpush.msra.mxu0 0.0
          %5797 = vmatpush.msra.mxu0 0.0
          %5798 = vmatpush.msra.mxu0 0.0
          %5799 = vmatpush.msra.mxu0 %v5735
          %5800 = vmatmul.f32.gmra.mxu0 %v5742
          %v5801 = vpop.f32.mrf.mxu0
          %v5802 = vadd.f32 0.0, %v5801
          %5803 = vdwg.mxu0
          %5804 = vmatpush.msra.mxu0 0.0
          %5805 = vmatpush.msra.mxu0 0.0
          %5806 = vmatpush.msra.mxu0 0.0
          %5807 = vmatpush.msra.mxu0 0.0
          %5808 = vmatpush.msra.mxu0 0.0
          %5809 = vmatpush.msra.mxu0 0.0
          %5810 = vmatpush.msra.mxu0 0.0
          %5811 = vmatpush.msra.mxu0 0.0
          %5812 = vmatpush.msra.mxu0 0.0
          %5813 = vmatpush.msra.mxu0 0.0
          %5814 = vmatpush.msra.mxu0 0.0
          %5815 = vmatpush.msra.mxu0 0.0
          %5816 = vmatpush.msra.mxu0 0.0
          %5817 = vmatpush.msra.mxu0 0.0
          %5818 = vmatpush.msra.mxu0 0.0
          %5819 = vmatpush.msra.mxu0 %v5736
          %5820 = vmatmul.f32.gmra.mxu0 %v5742
          %v5821 = vpop.f32.mrf.mxu0
          %v5822 = vadd.f32 0.0, %v5821
          %5823 = vdwg.mxu0
          %v5824 = vadd.f32 %v5685, %v5762
          %v5825 = vadd.f32 %v5686, %v5782
          %v5826 = vadd.f32 %v5687, %v5802
          %v5827 = vadd.f32 %v5688, %v5822
          %v5828 = vld [vmem:[%s3007] sm:$0xf]
          %v5830 = vperm.slane %v5828, 0
          %v5831 = vperm.slane %v5828, 1
          %v5832 = vperm.slane %v5828, 2
          %v5833 = vperm.slane %v5828, 3
          %5834 = vrot.lane.b32.xlu0 %v5830, 33
          %v5835 = vpop.permute.xlu0 %5834
          %5836 = vrot.lane.b32.xlu0 %v5831, 33
          %v5837 = vpop.permute.xlu0 %5836
          %5838 = vrot.lane.b32.xlu0 %v5832, 33
          %v5839 = vpop.permute.xlu0 %5838
          %5840 = vrot.lane.b32.xlu0 %v5833, 33
          %v5841 = vpop.permute.xlu0 %5840
          %v5842 = vsel %vm3022, %v5835, %v5837
          %v5843 = vsel %vm3022, %v5837, %v5839
          %v5844 = vsel %vm3022, %v5839, %v5841
          %v5850 = vmul.f32 %v4927, %v5835
          %v5851 = vmul.f32 %v4919, %v5842
          %v5852 = vmul.f32 %v4920, %v5843
          %v5853 = vmul.f32 %v4921, %v5844
          %v5854 = vmul.f32 %v4928, %v5841
          %s5855 = scalar_lea.vmem %s9, 56
          %v5856 = vld [vmem:[%s5855] sm:$0xff]
          %5862 = vrot.lane.b32.xlu0 %v5850, 95
          %v5863 = vpop.permute.xlu0 %5862
          %5864 = vrot.lane.b32.xlu0 %v5851, 95
          %v5865 = vpop.permute.xlu0 %5864
          %5866 = vrot.lane.b32.xlu0 %v5852, 95
          %v5867 = vpop.permute.xlu0 %5866
          %5868 = vrot.lane.b32.xlu0 %v5853, 95
          %v5869 = vpop.permute.xlu0 %5868
          %5870 = vrot.lane.b32.xlu0 %v5854, 95
          %v5871 = vpop.permute.xlu0 %5870
          %v5872 = vsel %vm3094, %v5863, %v5865
          %v5873 = vsel %vm3094, %v5865, %v5867
          %v5874 = vsel %vm3094, %v5867, %v5869
          %v5875 = vsel %vm3094, %v5869, %v5871
          %v5881 = vsel %vm4996, %v5856, 0
          %5883 = vmatpush.msra.mxu0 0.0
          %5884 = vmatpush.msra.mxu0 0.0
          %5885 = vmatpush.msra.mxu0 0.0
          %5886 = vmatpush.msra.mxu0 0.0
          %5887 = vmatpush.msra.mxu0 0.0
          %5888 = vmatpush.msra.mxu0 0.0
          %5889 = vmatpush.msra.mxu0 0.0
          %5890 = vmatpush.msra.mxu0 0.0
          %5891 = vmatpush.msra.mxu0 0.0
          %5892 = vmatpush.msra.mxu0 0.0
          %5893 = vmatpush.msra.mxu0 0.0
          %5894 = vmatpush.msra.mxu0 0.0
          %5895 = vmatpush.msra.mxu0 0.0
          %5896 = vmatpush.msra.mxu0 0.0
          %5897 = vmatpush.msra.mxu0 0.0
          %5898 = vmatpush.msra.mxu0 %v5872
          %5899 = vmatmul.f32.gmra.mxu0 %v5881
          %v5900 = vpop.f32.mrf.mxu0
          %v5901 = vadd.f32 0.0, %v5900
          %5902 = vdwg.mxu0
          %5903 = vmatpush.msra.mxu0 0.0
          %5904 = vmatpush.msra.mxu0 0.0
          %5905 = vmatpush.msra.mxu0 0.0
          %5906 = vmatpush.msra.mxu0 0.0
          %5907 = vmatpush.msra.mxu0 0.0
          %5908 = vmatpush.msra.mxu0 0.0
          %5909 = vmatpush.msra.mxu0 0.0
          %5910 = vmatpush.msra.mxu0 0.0
          %5911 = vmatpush.msra.mxu0 0.0
          %5912 = vmatpush.msra.mxu0 0.0
          %5913 = vmatpush.msra.mxu0 0.0
          %5914 = vmatpush.msra.mxu0 0.0
          %5915 = vmatpush.msra.mxu0 0.0
          %5916 = vmatpush.msra.mxu0 0.0
          %5917 = vmatpush.msra.mxu0 0.0
          %5918 = vmatpush.msra.mxu0 %v5873
          %5919 = vmatmul.f32.gmra.mxu0 %v5881
          %v5920 = vpop.f32.mrf.mxu0
          %v5921 = vadd.f32 0.0, %v5920
          %5922 = vdwg.mxu0
          %5923 = vmatpush.msra.mxu0 0.0
          %5924 = vmatpush.msra.mxu0 0.0
          %5925 = vmatpush.msra.mxu0 0.0
          %5926 = vmatpush.msra.mxu0 0.0
          %5927 = vmatpush.msra.mxu0 0.0
          %5928 = vmatpush.msra.mxu0 0.0
          %5929 = vmatpush.msra.mxu0 0.0
          %5930 = vmatpush.msra.mxu0 0.0
          %5931 = vmatpush.msra.mxu0 0.0
          %5932 = vmatpush.msra.mxu0 0.0
          %5933 = vmatpush.msra.mxu0 0.0
          %5934 = vmatpush.msra.mxu0 0.0
          %5935 = vmatpush.msra.mxu0 0.0
          %5936 = vmatpush.msra.mxu0 0.0
          %5937 = vmatpush.msra.mxu0 0.0
          %5938 = vmatpush.msra.mxu0 %v5874
          %5939 = vmatmul.f32.gmra.mxu0 %v5881
          %v5940 = vpop.f32.mrf.mxu0
          %v5941 = vadd.f32 0.0, %v5940
          %5942 = vdwg.mxu0
          %5943 = vmatpush.msra.mxu0 0.0
          %5944 = vmatpush.msra.mxu0 0.0
          %5945 = vmatpush.msra.mxu0 0.0
          %5946 = vmatpush.msra.mxu0 0.0
          %5947 = vmatpush.msra.mxu0 0.0
          %5948 = vmatpush.msra.mxu0 0.0
          %5949 = vmatpush.msra.mxu0 0.0
          %5950 = vmatpush.msra.mxu0 0.0
          %5951 = vmatpush.msra.mxu0 0.0
          %5952 = vmatpush.msra.mxu0 0.0
          %5953 = vmatpush.msra.mxu0 0.0
          %5954 = vmatpush.msra.mxu0 0.0
          %5955 = vmatpush.msra.mxu0 0.0
          %5956 = vmatpush.msra.mxu0 0.0
          %5957 = vmatpush.msra.mxu0 0.0
          %5958 = vmatpush.msra.mxu0 %v5875
          %5959 = vmatmul.f32.gmra.mxu0 %v5881
          %v5960 = vpop.f32.mrf.mxu0
          %v5961 = vadd.f32 0.0, %v5960
          %5962 = vdwg.mxu0
          %v5963 = vadd.f32 %v5824, %v5901
          %v5964 = vadd.f32 %v5825, %v5921
          %v5965 = vadd.f32 %v5826, %v5941
          %v5966 = vadd.f32 %v5827, %v5961
          %v5967 = vld [vmem:[%s3229] sm:$0xf]
          %v5969 = vperm.slane %v5967, 0
          %v5970 = vperm.slane %v5967, 1
          %v5971 = vperm.slane %v5967, 2
          %v5972 = vperm.slane %v5967, 3
          %5973 = vrot.lane.b32.xlu0 %v5969, 34
          %v5974 = vpop.permute.xlu0 %5973
          %5975 = vrot.lane.b32.xlu0 %v5970, 34
          %v5976 = vpop.permute.xlu0 %5975
          %5977 = vrot.lane.b32.xlu0 %v5971, 34
          %v5978 = vpop.permute.xlu0 %5977
          %5979 = vrot.lane.b32.xlu0 %v5972, 34
          %v5980 = vpop.permute.xlu0 %5979
          %v5981 = vsel %vm3244, %v5974, %v5976
          %v5982 = vsel %vm3244, %v5976, %v5978
          %v5983 = vsel %vm3244, %v5978, %v5980
          %v5989 = vmul.f32 %v4927, %v5974
          %v5990 = vmul.f32 %v4919, %v5981
          %v5991 = vmul.f32 %v4920, %v5982
          %v5992 = vmul.f32 %v4921, %v5983
          %v5993 = vmul.f32 %v4928, %v5980
          %s5994 = scalar_lea.vmem %s9, 64
          %v5995 = vld [vmem:[%s5994] sm:$0xff]
          %6001 = vrot.lane.b32.xlu0 %v5989, 94
          %v6002 = vpop.permute.xlu0 %6001
          %6003 = vrot.lane.b32.xlu0 %v5990, 94
          %v6004 = vpop.permute.xlu0 %6003
          %6005 = vrot.lane.b32.xlu0 %v5991, 94
          %v6006 = vpop.permute.xlu0 %6005
          %6007 = vrot.lane.b32.xlu0 %v5992, 94
          %v6008 = vpop.permute.xlu0 %6007
          %6009 = vrot.lane.b32.xlu0 %v5993, 94
          %v6010 = vpop.permute.xlu0 %6009
          %v6011 = vsel %vm3316, %v6002, %v6004
          %v6012 = vsel %vm3316, %v6004, %v6006
          %v6013 = vsel %vm3316, %v6006, %v6008
          %v6014 = vsel %vm3316, %v6008, %v6010
          %v6020 = vsel %vm4996, %v5995, 0
          %6022 = vmatpush.msra.mxu0 0.0
          %6023 = vmatpush.msra.mxu0 0.0
          %6024 = vmatpush.msra.mxu0 0.0
          %6025 = vmatpush.msra.mxu0 0.0
          %6026 = vmatpush.msra.mxu0 0.0
          %6027 = vmatpush.msra.mxu0 0.0
          %6028 = vmatpush.msra.mxu0 0.0
          %6029 = vmatpush.msra.mxu0 0.0
          %6030 = vmatpush.msra.mxu0 0.0
          %6031 = vmatpush.msra.mxu0 0.0
          %6032 = vmatpush.msra.mxu0 0.0
          %6033 = vmatpush.msra.mxu0 0.0
          %6034 = vmatpush.msra.mxu0 0.0
          %6035 = vmatpush.msra.mxu0 0.0
          %6036 = vmatpush.msra.mxu0 0.0
          %6037 = vmatpush.msra.mxu0 %v6011
          %6038 = vmatmul.f32.gmra.mxu0 %v6020
          %v6039 = vpop.f32.mrf.mxu0
          %v6040 = vadd.f32 0.0, %v6039
          %6041 = vdwg.mxu0
          %6042 = vmatpush.msra.mxu0 0.0
          %6043 = vmatpush.msra.mxu0 0.0
          %6044 = vmatpush.msra.mxu0 0.0
          %6045 = vmatpush.msra.mxu0 0.0
          %6046 = vmatpush.msra.mxu0 0.0
          %6047 = vmatpush.msra.mxu0 0.0
          %6048 = vmatpush.msra.mxu0 0.0
          %6049 = vmatpush.msra.mxu0 0.0
          %6050 = vmatpush.msra.mxu0 0.0
          %6051 = vmatpush.msra.mxu0 0.0
          %6052 = vmatpush.msra.mxu0 0.0
          %6053 = vmatpush.msra.mxu0 0.0
          %6054 = vmatpush.msra.mxu0 0.0
          %6055 = vmatpush.msra.mxu0 0.0
          %6056 = vmatpush.msra.mxu0 0.0
          %6057 = vmatpush.msra.mxu0 %v6012
          %6058 = vmatmul.f32.gmra.mxu0 %v6020
          %v6059 = vpop.f32.mrf.mxu0
          %v6060 = vadd.f32 0.0, %v6059
          %6061 = vdwg.mxu0
          %6062 = vmatpush.msra.mxu0 0.0
          %6063 = vmatpush.msra.mxu0 0.0
          %6064 = vmatpush.msra.mxu0 0.0
          %6065 = vmatpush.msra.mxu0 0.0
          %6066 = vmatpush.msra.mxu0 0.0
          %6067 = vmatpush.msra.mxu0 0.0
          %6068 = vmatpush.msra.mxu0 0.0
          %6069 = vmatpush.msra.mxu0 0.0
          %6070 = vmatpush.msra.mxu0 0.0
          %6071 = vmatpush.msra.mxu0 0.0
          %6072 = vmatpush.msra.mxu0 0.0
          %6073 = vmatpush.msra.mxu0 0.0
          %6074 = vmatpush.msra.mxu0 0.0
          %6075 = vmatpush.msra.mxu0 0.0
          %6076 = vmatpush.msra.mxu0 0.0
          %6077 = vmatpush.msra.mxu0 %v6013
          %6078 = vmatmul.f32.gmra.mxu0 %v6020
          %v6079 = vpop.f32.mrf.mxu0
          %v6080 = vadd.f32 0.0, %v6079
          %6081 = vdwg.mxu0
          %6082 = vmatpush.msra.mxu0 0.0
          %6083 = vmatpush.msra.mxu0 0.0
          %6084 = vmatpush.msra.mxu0 0.0
          %6085 = vmatpush.msra.mxu0 0.0
          %6086 = vmatpush.msra.mxu0 0.0
          %6087 = vmatpush.msra.mxu0 0.0
          %6088 = vmatpush.msra.mxu0 0.0
          %6089 = vmatpush.msra.mxu0 0.0
          %6090 = vmatpush.msra.mxu0 0.0
          %6091 = vmatpush.msra.mxu0 0.0
          %6092 = vmatpush.msra.mxu0 0.0
          %6093 = vmatpush.msra.mxu0 0.0
          %6094 = vmatpush.msra.mxu0 0.0
          %6095 = vmatpush.msra.mxu0 0.0
          %6096 = vmatpush.msra.mxu0 0.0
          %6097 = vmatpush.msra.mxu0 %v6014
          %6098 = vmatmul.f32.gmra.mxu0 %v6020
          %v6099 = vpop.f32.mrf.mxu0
          %v6100 = vadd.f32 0.0, %v6099
          %6101 = vdwg.mxu0
          %v6102 = vadd.f32 %v5963, %v6040
          %v6103 = vadd.f32 %v5964, %v6060
          %v6104 = vadd.f32 %v5965, %v6080
          %v6105 = vadd.f32 %v5966, %v6100
          %v6106 = vld [vmem:[%s10] sm:$0xff]
          %6108 = vset.pattern.permute.xlu0 0
          %6109 = vperm.xlu0 %6108, %v6106
          %v6110 = vpop.permute.xlu0 %6109
          %v6112 = vadd.f32 %v6102, %v6110
          %v6113 = vadd.f32 %v6103, %v6110
          %v6114 = vadd.f32 %v6104, %v6110
          %v6115 = vadd.f32 %v6105, %v6110
          %v6116 = vld [vmem:[#allocation9] sm:$0xff]
          %v6117 = vld [vmem:[#allocation9 + $0x8] sm:$0xff]
          %v6118 = vld [vmem:[#allocation9 + $0x10] sm:$0xff]
          %v6119 = vld [vmem:[#allocation9 + $0x18] sm:$0xff]
          %v6120 = vld [vmem:[#allocation9 + $0x20] sm:$0xff]
          %v6121 = vld [vmem:[#allocation9 + $0x28] sm:$0xff]
          %v6122 = vld [vmem:[#allocation9 + $0x30] sm:$0xff]
          %v6123 = vld [vmem:[#allocation9 + $0x38] sm:$0xff]
          %v6124 = vld [vmem:[#allocation9 + $0x40] sm:$0xff]
          %v6125 = vld [vmem:[#allocation9 + $0x48] sm:$0xff]
          %v6126 = vld [vmem:[#allocation9 + $0x50] sm:$0xff]
          %v6127 = vld [vmem:[#allocation9 + $0x58] sm:$0xff]
          %v6128 = vld [vmem:[#allocation9 + $0x60] sm:$0xff]
          %v6129 = vld [vmem:[#allocation9 + $0x68] sm:$0xff]
          %v6130 = vld [vmem:[#allocation9 + $0x70] sm:$0xff]
          %v6131 = vld [vmem:[#allocation9 + $0x78] sm:$0xff]
          %v6132 = vld [vmem:[#allocation9 + $0x80] sm:$0xff]
          %v6133 = vld [vmem:[#allocation9 + $0x88] sm:$0xff]
          %v6134 = vld [vmem:[#allocation9 + $0x90] sm:$0xff]
          %v6135 = vld [vmem:[#allocation9 + $0x98] sm:$0xff]
          %v6136 = vld [vmem:[#allocation9 + $0xa0] sm:$0xff]
          %v6137 = vld [vmem:[#allocation9 + $0xa8] sm:$0xff]
          %v6138 = vld [vmem:[#allocation9 + $0xb0] sm:$0xff]
          %v6139 = vld [vmem:[#allocation9 + $0xb8] sm:$0xff]
          %v6140 = vld [vmem:[#allocation9 + $0xc0] sm:$0xff]
          %v6141 = vld [vmem:[#allocation9 + $0xc8] sm:$0xff]
          %v6142 = vld [vmem:[#allocation9 + $0xd0] sm:$0xff]
          %v6143 = vld [vmem:[#allocation9 + $0xd8] sm:$0xff]
          %v6144 = vld [vmem:[#allocation9 + $0xe0] sm:$0xff]
          %v6145 = vld [vmem:[#allocation9 + $0xe8] sm:$0xff]
          %v6146 = vld [vmem:[#allocation9 + $0xf0] sm:$0xff]
          %v6147 = vld [vmem:[#allocation9 + $0xf8] sm:$0xff]
          %v6148 = vld [vmem:[#allocation9 + $0x100] sm:$0xff]
          %v6149 = vld [vmem:[#allocation9 + $0x108] sm:$0xff]
          %v6150 = vld [vmem:[#allocation9 + $0x110] sm:$0xff]
          %v6151 = vld [vmem:[#allocation9 + $0x118] sm:$0xff]
          %v6152 = vld [vmem:[#allocation9 + $0x120] sm:$0xff]
          %v6153 = vld [vmem:[#allocation9 + $0x128] sm:$0xff]
          %v6154 = vld [vmem:[#allocation9 + $0x130] sm:$0xff]
          %v6155 = vld [vmem:[#allocation9 + $0x138] sm:$0xff]
          %v6156 = vld [vmem:[#allocation9 + $0x140] sm:$0xff]
          %v6157 = vld [vmem:[#allocation9 + $0x148] sm:$0xff]
          %v6158 = vld [vmem:[#allocation9 + $0x150] sm:$0xff]
          %v6159 = vld [vmem:[#allocation9 + $0x158] sm:$0xff]
          %v6160 = vld [vmem:[#allocation9 + $0x160] sm:$0xff]
          %v6161 = vld [vmem:[#allocation9 + $0x168] sm:$0xff]
          %v6162 = vld [vmem:[#allocation9 + $0x170] sm:$0xff]
          %v6163 = vld [vmem:[#allocation9 + $0x178] sm:$0xff]
          %v6164 = vld [vmem:[#allocation9 + $0x180] sm:$0xff]
          %v6165 = vld [vmem:[#allocation9 + $0x188] sm:$0xff]
          %v6166 = vld [vmem:[#allocation9 + $0x190] sm:$0xff]
          %v6167 = vld [vmem:[#allocation9 + $0x198] sm:$0xff]
          %v6168 = vld [vmem:[#allocation9 + $0x1a0] sm:$0xff]
          %v6169 = vld [vmem:[#allocation9 + $0x1a8] sm:$0xff]
          %v6170 = vld [vmem:[#allocation9 + $0x1b0] sm:$0xff]
          %v6171 = vld [vmem:[#allocation9 + $0x1b8] sm:$0xff]
          %v6172 = vld [vmem:[#allocation9 + $0x1c0] sm:$0xff]
          %v6173 = vld [vmem:[#allocation9 + $0x1c8] sm:$0xff]
          %v6174 = vld [vmem:[#allocation9 + $0x1d0] sm:$0xff]
          %v6175 = vld [vmem:[#allocation9 + $0x1d8] sm:$0xff]
          %v6176 = vld [vmem:[#allocation9 + $0x1e0] sm:$0xff]
          %v6177 = vld [vmem:[#allocation9 + $0x1e8] sm:$0xff]
          %v6178 = vld [vmem:[#allocation9 + $0x1f0] sm:$0xff]
          %v6179 = vld [vmem:[#allocation9 + $0x1f8] sm:$0xff]
          %6180 = vmatpush.msra.mxu0 %v6131
          %6181 = vmatpush.msra.mxu0 %v6130
          %6182 = vmatpush.msra.mxu0 %v6129
          %6183 = vmatpush.msra.mxu0 %v6128
          %6184 = vmatpush.msra.mxu0 %v6127
          %6185 = vmatpush.msra.mxu0 %v6126
          %6186 = vmatpush.msra.mxu0 %v6125
          %6187 = vmatpush.msra.mxu0 %v6124
          %6188 = vmatpush.msra.mxu0 %v6123
          %6189 = vmatpush.msra.mxu0 %v6122
          %6190 = vmatpush.msra.mxu0 %v6121
          %6191 = vmatpush.msra.mxu0 %v6120
          %6192 = vmatpush.msra.mxu0 %v6119
          %6193 = vmatpush.msra.mxu0 %v6118
          %6194 = vmatpush.msra.mxu0 %v6117
          %6195 = vmatpush.msra.mxu0 %v6116
          %6196 = vmatmul.f32.gmra.mxu0 %v6112
          %v6197 = vpop.f32.mrf.mxu0
          %v6198 = vadd.f32 0.0, %v6197
          %6199 = vdwg.mxu0
          %6200 = vmatpush.msra.mxu0 %v6147
          %6201 = vmatpush.msra.mxu0 %v6146
          %6202 = vmatpush.msra.mxu0 %v6145
          %6203 = vmatpush.msra.mxu0 %v6144
          %6204 = vmatpush.msra.mxu0 %v6143
          %6205 = vmatpush.msra.mxu0 %v6142
          %6206 = vmatpush.msra.mxu0 %v6141
          %6207 = vmatpush.msra.mxu0 %v6140
          %6208 = vmatpush.msra.mxu0 %v6139
          %6209 = vmatpush.msra.mxu0 %v6138
          %6210 = vmatpush.msra.mxu0 %v6137
          %6211 = vmatpush.msra.mxu0 %v6136
          %6212 = vmatpush.msra.mxu0 %v6135
          %6213 = vmatpush.msra.mxu0 %v6134
          %6214 = vmatpush.msra.mxu0 %v6133
          %6215 = vmatpush.msra.mxu0 %v6132
          %6216 = vmatmul.f32.gmra.mxu0 %v6113
          %v6217 = vpop.f32.mrf.mxu0
          %v6218 = vadd.f32 %v6198, %v6217
          %6219 = vdwg.mxu0
          %6220 = vmatpush.msra.mxu0 %v6163
          %6221 = vmatpush.msra.mxu0 %v6162
          %6222 = vmatpush.msra.mxu0 %v6161
          %6223 = vmatpush.msra.mxu0 %v6160
          %6224 = vmatpush.msra.mxu0 %v6159
          %6225 = vmatpush.msra.mxu0 %v6158
          %6226 = vmatpush.msra.mxu0 %v6157
          %6227 = vmatpush.msra.mxu0 %v6156
          %6228 = vmatpush.msra.mxu0 %v6155
          %6229 = vmatpush.msra.mxu0 %v6154
          %6230 = vmatpush.msra.mxu0 %v6153
          %6231 = vmatpush.msra.mxu0 %v6152
          %6232 = vmatpush.msra.mxu0 %v6151
          %6233 = vmatpush.msra.mxu0 %v6150
          %6234 = vmatpush.msra.mxu0 %v6149
          %6235 = vmatpush.msra.mxu0 %v6148
          %6236 = vmatmul.f32.gmra.mxu0 %v6114
          %v6237 = vpop.f32.mrf.mxu0
          %v6238 = vadd.f32 %v6218, %v6237
          %6239 = vdwg.mxu0
          %6240 = vmatpush.msra.mxu0 %v6179
          %6241 = vmatpush.msra.mxu0 %v6178
          %6242 = vmatpush.msra.mxu0 %v6177
          %6243 = vmatpush.msra.mxu0 %v6176
          %6244 = vmatpush.msra.mxu0 %v6175
          %6245 = vmatpush.msra.mxu0 %v6174
          %6246 = vmatpush.msra.mxu0 %v6173
          %6247 = vmatpush.msra.mxu0 %v6172
          %6248 = vmatpush.msra.mxu0 %v6171
          %6249 = vmatpush.msra.mxu0 %v6170
          %6250 = vmatpush.msra.mxu0 %v6169
          %6251 = vmatpush.msra.mxu0 %v6168
          %6252 = vmatpush.msra.mxu0 %v6167
          %6253 = vmatpush.msra.mxu0 %v6166
          %6254 = vmatpush.msra.mxu0 %v6165
          %6255 = vmatpush.msra.mxu0 %v6164
          %6256 = vmatmul.f32.gmra.mxu0 %v6115
          %v6257 = vpop.f32.mrf.mxu0
          %v6258 = vadd.f32 %v6238, %v6257
          %6259 = vdwg.mxu0
          %s6260 = scalar_lea.vmem [#allocation9], 512
          %v6261 = vld [vmem:[%s6260] sm:$0xff]
          %v6262 = vld [vmem:[%s6260 + $0x8] sm:$0xff]
          %v6263 = vld [vmem:[%s6260 + $0x10] sm:$0xff]
          %v6264 = vld [vmem:[%s6260 + $0x18] sm:$0xff]
          %v6265 = vld [vmem:[%s6260 + $0x20] sm:$0xff]
          %v6266 = vld [vmem:[%s6260 + $0x28] sm:$0xff]
          %v6267 = vld [vmem:[%s6260 + $0x30] sm:$0xff]
          %v6268 = vld [vmem:[%s6260 + $0x38] sm:$0xff]
          %v6269 = vld [vmem:[%s6260 + $0x40] sm:$0xff]
          %v6270 = vld [vmem:[%s6260 + $0x48] sm:$0xff]
          %v6271 = vld [vmem:[%s6260 + $0x50] sm:$0xff]
          %v6272 = vld [vmem:[%s6260 + $0x58] sm:$0xff]
          %v6273 = vld [vmem:[%s6260 + $0x60] sm:$0xff]
          %v6274 = vld [vmem:[%s6260 + $0x68] sm:$0xff]
          %v6275 = vld [vmem:[%s6260 + $0x70] sm:$0xff]
          %v6276 = vld [vmem:[%s6260 + $0x78] sm:$0xff]
          %v6277 = vld [vmem:[%s6260 + $0x80] sm:$0xff]
          %v6278 = vld [vmem:[%s6260 + $0x88] sm:$0xff]
          %v6279 = vld [vmem:[%s6260 + $0x90] sm:$0xff]
          %v6280 = vld [vmem:[%s6260 + $0x98] sm:$0xff]
          %v6281 = vld [vmem:[%s6260 + $0xa0] sm:$0xff]
          %v6282 = vld [vmem:[%s6260 + $0xa8] sm:$0xff]
          %v6283 = vld [vmem:[%s6260 + $0xb0] sm:$0xff]
          %v6284 = vld [vmem:[%s6260 + $0xb8] sm:$0xff]
          %v6285 = vld [vmem:[%s6260 + $0xc0] sm:$0xff]
          %v6286 = vld [vmem:[%s6260 + $0xc8] sm:$0xff]
          %v6287 = vld [vmem:[%s6260 + $0xd0] sm:$0xff]
          %v6288 = vld [vmem:[%s6260 + $0xd8] sm:$0xff]
          %v6289 = vld [vmem:[%s6260 + $0xe0] sm:$0xff]
          %v6290 = vld [vmem:[%s6260 + $0xe8] sm:$0xff]
          %v6291 = vld [vmem:[%s6260 + $0xf0] sm:$0xff]
          %v6292 = vld [vmem:[%s6260 + $0xf8] sm:$0xff]
          %v6293 = vld [vmem:[%s6260 + $0x100] sm:$0xff]
          %v6294 = vld [vmem:[%s6260 + $0x108] sm:$0xff]
          %v6295 = vld [vmem:[%s6260 + $0x110] sm:$0xff]
          %v6296 = vld [vmem:[%s6260 + $0x118] sm:$0xff]
          %v6297 = vld [vmem:[%s6260 + $0x120] sm:$0xff]
          %v6298 = vld [vmem:[%s6260 + $0x128] sm:$0xff]
          %v6299 = vld [vmem:[%s6260 + $0x130] sm:$0xff]
          %v6300 = vld [vmem:[%s6260 + $0x138] sm:$0xff]
          %v6301 = vld [vmem:[%s6260 + $0x140] sm:$0xff]
          %v6302 = vld [vmem:[%s6260 + $0x148] sm:$0xff]
          %v6303 = vld [vmem:[%s6260 + $0x150] sm:$0xff]
          %v6304 = vld [vmem:[%s6260 + $0x158] sm:$0xff]
          %v6305 = vld [vmem:[%s6260 + $0x160] sm:$0xff]
          %v6306 = vld [vmem:[%s6260 + $0x168] sm:$0xff]
          %v6307 = vld [vmem:[%s6260 + $0x170] sm:$0xff]
          %v6308 = vld [vmem:[%s6260 + $0x178] sm:$0xff]
          %v6309 = vld [vmem:[%s6260 + $0x180] sm:$0xff]
          %v6310 = vld [vmem:[%s6260 + $0x188] sm:$0xff]
          %v6311 = vld [vmem:[%s6260 + $0x190] sm:$0xff]
          %v6312 = vld [vmem:[%s6260 + $0x198] sm:$0xff]
          %v6313 = vld [vmem:[%s6260 + $0x1a0] sm:$0xff]
          %v6314 = vld [vmem:[%s6260 + $0x1a8] sm:$0xff]
          %v6315 = vld [vmem:[%s6260 + $0x1b0] sm:$0xff]
          %v6316 = vld [vmem:[%s6260 + $0x1b8] sm:$0xff]
          %v6317 = vld [vmem:[%s6260 + $0x1c0] sm:$0xff]
          %v6318 = vld [vmem:[%s6260 + $0x1c8] sm:$0xff]
          %v6319 = vld [vmem:[%s6260 + $0x1d0] sm:$0xff]
          %v6320 = vld [vmem:[%s6260 + $0x1d8] sm:$0xff]
          %v6321 = vld [vmem:[%s6260 + $0x1e0] sm:$0xff]
          %v6322 = vld [vmem:[%s6260 + $0x1e8] sm:$0xff]
          %v6323 = vld [vmem:[%s6260 + $0x1f0] sm:$0xff]
          %v6324 = vld [vmem:[%s6260 + $0x1f8] sm:$0xff]
          %6325 = vmatpush.msra.mxu0 %v6276
          %6326 = vmatpush.msra.mxu0 %v6275
          %6327 = vmatpush.msra.mxu0 %v6274
          %6328 = vmatpush.msra.mxu0 %v6273
          %6329 = vmatpush.msra.mxu0 %v6272
          %6330 = vmatpush.msra.mxu0 %v6271
          %6331 = vmatpush.msra.mxu0 %v6270
          %6332 = vmatpush.msra.mxu0 %v6269
          %6333 = vmatpush.msra.mxu0 %v6268
          %6334 = vmatpush.msra.mxu0 %v6267
          %6335 = vmatpush.msra.mxu0 %v6266
          %6336 = vmatpush.msra.mxu0 %v6265
          %6337 = vmatpush.msra.mxu0 %v6264
          %6338 = vmatpush.msra.mxu0 %v6263
          %6339 = vmatpush.msra.mxu0 %v6262
          %6340 = vmatpush.msra.mxu0 %v6261
          %6341 = vmatmul.f32.gmra.mxu0 %v6112
          %v6342 = vpop.f32.mrf.mxu0
          %v6343 = vadd.f32 0.0, %v6342
          %6344 = vdwg.mxu0
          %6345 = vmatpush.msra.mxu0 %v6292
          %6346 = vmatpush.msra.mxu0 %v6291
          %6347 = vmatpush.msra.mxu0 %v6290
          %6348 = vmatpush.msra.mxu0 %v6289
          %6349 = vmatpush.msra.mxu0 %v6288
          %6350 = vmatpush.msra.mxu0 %v6287
          %6351 = vmatpush.msra.mxu0 %v6286
          %6352 = vmatpush.msra.mxu0 %v6285
          %6353 = vmatpush.msra.mxu0 %v6284
          %6354 = vmatpush.msra.mxu0 %v6283
          %6355 = vmatpush.msra.mxu0 %v6282
          %6356 = vmatpush.msra.mxu0 %v6281
          %6357 = vmatpush.msra.mxu0 %v6280
          %6358 = vmatpush.msra.mxu0 %v6279
          %6359 = vmatpush.msra.mxu0 %v6278
          %6360 = vmatpush.msra.mxu0 %v6277
          %6361 = vmatmul.f32.gmra.mxu0 %v6113
          %v6362 = vpop.f32.mrf.mxu0
          %v6363 = vadd.f32 %v6343, %v6362
          %6364 = vdwg.mxu0
          %6365 = vmatpush.msra.mxu0 %v6308
          %6366 = vmatpush.msra.mxu0 %v6307
          %6367 = vmatpush.msra.mxu0 %v6306
          %6368 = vmatpush.msra.mxu0 %v6305
          %6369 = vmatpush.msra.mxu0 %v6304
          %6370 = vmatpush.msra.mxu0 %v6303
          %6371 = vmatpush.msra.mxu0 %v6302
          %6372 = vmatpush.msra.mxu0 %v6301
          %6373 = vmatpush.msra.mxu0 %v6300
          %6374 = vmatpush.msra.mxu0 %v6299
          %6375 = vmatpush.msra.mxu0 %v6298
          %6376 = vmatpush.msra.mxu0 %v6297
          %6377 = vmatpush.msra.mxu0 %v6296
          %6378 = vmatpush.msra.mxu0 %v6295
          %6379 = vmatpush.msra.mxu0 %v6294
          %6380 = vmatpush.msra.mxu0 %v6293
          %6381 = vmatmul.f32.gmra.mxu0 %v6114
          %v6382 = vpop.f32.mrf.mxu0
          %v6383 = vadd.f32 %v6363, %v6382
          %6384 = vdwg.mxu0
          %6385 = vmatpush.msra.mxu0 %v6324
          %6386 = vmatpush.msra.mxu0 %v6323
          %6387 = vmatpush.msra.mxu0 %v6322
          %6388 = vmatpush.msra.mxu0 %v6321
          %6389 = vmatpush.msra.mxu0 %v6320
          %6390 = vmatpush.msra.mxu0 %v6319
          %6391 = vmatpush.msra.mxu0 %v6318
          %6392 = vmatpush.msra.mxu0 %v6317
          %6393 = vmatpush.msra.mxu0 %v6316
          %6394 = vmatpush.msra.mxu0 %v6315
          %6395 = vmatpush.msra.mxu0 %v6314
          %6396 = vmatpush.msra.mxu0 %v6313
          %6397 = vmatpush.msra.mxu0 %v6312
          %6398 = vmatpush.msra.mxu0 %v6311
          %6399 = vmatpush.msra.mxu0 %v6310
          %6400 = vmatpush.msra.mxu0 %v6309
          %6401 = vmatmul.f32.gmra.mxu0 %v6115
          %v6402 = vpop.f32.mrf.mxu0
          %v6403 = vadd.f32 %v6383, %v6402
          %6404 = vdwg.mxu0
          %v6405 = vmax.f32 %v6258, %v6403
          %s6406 = scalar_lea.vmem [#allocation9], 1024
          %v6407 = vld [vmem:[%s6406] sm:$0xff]
          %v6408 = vld [vmem:[%s6406 + $0x8] sm:$0xff]
          %v6409 = vld [vmem:[%s6406 + $0x10] sm:$0xff]
          %v6410 = vld [vmem:[%s6406 + $0x18] sm:$0xff]
          %v6411 = vld [vmem:[%s6406 + $0x20] sm:$0xff]
          %v6412 = vld [vmem:[%s6406 + $0x28] sm:$0xff]
          %v6413 = vld [vmem:[%s6406 + $0x30] sm:$0xff]
          %v6414 = vld [vmem:[%s6406 + $0x38] sm:$0xff]
          %v6415 = vld [vmem:[%s6406 + $0x40] sm:$0xff]
          %v6416 = vld [vmem:[%s6406 + $0x48] sm:$0xff]
          %v6417 = vld [vmem:[%s6406 + $0x50] sm:$0xff]
          %v6418 = vld [vmem:[%s6406 + $0x58] sm:$0xff]
          %v6419 = vld [vmem:[%s6406 + $0x60] sm:$0xff]
          %v6420 = vld [vmem:[%s6406 + $0x68] sm:$0xff]
          %v6421 = vld [vmem:[%s6406 + $0x70] sm:$0xff]
          %v6422 = vld [vmem:[%s6406 + $0x78] sm:$0xff]
          %v6423 = vld [vmem:[%s6406 + $0x80] sm:$0xff]
          %v6424 = vld [vmem:[%s6406 + $0x88] sm:$0xff]
          %v6425 = vld [vmem:[%s6406 + $0x90] sm:$0xff]
          %v6426 = vld [vmem:[%s6406 + $0x98] sm:$0xff]
          %v6427 = vld [vmem:[%s6406 + $0xa0] sm:$0xff]
          %v6428 = vld [vmem:[%s6406 + $0xa8] sm:$0xff]
          %v6429 = vld [vmem:[%s6406 + $0xb0] sm:$0xff]
          %v6430 = vld [vmem:[%s6406 + $0xb8] sm:$0xff]
          %v6431 = vld [vmem:[%s6406 + $0xc0] sm:$0xff]
          %v6432 = vld [vmem:[%s6406 + $0xc8] sm:$0xff]
          %v6433 = vld [vmem:[%s6406 + $0xd0] sm:$0xff]
          %v6434 = vld [vmem:[%s6406 + $0xd8] sm:$0xff]
          %v6435 = vld [vmem:[%s6406 + $0xe0] sm:$0xff]
          %v6436 = vld [vmem:[%s6406 + $0xe8] sm:$0xff]
          %v6437 = vld [vmem:[%s6406 + $0xf0] sm:$0xff]
          %v6438 = vld [vmem:[%s6406 + $0xf8] sm:$0xff]
          %v6439 = vld [vmem:[%s6406 + $0x100] sm:$0xff]
          %v6440 = vld [vmem:[%s6406 + $0x108] sm:$0xff]
          %v6441 = vld [vmem:[%s6406 + $0x110] sm:$0xff]
          %v6442 = vld [vmem:[%s6406 + $0x118] sm:$0xff]
          %v6443 = vld [vmem:[%s6406 + $0x120] sm:$0xff]
          %v6444 = vld [vmem:[%s6406 + $0x128] sm:$0xff]
          %v6445 = vld [vmem:[%s6406 + $0x130] sm:$0xff]
          %v6446 = vld [vmem:[%s6406 + $0x138] sm:$0xff]
          %v6447 = vld [vmem:[%s6406 + $0x140] sm:$0xff]
          %v6448 = vld [vmem:[%s6406 + $0x148] sm:$0xff]
          %v6449 = vld [vmem:[%s6406 + $0x150] sm:$0xff]
          %v6450 = vld [vmem:[%s6406 + $0x158] sm:$0xff]
          %v6451 = vld [vmem:[%s6406 + $0x160] sm:$0xff]
          %v6452 = vld [vmem:[%s6406 + $0x168] sm:$0xff]
          %v6453 = vld [vmem:[%s6406 + $0x170] sm:$0xff]
          %v6454 = vld [vmem:[%s6406 + $0x178] sm:$0xff]
          %v6455 = vld [vmem:[%s6406 + $0x180] sm:$0xff]
          %v6456 = vld [vmem:[%s6406 + $0x188] sm:$0xff]
          %v6457 = vld [vmem:[%s6406 + $0x190] sm:$0xff]
          %v6458 = vld [vmem:[%s6406 + $0x198] sm:$0xff]
          %v6459 = vld [vmem:[%s6406 + $0x1a0] sm:$0xff]
          %v6460 = vld [vmem:[%s6406 + $0x1a8] sm:$0xff]
          %v6461 = vld [vmem:[%s6406 + $0x1b0] sm:$0xff]
          %v6462 = vld [vmem:[%s6406 + $0x1b8] sm:$0xff]
          %v6463 = vld [vmem:[%s6406 + $0x1c0] sm:$0xff]
          %v6464 = vld [vmem:[%s6406 + $0x1c8] sm:$0xff]
          %v6465 = vld [vmem:[%s6406 + $0x1d0] sm:$0xff]
          %v6466 = vld [vmem:[%s6406 + $0x1d8] sm:$0xff]
          %v6467 = vld [vmem:[%s6406 + $0x1e0] sm:$0xff]
          %v6468 = vld [vmem:[%s6406 + $0x1e8] sm:$0xff]
          %v6469 = vld [vmem:[%s6406 + $0x1f0] sm:$0xff]
          %v6470 = vld [vmem:[%s6406 + $0x1f8] sm:$0xff]
          %6471 = vmatpush.msra.mxu0 %v6422
          %6472 = vmatpush.msra.mxu0 %v6421
          %6473 = vmatpush.msra.mxu0 %v6420
          %6474 = vmatpush.msra.mxu0 %v6419
          %6475 = vmatpush.msra.mxu0 %v6418
          %6476 = vmatpush.msra.mxu0 %v6417
          %6477 = vmatpush.msra.mxu0 %v6416
          %6478 = vmatpush.msra.mxu0 %v6415
          %6479 = vmatpush.msra.mxu0 %v6414
          %6480 = vmatpush.msra.mxu0 %v6413
          %6481 = vmatpush.msra.mxu0 %v6412
          %6482 = vmatpush.msra.mxu0 %v6411
          %6483 = vmatpush.msra.mxu0 %v6410
          %6484 = vmatpush.msra.mxu0 %v6409
          %6485 = vmatpush.msra.mxu0 %v6408
          %6486 = vmatpush.msra.mxu0 %v6407
          %6487 = vmatmul.f32.gmra.mxu0 %v6112
          %v6488 = vpop.f32.mrf.mxu0
          %v6489 = vadd.f32 0.0, %v6488
          %6490 = vdwg.mxu0
          %6491 = vmatpush.msra.mxu0 %v6438
          %6492 = vmatpush.msra.mxu0 %v6437
          %6493 = vmatpush.msra.mxu0 %v6436
          %6494 = vmatpush.msra.mxu0 %v6435
          %6495 = vmatpush.msra.mxu0 %v6434
          %6496 = vmatpush.msra.mxu0 %v6433
          %6497 = vmatpush.msra.mxu0 %v6432
          %6498 = vmatpush.msra.mxu0 %v6431
          %6499 = vmatpush.msra.mxu0 %v6430
          %6500 = vmatpush.msra.mxu0 %v6429
          %6501 = vmatpush.msra.mxu0 %v6428
          %6502 = vmatpush.msra.mxu0 %v6427
          %6503 = vmatpush.msra.mxu0 %v6426
          %6504 = vmatpush.msra.mxu0 %v6425
          %6505 = vmatpush.msra.mxu0 %v6424
          %6506 = vmatpush.msra.mxu0 %v6423
          %6507 = vmatmul.f32.gmra.mxu0 %v6113
          %v6508 = vpop.f32.mrf.mxu0
          %v6509 = vadd.f32 %v6489, %v6508
          %6510 = vdwg.mxu0
          %6511 = vmatpush.msra.mxu0 %v6454
          %6512 = vmatpush.msra.mxu0 %v6453
          %6513 = vmatpush.msra.mxu0 %v6452
          %6514 = vmatpush.msra.mxu0 %v6451
          %6515 = vmatpush.msra.mxu0 %v6450
          %6516 = vmatpush.msra.mxu0 %v6449
          %6517 = vmatpush.msra.mxu0 %v6448
          %6518 = vmatpush.msra.mxu0 %v6447
          %6519 = vmatpush.msra.mxu0 %v6446
          %6520 = vmatpush.msra.mxu0 %v6445
          %6521 = vmatpush.msra.mxu0 %v6444
          %6522 = vmatpush.msra.mxu0 %v6443
          %6523 = vmatpush.msra.mxu0 %v6442
          %6524 = vmatpush.msra.mxu0 %v6441
          %6525 = vmatpush.msra.mxu0 %v6440
          %6526 = vmatpush.msra.mxu0 %v6439
          %6527 = vmatmul.f32.gmra.mxu0 %v6114
          %v6528 = vpop.f32.mrf.mxu0
          %v6529 = vadd.f32 %v6509, %v6528
          %6530 = vdwg.mxu0
          %6531 = vmatpush.msra.mxu0 %v6470
          %6532 = vmatpush.msra.mxu0 %v6469
          %6533 = vmatpush.msra.mxu0 %v6468
          %6534 = vmatpush.msra.mxu0 %v6467
          %6535 = vmatpush.msra.mxu0 %v6466
          %6536 = vmatpush.msra.mxu0 %v6465
          %6537 = vmatpush.msra.mxu0 %v6464
          %6538 = vmatpush.msra.mxu0 %v6463
          %6539 = vmatpush.msra.mxu0 %v6462
          %6540 = vmatpush.msra.mxu0 %v6461
          %6541 = vmatpush.msra.mxu0 %v6460
          %6542 = vmatpush.msra.mxu0 %v6459
          %6543 = vmatpush.msra.mxu0 %v6458
          %6544 = vmatpush.msra.mxu0 %v6457
          %6545 = vmatpush.msra.mxu0 %v6456
          %6546 = vmatpush.msra.mxu0 %v6455
          %6547 = vmatmul.f32.gmra.mxu0 %v6115
          %v6548 = vpop.f32.mrf.mxu0
          %v6549 = vadd.f32 %v6529, %v6548
          %6550 = vdwg.mxu0
          %v6551 = vmax.f32 %v6405, %v6549
          %s6552 = scalar_lea.vmem [#allocation9], 1536
          %v6553 = vld [vmem:[%s6552] sm:$0xff]
          %v6554 = vld [vmem:[%s6552 + $0x8] sm:$0xff]
          %v6555 = vld [vmem:[%s6552 + $0x10] sm:$0xff]
          %v6556 = vld [vmem:[%s6552 + $0x18] sm:$0xff]
          %v6557 = vld [vmem:[%s6552 + $0x20] sm:$0xff]
          %v6558 = vld [vmem:[%s6552 + $0x28] sm:$0xff]
          %v6559 = vld [vmem:[%s6552 + $0x30] sm:$0xff]
          %v6560 = vld [vmem:[%s6552 + $0x38] sm:$0xff]
          %v6561 = vld [vmem:[%s6552 + $0x40] sm:$0xff]
          %v6562 = vld [vmem:[%s6552 + $0x48] sm:$0xff]
          %v6563 = vld [vmem:[%s6552 + $0x50] sm:$0xff]
          %v6564 = vld [vmem:[%s6552 + $0x58] sm:$0xff]
          %v6565 = vld [vmem:[%s6552 + $0x60] sm:$0xff]
          %v6566 = vld [vmem:[%s6552 + $0x68] sm:$0xff]
          %v6567 = vld [vmem:[%s6552 + $0x70] sm:$0xff]
          %v6568 = vld [vmem:[%s6552 + $0x78] sm:$0xff]
          %v6569 = vld [vmem:[%s6552 + $0x80] sm:$0xff]
          %v6570 = vld [vmem:[%s6552 + $0x88] sm:$0xff]
          %v6571 = vld [vmem:[%s6552 + $0x90] sm:$0xff]
          %v6572 = vld [vmem:[%s6552 + $0x98] sm:$0xff]
          %v6573 = vld [vmem:[%s6552 + $0xa0] sm:$0xff]
          %v6574 = vld [vmem:[%s6552 + $0xa8] sm:$0xff]
          %v6575 = vld [vmem:[%s6552 + $0xb0] sm:$0xff]
          %v6576 = vld [vmem:[%s6552 + $0xb8] sm:$0xff]
          %v6577 = vld [vmem:[%s6552 + $0xc0] sm:$0xff]
          %v6578 = vld [vmem:[%s6552 + $0xc8] sm:$0xff]
          %v6579 = vld [vmem:[%s6552 + $0xd0] sm:$0xff]
          %v6580 = vld [vmem:[%s6552 + $0xd8] sm:$0xff]
          %v6581 = vld [vmem:[%s6552 + $0xe0] sm:$0xff]
          %v6582 = vld [vmem:[%s6552 + $0xe8] sm:$0xff]
          %v6583 = vld [vmem:[%s6552 + $0xf0] sm:$0xff]
          %v6584 = vld [vmem:[%s6552 + $0xf8] sm:$0xff]
          %v6585 = vld [vmem:[%s6552 + $0x100] sm:$0xff]
          %v6586 = vld [vmem:[%s6552 + $0x108] sm:$0xff]
          %v6587 = vld [vmem:[%s6552 + $0x110] sm:$0xff]
          %v6588 = vld [vmem:[%s6552 + $0x118] sm:$0xff]
          %v6589 = vld [vmem:[%s6552 + $0x120] sm:$0xff]
          %v6590 = vld [vmem:[%s6552 + $0x128] sm:$0xff]
          %v6591 = vld [vmem:[%s6552 + $0x130] sm:$0xff]
          %v6592 = vld [vmem:[%s6552 + $0x138] sm:$0xff]
          %v6593 = vld [vmem:[%s6552 + $0x140] sm:$0xff]
          %v6594 = vld [vmem:[%s6552 + $0x148] sm:$0xff]
          %v6595 = vld [vmem:[%s6552 + $0x150] sm:$0xff]
          %v6596 = vld [vmem:[%s6552 + $0x158] sm:$0xff]
          %v6597 = vld [vmem:[%s6552 + $0x160] sm:$0xff]
          %v6598 = vld [vmem:[%s6552 + $0x168] sm:$0xff]
          %v6599 = vld [vmem:[%s6552 + $0x170] sm:$0xff]
          %v6600 = vld [vmem:[%s6552 + $0x178] sm:$0xff]
          %v6601 = vld [vmem:[%s6552 + $0x180] sm:$0xff]
          %v6602 = vld [vmem:[%s6552 + $0x188] sm:$0xff]
          %v6603 = vld [vmem:[%s6552 + $0x190] sm:$0xff]
          %v6604 = vld [vmem:[%s6552 + $0x198] sm:$0xff]
          %v6605 = vld [vmem:[%s6552 + $0x1a0] sm:$0xff]
          %v6606 = vld [vmem:[%s6552 + $0x1a8] sm:$0xff]
          %v6607 = vld [vmem:[%s6552 + $0x1b0] sm:$0xff]
          %v6608 = vld [vmem:[%s6552 + $0x1b8] sm:$0xff]
          %v6609 = vld [vmem:[%s6552 + $0x1c0] sm:$0xff]
          %v6610 = vld [vmem:[%s6552 + $0x1c8] sm:$0xff]
          %v6611 = vld [vmem:[%s6552 + $0x1d0] sm:$0xff]
          %v6612 = vld [vmem:[%s6552 + $0x1d8] sm:$0xff]
          %v6613 = vld [vmem:[%s6552 + $0x1e0] sm:$0xff]
          %v6614 = vld [vmem:[%s6552 + $0x1e8] sm:$0xff]
          %v6615 = vld [vmem:[%s6552 + $0x1f0] sm:$0xff]
          %v6616 = vld [vmem:[%s6552 + $0x1f8] sm:$0xff]
          %6617 = vmatpush.msra.mxu0 %v6568
          %6618 = vmatpush.msra.mxu0 %v6567
          %6619 = vmatpush.msra.mxu0 %v6566
          %6620 = vmatpush.msra.mxu0 %v6565
          %6621 = vmatpush.msra.mxu0 %v6564
          %6622 = vmatpush.msra.mxu0 %v6563
          %6623 = vmatpush.msra.mxu0 %v6562
          %6624 = vmatpush.msra.mxu0 %v6561
          %6625 = vmatpush.msra.mxu0 %v6560
          %6626 = vmatpush.msra.mxu0 %v6559
          %6627 = vmatpush.msra.mxu0 %v6558
          %6628 = vmatpush.msra.mxu0 %v6557
          %6629 = vmatpush.msra.mxu0 %v6556
          %6630 = vmatpush.msra.mxu0 %v6555
          %6631 = vmatpush.msra.mxu0 %v6554
          %6632 = vmatpush.msra.mxu0 %v6553
          %6633 = vmatmul.f32.gmra.mxu0 %v6112
          %v6634 = vpop.f32.mrf.mxu0
          %v6635 = vadd.f32 0.0, %v6634
          %6636 = vdwg.mxu0
          %6637 = vmatpush.msra.mxu0 %v6584
          %6638 = vmatpush.msra.mxu0 %v6583
          %6639 = vmatpush.msra.mxu0 %v6582
          %6640 = vmatpush.msra.mxu0 %v6581
          %6641 = vmatpush.msra.mxu0 %v6580
          %6642 = vmatpush.msra.mxu0 %v6579
          %6643 = vmatpush.msra.mxu0 %v6578
          %6644 = vmatpush.msra.mxu0 %v6577
          %6645 = vmatpush.msra.mxu0 %v6576
          %6646 = vmatpush.msra.mxu0 %v6575
          %6647 = vmatpush.msra.mxu0 %v6574
          %6648 = vmatpush.msra.mxu0 %v6573
          %6649 = vmatpush.msra.mxu0 %v6572
          %6650 = vmatpush.msra.mxu0 %v6571
          %6651 = vmatpush.msra.mxu0 %v6570
          %6652 = vmatpush.msra.mxu0 %v6569
          %6653 = vmatmul.f32.gmra.mxu0 %v6113
          %v6654 = vpop.f32.mrf.mxu0
          %v6655 = vadd.f32 %v6635, %v6654
          %6656 = vdwg.mxu0
          %6657 = vmatpush.msra.mxu0 %v6600
          %6658 = vmatpush.msra.mxu0 %v6599
          %6659 = vmatpush.msra.mxu0 %v6598
          %6660 = vmatpush.msra.mxu0 %v6597
          %6661 = vmatpush.msra.mxu0 %v6596
          %6662 = vmatpush.msra.mxu0 %v6595
          %6663 = vmatpush.msra.mxu0 %v6594
          %6664 = vmatpush.msra.mxu0 %v6593
          %6665 = vmatpush.msra.mxu0 %v6592
          %6666 = vmatpush.msra.mxu0 %v6591
          %6667 = vmatpush.msra.mxu0 %v6590
          %6668 = vmatpush.msra.mxu0 %v6589
          %6669 = vmatpush.msra.mxu0 %v6588
          %6670 = vmatpush.msra.mxu0 %v6587
          %6671 = vmatpush.msra.mxu0 %v6586
          %6672 = vmatpush.msra.mxu0 %v6585
          %6673 = vmatmul.f32.gmra.mxu0 %v6114
          %v6674 = vpop.f32.mrf.mxu0
          %v6675 = vadd.f32 %v6655, %v6674
          %6676 = vdwg.mxu0
          %6677 = vmatpush.msra.mxu0 %v6616
          %6678 = vmatpush.msra.mxu0 %v6615
          %6679 = vmatpush.msra.mxu0 %v6614
          %6680 = vmatpush.msra.mxu0 %v6613
          %6681 = vmatpush.msra.mxu0 %v6612
          %6682 = vmatpush.msra.mxu0 %v6611
          %6683 = vmatpush.msra.mxu0 %v6610
          %6684 = vmatpush.msra.mxu0 %v6609
          %6685 = vmatpush.msra.mxu0 %v6608
          %6686 = vmatpush.msra.mxu0 %v6607
          %6687 = vmatpush.msra.mxu0 %v6606
          %6688 = vmatpush.msra.mxu0 %v6605
          %6689 = vmatpush.msra.mxu0 %v6604
          %6690 = vmatpush.msra.mxu0 %v6603
          %6691 = vmatpush.msra.mxu0 %v6602
          %6692 = vmatpush.msra.mxu0 %v6601
          %6693 = vmatmul.f32.gmra.mxu0 %v6115
          %v6694 = vpop.f32.mrf.mxu0
          %v6695 = vadd.f32 %v6675, %v6694
          %6696 = vdwg.mxu0
          %v6697 = vmax.f32 %v6551, %v6695
          %6698 = vst [vmem:[#allocation8] sm:$0xff] %v6697
          %v6699 = vld [vmem:[#allocation8] sm:$0xff]
          %6701 = vrot.lane.b32.xlu0 %v1337, 9
          %v6702 = vpop.permute.xlu0 %6701
          %v6704 = vsel %vm551, 0.0, %v6702
          %v6705 = vsel %vm551, %v6702, 0.0
          %v6706 = vld [vmem:[%s12] sm:$0x1]
          %v6708 = vperm.slane %v6706, 0
          %v6710 = vmul.f32 %v6704, %v6708
          %v6711 = vld [vmem:[%s6] sm:$0xff]
          %v6712 = vld [vmem:[%s569] sm:$0x1]
          %v6714 = vperm.slane %v6712, 0
          %6715 = vrot.lane.b32.xlu0 %v6714, 1
          %v6716 = vpop.permute.xlu0 %6715
          %v6718 = vmul.f32 %v6704, %v6716
          %v6719 = vmul.f32 %v6705, %v6716
          %s6720 = scalar_lea.vmem %s6, 8
          %v6721 = vld [vmem:[%s6720] sm:$0xff]
          %6724 = vrot.lane.b32.xlu0 %v6718, 127
          %v6725 = vpop.permute.xlu0 %6724
          %6726 = vrot.lane.b32.xlu0 %v6719, 127
          %v6727 = vpop.permute.xlu0 %6726
          %v6728 = vsel %vm605, %v6725, %v6727
          %v6731 = vsel %vm4996, %v6721, 0
          %6733 = vmatpush.msra.mxu0 0.0
          %6734 = vmatpush.msra.mxu0 0.0
          %6735 = vmatpush.msra.mxu0 0.0
          %6736 = vmatpush.msra.mxu0 0.0
          %6737 = vmatpush.msra.mxu0 0.0
          %6738 = vmatpush.msra.mxu0 0.0
          %6739 = vmatpush.msra.mxu0 0.0
          %6740 = vmatpush.msra.mxu0 0.0
          %6741 = vmatpush.msra.mxu0 0.0
          %6742 = vmatpush.msra.mxu0 0.0
          %6743 = vmatpush.msra.mxu0 0.0
          %6744 = vmatpush.msra.mxu0 0.0
          %6745 = vmatpush.msra.mxu0 0.0
          %6746 = vmatpush.msra.mxu0 0.0
          %6747 = vmatpush.msra.mxu0 0.0
          %6748 = vmatpush.msra.mxu0 %v6728
          %6749 = vmatmul.f32.gmra.mxu0 %v6731
          %v6750 = vpop.f32.mrf.mxu0
          %v6751 = vadd.f32 0.0, %v6750
          %6752 = vdwg.mxu0
          %v6754 = vsel %vm4996, %v6711, 0
          %6756 = vmatpush.msra.mxu0 0.0
          %6757 = vmatpush.msra.mxu0 0.0
          %6758 = vmatpush.msra.mxu0 0.0
          %6759 = vmatpush.msra.mxu0 0.0
          %6760 = vmatpush.msra.mxu0 0.0
          %6761 = vmatpush.msra.mxu0 0.0
          %6762 = vmatpush.msra.mxu0 0.0
          %6763 = vmatpush.msra.mxu0 0.0
          %6764 = vmatpush.msra.mxu0 0.0
          %6765 = vmatpush.msra.mxu0 0.0
          %6766 = vmatpush.msra.mxu0 0.0
          %6767 = vmatpush.msra.mxu0 0.0
          %6768 = vmatpush.msra.mxu0 0.0
          %6769 = vmatpush.msra.mxu0 0.0
          %6770 = vmatpush.msra.mxu0 0.0
          %6771 = vmatpush.msra.mxu0 %v6710
          %6772 = vmatmul.f32.gmra.mxu0 %v6754
          %v6773 = vpop.f32.mrf.mxu0
          %v6774 = vadd.f32 %v6751, %v6773
          %6775 = vdwg.mxu0
          %v6776 = vld [vmem:[%s695] sm:$0x1]
          %v6778 = vperm.slane %v6776, 0
          %6779 = vrot.lane.b32.xlu0 %v6778, 2
          %v6780 = vpop.permute.xlu0 %6779
          %v6782 = vmul.f32 %v6704, %v6780
          %v6783 = vmul.f32 %v6705, %v6780
          %s6784 = scalar_lea.vmem %s6, 16
          %v6785 = vld [vmem:[%s6784] sm:$0xff]
          %6788 = vrot.lane.b32.xlu0 %v6782, 126
          %v6789 = vpop.permute.xlu0 %6788
          %6790 = vrot.lane.b32.xlu0 %v6783, 126
          %v6791 = vpop.permute.xlu0 %6790
          %v6792 = vsel %vm731, %v6789, %v6791
          %v6795 = vsel %vm4996, %v6785, 0
          %6797 = vmatpush.msra.mxu0 0.0
          %6798 = vmatpush.msra.mxu0 0.0
          %6799 = vmatpush.msra.mxu0 0.0
          %6800 = vmatpush.msra.mxu0 0.0
          %6801 = vmatpush.msra.mxu0 0.0
          %6802 = vmatpush.msra.mxu0 0.0
          %6803 = vmatpush.msra.mxu0 0.0
          %6804 = vmatpush.msra.mxu0 0.0
          %6805 = vmatpush.msra.mxu0 0.0
          %6806 = vmatpush.msra.mxu0 0.0
          %6807 = vmatpush.msra.mxu0 0.0
          %6808 = vmatpush.msra.mxu0 0.0
          %6809 = vmatpush.msra.mxu0 0.0
          %6810 = vmatpush.msra.mxu0 0.0
          %6811 = vmatpush.msra.mxu0 0.0
          %6812 = vmatpush.msra.mxu0 %v6792
          %6813 = vmatmul.f32.gmra.mxu0 %v6795
          %v6814 = vpop.f32.mrf.mxu0
          %v6815 = vadd.f32 0.0, %v6814
          %6816 = vdwg.mxu0
          %v6817 = vadd.f32 %v6774, %v6815
          %v6818 = vld [vmem:[%s783] sm:$0x1]
          %v6820 = vperm.slane %v6818, 0
          %6821 = vrot.lane.b32.xlu0 %v6820, 8
          %v6822 = vpop.permute.xlu0 %6821
          %v6824 = vmul.f32 %v6704, %v6822
          %v6825 = vmul.f32 %v6705, %v6822
          %s6826 = scalar_lea.vmem %s6, 24
          %v6827 = vld [vmem:[%s6826] sm:$0xff]
          %6830 = vrot.lane.b32.xlu0 %v6824, 120
          %v6831 = vpop.permute.xlu0 %6830
          %6832 = vrot.lane.b32.xlu0 %v6825, 120
          %v6833 = vpop.permute.xlu0 %6832
          %v6834 = vsel %vm819, %v6831, %v6833
          %v6837 = vsel %vm4996, %v6827, 0
          %6839 = vmatpush.msra.mxu0 0.0
          %6840 = vmatpush.msra.mxu0 0.0
          %6841 = vmatpush.msra.mxu0 0.0
          %6842 = vmatpush.msra.mxu0 0.0
          %6843 = vmatpush.msra.mxu0 0.0
          %6844 = vmatpush.msra.mxu0 0.0
          %6845 = vmatpush.msra.mxu0 0.0
          %6846 = vmatpush.msra.mxu0 0.0
          %6847 = vmatpush.msra.mxu0 0.0
          %6848 = vmatpush.msra.mxu0 0.0
          %6849 = vmatpush.msra.mxu0 0.0
          %6850 = vmatpush.msra.mxu0 0.0
          %6851 = vmatpush.msra.mxu0 0.0
          %6852 = vmatpush.msra.mxu0 0.0
          %6853 = vmatpush.msra.mxu0 0.0
          %6854 = vmatpush.msra.mxu0 %v6834
          %6855 = vmatmul.f32.gmra.mxu0 %v6837
          %v6856 = vpop.f32.mrf.mxu0
          %v6857 = vadd.f32 0.0, %v6856
          %6858 = vdwg.mxu0
          %v6859 = vadd.f32 %v6817, %v6857
          %s6860 = scalar_lea.vmem %s6, 32
          %v6861 = vld [vmem:[%s6860] sm:$0xff]
          %6864 = vrot.lane.b32.xlu0 %v6704, 119
          %v6865 = vpop.permute.xlu0 %6864
          %6866 = vrot.lane.b32.xlu0 %v6705, 119
          %v6867 = vpop.permute.xlu0 %6866
          %v6868 = vsel %vm894, %v6865, %v6867
          %v6871 = vsel %vm4996, %v6861, 0
          %6873 = vmatpush.msra.mxu0 0.0
          %6874 = vmatpush.msra.mxu0 0.0
          %6875 = vmatpush.msra.mxu0 0.0
          %6876 = vmatpush.msra.mxu0 0.0
          %6877 = vmatpush.msra.mxu0 0.0
          %6878 = vmatpush.msra.mxu0 0.0
          %6879 = vmatpush.msra.mxu0 0.0
          %6880 = vmatpush.msra.mxu0 0.0
          %6881 = vmatpush.msra.mxu0 0.0
          %6882 = vmatpush.msra.mxu0 0.0
          %6883 = vmatpush.msra.mxu0 0.0
          %6884 = vmatpush.msra.mxu0 0.0
          %6885 = vmatpush.msra.mxu0 0.0
          %6886 = vmatpush.msra.mxu0 0.0
          %6887 = vmatpush.msra.mxu0 0.0
          %6888 = vmatpush.msra.mxu0 %v6868
          %6889 = vmatmul.f32.gmra.mxu0 %v6871
          %v6890 = vpop.f32.mrf.mxu0
          %v6891 = vadd.f32 0.0, %v6890
          %6892 = vdwg.mxu0
          %v6893 = vadd.f32 %v6859, %v6891
          %v6894 = vld [vmem:[%s946] sm:$0x1]
          %v6896 = vperm.slane %v6894, 0
          %6897 = vrot.lane.b32.xlu0 %v6896, 10
          %v6898 = vpop.permute.xlu0 %6897
          %v6900 = vmul.f32 %v6704, %v6898
          %v6901 = vmul.f32 %v6705, %v6898
          %s6902 = scalar_lea.vmem %s6, 40
          %v6903 = vld [vmem:[%s6902] sm:$0xff]
          %6906 = vrot.lane.b32.xlu0 %v6900, 118
          %v6907 = vpop.permute.xlu0 %6906
          %6908 = vrot.lane.b32.xlu0 %v6901, 118
          %v6909 = vpop.permute.xlu0 %6908
          %v6910 = vsel %vm982, %v6907, %v6909
          %v6913 = vsel %vm4996, %v6903, 0
          %6915 = vmatpush.msra.mxu0 0.0
          %6916 = vmatpush.msra.mxu0 0.0
          %6917 = vmatpush.msra.mxu0 0.0
          %6918 = vmatpush.msra.mxu0 0.0
          %6919 = vmatpush.msra.mxu0 0.0
          %6920 = vmatpush.msra.mxu0 0.0
          %6921 = vmatpush.msra.mxu0 0.0
          %6922 = vmatpush.msra.mxu0 0.0
          %6923 = vmatpush.msra.mxu0 0.0
          %6924 = vmatpush.msra.mxu0 0.0
          %6925 = vmatpush.msra.mxu0 0.0
          %6926 = vmatpush.msra.mxu0 0.0
          %6927 = vmatpush.msra.mxu0 0.0
          %6928 = vmatpush.msra.mxu0 0.0
          %6929 = vmatpush.msra.mxu0 0.0
          %6930 = vmatpush.msra.mxu0 %v6910
          %6931 = vmatmul.f32.gmra.mxu0 %v6913
          %v6932 = vpop.f32.mrf.mxu0
          %v6933 = vadd.f32 0.0, %v6932
          %6934 = vdwg.mxu0
          %v6935 = vadd.f32 %v6893, %v6933
          %v6936 = vld [vmem:[%s1034] sm:$0x1]
          %v6938 = vperm.slane %v6936, 0
          %6939 = vrot.lane.b32.xlu0 %v6938, 16
          %v6940 = vpop.permute.xlu0 %6939
          %v6942 = vmul.f32 %v6704, %v6940
          %v6943 = vmul.f32 %v6705, %v6940
          %s6944 = scalar_lea.vmem %s6, 48
          %v6945 = vld [vmem:[%s6944] sm:$0xff]
          %6948 = vrot.lane.b32.xlu0 %v6942, 112
          %v6949 = vpop.permute.xlu0 %6948
          %6950 = vrot.lane.b32.xlu0 %v6943, 112
          %v6951 = vpop.permute.xlu0 %6950
          %v6952 = vsel %vm1070, %v6949, %v6951
          %v6955 = vsel %vm4996, %v6945, 0
          %6957 = vmatpush.msra.mxu0 0.0
          %6958 = vmatpush.msra.mxu0 0.0
          %6959 = vmatpush.msra.mxu0 0.0
          %6960 = vmatpush.msra.mxu0 0.0
          %6961 = vmatpush.msra.mxu0 0.0
          %6962 = vmatpush.msra.mxu0 0.0
          %6963 = vmatpush.msra.mxu0 0.0
          %6964 = vmatpush.msra.mxu0 0.0
          %6965 = vmatpush.msra.mxu0 0.0
          %6966 = vmatpush.msra.mxu0 0.0
          %6967 = vmatpush.msra.mxu0 0.0
          %6968 = vmatpush.msra.mxu0 0.0
          %6969 = vmatpush.msra.mxu0 0.0
          %6970 = vmatpush.msra.mxu0 0.0
          %6971 = vmatpush.msra.mxu0 0.0
          %6972 = vmatpush.msra.mxu0 %v6952
          %6973 = vmatmul.f32.gmra.mxu0 %v6955
          %v6974 = vpop.f32.mrf.mxu0
          %v6975 = vadd.f32 0.0, %v6974
          %6976 = vdwg.mxu0
          %v6977 = vadd.f32 %v6935, %v6975
          %v6978 = vld [vmem:[%s1122] sm:$0x1]
          %v6980 = vperm.slane %v6978, 0
          %6981 = vrot.lane.b32.xlu0 %v6980, 17
          %v6982 = vpop.permute.xlu0 %6981
          %v6984 = vmul.f32 %v6704, %v6982
          %v6985 = vmul.f32 %v6705, %v6982
          %s6986 = scalar_lea.vmem %s6, 56
          %v6987 = vld [vmem:[%s6986] sm:$0xff]
          %6990 = vrot.lane.b32.xlu0 %v6984, 111
          %v6991 = vpop.permute.xlu0 %6990
          %6992 = vrot.lane.b32.xlu0 %v6985, 111
          %v6993 = vpop.permute.xlu0 %6992
          %v6994 = vsel %vm1158, %v6991, %v6993
          %v6997 = vsel %vm4996, %v6987, 0
          %6999 = vmatpush.msra.mxu0 0.0
          %7000 = vmatpush.msra.mxu0 0.0
          %7001 = vmatpush.msra.mxu0 0.0
          %7002 = vmatpush.msra.mxu0 0.0
          %7003 = vmatpush.msra.mxu0 0.0
          %7004 = vmatpush.msra.mxu0 0.0
          %7005 = vmatpush.msra.mxu0 0.0
          %7006 = vmatpush.msra.mxu0 0.0
          %7007 = vmatpush.msra.mxu0 0.0
          %7008 = vmatpush.msra.mxu0 0.0
          %7009 = vmatpush.msra.mxu0 0.0
          %7010 = vmatpush.msra.mxu0 0.0
          %7011 = vmatpush.msra.mxu0 0.0
          %7012 = vmatpush.msra.mxu0 0.0
          %7013 = vmatpush.msra.mxu0 0.0
          %7014 = vmatpush.msra.mxu0 %v6994
          %7015 = vmatmul.f32.gmra.mxu0 %v6997
          %v7016 = vpop.f32.mrf.mxu0
          %v7017 = vadd.f32 0.0, %v7016
          %7018 = vdwg.mxu0
          %v7019 = vadd.f32 %v6977, %v7017
          %v7020 = vld [vmem:[%s1210] sm:$0x1]
          %v7022 = vperm.slane %v7020, 0
          %7023 = vrot.lane.b32.xlu0 %v7022, 18
          %v7024 = vpop.permute.xlu0 %7023
          %v7026 = vmul.f32 %v6704, %v7024
          %v7027 = vmul.f32 %v6705, %v7024
          %s7028 = scalar_lea.vmem %s6, 64
          %v7029 = vld [vmem:[%s7028] sm:$0xff]
          %7032 = vrot.lane.b32.xlu0 %v7026, 110
          %v7033 = vpop.permute.xlu0 %7032
          %7034 = vrot.lane.b32.xlu0 %v7027, 110
          %v7035 = vpop.permute.xlu0 %7034
          %v7036 = vsel %vm1246, %v7033, %v7035
          %v7039 = vsel %vm4996, %v7029, 0
          %7041 = vmatpush.msra.mxu0 0.0
          %7042 = vmatpush.msra.mxu0 0.0
          %7043 = vmatpush.msra.mxu0 0.0
          %7044 = vmatpush.msra.mxu0 0.0
          %7045 = vmatpush.msra.mxu0 0.0
          %7046 = vmatpush.msra.mxu0 0.0
          %7047 = vmatpush.msra.mxu0 0.0
          %7048 = vmatpush.msra.mxu0 0.0
          %7049 = vmatpush.msra.mxu0 0.0
          %7050 = vmatpush.msra.mxu0 0.0
          %7051 = vmatpush.msra.mxu0 0.0
          %7052 = vmatpush.msra.mxu0 0.0
          %7053 = vmatpush.msra.mxu0 0.0
          %7054 = vmatpush.msra.mxu0 0.0
          %7055 = vmatpush.msra.mxu0 0.0
          %7056 = vmatpush.msra.mxu0 %v7036
          %7057 = vmatmul.f32.gmra.mxu0 %v7039
          %v7058 = vpop.f32.mrf.mxu0
          %v7059 = vadd.f32 0.0, %v7058
          %7060 = vdwg.mxu0
          %v7061 = vadd.f32 %v7019, %v7059
          %v7062 = vld [vmem:[%s8] sm:$0xff]
          %7064 = vset.pattern.permute.xlu0 0
          %7065 = vperm.xlu0 %7064, %v7062
          %v7066 = vpop.permute.xlu0 %7065
          %v7068 = vadd.f32 %v7061, %v7066
          %v7069 = vmax.f32 %v7068, 0.0
          %v7070 = vsub.f32 %v7069, %v6699
          %v7071 = vmax.f32 %v7070, 0.0
          %v7072 = vsub.f32 %v6699, %v7069
          %v7073 = vmax.f32 %v7072, 0.0
          %7074 = vst [vmem:[#allocation7] sm:$0xff] %v7071
          %7075 = vst [vmem:[#allocation7 + $0x8] sm:$0xff] %v7073
        $region92: #{prednet_forward.1} parent=79 // pred_fallthru
          _
        %p7076 = scmp.lt.s32.totalorder %s27, 2
        %s7077 = scalar_select %p7076, %s27, 2
        %s7078 = smul.addr %s7077, 4
        %s7079 = smul.addr %s7078, 4
        %s7080 = scalar_lea.vmem %s15, %s7079
        // Predicated region
        $region93: #{prednet_forward.1} parent=79 // pred_check
          %p7081 = pneg %p367
        $region94: #{prednet_forward.1} parent=79 // pred_check_branch
          %7083 = sbr.rel (%p7081) target = $region96
        $region95: #{prednet_forward.1} parent=79 // pred_region
          _
        $region96: #{prednet_forward.1} parent=79 // pred_fallthru
          _
      $region80: #{prednet_forward.1} parent=5 // pred_fallthru
        _
      %p7084 = scmp.le.s32.totalorder 2, %s22
      // Predicated region
      $region97: #{prednet_forward.1} parent=5 // pred_check
        %p7085 = pneg %p7084
      $region98: #{prednet_forward.1} parent=5 // pred_check_branch
        %7087 = sbr.rel (%p7085) target = $region100
      $region99: #{prednet_forward.1} parent=5 // pred_region
        %s7088 = ssub.s32 %s22, 2
        // Predicated region
        $region101: #{prednet_forward.1} parent=99 // pred_check
          %p7089 = pneg %p373
        $region102: #{prednet_forward.1} parent=99 // pred_check_branch
          %7091 = sbr.rel (%p7089) target = $region104
        $region103: #{prednet_forward.1} parent=99 // pred_region
          %p7092 = scmp.lt.s32.totalorder %s28, 2
          %s7093 = scalar_select %p7092, %s28, 2
          %s7094 = smul.addr %s7093, 4
          %s7095 = smul.addr %s7094, 4
          %s7096 = scalar_lea.vmem %s15, %s7095
        $region104: #{prednet_forward.1} parent=99 // pred_fallthru
          _
      $region100: #{prednet_forward.1} parent=5 // pred_fallthru
        _
    $region6: #{prednet_forward.1} parent=1 // loop_footer
      %s26 = sadd.s32 1, %s22
    $region7: #{prednet_forward.1} parent=1 // loop_footer_branch
      %21 = sbr.rel target = $region3
    $region8: #{prednet_forward.1} parent=1 // loop_exit
      _
    %7097 = vsyncpa [#allocation10], 1
    %s7098 = scalar_lea.sflag [#allocation10], 1
    %7099 = vsyncpa %s7098, 1

</llo_original>
